<compile_context>
chip_gen: v7x
topology: tpu7x:2x2x1
jax: 0.10.0
libtpu: 0.0.40
codegen_flags: <defaults>
</compile_context>

<pallas_src>
import functools
import math

import jax
import jax.numpy as jnp
from jax.experimental import pallas as pl
from jax.experimental.pallas import tpu as pltpu

# ----------------------- small config (scaled-down TransferFunctionModel) -----------------------
N_SAMPLES = 512          # exp.n_samples (2**15 in original)
LOWEST_BAND = 128        # 512 in original
CHANNELS = 16            # 128 in original
BANK_K = 16              # analysis kernel_size (128 in original)
N_ATOMS = 32             # 1024 in original
K_SPARSE = 4             # atoms_to_keep (8 in original)
POS_FREQS = 16           # -> 2*16 + 1 = 33 positional channels (matches `channels + 33`)
DILATIONS = (1, 3, 9, 27, 81, 1)
N_ROOMS = 8
WEIGHT_INIT = 0.1

_START = int(math.log2(LOWEST_BAND))
_END = int(math.log2(N_SAMPLES))
BAND_SIZES = [2 ** k for k in range(_START, _END)]       # [128, 256]
N_BANDS = len(BAND_SIZES)
N_BLOCKS = len(DILATIONS)


def _round_up(x, m):
    return ((x + m - 1) // m) * m


# ----------------------- Pallas kernels -----------------------

def _band_kernel(x_ref, eff_ref, pos_ref, wblk_ref, watoms_ref, atom_ref, ctx_ref,
                 *, t, dilations):
    """Fused per-band / per-example analysis path (one grid step per batch element).

    x_ref     : [1, 1, T]        raw band signal for this example
    eff_ref   : [C, K]   bf16    w_spec @ filter_bank  (filter bank + reduce-conv spec part folded)
    pos_ref   : [C, T]   f32     reduce_w[:, C:] @ pos_encoded (batch-invariant bias)
    wblk_ref  : [nblk, 3, C, C]  bf16, per-block tap weights with the 1x1 `wp` folded in
    watoms_ref: [A, C]   bf16    to_atoms 1x1 conv weight
    atom_ref  : [1, A, T] f32    relu(to_atoms(features))
    ctx_ref   : [1, C, 1] f32    max over time of the features (per-example context)
    """
    lane = jax.lax.broadcasted_iota(jnp.int32, (1, t), 1)        # reused by every shift mask

    # --- causal filter-bank conv (+ reduce spec part), alignment == F.pad(x,(K,0)); conv1d; [:T]
    xr = x_ref[0]                                                # [1, T] f32
    rows = []
    for k in range(BANK_K):
        s = BANK_K - k                                           # tap k reads x[t - (K - k)]
        r = pltpu.roll(xr, shift=s, axis=1)
        rows.append(jnp.where(lane >= s, r, 0.0))
    cols = jnp.concatenate(rows, axis=0).astype(jnp.bfloat16)    # [K, T] (tiny, per-example)
    x = jnp.dot(eff_ref[...], cols, preferred_element_type=jnp.float32) + pos_ref[...]   # [C, T]
    c = x.shape[0]

    # --- six residual DilatedBlocks: three accumulating [C,C]@[C,T] dots (no 3C concat)
    for blk, d in enumerate(dilations):
        # TODO(synk): F.dropout(p=0.1, training default) inside DilatedBlock treated as identity.
        xb = x.astype(jnp.bfloat16)
        x_prev = jnp.where(lane >= d, pltpu.roll(x, shift=d, axis=1), 0.0).astype(jnp.bfloat16)
        x_next = jnp.where(lane < t - d, pltpu.roll(x, shift=t - d, axis=1), 0.0).astype(jnp.bfloat16)
        y = jnp.dot(wblk_ref[blk, 0], x_prev, preferred_element_type=jnp.float32)
        y = y + jnp.dot(wblk_ref[blk, 1], xb, preferred_element_type=jnp.float32)
        y = y + jnp.dot(wblk_ref[blk, 2], x_next, preferred_element_type=jnp.float32)
        y = y + x
        x = jnp.where(y >= 0.0, y, 0.2 * y)                      # leaky_relu(0.2)

    # --- per-example context (max over time)
    ctx_ref[0] = jnp.max(x, axis=1, keepdims=True)               # [C, 1]
    # --- to_atoms + relu, lane-dense [A, T] slab
    atom_ref[0] = jnp.maximum(
        jnp.dot(watoms_ref[...], x.astype(jnp.bfloat16), preferred_element_type=jnp.float32), 0.0)


def band_fused(signal, p, batch, tb):
    kern = functools.partial(_band_kernel, t=tb, dilations=DILATIONS)
    grid_spec = pltpu.PrefetchScalarGridSpec(
        num_scalar_prefetch=0,
        grid=(batch,),
        in_specs=[
            pl.BlockSpec((1, 1, tb), lambda b: (b, 0, 0)),                       # streamed signal
            pl.BlockSpec((CHANNELS, BANK_K), lambda b: (0, 0)),                  # resident weights
            pl.BlockSpec((CHANNELS, tb), lambda b: (0, 0)),
            pl.BlockSpec((N_BLOCKS, 3, CHANNELS, CHANNELS), lambda b: (0, 0, 0, 0)),
            pl.BlockSpec((N_ATOMS, CHANNELS), lambda b: (0, 0)),
        ],
        out_specs=[
            pl.BlockSpec((1, N_ATOMS, tb), lambda b: (b, 0, 0)),
            pl.BlockSpec((1, CHANNELS, 1), lambda b: (b, 0, 0)),
        ],
    )
    return pl.pallas_call(
        kern,
        grid_spec=grid_spec,
        out_shape=(jax.ShapeDtypeStruct((batch, N_ATOMS, tb), jnp.float32),
                   jax.ShapeDtypeStruct((batch, CHANNELS, 1), jnp.float32)),
        compiler_params=pltpu.CompilerParams(
            dimension_semantics=("parallel",),
            vmem_limit_bytes=32 * 1024 * 1024),
    )(signal, p['eff'], p['pos_bias'], p['wblk'], p['watoms'])


def _sparse_synth_kernel(tidx_ref, waves_ref, out_ref, *, atom_size, k_sparse):
    """Sparse conv_transpose1d: scatter-add K_SPARSE pre-scaled atom waveforms per example.

    tidx_ref  : [B, K]  int32 (SMEM scalar prefetch) time index of each surviving activation
    waves_ref : [1, atom_size, K] f32   value-scaled atom waveforms (time on sublanes)
    out_ref   : [1, Lpad, 1] f32        synthesized band audio (time on sublanes)
    out[t + atom_size + s] += value * atoms[a, s]   (matches F.pad(x,(atom_size,0)) + conv_transpose1d)
    """
    b = pl.program_id(0)
    out_ref[...] = jnp.zeros(out_ref.shape, out_ref.dtype)
    waves = waves_ref[0]                                         # [atom_size, K]
    for j in range(k_sparse):                                    # static unroll, K_SPARSE tiny
        start = tidx_ref[b, j] + atom_size
        cur = out_ref[0, pl.ds(start, atom_size), :]             # [atom_size, 1]
        out_ref[0, pl.ds(start, atom_size), :] = cur + waves[:, j:j + 1]


def sparse_atom_synth(t_idx, scaled_waves_t, lpad, batch):
    atom_size = scaled_waves_t.shape[1]
    kern = functools.partial(_sparse_synth_kernel, atom_size=atom_size, k_sparse=K_SPARSE)
    grid_spec = pltpu.PrefetchScalarGridSpec(
        num_scalar_prefetch=1,
        grid=(batch,),
        in_specs=[pl.BlockSpec((1, atom_size, K_SPARSE), lambda b, *_: (b, 0, 0))],
        out_specs=pl.BlockSpec((1, lpad, 1), lambda b, *_: (b, 0, 0)),
    )
    return pl.pallas_call(
        kern,
        grid_spec=grid_spec,
        out_shape=jax.ShapeDtypeStruct((batch, lpad, 1), jnp.float32),
        compiler_params=pltpu.CompilerParams(dimension_semantics=("arbitrary",)),
    )(t_idx, scaled_waves_t)


# ----------------------- plain-JAX glue -----------------------

def pos_encoded(t):
    pos = jnp.linspace(-jnp.pi, jnp.pi, t)
    feats = [pos]
    for i in range(POS_FREQS):
        feats.append(jnp.sin((2.0 ** i) * pos))
        feats.append(jnp.cos((2.0 ** i) * pos))
    return jnp.stack(feats, axis=0).astype(jnp.float32)        # [33, T]


def fft_frequency_decompose(x, min_size):
    # TODO(synk): exact fft_frequency_decompose helper not provided; rfft band masking used.
    coeffs = jnp.fft.rfft(x, norm='ortho')
    out = {}
    size = min_size
    while size < x.shape[-1]:                                  # model only consumes bands < n_samples
        sl = coeffs[..., :size // 2 + 1]
        if size > min_size:
            mask = jnp.zeros(size // 2 + 1, jnp.float32).at[size // 4:].set(1.0)
            sl = sl * mask
        out[size] = jnp.fft.irfft(sl, n=size, norm='ortho').astype(jnp.float32)
        size *= 2
    return out


def fft_frequency_recompose(audio, n_samples):
    # TODO(synk): exact fft_frequency_recompose helper not provided; FFT zero-pad resample + sum.
    total = jnp.zeros(audio[BAND_SIZES[0]].shape[:-1] + (n_samples,), jnp.float32)
    for size in sorted(audio.keys()):
        band = audio[size]
        spec = jnp.fft.rfft(band, norm='ortho')
        nbins = n_samples // 2 + 1
        take = min(spec.shape[-1], nbins)
        new = jnp.zeros(band.shape[:-1] + (nbins,), spec.dtype).at[..., :take].set(spec[..., :take])
        total = total + jnp.fft.irfft(new, n=n_samples, norm='ortho').astype(jnp.float32)
    return total


def fft_convolve(a, b):
    n = a.shape[-1]
    ap = jnp.pad(a, ((0, 0), (0, n)))
    bp = jnp.pad(b, ((0, 0), (0, n)))
    spec = jnp.fft.rfft(ap) * jnp.fft.rfft(bp)
    return jnp.fft.irfft(spec, n=2 * n)[..., :n].astype(jnp.float32)


def linear_stack(x, layers):
    # tiny [B,16] matmuls -> left to XLA (a Pallas call here is pure launch/DMA overhead)
    n = len(layers)
    for i, (w, b) in enumerate(layers):
        x = x @ w + b
        if i < n - 1:
            x = jnp.where(x >= 0.0, x, 0.2 * x)                # leaky_relu(0.2)
    return x


# ----------------------- deterministic parameter construction -----------------------

def _uinit(key, shape, scale=WEIGHT_INIT):
    return jax.random.uniform(key, shape, jnp.float32, -scale, scale)


def make_filter_bank(channels, size):
    # TODO(synk): zounds / morlet_filter_bank unavailable; deterministic Gabor bank substituted.
    t = jnp.linspace(-1.0, 1.0, size)
    freqs = jnp.linspace(1.0, size / 2.0, channels)
    win = jnp.exp(-0.5 * (t / 0.3) ** 2)
    bank = jnp.cos(2.0 * jnp.pi * freqs[:, None] * t[None, :]) * win[None, :]
    bank = bank / (jnp.linalg.norm(bank, axis=-1, keepdims=True) + 1e-8)
    return bank.astype(jnp.float32)


def make_stack_params(key, dims):
    layers = []
    keys = jax.random.split(key, 2 * (len(dims) - 1))
    for i in range(len(dims) - 1):
        w = _uinit(keys[2 * i], (dims[i], dims[i + 1]))        # stored pre-transposed [Cin, Cout]
        b = _uinit(keys[2 * i + 1], (1, dims[i + 1]))
        layers.append((w, b))
    return layers


def make_band_params(key, size):
    atom_size = size // 8                                      # 2**k // 8
    ks = jax.random.split(key, 5)
    C = CHANNELS
    # DilatedBlock weights: dilated Conv1d(C, C, 3, dilation=d) taps + 1x1 conv wp
    wd = _uinit(ks[0], (N_BLOCKS, C, C, 3))                    # [blk, Cout, Cin, tap]
    wp = _uinit(ks[2], (N_BLOCKS, C, C))                       # [blk, Cout, Cin]
    # fold wp into the taps: wp @ (W0 x_prev + W1 x + W2 x_next) -> per-tap [C, C] weights
    wblk = jnp.stack([jnp.einsum('bij,bjk->bik', wp, wd[..., t]) for t in range(3)],
                     axis=1)                                   # [blk, 3, C, C]
    reduce_w = _uinit(ks[1], (C, C + 2 * POS_FREQS + 1))       # Conv1d(C+33, C, 1) weight
    pos = pos_encoded(size)                                    # [33, T] (batch-invariant)
    bank = make_filter_bank(C, BANK_K)                         # [C, K]
    atoms = jax.random.uniform(ks[3], (N_ATOMS, atom_size), jnp.float32, -1.0, 1.0)
    return dict(
        eff=(reduce_w[:, :C] @ bank).astype(jnp.bfloat16),     # folded filterbank + reduce (spec)
        pos_bias=(reduce_w[:, C:] @ pos).astype(jnp.float32),  # folded positional contribution [C,T]
        wblk=wblk.astype(jnp.bfloat16),
        watoms=_uinit(ks[4], (N_ATOMS, C)).astype(jnp.bfloat16),
        atoms=atoms,                                           # [N_ATOMS, atom_size] synth bank
    )


def make_model_params(key):
    kb, kc, kr = jax.random.split(key, 3)
    band_keys = jax.random.split(kb, N_BANDS)
    bands = {size: make_band_params(band_keys[i], size) for i, size in enumerate(BAND_SIZES)}
    # to_context = LinearOutputStack(channels, 3, out=channels, in=channels * n_bands)
    to_context = make_stack_params(
        kc, [CHANNELS * N_BANDS, CHANNELS, CHANNELS, CHANNELS, CHANNELS, CHANNELS])
    # ReverbGenerator(model_dim, 3, samplerate, n_samples)
    kr1, kr2, kr3 = jax.random.split(kr, 3)
    to_rooms = make_stack_params(kr1, [CHANNELS, CHANNELS, CHANNELS, CHANNELS, N_ROOMS])
    to_mix = make_stack_params(kr2, [CHANNELS, CHANNELS, CHANNELS, CHANNELS, 1])
    decay = jnp.exp(-jnp.linspace(0.0, 6.0, N_SAMPLES))
    room_bank = (jax.random.normal(kr3, (N_ROOMS, N_SAMPLES)) * decay[None, :] * 0.1).astype(jnp.float32)
    return dict(bands=bands, to_context=to_context,
                verb=dict(to_rooms=to_rooms, to_mix=to_mix, room_bank=room_bank))


# ----------------------- forward pass -----------------------

def analysis_band_forward(signal, p):
    # signal: [B, 1, T]
    b, _, tb = signal.shape
    atom_size = p['atoms'].shape[1]
    atom_act, ctx = band_fused(signal, p, b, tb)               # [B, A, T], [B, C, 1]
    # TODO(synk): F.dropout(p=0.1 / p=0.01, functional default training=True) treated as identity.
    # top-k selection (sparsify) — no clean Mosaic lowering for top_k, kept in XLA glue.
    flat = atom_act.reshape(b, -1)
    vals, idx = jax.lax.top_k(flat, K_SPARSE)                  # [B, K]
    a_idx = idx // tb
    t_idx = (idx % tb).astype(jnp.int32)
    # pre-scale the K surviving atom waveforms (tiny gather, left to XLA); time on sublanes.
    waves = p['atoms'][a_idx] * vals[..., None]                # [B, K, atom_size]
    waves_t = jnp.transpose(waves, (0, 2, 1))                  # [B, atom_size, K]
    lpad = _round_up(tb + 2 * atom_size, 128)                  # fits every t + 2*atom_size write
    audio = sparse_atom_synth(t_idx, waves_t, lpad, b)         # [B, Lpad, 1]
    # TODO(synk): exact trim/alignment of the transposed-conv tail vs. the original
    # fft_frequency_recompose is ambiguous; band is trimmed back to its native length here.
    audio = audio[:, :tb, 0][:, None, :]                       # [B, 1, T]
    return audio, ctx[:, :, 0]                                 # [B, 1, T], [B, C]


def reverb_forward(context, dry, vp):
    # TODO(synk): ReverbGenerator source not provided; room-softmax / mix-sigmoid formulation used.
    room_w = jax.nn.softmax(linear_stack(context, vp['to_rooms']), axis=-1)   # [B, n_rooms]
    mix = jax.nn.sigmoid(linear_stack(context, vp['to_mix']))                 # [B, 1]
    impulse = room_w @ vp['room_bank']                                        # [B, n_samples]
    dry2 = dry[:, 0, :]
    wet = fft_convolve(dry2, impulse)
    out = dry2 * mix + wet * (1.0 - mix)
    return out[:, None, :]


def transfer_function_model_forward(x, params):
    n_samples = x.shape[-1]
    bands = fft_frequency_decompose(x, LOWEST_BAND)
    audio = {}
    feats = []
    for size in BAND_SIZES:                                    # ModuleDict insertion order
        a, f = analysis_band_forward(bands[size], params['bands'][size])
        audio[size] = a
        feats.append(f)
    f = jnp.concatenate(feats, axis=-1)                        # [B, C * n_bands]
    context = linear_stack(f, params['to_context'])            # [B, C]
    dry = fft_frequency_recompose(audio, n_samples)            # [B, 1, n_samples]
    return reverb_forward(context, dry, params['verb'])


if __name__ == "__main__":
    key = jax.random.PRNGKey(0)
    kp, kx = jax.random.split(key)
    params = make_model_params(kp)
    x = jax.random.normal(kx, (2, 1, N_SAMPLES), jnp.float32)  # [batch, 1, n_samples]

    fwd = jax.jit(lambda inp: transfer_function_model_forward(inp, params))
    out = fwd(x)
    out = jax.block_until_ready(out)
    assert out.shape == (2, 1, N_SAMPLES), out.shape
    assert bool(jnp.all(jnp.isfinite(out)))
    print("KERNEL_OK")
</pallas_src>

<mosaic_0001>
module attributes {stable_mosaic.version = 11 : i64} {
  func.func @_band_kernel(%arg0: i32, %arg1: memref<1x1x128xf32, #tpu.memory_space<vmem>>, %arg2: memref<16x16xbf16, #tpu.memory_space<vmem>>, %arg3: memref<16x128xf32, #tpu.memory_space<vmem>>, %arg4: memref<6x3x16x16xbf16, #tpu.memory_space<vmem>>, %arg5: memref<32x16xbf16, #tpu.memory_space<vmem>>, %arg6: memref<1x32x128xf32, #tpu.memory_space<vmem>>, %arg7: memref<1x16x1xf32, #tpu.memory_space<vmem>>) attributes {dimension_semantics = [#tpu.dimension_semantics<parallel>], iteration_bounds = array<i64: 2>, scalar_prefetch = 0 : i64, scratch_operands = 0 : i64, tpu.core_type = #tpu.core_type<tc>, window_params = [{transform_indices = @transform_0, window_bounds = array<i64: 1, 1, 128>}, {pipeline_mode = #tpu.pipeline_mode<synchronous>, transform_indices = @transform_1, window_bounds = array<i64: 16, 16>}, {pipeline_mode = #tpu.pipeline_mode<synchronous>, transform_indices = @transform_2, window_bounds = array<i64: 16, 128>}, {pipeline_mode = #tpu.pipeline_mode<synchronous>, transform_indices = @transform_3, window_bounds = array<i64: 6, 3, 16, 16>}, {pipeline_mode = #tpu.pipeline_mode<synchronous>, transform_indices = @transform_4, window_bounds = array<i64: 32, 16>}, {transform_indices = @transform_5, window_bounds = array<i64: 1, 32, 128>}, {transform_indices = @transform_6, window_bounds = array<i64: 1, 16, 1>}]} {
    %0 = tpu.iota {dimensions = array<i32: 1>} : vector<1x128xi32>
    %c0 = arith.constant 0 : index
    %c0_0 = arith.constant 0 : index
    %c0_1 = arith.constant 0 : index
    %1 = vector.load %arg1[%c0, %c0_0, %c0_1] : memref<1x1x128xf32, #tpu.memory_space<vmem>>, vector<1x1x128xf32>
    %2 = vector.shape_cast %1 : vector<1x1x128xf32> to vector<1x128xf32>
    %c16_i32 = arith.constant 16 : i32
    %3 = tpu.dynamic_rotate %2 by %c16_i32 dim 1 : vector<1x128xf32>, i32 -> vector<1x128xf32>
    %c16_i32_2 = arith.constant 16 : i32
    %4 = vector.broadcast %c16_i32_2 : i32 to vector<1x128xi32>
    %5 = arith.cmpi sge, %0, %4 : vector<1x128xi32>
    %cst = arith.constant 0.000000e+00 : f32
    %6 = vector.broadcast %cst : f32 to vector<1x128xf32>
    %7 = arith.select %5, %3, %6 : vector<1x128xi1>, vector<1x128xf32>
    %c15_i32 = arith.constant 15 : i32
    %8 = tpu.dynamic_rotate %2 by %c15_i32 dim 1 : vector<1x128xf32>, i32 -> vector<1x128xf32>
    %c15_i32_3 = arith.constant 15 : i32
    %9 = vector.broadcast %c15_i32_3 : i32 to vector<1x128xi32>
    %10 = arith.cmpi sge, %0, %9 : vector<1x128xi32>
    %cst_4 = arith.constant 0.000000e+00 : f32
    %11 = vector.broadcast %cst_4 : f32 to vector<1x128xf32>
    %12 = arith.select %10, %8, %11 : vector<1x128xi1>, vector<1x128xf32>
    %c14_i32 = arith.constant 14 : i32
    %13 = tpu.dynamic_rotate %2 by %c14_i32 dim 1 : vector<1x128xf32>, i32 -> vector<1x128xf32>
    %c14_i32_5 = arith.constant 14 : i32
    %14 = vector.broadcast %c14_i32_5 : i32 to vector<1x128xi32>
    %15 = arith.cmpi sge, %0, %14 : vector<1x128xi32>
    %cst_6 = arith.constant 0.000000e+00 : f32
    %16 = vector.broadcast %cst_6 : f32 to vector<1x128xf32>
    %17 = arith.select %15, %13, %16 : vector<1x128xi1>, vector<1x128xf32>
    %c13_i32 = arith.constant 13 : i32
    %18 = tpu.dynamic_rotate %2 by %c13_i32 dim 1 : vector<1x128xf32>, i32 -> vector<1x128xf32>
    %c13_i32_7 = arith.constant 13 : i32
    %19 = vector.broadcast %c13_i32_7 : i32 to vector<1x128xi32>
    %20 = arith.cmpi sge, %0, %19 : vector<1x128xi32>
    %cst_8 = arith.constant 0.000000e+00 : f32
    %21 = vector.broadcast %cst_8 : f32 to vector<1x128xf32>
    %22 = arith.select %20, %18, %21 : vector<1x128xi1>, vector<1x128xf32>
    %c12_i32 = arith.constant 12 : i32
    %23 = tpu.dynamic_rotate %2 by %c12_i32 dim 1 : vector<1x128xf32>, i32 -> vector<1x128xf32>
    %c12_i32_9 = arith.constant 12 : i32
    %24 = vector.broadcast %c12_i32_9 : i32 to vector<1x128xi32>
    %25 = arith.cmpi sge, %0, %24 : vector<1x128xi32>
    %cst_10 = arith.constant 0.000000e+00 : f32
    %26 = vector.broadcast %cst_10 : f32 to vector<1x128xf32>
    %27 = arith.select %25, %23, %26 : vector<1x128xi1>, vector<1x128xf32>
    %c11_i32 = arith.constant 11 : i32
    %28 = tpu.dynamic_rotate %2 by %c11_i32 dim 1 : vector<1x128xf32>, i32 -> vector<1x128xf32>
    %c11_i32_11 = arith.constant 11 : i32
    %29 = vector.broadcast %c11_i32_11 : i32 to vector<1x128xi32>
    %30 = arith.cmpi sge, %0, %29 : vector<1x128xi32>
    %cst_12 = arith.constant 0.000000e+00 : f32
    %31 = vector.broadcast %cst_12 : f32 to vector<1x128xf32>
    %32 = arith.select %30, %28, %31 : vector<1x128xi1>, vector<1x128xf32>
    %c10_i32 = arith.constant 10 : i32
    %33 = tpu.dynamic_rotate %2 by %c10_i32 dim 1 : vector<1x128xf32>, i32 -> vector<1x128xf32>
    %c10_i32_13 = arith.constant 10 : i32
    %34 = vector.broadcast %c10_i32_13 : i32 to vector<1x128xi32>
    %35 = arith.cmpi sge, %0, %34 : vector<1x128xi32>
    %cst_14 = arith.constant 0.000000e+00 : f32
    %36 = vector.broadcast %cst_14 : f32 to vector<1x128xf32>
    %37 = arith.select %35, %33, %36 : vector<1x128xi1>, vector<1x128xf32>
    %c9_i32 = arith.constant 9 : i32
    %38 = tpu.dynamic_rotate %2 by %c9_i32 dim 1 : vector<1x128xf32>, i32 -> vector<1x128xf32>
    %c9_i32_15 = arith.constant 9 : i32
    %39 = vector.broadcast %c9_i32_15 : i32 to vector<1x128xi32>
    %40 = arith.cmpi sge, %0, %39 : vector<1x128xi32>
    %cst_16 = arith.constant 0.000000e+00 : f32
    %41 = vector.broadcast %cst_16 : f32 to vector<1x128xf32>
    %42 = arith.select %40, %38, %41 : vector<1x128xi1>, vector<1x128xf32>
    %c8_i32 = arith.constant 8 : i32
    %43 = tpu.dynamic_rotate %2 by %c8_i32 dim 1 : vector<1x128xf32>, i32 -> vector<1x128xf32>
    %c8_i32_17 = arith.constant 8 : i32
    %44 = vector.broadcast %c8_i32_17 : i32 to vector<1x128xi32>
    %45 = arith.cmpi sge, %0, %44 : vector<1x128xi32>
    %cst_18 = arith.constant 0.000000e+00 : f32
    %46 = vector.broadcast %cst_18 : f32 to vector<1x128xf32>
    %47 = arith.select %45, %43, %46 : vector<1x128xi1>, vector<1x128xf32>
    %c7_i32 = arith.constant 7 : i32
    %48 = tpu.dynamic_rotate %2 by %c7_i32 dim 1 : vector<1x128xf32>, i32 -> vector<1x128xf32>
    %c7_i32_19 = arith.constant 7 : i32
    %49 = vector.broadcast %c7_i32_19 : i32 to vector<1x128xi32>
    %50 = arith.cmpi sge, %0, %49 : vector<1x128xi32>
    %cst_20 = arith.constant 0.000000e+00 : f32
    %51 = vector.broadcast %cst_20 : f32 to vector<1x128xf32>
    %52 = arith.select %50, %48, %51 : vector<1x128xi1>, vector<1x128xf32>
    %c6_i32 = arith.constant 6 : i32
    %53 = tpu.dynamic_rotate %2 by %c6_i32 dim 1 : vector<1x128xf32>, i32 -> vector<1x128xf32>
    %c6_i32_21 = arith.constant 6 : i32
    %54 = vector.broadcast %c6_i32_21 : i32 to vector<1x128xi32>
    %55 = arith.cmpi sge, %0, %54 : vector<1x128xi32>
    %cst_22 = arith.constant 0.000000e+00 : f32
    %56 = vector.broadcast %cst_22 : f32 to vector<1x128xf32>
    %57 = arith.select %55, %53, %56 : vector<1x128xi1>, vector<1x128xf32>
    %c5_i32 = arith.constant 5 : i32
    %58 = tpu.dynamic_rotate %2 by %c5_i32 dim 1 : vector<1x128xf32>, i32 -> vector<1x128xf32>
    %c5_i32_23 = arith.constant 5 : i32
    %59 = vector.broadcast %c5_i32_23 : i32 to vector<1x128xi32>
    %60 = arith.cmpi sge, %0, %59 : vector<1x128xi32>
    %cst_24 = arith.constant 0.000000e+00 : f32
    %61 = vector.broadcast %cst_24 : f32 to vector<1x128xf32>
    %62 = arith.select %60, %58, %61 : vector<1x128xi1>, vector<1x128xf32>
    %c4_i32 = arith.constant 4 : i32
    %63 = tpu.dynamic_rotate %2 by %c4_i32 dim 1 : vector<1x128xf32>, i32 -> vector<1x128xf32>
    %c4_i32_25 = arith.constant 4 : i32
    %64 = vector.broadcast %c4_i32_25 : i32 to vector<1x128xi32>
    %65 = arith.cmpi sge, %0, %64 : vector<1x128xi32>
    %cst_26 = arith.constant 0.000000e+00 : f32
    %66 = vector.broadcast %cst_26 : f32 to vector<1x128xf32>
    %67 = arith.select %65, %63, %66 : vector<1x128xi1>, vector<1x128xf32>
    %c3_i32 = arith.constant 3 : i32
    %68 = tpu.dynamic_rotate %2 by %c3_i32 dim 1 : vector<1x128xf32>, i32 -> vector<1x128xf32>
    %c3_i32_27 = arith.constant 3 : i32
    %69 = vector.broadcast %c3_i32_27 : i32 to vector<1x128xi32>
    %70 = arith.cmpi sge, %0, %69 : vector<1x128xi32>
    %cst_28 = arith.constant 0.000000e+00 : f32
    %71 = vector.broadcast %cst_28 : f32 to vector<1x128xf32>
    %72 = arith.select %70, %68, %71 : vector<1x128xi1>, vector<1x128xf32>
    %c2_i32 = arith.constant 2 : i32
    %73 = tpu.dynamic_rotate %2 by %c2_i32 dim 1 : vector<1x128xf32>, i32 -> vector<1x128xf32>
    %c2_i32_29 = arith.constant 2 : i32
    %74 = vector.broadcast %c2_i32_29 : i32 to vector<1x128xi32>
    %75 = arith.cmpi sge, %0, %74 : vector<1x128xi32>
    %cst_30 = arith.constant 0.000000e+00 : f32
    %76 = vector.broadcast %cst_30 : f32 to vector<1x128xf32>
    %77 = arith.select %75, %73, %76 : vector<1x128xi1>, vector<1x128xf32>
    %c1_i32 = arith.constant 1 : i32
    %78 = tpu.dynamic_rotate %2 by %c1_i32 dim 1 : vector<1x128xf32>, i32 -> vector<1x128xf32>
    %c1_i32_31 = arith.constant 1 : i32
    %79 = vector.broadcast %c1_i32_31 : i32 to vector<1x128xi32>
    %80 = arith.cmpi sge, %0, %79 : vector<1x128xi32>
    %cst_32 = arith.constant 0.000000e+00 : f32
    %81 = vector.broadcast %cst_32 : f32 to vector<1x128xf32>
    %82 = arith.select %80, %78, %81 : vector<1x128xi1>, vector<1x128xf32>
    %83 = tpu.concatenate %7, %12, %17, %22, %27, %32, %37, %42, %47, %52, %57, %62, %67, %72, %77, %82 in 0 : vector<1x128xf32>, vector<1x128xf32>, vector<1x128xf32>, vector<1x128xf32>, vector<1x128xf32>, vector<1x128xf32>, vector<1x128xf32>, vector<1x128xf32>, vector<1x128xf32>, vector<1x128xf32>, vector<1x128xf32>, vector<1x128xf32>, vector<1x128xf32>, vector<1x128xf32>, vector<1x128xf32>, vector<1x128xf32> -> vector<16x128xf32>
    %84 = arith.truncf %83 : vector<16x128xf32> to vector<16x128xbf16>
    %c0_33 = arith.constant 0 : index
    %c0_34 = arith.constant 0 : index
    %85 = vector.load %arg2[%c0_33, %c0_34] : memref<16x16xbf16, #tpu.memory_space<vmem>>, vector<16x16xbf16>
    %cst_35 = arith.constant dense<0.000000e+00> : vector<16x128xf32>
    %86 = tpu.matmul %85, %84, %cst_35 {dimension_numbers = #tpu.dot_dimension_numbers<[1], [0], [0], [1], [0, 0, 1, 1], [], []>} : vector<16x16xbf16>, vector<16x128xbf16>, vector<16x128xf32> -> vector<16x128xf32>
    %c0_36 = arith.constant 0 : index
    %c0_37 = arith.constant 0 : index
    %87 = vector.load %arg3[%c0_36, %c0_37] : memref<16x128xf32, #tpu.memory_space<vmem>>, vector<16x128xf32>
    %88 = arith.addf %86, %87 : vector<16x128xf32>
    %89 = arith.truncf %88 : vector<16x128xf32> to vector<16x128xbf16>
    %c1_i32_38 = arith.constant 1 : i32
    %90 = vector.broadcast %c1_i32_38 : i32 to vector<1x128xi32>
    %91 = arith.cmpi sge, %0, %90 : vector<1x128xi32>
    %c1_i32_39 = arith.constant 1 : i32
    %92 = tpu.dynamic_rotate %88 by %c1_i32_39 dim 1 : vector<16x128xf32>, i32 -> vector<16x128xf32>
    %cst_40 = arith.constant 0.000000e+00 : f32
    %93 = vector.shape_cast %91 : vector<1x128xi1> to vector<1x128xi1>
    %94 = vector.broadcast %93 : vector<1x128xi1> to vector<16x128xi1>
    %95 = vector.broadcast %cst_40 : f32 to vector<16x128xf32>
    %96 = arith.select %94, %92, %95 : vector<16x128xi1>, vector<16x128xf32>
    %97 = arith.truncf %96 : vector<16x128xf32> to vector<16x128xbf16>
    %c127_i32 = arith.constant 127 : i32
    %98 = vector.broadcast %c127_i32 : i32 to vector<1x128xi32>
    %99 = arith.cmpi slt, %0, %98 : vector<1x128xi32>
    %c127_i32_41 = arith.constant 127 : i32
    %100 = tpu.dynamic_rotate %88 by %c127_i32_41 dim 1 : vector<16x128xf32>, i32 -> vector<16x128xf32>
    %cst_42 = arith.constant 0.000000e+00 : f32
    %101 = vector.shape_cast %99 : vector<1x128xi1> to vector<1x128xi1>
    %102 = vector.broadcast %101 : vector<1x128xi1> to vector<16x128xi1>
    %103 = vector.broadcast %cst_42 : f32 to vector<16x128xf32>
    %104 = arith.select %102, %100, %103 : vector<16x128xi1>, vector<16x128xf32>
    %105 = arith.truncf %104 : vector<16x128xf32> to vector<16x128xbf16>
    %c0_43 = arith.constant 0 : index
    %c0_44 = arith.constant 0 : index
    %c0_45 = arith.constant 0 : index
    %c0_46 = arith.constant 0 : index
    %106 = vector.load %arg4[%c0_43, %c0_44, %c0_45, %c0_46] : memref<6x3x16x16xbf16, #tpu.memory_space<vmem>>, vector<1x1x16x16xbf16>
    %107 = vector.shape_cast %106 : vector<1x1x16x16xbf16> to vector<16x16xbf16>
    %cst_47 = arith.constant dense<0.000000e+00> : vector<16x128xf32>
    %108 = tpu.matmul %107, %97, %cst_47 {dimension_numbers = #tpu.dot_dimension_numbers<[1], [0], [0], [1], [0, 0, 1, 1], [], []>} : vector<16x16xbf16>, vector<16x128xbf16>, vector<16x128xf32> -> vector<16x128xf32>
    %c0_48 = arith.constant 0 : index
    %c1 = arith.constant 1 : index
    %c0_49 = arith.constant 0 : index
    %c0_50 = arith.constant 0 : index
    %109 = vector.load %arg4[%c0_48, %c1, %c0_49, %c0_50] : memref<6x3x16x16xbf16, #tpu.memory_space<vmem>>, vector<1x1x16x16xbf16>
    %110 = vector.shape_cast %109 : vector<1x1x16x16xbf16> to vector<16x16xbf16>
    %cst_51 = arith.constant dense<0.000000e+00> : vector<16x128xf32>
    %111 = tpu.matmul %110, %89, %cst_51 {dimension_numbers = #tpu.dot_dimension_numbers<[1], [0], [0], [1], [0, 0, 1, 1], [], []>} : vector<16x16xbf16>, vector<16x128xbf16>, vector<16x128xf32> -> vector<16x128xf32>
    %112 = arith.addf %108, %111 : vector<16x128xf32>
    %c0_52 = arith.constant 0 : index
    %c2 = arith.constant 2 : index
    %c0_53 = arith.constant 0 : index
    %c0_54 = arith.constant 0 : index
    %113 = vector.load %arg4[%c0_52, %c2, %c0_53, %c0_54] : memref<6x3x16x16xbf16, #tpu.memory_space<vmem>>, vector<1x1x16x16xbf16>
    %114 = vector.shape_cast %113 : vector<1x1x16x16xbf16> to vector<16x16xbf16>
    %cst_55 = arith.constant dense<0.000000e+00> : vector<16x128xf32>
    %115 = tpu.matmul %114, %105, %cst_55 {dimension_numbers = #tpu.dot_dimension_numbers<[1], [0], [0], [1], [0, 0, 1, 1], [], []>} : vector<16x16xbf16>, vector<16x128xbf16>, vector<16x128xf32> -> vector<16x128xf32>
    %116 = arith.addf %112, %115 : vector<16x128xf32>
    %117 = arith.addf %116, %88 : vector<16x128xf32>
    %cst_56 = arith.constant 0.000000e+00 : f32
    %118 = vector.broadcast %cst_56 : f32 to vector<16x128xf32>
    %119 = arith.cmpf oge, %117, %118 : vector<16x128xf32>
    %cst_57 = arith.constant 2.000000e-01 : f32
    %120 = vector.broadcast %cst_57 : f32 to vector<16x128xf32>
    %121 = arith.mulf %120, %117 : vector<16x128xf32>
    %122 = arith.select %119, %117, %121 : vector<16x128xi1>, vector<16x128xf32>
    %123 = arith.truncf %122 : vector<16x128xf32> to vector<16x128xbf16>
    %c3_i32_58 = arith.constant 3 : i32
    %124 = vector.broadcast %c3_i32_58 : i32 to vector<1x128xi32>
    %125 = arith.cmpi sge, %0, %124 : vector<1x128xi32>
    %c3_i32_59 = arith.constant 3 : i32
    %126 = tpu.dynamic_rotate %122 by %c3_i32_59 dim 1 : vector<16x128xf32>, i32 -> vector<16x128xf32>
    %cst_60 = arith.constant 0.000000e+00 : f32
    %127 = vector.shape_cast %125 : vector<1x128xi1> to vector<1x128xi1>
    %128 = vector.broadcast %127 : vector<1x128xi1> to vector<16x128xi1>
    %129 = vector.broadcast %cst_60 : f32 to vector<16x128xf32>
    %130 = arith.select %128, %126, %129 : vector<16x128xi1>, vector<16x128xf32>
    %131 = arith.truncf %130 : vector<16x128xf32> to vector<16x128xbf16>
    %c125_i32 = arith.constant 125 : i32
    %132 = vector.broadcast %c125_i32 : i32 to vector<1x128xi32>
    %133 = arith.cmpi slt, %0, %132 : vector<1x128xi32>
    %c125_i32_61 = arith.constant 125 : i32
    %134 = tpu.dynamic_rotate %122 by %c125_i32_61 dim 1 : vector<16x128xf32>, i32 -> vector<16x128xf32>
    %cst_62 = arith.constant 0.000000e+00 : f32
    %135 = vector.shape_cast %133 : vector<1x128xi1> to vector<1x128xi1>
    %136 = vector.broadcast %135 : vector<1x128xi1> to vector<16x128xi1>
    %137 = vector.broadcast %cst_62 : f32 to vector<16x128xf32>
    %138 = arith.select %136, %134, %137 : vector<16x128xi1>, vector<16x128xf32>
    %139 = arith.truncf %138 : vector<16x128xf32> to vector<16x128xbf16>
    %c1_63 = arith.constant 1 : index
    %c0_64 = arith.constant 0 : index
    %c0_65 = arith.constant 0 : index
    %c0_66 = arith.constant 0 : index
    %140 = vector.load %arg4[%c1_63, %c0_64, %c0_65, %c0_66] : memref<6x3x16x16xbf16, #tpu.memory_space<vmem>>, vector<1x1x16x16xbf16>
    %141 = vector.shape_cast %140 : vector<1x1x16x16xbf16> to vector<16x16xbf16>
    %cst_67 = arith.constant dense<0.000000e+00> : vector<16x128xf32>
    %142 = tpu.matmul %141, %131, %cst_67 {dimension_numbers = #tpu.dot_dimension_numbers<[1], [0], [0], [1], [0, 0, 1, 1], [], []>} : vector<16x16xbf16>, vector<16x128xbf16>, vector<16x128xf32> -> vector<16x128xf32>
    %c1_68 = arith.constant 1 : index
    %c1_69 = arith.constant 1 : index
    %c0_70 = arith.constant 0 : index
    %c0_71 = arith.constant 0 : index
    %143 = vector.load %arg4[%c1_68, %c1_69, %c0_70, %c0_71] : memref<6x3x16x16xbf16, #tpu.memory_space<vmem>>, vector<1x1x16x16xbf16>
    %144 = vector.shape_cast %143 : vector<1x1x16x16xbf16> to vector<16x16xbf16>
    %cst_72 = arith.constant dense<0.000000e+00> : vector<16x128xf32>
    %145 = tpu.matmul %144, %123, %cst_72 {dimension_numbers = #tpu.dot_dimension_numbers<[1], [0], [0], [1], [0, 0, 1, 1], [], []>} : vector<16x16xbf16>, vector<16x128xbf16>, vector<16x128xf32> -> vector<16x128xf32>
    %146 = arith.addf %142, %145 : vector<16x128xf32>
    %c1_73 = arith.constant 1 : index
    %c2_74 = arith.constant 2 : index
    %c0_75 = arith.constant 0 : index
    %c0_76 = arith.constant 0 : index
    %147 = vector.load %arg4[%c1_73, %c2_74, %c0_75, %c0_76] : memref<6x3x16x16xbf16, #tpu.memory_space<vmem>>, vector<1x1x16x16xbf16>
    %148 = vector.shape_cast %147 : vector<1x1x16x16xbf16> to vector<16x16xbf16>
    %cst_77 = arith.constant dense<0.000000e+00> : vector<16x128xf32>
    %149 = tpu.matmul %148, %139, %cst_77 {dimension_numbers = #tpu.dot_dimension_numbers<[1], [0], [0], [1], [0, 0, 1, 1], [], []>} : vector<16x16xbf16>, vector<16x128xbf16>, vector<16x128xf32> -> vector<16x128xf32>
    %150 = arith.addf %146, %149 : vector<16x128xf32>
    %151 = arith.addf %150, %122 : vector<16x128xf32>
    %cst_78 = arith.constant 0.000000e+00 : f32
    %152 = vector.broadcast %cst_78 : f32 to vector<16x128xf32>
    %153 = arith.cmpf oge, %151, %152 : vector<16x128xf32>
    %cst_79 = arith.constant 2.000000e-01 : f32
    %154 = vector.broadcast %cst_79 : f32 to vector<16x128xf32>
    %155 = arith.mulf %154, %151 : vector<16x128xf32>
    %156 = arith.select %153, %151, %155 : vector<16x128xi1>, vector<16x128xf32>
    %157 = arith.truncf %156 : vector<16x128xf32> to vector<16x128xbf16>
    %c9_i32_80 = arith.constant 9 : i32
    %158 = vector.broadcast %c9_i32_80 : i32 to vector<1x128xi32>
    %159 = arith.cmpi sge, %0, %158 : vector<1x128xi32>
    %c9_i32_81 = arith.constant 9 : i32
    %160 = tpu.dynamic_rotate %156 by %c9_i32_81 dim 1 : vector<16x128xf32>, i32 -> vector<16x128xf32>
    %cst_82 = arith.constant 0.000000e+00 : f32
    %161 = vector.shape_cast %159 : vector<1x128xi1> to vector<1x128xi1>
    %162 = vector.broadcast %161 : vector<1x128xi1> to vector<16x128xi1>
    %163 = vector.broadcast %cst_82 : f32 to vector<16x128xf32>
    %164 = arith.select %162, %160, %163 : vector<16x128xi1>, vector<16x128xf32>
    %165 = arith.truncf %164 : vector<16x128xf32> to vector<16x128xbf16>
    %c119_i32 = arith.constant 119 : i32
    %166 = vector.broadcast %c119_i32 : i32 to vector<1x128xi32>
    %167 = arith.cmpi slt, %0, %166 : vector<1x128xi32>
    %c119_i32_83 = arith.constant 119 : i32
    %168 = tpu.dynamic_rotate %156 by %c119_i32_83 dim 1 : vector<16x128xf32>, i32 -> vector<16x128xf32>
    %cst_84 = arith.constant 0.000000e+00 : f32
    %169 = vector.shape_cast %167 : vector<1x128xi1> to vector<1x128xi1>
    %170 = vector.broadcast %169 : vector<1x128xi1> to vector<16x128xi1>
    %171 = vector.broadcast %cst_84 : f32 to vector<16x128xf32>
    %172 = arith.select %170, %168, %171 : vector<16x128xi1>, vector<16x128xf32>
    %173 = arith.truncf %172 : vector<16x128xf32> to vector<16x128xbf16>
    %c2_85 = arith.constant 2 : index
    %c0_86 = arith.constant 0 : index
    %c0_87 = arith.constant 0 : index
    %c0_88 = arith.constant 0 : index
    %174 = vector.load %arg4[%c2_85, %c0_86, %c0_87, %c0_88] : memref<6x3x16x16xbf16, #tpu.memory_space<vmem>>, vector<1x1x16x16xbf16>
    %175 = vector.shape_cast %174 : vector<1x1x16x16xbf16> to vector<16x16xbf16>
    %cst_89 = arith.constant dense<0.000000e+00> : vector<16x128xf32>
    %176 = tpu.matmul %175, %165, %cst_89 {dimension_numbers = #tpu.dot_dimension_numbers<[1], [0], [0], [1], [0, 0, 1, 1], [], []>} : vector<16x16xbf16>, vector<16x128xbf16>, vector<16x128xf32> -> vector<16x128xf32>
    %c2_90 = arith.constant 2 : index
    %c1_91 = arith.constant 1 : index
    %c0_92 = arith.constant 0 : index
    %c0_93 = arith.constant 0 : index
    %177 = vector.load %arg4[%c2_90, %c1_91, %c0_92, %c0_93] : memref<6x3x16x16xbf16, #tpu.memory_space<vmem>>, vector<1x1x16x16xbf16>
    %178 = vector.shape_cast %177 : vector<1x1x16x16xbf16> to vector<16x16xbf16>
    %cst_94 = arith.constant dense<0.000000e+00> : vector<16x128xf32>
    %179 = tpu.matmul %178, %157, %cst_94 {dimension_numbers = #tpu.dot_dimension_numbers<[1], [0], [0], [1], [0, 0, 1, 1], [], []>} : vector<16x16xbf16>, vector<16x128xbf16>, vector<16x128xf32> -> vector<16x128xf32>
    %180 = arith.addf %176, %179 : vector<16x128xf32>
    %c2_95 = arith.constant 2 : index
    %c2_96 = arith.constant 2 : index
    %c0_97 = arith.constant 0 : index
    %c0_98 = arith.constant 0 : index
    %181 = vector.load %arg4[%c2_95, %c2_96, %c0_97, %c0_98] : memref<6x3x16x16xbf16, #tpu.memory_space<vmem>>, vector<1x1x16x16xbf16>
    %182 = vector.shape_cast %181 : vector<1x1x16x16xbf16> to vector<16x16xbf16>
    %cst_99 = arith.constant dense<0.000000e+00> : vector<16x128xf32>
    %183 = tpu.matmul %182, %173, %cst_99 {dimension_numbers = #tpu.dot_dimension_numbers<[1], [0], [0], [1], [0, 0, 1, 1], [], []>} : vector<16x16xbf16>, vector<16x128xbf16>, vector<16x128xf32> -> vector<16x128xf32>
    %184 = arith.addf %180, %183 : vector<16x128xf32>
    %185 = arith.addf %184, %156 : vector<16x128xf32>
    %cst_100 = arith.constant 0.000000e+00 : f32
    %186 = vector.broadcast %cst_100 : f32 to vector<16x128xf32>
    %187 = arith.cmpf oge, %185, %186 : vector<16x128xf32>
    %cst_101 = arith.constant 2.000000e-01 : f32
    %188 = vector.broadcast %cst_101 : f32 to vector<16x128xf32>
    %189 = arith.mulf %188, %185 : vector<16x128xf32>
    %190 = arith.select %187, %185, %189 : vector<16x128xi1>, vector<16x128xf32>
    %191 = arith.truncf %190 : vector<16x128xf32> to vector<16x128xbf16>
    %c27_i32 = arith.constant 27 : i32
    %192 = vector.broadcast %c27_i32 : i32 to vector<1x128xi32>
    %193 = arith.cmpi sge, %0, %192 : vector<1x128xi32>
    %c27_i32_102 = arith.constant 27 : i32
    %194 = tpu.dynamic_rotate %190 by %c27_i32_102 dim 1 : vector<16x128xf32>, i32 -> vector<16x128xf32>
    %cst_103 = arith.constant 0.000000e+00 : f32
    %195 = vector.shape_cast %193 : vector<1x128xi1> to vector<1x128xi1>
    %196 = vector.broadcast %195 : vector<1x128xi1> to vector<16x128xi1>
    %197 = vector.broadcast %cst_103 : f32 to vector<16x128xf32>
    %198 = arith.select %196, %194, %197 : vector<16x128xi1>, vector<16x128xf32>
    %199 = arith.truncf %198 : vector<16x128xf32> to vector<16x128xbf16>
    %c101_i32 = arith.constant 101 : i32
    %200 = vector.broadcast %c101_i32 : i32 to vector<1x128xi32>
    %201 = arith.cmpi slt, %0, %200 : vector<1x128xi32>
    %c101_i32_104 = arith.constant 101 : i32
    %202 = tpu.dynamic_rotate %190 by %c101_i32_104 dim 1 : vector<16x128xf32>, i32 -> vector<16x128xf32>
    %cst_105 = arith.constant 0.000000e+00 : f32
    %203 = vector.shape_cast %201 : vector<1x128xi1> to vector<1x128xi1>
    %204 = vector.broadcast %203 : vector<1x128xi1> to vector<16x128xi1>
    %205 = vector.broadcast %cst_105 : f32 to vector<16x128xf32>
    %206 = arith.select %204, %202, %205 : vector<16x128xi1>, vector<16x128xf32>
    %207 = arith.truncf %206 : vector<16x128xf32> to vector<16x128xbf16>
    %c3 = arith.constant 3 : index
    %c0_106 = arith.constant 0 : index
    %c0_107 = arith.constant 0 : index
    %c0_108 = arith.constant 0 : index
    %208 = vector.load %arg4[%c3, %c0_106, %c0_107, %c0_108] : memref<6x3x16x16xbf16, #tpu.memory_space<vmem>>, vector<1x1x16x16xbf16>
    %209 = vector.shape_cast %208 : vector<1x1x16x16xbf16> to vector<16x16xbf16>
    %cst_109 = arith.constant dense<0.000000e+00> : vector<16x128xf32>
    %210 = tpu.matmul %209, %199, %cst_109 {dimension_numbers = #tpu.dot_dimension_numbers<[1], [0], [0], [1], [0, 0, 1, 1], [], []>} : vector<16x16xbf16>, vector<16x128xbf16>, vector<16x128xf32> -> vector<16x128xf32>
    %c3_110 = arith.constant 3 : index
    %c1_111 = arith.constant 1 : index
    %c0_112 = arith.constant 0 : index
    %c0_113 = arith.constant 0 : index
    %211 = vector.load %arg4[%c3_110, %c1_111, %c0_112, %c0_113] : memref<6x3x16x16xbf16, #tpu.memory_space<vmem>>, vector<1x1x16x16xbf16>
    %212 = vector.shape_cast %211 : vector<1x1x16x16xbf16> to vector<16x16xbf16>
    %cst_114 = arith.constant dense<0.000000e+00> : vector<16x128xf32>
    %213 = tpu.matmul %212, %191, %cst_114 {dimension_numbers = #tpu.dot_dimension_numbers<[1], [0], [0], [1], [0, 0, 1, 1], [], []>} : vector<16x16xbf16>, vector<16x128xbf16>, vector<16x128xf32> -> vector<16x128xf32>
    %214 = arith.addf %210, %213 : vector<16x128xf32>
    %c3_115 = arith.constant 3 : index
    %c2_116 = arith.constant 2 : index
    %c0_117 = arith.constant 0 : index
    %c0_118 = arith.constant 0 : index
    %215 = vector.load %arg4[%c3_115, %c2_116, %c0_117, %c0_118] : memref<6x3x16x16xbf16, #tpu.memory_space<vmem>>, vector<1x1x16x16xbf16>
    %216 = vector.shape_cast %215 : vector<1x1x16x16xbf16> to vector<16x16xbf16>
    %cst_119 = arith.constant dense<0.000000e+00> : vector<16x128xf32>
    %217 = tpu.matmul %216, %207, %cst_119 {dimension_numbers = #tpu.dot_dimension_numbers<[1], [0], [0], [1], [0, 0, 1, 1], [], []>} : vector<16x16xbf16>, vector<16x128xbf16>, vector<16x128xf32> -> vector<16x128xf32>
    %218 = arith.addf %214, %217 : vector<16x128xf32>
    %219 = arith.addf %218, %190 : vector<16x128xf32>
    %cst_120 = arith.constant 0.000000e+00 : f32
    %220 = vector.broadcast %cst_120 : f32 to vector<16x128xf32>
    %221 = arith.cmpf oge, %219, %220 : vector<16x128xf32>
    %cst_121 = arith.constant 2.000000e-01 : f32
    %222 = vector.broadcast %cst_121 : f32 to vector<16x128xf32>
    %223 = arith.mulf %222, %219 : vector<16x128xf32>
    %224 = arith.select %221, %219, %223 : vector<16x128xi1>, vector<16x128xf32>
    %225 = arith.truncf %224 : vector<16x128xf32> to vector<16x128xbf16>
    %c81_i32 = arith.constant 81 : i32
    %226 = vector.broadcast %c81_i32 : i32 to vector<1x128xi32>
    %227 = arith.cmpi sge, %0, %226 : vector<1x128xi32>
    %c81_i32_122 = arith.constant 81 : i32
    %228 = tpu.dynamic_rotate %224 by %c81_i32_122 dim 1 : vector<16x128xf32>, i32 -> vector<16x128xf32>
    %cst_123 = arith.constant 0.000000e+00 : f32
    %229 = vector.shape_cast %227 : vector<1x128xi1> to vector<1x128xi1>
    %230 = vector.broadcast %229 : vector<1x128xi1> to vector<16x128xi1>
    %231 = vector.broadcast %cst_123 : f32 to vector<16x128xf32>
    %232 = arith.select %230, %228, %231 : vector<16x128xi1>, vector<16x128xf32>
    %233 = arith.truncf %232 : vector<16x128xf32> to vector<16x128xbf16>
    %c47_i32 = arith.constant 47 : i32
    %234 = vector.broadcast %c47_i32 : i32 to vector<1x128xi32>
    %235 = arith.cmpi slt, %0, %234 : vector<1x128xi32>
    %c47_i32_124 = arith.constant 47 : i32
    %236 = tpu.dynamic_rotate %224 by %c47_i32_124 dim 1 : vector<16x128xf32>, i32 -> vector<16x128xf32>
    %cst_125 = arith.constant 0.000000e+00 : f32
    %237 = vector.shape_cast %235 : vector<1x128xi1> to vector<1x128xi1>
    %238 = vector.broadcast %237 : vector<1x128xi1> to vector<16x128xi1>
    %239 = vector.broadcast %cst_125 : f32 to vector<16x128xf32>
    %240 = arith.select %238, %236, %239 : vector<16x128xi1>, vector<16x128xf32>
    %241 = arith.truncf %240 : vector<16x128xf32> to vector<16x128xbf16>
    %c4 = arith.constant 4 : index
    %c0_126 = arith.constant 0 : index
    %c0_127 = arith.constant 0 : index
    %c0_128 = arith.constant 0 : index
    %242 = vector.load %arg4[%c4, %c0_126, %c0_127, %c0_128] : memref<6x3x16x16xbf16, #tpu.memory_space<vmem>>, vector<1x1x16x16xbf16>
    %243 = vector.shape_cast %242 : vector<1x1x16x16xbf16> to vector<16x16xbf16>
    %cst_129 = arith.constant dense<0.000000e+00> : vector<16x128xf32>
    %244 = tpu.matmul %243, %233, %cst_129 {dimension_numbers = #tpu.dot_dimension_numbers<[1], [0], [0], [1], [0, 0, 1, 1], [], []>} : vector<16x16xbf16>, vector<16x128xbf16>, vector<16x128xf32> -> vector<16x128xf32>
    %c4_130 = arith.constant 4 : index
    %c1_131 = arith.constant 1 : index
    %c0_132 = arith.constant 0 : index
    %c0_133 = arith.constant 0 : index
    %245 = vector.load %arg4[%c4_130, %c1_131, %c0_132, %c0_133] : memref<6x3x16x16xbf16, #tpu.memory_space<vmem>>, vector<1x1x16x16xbf16>
    %246 = vector.shape_cast %245 : vector<1x1x16x16xbf16> to vector<16x16xbf16>
    %cst_134 = arith.constant dense<0.000000e+00> : vector<16x128xf32>
    %247 = tpu.matmul %246, %225, %cst_134 {dimension_numbers = #tpu.dot_dimension_numbers<[1], [0], [0], [1], [0, 0, 1, 1], [], []>} : vector<16x16xbf16>, vector<16x128xbf16>, vector<16x128xf32> -> vector<16x128xf32>
    %248 = arith.addf %244, %247 : vector<16x128xf32>
    %c4_135 = arith.constant 4 : index
    %c2_136 = arith.constant 2 : index
    %c0_137 = arith.constant 0 : index
    %c0_138 = arith.constant 0 : index
    %249 = vector.load %arg4[%c4_135, %c2_136, %c0_137, %c0_138] : memref<6x3x16x16xbf16, #tpu.memory_space<vmem>>, vector<1x1x16x16xbf16>
    %250 = vector.shape_cast %249 : vector<1x1x16x16xbf16> to vector<16x16xbf16>
    %cst_139 = arith.constant dense<0.000000e+00> : vector<16x128xf32>
    %251 = tpu.matmul %250, %241, %cst_139 {dimension_numbers = #tpu.dot_dimension_numbers<[1], [0], [0], [1], [0, 0, 1, 1], [], []>} : vector<16x16xbf16>, vector<16x128xbf16>, vector<16x128xf32> -> vector<16x128xf32>
    %252 = arith.addf %248, %251 : vector<16x128xf32>
    %253 = arith.addf %252, %224 : vector<16x128xf32>
    %cst_140 = arith.constant 0.000000e+00 : f32
    %254 = vector.broadcast %cst_140 : f32 to vector<16x128xf32>
    %255 = arith.cmpf oge, %253, %254 : vector<16x128xf32>
    %cst_141 = arith.constant 2.000000e-01 : f32
    %256 = vector.broadcast %cst_141 : f32 to vector<16x128xf32>
    %257 = arith.mulf %256, %253 : vector<16x128xf32>
    %258 = arith.select %255, %253, %257 : vector<16x128xi1>, vector<16x128xf32>
    %259 = arith.truncf %258 : vector<16x128xf32> to vector<16x128xbf16>
    %c1_i32_142 = arith.constant 1 : i32
    %260 = vector.broadcast %c1_i32_142 : i32 to vector<1x128xi32>
    %261 = arith.cmpi sge, %0, %260 : vector<1x128xi32>
    %c1_i32_143 = arith.constant 1 : i32
    %262 = tpu.dynamic_rotate %258 by %c1_i32_143 dim 1 : vector<16x128xf32>, i32 -> vector<16x128xf32>
    %cst_144 = arith.constant 0.000000e+00 : f32
    %263 = vector.shape_cast %261 : vector<1x128xi1> to vector<1x128xi1>
    %264 = vector.broadcast %263 : vector<1x128xi1> to vector<16x128xi1>
    %265 = vector.broadcast %cst_144 : f32 to vector<16x128xf32>
    %266 = arith.select %264, %262, %265 : vector<16x128xi1>, vector<16x128xf32>
    %267 = arith.truncf %266 : vector<16x128xf32> to vector<16x128xbf16>
    %c127_i32_145 = arith.constant 127 : i32
    %268 = vector.broadcast %c127_i32_145 : i32 to vector<1x128xi32>
    %269 = arith.cmpi slt, %0, %268 : vector<1x128xi32>
    %c127_i32_146 = arith.constant 127 : i32
    %270 = tpu.dynamic_rotate %258 by %c127_i32_146 dim 1 : vector<16x128xf32>, i32 -> vector<16x128xf32>
    %cst_147 = arith.constant 0.000000e+00 : f32
    %271 = vector.shape_cast %269 : vector<1x128xi1> to vector<1x128xi1>
    %272 = vector.broadcast %271 : vector<1x128xi1> to vector<16x128xi1>
    %273 = vector.broadcast %cst_147 : f32 to vector<16x128xf32>
    %274 = arith.select %272, %270, %273 : vector<16x128xi1>, vector<16x128xf32>
    %275 = arith.truncf %274 : vector<16x128xf32> to vector<16x128xbf16>
    %c5 = arith.constant 5 : index
    %c0_148 = arith.constant 0 : index
    %c0_149 = arith.constant 0 : index
    %c0_150 = arith.constant 0 : index
    %276 = vector.load %arg4[%c5, %c0_148, %c0_149, %c0_150] : memref<6x3x16x16xbf16, #tpu.memory_space<vmem>>, vector<1x1x16x16xbf16>
    %277 = vector.shape_cast %276 : vector<1x1x16x16xbf16> to vector<16x16xbf16>
    %cst_151 = arith.constant dense<0.000000e+00> : vector<16x128xf32>
    %278 = tpu.matmul %277, %267, %cst_151 {dimension_numbers = #tpu.dot_dimension_numbers<[1], [0], [0], [1], [0, 0, 1, 1], [], []>} : vector<16x16xbf16>, vector<16x128xbf16>, vector<16x128xf32> -> vector<16x128xf32>
    %c5_152 = arith.constant 5 : index
    %c1_153 = arith.constant 1 : index
    %c0_154 = arith.constant 0 : index
    %c0_155 = arith.constant 0 : index
    %279 = vector.load %arg4[%c5_152, %c1_153, %c0_154, %c0_155] : memref<6x3x16x16xbf16, #tpu.memory_space<vmem>>, vector<1x1x16x16xbf16>
    %280 = vector.shape_cast %279 : vector<1x1x16x16xbf16> to vector<16x16xbf16>
    %cst_156 = arith.constant dense<0.000000e+00> : vector<16x128xf32>
    %281 = tpu.matmul %280, %259, %cst_156 {dimension_numbers = #tpu.dot_dimension_numbers<[1], [0], [0], [1], [0, 0, 1, 1], [], []>} : vector<16x16xbf16>, vector<16x128xbf16>, vector<16x128xf32> -> vector<16x128xf32>
    %282 = arith.addf %278, %281 : vector<16x128xf32>
    %c5_157 = arith.constant 5 : index
    %c2_158 = arith.constant 2 : index
    %c0_159 = arith.constant 0 : index
    %c0_160 = arith.constant 0 : index
    %283 = vector.load %arg4[%c5_157, %c2_158, %c0_159, %c0_160] : memref<6x3x16x16xbf16, #tpu.memory_space<vmem>>, vector<1x1x16x16xbf16>
    %284 = vector.shape_cast %283 : vector<1x1x16x16xbf16> to vector<16x16xbf16>
    %cst_161 = arith.constant dense<0.000000e+00> : vector<16x128xf32>
    %285 = tpu.matmul %284, %275, %cst_161 {dimension_numbers = #tpu.dot_dimension_numbers<[1], [0], [0], [1], [0, 0, 1, 1], [], []>} : vector<16x16xbf16>, vector<16x128xbf16>, vector<16x128xf32> -> vector<16x128xf32>
    %286 = arith.addf %282, %285 : vector<16x128xf32>
    %287 = arith.addf %286, %258 : vector<16x128xf32>
    %cst_162 = arith.constant 0.000000e+00 : f32
    %288 = vector.broadcast %cst_162 : f32 to vector<16x128xf32>
    %289 = arith.cmpf oge, %287, %288 : vector<16x128xf32>
    %cst_163 = arith.constant 2.000000e-01 : f32
    %290 = vector.broadcast %cst_163 : f32 to vector<16x128xf32>
    %291 = arith.mulf %290, %287 : vector<16x128xf32>
    %292 = arith.select %289, %287, %291 : vector<16x128xi1>, vector<16x128xf32>
    %cst_164 = arith.constant dense<0xFF800000> : vector<16xf32>
    %293 = vector.multi_reduction <maximumf>, %292, %cst_164 [1] : vector<16x128xf32> to vector<16xf32>
    %294 = vector.shape_cast %293 : vector<16xf32> to vector<16x1xf32>
    %c0_165 = arith.constant 0 : index
    %c0_166 = arith.constant 0 : index
    %c0_167 = arith.constant 0 : index
    %295 = vector.load %arg7[%c0_165, %c0_166, %c0_167] : memref<1x16x1xf32, #tpu.memory_space<vmem>>, vector<1x16x1xf32>
    %296 = vector.shape_cast %295 : vector<1x16x1xf32> to vector<16x1xf32>
    %297 = vector.shape_cast %294 : vector<16x1xf32> to vector<1x16x1xf32>
    tpu.vector_store %arg7[%c0_165, %c0_166, %c0_167], %297 {strides = array<i32>} : memref<1x16x1xf32, #tpu.memory_space<vmem>>, vector<1x16x1xf32>,
    %c0_168 = arith.constant 0 : index
    %c0_169 = arith.constant 0 : index
    %298 = vector.load %arg5[%c0_168, %c0_169] : memref<32x16xbf16, #tpu.memory_space<vmem>>, vector<32x16xbf16>
    %299 = arith.truncf %292 : vector<16x128xf32> to vector<16x128xbf16>
    %cst_170 = arith.constant dense<0.000000e+00> : vector<32x128xf32>
    %300 = tpu.matmul %298, %299, %cst_170 {dimension_numbers = #tpu.dot_dimension_numbers<[1], [0], [0], [1], [0, 0, 1, 1], [], []>} : vector<32x16xbf16>, vector<16x128xbf16>, vector<32x128xf32> -> vector<32x128xf32>
    %cst_171 = arith.constant 0.000000e+00 : f32
    %301 = vector.broadcast %cst_171 : f32 to vector<32x128xf32>
    %302 = arith.maximumf %300, %301 : vector<32x128xf32>
    %c0_172 = arith.constant 0 : index
    %c0_173 = arith.constant 0 : index
    %c0_174 = arith.constant 0 : index
    %303 = vector.load %arg6[%c0_172, %c0_173, %c0_174] : memref<1x32x128xf32, #tpu.memory_space<vmem>>, vector<1x32x128xf32>
    %304 = vector.shape_cast %303 : vector<1x32x128xf32> to vector<32x128xf32>
    %305 = vector.shape_cast %302 : vector<32x128xf32> to vector<1x32x128xf32>
    tpu.vector_store %arg6[%c0_172, %c0_173, %c0_174], %305 {strides = array<i32>} : memref<1x32x128xf32, #tpu.memory_space<vmem>>, vector<1x32x128xf32>,
    return
  }
  func.func @transform_0(%arg0: i32) -> (i32, i32, i32) {
    %c0_i32 = arith.constant 0 : i32
    %c0_i32_0 = arith.constant 0 : i32
    %c0_i32_1 = arith.constant 0 : i32
    return %arg0, %c0_i32, %c0_i32_0 : i32, i32, i32
  }
  func.func @transform_1(%arg0: i32) -> (i32, i32) {
    %c0_i32 = arith.constant 0 : i32
    %c0_i32_0 = arith.constant 0 : i32
    %c0_i32_1 = arith.constant 0 : i32
    return %c0_i32, %c0_i32_0 : i32, i32
  }
  func.func @transform_2(%arg0: i32) -> (i32, i32) {
    %c0_i32 = arith.constant 0 : i32
    %c0_i32_0 = arith.constant 0 : i32
    %c0_i32_1 = arith.constant 0 : i32
    return %c0_i32, %c0_i32_0 : i32, i32
  }
  func.func @transform_3(%arg0: i32) -> (i32, i32, i32, i32) {
    %c0_i32 = arith.constant 0 : i32
    %c0_i32_0 = arith.constant 0 : i32
    %c0_i32_1 = arith.constant 0 : i32
    %c0_i32_2 = arith.constant 0 : i32
    %c0_i32_3 = arith.constant 0 : i32
    return %c0_i32, %c0_i32_0, %c0_i32_1, %c0_i32_2 : i32, i32, i32, i32
  }
  func.func @transform_4(%arg0: i32) -> (i32, i32) {
    %c0_i32 = arith.constant 0 : i32
    %c0_i32_0 = arith.constant 0 : i32
    %c0_i32_1 = arith.constant 0 : i32
    return %c0_i32, %c0_i32_0 : i32, i32
  }
  func.func @transform_5(%arg0: i32) -> (i32, i32, i32) {
    %c0_i32 = arith.constant 0 : i32
    %c0_i32_0 = arith.constant 0 : i32
    %c0_i32_1 = arith.constant 0 : i32
    return %arg0, %c0_i32, %c0_i32_0 : i32, i32, i32
  }
  func.func @transform_6(%arg0: i32) -> (i32, i32, i32) {
    %c0_i32 = arith.constant 0 : i32
    %c0_i32_0 = arith.constant 0 : i32
    %c0_i32_1 = arith.constant 0 : i32
    return %arg0, %c0_i32, %c0_i32_0 : i32, i32, i32
  }
}

module attributes {stable_mosaic.version = 11 : i64} {
  func.func @_sparse_synth_kernel(%arg0: i32, %arg1: memref<2x4xi32, #tpu.memory_space<smem>>, %arg2: memref<1x16x4xf32, #tpu.memory_space<vmem>>, %arg3: memref<1x256x1xf32, #tpu.memory_space<vmem>>) attributes {dimension_semantics = [#tpu.dimension_semantics<arbitrary>], iteration_bounds = array<i64: 2>, scalar_prefetch = 1 : i64, scratch_operands = 0 : i64, tpu.core_type = #tpu.core_type<tc>, window_params = [{transform_indices = @transform_0, window_bounds = array<i64: 1, 16, 4>}, {transform_indices = @transform_1, window_bounds = array<i64: 1, 256, 1>}]} {
    %cst = arith.constant 0.000000e+00 : f32
    %0 = vector.broadcast %cst : f32 to vector<1x256x1xf32>
    %c0 = arith.constant 0 : index
    %c0_0 = arith.constant 0 : index
    %c0_1 = arith.constant 0 : index
    %1 = vector.load %arg3[%c0, %c0_0, %c0_1] : memref<1x256x1xf32, #tpu.memory_space<vmem>>, vector<1x256x1xf32>
    tpu.vector_store %arg3[%c0, %c0_0, %c0_1], %0 {strides = array<i32>} : memref<1x256x1xf32, #tpu.memory_space<vmem>>, vector<1x256x1xf32>,
    %c0_2 = arith.constant 0 : index
    %c0_3 = arith.constant 0 : index
    %c0_4 = arith.constant 0 : index
    %2 = vector.load %arg2[%c0_2, %c0_3, %c0_4] : memref<1x16x4xf32, #tpu.memory_space<vmem>>, vector<1x16x4xf32>
    %3 = vector.shape_cast %2 : vector<1x16x4xf32> to vector<16x4xf32>
    %4 = arith.index_cast %arg0 : i32 to index
    %c0_5 = arith.constant 0 : index
    %5 = memref.load %arg1[%4, %c0_5] : memref<2x4xi32, #tpu.memory_space<smem>>
    %c16_i32 = arith.constant 16 : i32
    %6 = arith.addi %5, %c16_i32 : i32
    %c0_6 = arith.constant 0 : index
    %7 = arith.index_cast %6 : i32 to index
    %c0_7 = arith.constant 0 : index
    %8 = vector.load %arg3[%c0_6, %7, %c0_7] : memref<1x256x1xf32, #tpu.memory_space<vmem>>, vector<1x16x1xf32>
    %9 = vector.shape_cast %8 : vector<1x16x1xf32> to vector<16x1xf32>
    %10 = vector.extract_strided_slice %3 {offsets = [0, 0], sizes = [16, 1], strides = [1, 1]} : vector<16x4xf32> to vector<16x1xf32>
    %11 = arith.addf %9, %10 : vector<16x1xf32>
    %c0_8 = arith.constant 0 : index
    %12 = arith.index_cast %6 : i32 to index
    %c0_9 = arith.constant 0 : index
    %13 = vector.load %arg3[%c0_8, %12, %c0_9] : memref<1x256x1xf32, #tpu.memory_space<vmem>>, vector<1x16x1xf32>
    %14 = vector.shape_cast %13 : vector<1x16x1xf32> to vector<16x1xf32>
    %15 = vector.shape_cast %11 : vector<16x1xf32> to vector<1x16x1xf32>
    tpu.vector_store %arg3[%c0_8, %12, %c0_9], %15 {strides = array<i32>} : memref<1x256x1xf32, #tpu.memory_space<vmem>>, vector<1x16x1xf32>,
    %16 = arith.index_cast %arg0 : i32 to index
    %c1 = arith.constant 1 : index
    %17 = memref.load %arg1[%16, %c1] : memref<2x4xi32, #tpu.memory_space<smem>>
    %c16_i32_10 = arith.constant 16 : i32
    %18 = arith.addi %17, %c16_i32_10 : i32
    %c0_11 = arith.constant 0 : index
    %19 = arith.index_cast %18 : i32 to index
    %c0_12 = arith.constant 0 : index
    %20 = vector.load %arg3[%c0_11, %19, %c0_12] : memref<1x256x1xf32, #tpu.memory_space<vmem>>, vector<1x16x1xf32>
    %21 = vector.shape_cast %20 : vector<1x16x1xf32> to vector<16x1xf32>
    %22 = vector.extract_strided_slice %3 {offsets = [0, 1], sizes = [16, 1], strides = [1, 1]} : vector<16x4xf32> to vector<16x1xf32>
    %23 = arith.addf %21, %22 : vector<16x1xf32>
    %c0_13 = arith.constant 0 : index
    %24 = arith.index_cast %18 : i32 to index
    %c0_14 = arith.constant 0 : index
    %25 = vector.load %arg3[%c0_13, %24, %c0_14] : memref<1x256x1xf32, #tpu.memory_space<vmem>>, vector<1x16x1xf32>
    %26 = vector.shape_cast %25 : vector<1x16x1xf32> to vector<16x1xf32>
    %27 = vector.shape_cast %23 : vector<16x1xf32> to vector<1x16x1xf32>
    tpu.vector_store %arg3[%c0_13, %24, %c0_14], %27 {strides = array<i32>} : memref<1x256x1xf32, #tpu.memory_space<vmem>>, vector<1x16x1xf32>,
    %28 = arith.index_cast %arg0 : i32 to index
    %c2 = arith.constant 2 : index
    %29 = memref.load %arg1[%28, %c2] : memref<2x4xi32, #tpu.memory_space<smem>>
    %c16_i32_15 = arith.constant 16 : i32
    %30 = arith.addi %29, %c16_i32_15 : i32
    %c0_16 = arith.constant 0 : index
    %31 = arith.index_cast %30 : i32 to index
    %c0_17 = arith.constant 0 : index
    %32 = vector.load %arg3[%c0_16, %31, %c0_17] : memref<1x256x1xf32, #tpu.memory_space<vmem>>, vector<1x16x1xf32>
    %33 = vector.shape_cast %32 : vector<1x16x1xf32> to vector<16x1xf32>
    %34 = vector.extract_strided_slice %3 {offsets = [0, 2], sizes = [16, 1], strides = [1, 1]} : vector<16x4xf32> to vector<16x1xf32>
    %35 = arith.addf %33, %34 : vector<16x1xf32>
    %c0_18 = arith.constant 0 : index
    %36 = arith.index_cast %30 : i32 to index
    %c0_19 = arith.constant 0 : index
    %37 = vector.load %arg3[%c0_18, %36, %c0_19] : memref<1x256x1xf32, #tpu.memory_space<vmem>>, vector<1x16x1xf32>
    %38 = vector.shape_cast %37 : vector<1x16x1xf32> to vector<16x1xf32>
    %39 = vector.shape_cast %35 : vector<16x1xf32> to vector<1x16x1xf32>
    tpu.vector_store %arg3[%c0_18, %36, %c0_19], %39 {strides = array<i32>} : memref<1x256x1xf32, #tpu.memory_space<vmem>>, vector<1x16x1xf32>,
    %40 = arith.index_cast %arg0 : i32 to index
    %c3 = arith.constant 3 : index
    %41 = memref.load %arg1[%40, %c3] : memref<2x4xi32, #tpu.memory_space<smem>>
    %c16_i32_20 = arith.constant 16 : i32
    %42 = arith.addi %41, %c16_i32_20 : i32
    %c0_21 = arith.constant 0 : index
    %43 = arith.index_cast %42 : i32 to index
    %c0_22 = arith.constant 0 : index
    %44 = vector.load %arg3[%c0_21, %43, %c0_22] : memref<1x256x1xf32, #tpu.memory_space<vmem>>, vector<1x16x1xf32>
    %45 = vector.shape_cast %44 : vector<1x16x1xf32> to vector<16x1xf32>
    %46 = vector.extract_strided_slice %3 {offsets = [0, 3], sizes = [16, 1], strides = [1, 1]} : vector<16x4xf32> to vector<16x1xf32>
    %47 = arith.addf %45, %46 : vector<16x1xf32>
    %c0_23 = arith.constant 0 : index
    %48 = arith.index_cast %42 : i32 to index
    %c0_24 = arith.constant 0 : index
    %49 = vector.load %arg3[%c0_23, %48, %c0_24] : memref<1x256x1xf32, #tpu.memory_space<vmem>>, vector<1x16x1xf32>
    %50 = vector.shape_cast %49 : vector<1x16x1xf32> to vector<16x1xf32>
    %51 = vector.shape_cast %47 : vector<16x1xf32> to vector<1x16x1xf32>
    tpu.vector_store %arg3[%c0_23, %48, %c0_24], %51 {strides = array<i32>} : memref<1x256x1xf32, #tpu.memory_space<vmem>>, vector<1x16x1xf32>,
    return
  }
  func.func @transform_0(%arg0: i32, %arg1: memref<2x4xi32, #tpu.memory_space<smem>>) -> (i32, i32, i32) {
    %c0_i32 = arith.constant 0 : i32
    %c0_i32_0 = arith.constant 0 : i32
    %c0_i32_1 = arith.constant 0 : i32
    return %arg0, %c0_i32, %c0_i32_0 : i32, i32, i32
  }
  func.func @transform_1(%arg0: i32, %arg1: memref<2x4xi32, #tpu.memory_space<smem>>) -> (i32, i32, i32) {
    %c0_i32 = arith.constant 0 : i32
    %c0_i32_0 = arith.constant 0 : i32
    %c0_i32_1 = arith.constant 0 : i32
    return %arg0, %c0_i32, %c0_i32_0 : i32, i32, i32
  }
}

module attributes {stable_mosaic.version = 11 : i64} {
  func.func @_band_kernel(%arg0: i32, %arg1: memref<1x1x256xf32, #tpu.memory_space<vmem>>, %arg2: memref<16x16xbf16, #tpu.memory_space<vmem>>, %arg3: memref<16x256xf32, #tpu.memory_space<vmem>>, %arg4: memref<6x3x16x16xbf16, #tpu.memory_space<vmem>>, %arg5: memref<32x16xbf16, #tpu.memory_space<vmem>>, %arg6: memref<1x32x256xf32, #tpu.memory_space<vmem>>, %arg7: memref<1x16x1xf32, #tpu.memory_space<vmem>>) attributes {dimension_semantics = [#tpu.dimension_semantics<parallel>], iteration_bounds = array<i64: 2>, scalar_prefetch = 0 : i64, scratch_operands = 0 : i64, tpu.core_type = #tpu.core_type<tc>, window_params = [{transform_indices = @transform_0, window_bounds = array<i64: 1, 1, 256>}, {pipeline_mode = #tpu.pipeline_mode<synchronous>, transform_indices = @transform_1, window_bounds = array<i64: 16, 16>}, {pipeline_mode = #tpu.pipeline_mode<synchronous>, transform_indices = @transform_2, window_bounds = array<i64: 16, 256>}, {pipeline_mode = #tpu.pipeline_mode<synchronous>, transform_indices = @transform_3, window_bounds = array<i64: 6, 3, 16, 16>}, {pipeline_mode = #tpu.pipeline_mode<synchronous>, transform_indices = @transform_4, window_bounds = array<i64: 32, 16>}, {transform_indices = @transform_5, window_bounds = array<i64: 1, 32, 256>}, {transform_indices = @transform_6, window_bounds = array<i64: 1, 16, 1>}]} {
    %0 = tpu.iota {dimensions = array<i32: 1>} : vector<1x256xi32>
    %c0 = arith.constant 0 : index
    %c0_0 = arith.constant 0 : index
    %c0_1 = arith.constant 0 : index
    %1 = vector.load %arg1[%c0, %c0_0, %c0_1] : memref<1x1x256xf32, #tpu.memory_space<vmem>>, vector<1x1x256xf32>
    %2 = vector.shape_cast %1 : vector<1x1x256xf32> to vector<1x256xf32>
    %c16_i32 = arith.constant 16 : i32
    %3 = tpu.dynamic_rotate %2 by %c16_i32 dim 1 : vector<1x256xf32>, i32 -> vector<1x256xf32>
    %c16_i32_2 = arith.constant 16 : i32
    %4 = vector.broadcast %c16_i32_2 : i32 to vector<1x256xi32>
    %5 = arith.cmpi sge, %0, %4 : vector<1x256xi32>
    %cst = arith.constant 0.000000e+00 : f32
    %6 = vector.broadcast %cst : f32 to vector<1x256xf32>
    %7 = arith.select %5, %3, %6 : vector<1x256xi1>, vector<1x256xf32>
    %c15_i32 = arith.constant 15 : i32
    %8 = tpu.dynamic_rotate %2 by %c15_i32 dim 1 : vector<1x256xf32>, i32 -> vector<1x256xf32>
    %c15_i32_3 = arith.constant 15 : i32
    %9 = vector.broadcast %c15_i32_3 : i32 to vector<1x256xi32>
    %10 = arith.cmpi sge, %0, %9 : vector<1x256xi32>
    %cst_4 = arith.constant 0.000000e+00 : f32
    %11 = vector.broadcast %cst_4 : f32 to vector<1x256xf32>
    %12 = arith.select %10, %8, %11 : vector<1x256xi1>, vector<1x256xf32>
    %c14_i32 = arith.constant 14 : i32
    %13 = tpu.dynamic_rotate %2 by %c14_i32 dim 1 : vector<1x256xf32>, i32 -> vector<1x256xf32>
    %c14_i32_5 = arith.constant 14 : i32
    %14 = vector.broadcast %c14_i32_5 : i32 to vector<1x256xi32>
    %15 = arith.cmpi sge, %0, %14 : vector<1x256xi32>
    %cst_6 = arith.constant 0.000000e+00 : f32
    %16 = vector.broadcast %cst_6 : f32 to vector<1x256xf32>
    %17 = arith.select %15, %13, %16 : vector<1x256xi1>, vector<1x256xf32>
    %c13_i32 = arith.constant 13 : i32
    %18 = tpu.dynamic_rotate %2 by %c13_i32 dim 1 : vector<1x256xf32>, i32 -> vector<1x256xf32>
    %c13_i32_7 = arith.constant 13 : i32
    %19 = vector.broadcast %c13_i32_7 : i32 to vector<1x256xi32>
    %20 = arith.cmpi sge, %0, %19 : vector<1x256xi32>
    %cst_8 = arith.constant 0.000000e+00 : f32
    %21 = vector.broadcast %cst_8 : f32 to vector<1x256xf32>
    %22 = arith.select %20, %18, %21 : vector<1x256xi1>, vector<1x256xf32>
    %c12_i32 = arith.constant 12 : i32
    %23 = tpu.dynamic_rotate %2 by %c12_i32 dim 1 : vector<1x256xf32>, i32 -> vector<1x256xf32>
    %c12_i32_9 = arith.constant 12 : i32
    %24 = vector.broadcast %c12_i32_9 : i32 to vector<1x256xi32>
    %25 = arith.cmpi sge, %0, %24 : vector<1x256xi32>
    %cst_10 = arith.constant 0.000000e+00 : f32
    %26 = vector.broadcast %cst_10 : f32 to vector<1x256xf32>
    %27 = arith.select %25, %23, %26 : vector<1x256xi1>, vector<1x256xf32>
    %c11_i32 = arith.constant 11 : i32
    %28 = tpu.dynamic_rotate %2 by %c11_i32 dim 1 : vector<1x256xf32>, i32 -> vector<1x256xf32>
    %c11_i32_11 = arith.constant 11 : i32
    %29 = vector.broadcast %c11_i32_11 : i32 to vector<1x256xi32>
    %30 = arith.cmpi sge, %0, %29 : vector<1x256xi32>
    %cst_12 = arith.constant 0.000000e+00 : f32
    %31 = vector.broadcast %cst_12 : f32 to vector<1x256xf32>
    %32 = arith.select %30, %28, %31 : vector<1x256xi1>, vector<1x256xf32>
    %c10_i32 = arith.constant 10 : i32
    %33 = tpu.dynamic_rotate %2 by %c10_i32 dim 1 : vector<1x256xf32>, i32 -> vector<1x256xf32>
    %c10_i32_13 = arith.constant 10 : i32
    %34 = vector.broadcast %c10_i32_13 : i32 to vector<1x256xi32>
    %35 = arith.cmpi sge, %0, %34 : vector<1x256xi32>
    %cst_14 = arith.constant 0.000000e+00 : f32
    %36 = vector.broadcast %cst_14 : f32 to vector<1x256xf32>
    %37 = arith.select %35, %33, %36 : vector<1x256xi1>, vector<1x256xf32>
    %c9_i32 = arith.constant 9 : i32
    %38 = tpu.dynamic_rotate %2 by %c9_i32 dim 1 : vector<1x256xf32>, i32 -> vector<1x256xf32>
    %c9_i32_15 = arith.constant 9 : i32
    %39 = vector.broadcast %c9_i32_15 : i32 to vector<1x256xi32>
    %40 = arith.cmpi sge, %0, %39 : vector<1x256xi32>
    %cst_16 = arith.constant 0.000000e+00 : f32
    %41 = vector.broadcast %cst_16 : f32 to vector<1x256xf32>
    %42 = arith.select %40, %38, %41 : vector<1x256xi1>, vector<1x256xf32>
    %c8_i32 = arith.constant 8 : i32
    %43 = tpu.dynamic_rotate %2 by %c8_i32 dim 1 : vector<1x256xf32>, i32 -> vector<1x256xf32>
    %c8_i32_17 = arith.constant 8 : i32
    %44 = vector.broadcast %c8_i32_17 : i32 to vector<1x256xi32>
    %45 = arith.cmpi sge, %0, %44 : vector<1x256xi32>
    %cst_18 = arith.constant 0.000000e+00 : f32
    %46 = vector.broadcast %cst_18 : f32 to vector<1x256xf32>
    %47 = arith.select %45, %43, %46 : vector<1x256xi1>, vector<1x256xf32>
    %c7_i32 = arith.constant 7 : i32
    %48 = tpu.dynamic_rotate %2 by %c7_i32 dim 1 : vector<1x256xf32>, i32 -> vector<1x256xf32>
    %c7_i32_19 = arith.constant 7 : i32
    %49 = vector.broadcast %c7_i32_19 : i32 to vector<1x256xi32>
    %50 = arith.cmpi sge, %0, %49 : vector<1x256xi32>
    %cst_20 = arith.constant 0.000000e+00 : f32
    %51 = vector.broadcast %cst_20 : f32 to vector<1x256xf32>
    %52 = arith.select %50, %48, %51 : vector<1x256xi1>, vector<1x256xf32>
    %c6_i32 = arith.constant 6 : i32
    %53 = tpu.dynamic_rotate %2 by %c6_i32 dim 1 : vector<1x256xf32>, i32 -> vector<1x256xf32>
    %c6_i32_21 = arith.constant 6 : i32
    %54 = vector.broadcast %c6_i32_21 : i32 to vector<1x256xi32>
    %55 = arith.cmpi sge, %0, %54 : vector<1x256xi32>
    %cst_22 = arith.constant 0.000000e+00 : f32
    %56 = vector.broadcast %cst_22 : f32 to vector<1x256xf32>
    %57 = arith.select %55, %53, %56 : vector<1x256xi1>, vector<1x256xf32>
    %c5_i32 = arith.constant 5 : i32
    %58 = tpu.dynamic_rotate %2 by %c5_i32 dim 1 : vector<1x256xf32>, i32 -> vector<1x256xf32>
    %c5_i32_23 = arith.constant 5 : i32
    %59 = vector.broadcast %c5_i32_23 : i32 to vector<1x256xi32>
    %60 = arith.cmpi sge, %0, %59 : vector<1x256xi32>
    %cst_24 = arith.constant 0.000000e+00 : f32
    %61 = vector.broadcast %cst_24 : f32 to vector<1x256xf32>
    %62 = arith.select %60, %58, %61 : vector<1x256xi1>, vector<1x256xf32>
    %c4_i32 = arith.constant 4 : i32
    %63 = tpu.dynamic_rotate %2 by %c4_i32 dim 1 : vector<1x256xf32>, i32 -> vector<1x256xf32>
    %c4_i32_25 = arith.constant 4 : i32
    %64 = vector.broadcast %c4_i32_25 : i32 to vector<1x256xi32>
    %65 = arith.cmpi sge, %0, %64 : vector<1x256xi32>
    %cst_26 = arith.constant 0.000000e+00 : f32
    %66 = vector.broadcast %cst_26 : f32 to vector<1x256xf32>
    %67 = arith.select %65, %63, %66 : vector<1x256xi1>, vector<1x256xf32>
    %c3_i32 = arith.constant 3 : i32
    %68 = tpu.dynamic_rotate %2 by %c3_i32 dim 1 : vector<1x256xf32>, i32 -> vector<1x256xf32>
    %c3_i32_27 = arith.constant 3 : i32
    %69 = vector.broadcast %c3_i32_27 : i32 to vector<1x256xi32>
    %70 = arith.cmpi sge, %0, %69 : vector<1x256xi32>
    %cst_28 = arith.constant 0.000000e+00 : f32
    %71 = vector.broadcast %cst_28 : f32 to vector<1x256xf32>
    %72 = arith.select %70, %68, %71 : vector<1x256xi1>, vector<1x256xf32>
    %c2_i32 = arith.constant 2 : i32
    %73 = tpu.dynamic_rotate %2 by %c2_i32 dim 1 : vector<1x256xf32>, i32 -> vector<1x256xf32>
    %c2_i32_29 = arith.constant 2 : i32
    %74 = vector.broadcast %c2_i32_29 : i32 to vector<1x256xi32>
    %75 = arith.cmpi sge, %0, %74 : vector<1x256xi32>
    %cst_30 = arith.constant 0.000000e+00 : f32
    %76 = vector.broadcast %cst_30 : f32 to vector<1x256xf32>
    %77 = arith.select %75, %73, %76 : vector<1x256xi1>, vector<1x256xf32>
    %c1_i32 = arith.constant 1 : i32
    %78 = tpu.dynamic_rotate %2 by %c1_i32 dim 1 : vector<1x256xf32>, i32 -> vector<1x256xf32>
    %c1_i32_31 = arith.constant 1 : i32
    %79 = vector.broadcast %c1_i32_31 : i32 to vector<1x256xi32>
    %80 = arith.cmpi sge, %0, %79 : vector<1x256xi32>
    %cst_32 = arith.constant 0.000000e+00 : f32
    %81 = vector.broadcast %cst_32 : f32 to vector<1x256xf32>
    %82 = arith.select %80, %78, %81 : vector<1x256xi1>, vector<1x256xf32>
    %83 = tpu.concatenate %7, %12, %17, %22, %27, %32, %37, %42, %47, %52, %57, %62, %67, %72, %77, %82 in 0 : vector<1x256xf32>, vector<1x256xf32>, vector<1x256xf32>, vector<1x256xf32>, vector<1x256xf32>, vector<1x256xf32>, vector<1x256xf32>, vector<1x256xf32>, vector<1x256xf32>, vector<1x256xf32>, vector<1x256xf32>, vector<1x256xf32>, vector<1x256xf32>, vector<1x256xf32>, vector<1x256xf32>, vector<1x256xf32> -> vector<16x256xf32>
    %84 = arith.truncf %83 : vector<16x256xf32> to vector<16x256xbf16>
    %c0_33 = arith.constant 0 : index
    %c0_34 = arith.constant 0 : index
    %85 = vector.load %arg2[%c0_33, %c0_34] : memref<16x16xbf16, #tpu.memory_space<vmem>>, vector<16x16xbf16>
    %cst_35 = arith.constant dense<0.000000e+00> : vector<16x256xf32>
    %86 = tpu.matmul %85, %84, %cst_35 {dimension_numbers = #tpu.dot_dimension_numbers<[1], [0], [0], [1], [0, 0, 1, 1], [], []>} : vector<16x16xbf16>, vector<16x256xbf16>, vector<16x256xf32> -> vector<16x256xf32>
    %c0_36 = arith.constant 0 : index
    %c0_37 = arith.constant 0 : index
    %87 = vector.load %arg3[%c0_36, %c0_37] : memref<16x256xf32, #tpu.memory_space<vmem>>, vector<16x256xf32>
    %88 = arith.addf %86, %87 : vector<16x256xf32>
    %89 = arith.truncf %88 : vector<16x256xf32> to vector<16x256xbf16>
    %c1_i32_38 = arith.constant 1 : i32
    %90 = vector.broadcast %c1_i32_38 : i32 to vector<1x256xi32>
    %91 = arith.cmpi sge, %0, %90 : vector<1x256xi32>
    %c1_i32_39 = arith.constant 1 : i32
    %92 = tpu.dynamic_rotate %88 by %c1_i32_39 dim 1 : vector<16x256xf32>, i32 -> vector<16x256xf32>
    %cst_40 = arith.constant 0.000000e+00 : f32
    %93 = vector.shape_cast %91 : vector<1x256xi1> to vector<1x256xi1>
    %94 = vector.broadcast %93 : vector<1x256xi1> to vector<16x256xi1>
    %95 = vector.broadcast %cst_40 : f32 to vector<16x256xf32>
    %96 = arith.select %94, %92, %95 : vector<16x256xi1>, vector<16x256xf32>
    %97 = arith.truncf %96 : vector<16x256xf32> to vector<16x256xbf16>
    %c255_i32 = arith.constant 255 : i32
    %98 = vector.broadcast %c255_i32 : i32 to vector<1x256xi32>
    %99 = arith.cmpi slt, %0, %98 : vector<1x256xi32>
    %c255_i32_41 = arith.constant 255 : i32
    %100 = tpu.dynamic_rotate %88 by %c255_i32_41 dim 1 : vector<16x256xf32>, i32 -> vector<16x256xf32>
    %cst_42 = arith.constant 0.000000e+00 : f32
    %101 = vector.shape_cast %99 : vector<1x256xi1> to vector<1x256xi1>
    %102 = vector.broadcast %101 : vector<1x256xi1> to vector<16x256xi1>
    %103 = vector.broadcast %cst_42 : f32 to vector<16x256xf32>
    %104 = arith.select %102, %100, %103 : vector<16x256xi1>, vector<16x256xf32>
    %105 = arith.truncf %104 : vector<16x256xf32> to vector<16x256xbf16>
    %c0_43 = arith.constant 0 : index
    %c0_44 = arith.constant 0 : index
    %c0_45 = arith.constant 0 : index
    %c0_46 = arith.constant 0 : index
    %106 = vector.load %arg4[%c0_43, %c0_44, %c0_45, %c0_46] : memref<6x3x16x16xbf16, #tpu.memory_space<vmem>>, vector<1x1x16x16xbf16>
    %107 = vector.shape_cast %106 : vector<1x1x16x16xbf16> to vector<16x16xbf16>
    %cst_47 = arith.constant dense<0.000000e+00> : vector<16x256xf32>
    %108 = tpu.matmul %107, %97, %cst_47 {dimension_numbers = #tpu.dot_dimension_numbers<[1], [0], [0], [1], [0, 0, 1, 1], [], []>} : vector<16x16xbf16>, vector<16x256xbf16>, vector<16x256xf32> -> vector<16x256xf32>
    %c0_48 = arith.constant 0 : index
    %c1 = arith.constant 1 : index
    %c0_49 = arith.constant 0 : index
    %c0_50 = arith.constant 0 : index
    %109 = vector.load %arg4[%c0_48, %c1, %c0_49, %c0_50] : memref<6x3x16x16xbf16, #tpu.memory_space<vmem>>, vector<1x1x16x16xbf16>
    %110 = vector.shape_cast %109 : vector<1x1x16x16xbf16> to vector<16x16xbf16>
    %cst_51 = arith.constant dense<0.000000e+00> : vector<16x256xf32>
    %111 = tpu.matmul %110, %89, %cst_51 {dimension_numbers = #tpu.dot_dimension_numbers<[1], [0], [0], [1], [0, 0, 1, 1], [], []>} : vector<16x16xbf16>, vector<16x256xbf16>, vector<16x256xf32> -> vector<16x256xf32>
    %112 = arith.addf %108, %111 : vector<16x256xf32>
    %c0_52 = arith.constant 0 : index
    %c2 = arith.constant 2 : index
    %c0_53 = arith.constant 0 : index
    %c0_54 = arith.constant 0 : index
    %113 = vector.load %arg4[%c0_52, %c2, %c0_53, %c0_54] : memref<6x3x16x16xbf16, #tpu.memory_space<vmem>>, vector<1x1x16x16xbf16>
    %114 = vector.shape_cast %113 : vector<1x1x16x16xbf16> to vector<16x16xbf16>
    %cst_55 = arith.constant dense<0.000000e+00> : vector<16x256xf32>
    %115 = tpu.matmul %114, %105, %cst_55 {dimension_numbers = #tpu.dot_dimension_numbers<[1], [0], [0], [1], [0, 0, 1, 1], [], []>} : vector<16x16xbf16>, vector<16x256xbf16>, vector<16x256xf32> -> vector<16x256xf32>
    %116 = arith.addf %112, %115 : vector<16x256xf32>
    %117 = arith.addf %116, %88 : vector<16x256xf32>
    %cst_56 = arith.constant 0.000000e+00 : f32
    %118 = vector.broadcast %cst_56 : f32 to vector<16x256xf32>
    %119 = arith.cmpf oge, %117, %118 : vector<16x256xf32>
    %cst_57 = arith.constant 2.000000e-01 : f32
    %120 = vector.broadcast %cst_57 : f32 to vector<16x256xf32>
    %121 = arith.mulf %120, %117 : vector<16x256xf32>
    %122 = arith.select %119, %117, %121 : vector<16x256xi1>, vector<16x256xf32>
    %123 = arith.truncf %122 : vector<16x256xf32> to vector<16x256xbf16>
    %c3_i32_58 = arith.constant 3 : i32
    %124 = vector.broadcast %c3_i32_58 : i32 to vector<1x256xi32>
    %125 = arith.cmpi sge, %0, %124 : vector<1x256xi32>
    %c3_i32_59 = arith.constant 3 : i32
    %126 = tpu.dynamic_rotate %122 by %c3_i32_59 dim 1 : vector<16x256xf32>, i32 -> vector<16x256xf32>
    %cst_60 = arith.constant 0.000000e+00 : f32
    %127 = vector.shape_cast %125 : vector<1x256xi1> to vector<1x256xi1>
    %128 = vector.broadcast %127 : vector<1x256xi1> to vector<16x256xi1>
    %129 = vector.broadcast %cst_60 : f32 to vector<16x256xf32>
    %130 = arith.select %128, %126, %129 : vector<16x256xi1>, vector<16x256xf32>
    %131 = arith.truncf %130 : vector<16x256xf32> to vector<16x256xbf16>
    %c253_i32 = arith.constant 253 : i32
    %132 = vector.broadcast %c253_i32 : i32 to vector<1x256xi32>
    %133 = arith.cmpi slt, %0, %132 : vector<1x256xi32>
    %c253_i32_61 = arith.constant 253 : i32
    %134 = tpu.dynamic_rotate %122 by %c253_i32_61 dim 1 : vector<16x256xf32>, i32 -> vector<16x256xf32>
    %cst_62 = arith.constant 0.000000e+00 : f32
    %135 = vector.shape_cast %133 : vector<1x256xi1> to vector<1x256xi1>
    %136 = vector.broadcast %135 : vector<1x256xi1> to vector<16x256xi1>
    %137 = vector.broadcast %cst_62 : f32 to vector<16x256xf32>
    %138 = arith.select %136, %134, %137 : vector<16x256xi1>, vector<16x256xf32>
    %139 = arith.truncf %138 : vector<16x256xf32> to vector<16x256xbf16>
    %c1_63 = arith.constant 1 : index
    %c0_64 = arith.constant 0 : index
    %c0_65 = arith.constant 0 : index
    %c0_66 = arith.constant 0 : index
    %140 = vector.load %arg4[%c1_63, %c0_64, %c0_65, %c0_66] : memref<6x3x16x16xbf16, #tpu.memory_space<vmem>>, vector<1x1x16x16xbf16>
    %141 = vector.shape_cast %140 : vector<1x1x16x16xbf16> to vector<16x16xbf16>
    %cst_67 = arith.constant dense<0.000000e+00> : vector<16x256xf32>
    %142 = tpu.matmul %141, %131, %cst_67 {dimension_numbers = #tpu.dot_dimension_numbers<[1], [0], [0], [1], [0, 0, 1, 1], [], []>} : vector<16x16xbf16>, vector<16x256xbf16>, vector<16x256xf32> -> vector<16x256xf32>
    %c1_68 = arith.constant 1 : index
    %c1_69 = arith.constant 1 : index
    %c0_70 = arith.constant 0 : index
    %c0_71 = arith.constant 0 : index
    %143 = vector.load %arg4[%c1_68, %c1_69, %c0_70, %c0_71] : memref<6x3x16x16xbf16, #tpu.memory_space<vmem>>, vector<1x1x16x16xbf16>
    %144 = vector.shape_cast %143 : vector<1x1x16x16xbf16> to vector<16x16xbf16>
    %cst_72 = arith.constant dense<0.000000e+00> : vector<16x256xf32>
    %145 = tpu.matmul %144, %123, %cst_72 {dimension_numbers = #tpu.dot_dimension_numbers<[1], [0], [0], [1], [0, 0, 1, 1], [], []>} : vector<16x16xbf16>, vector<16x256xbf16>, vector<16x256xf32> -> vector<16x256xf32>
    %146 = arith.addf %142, %145 : vector<16x256xf32>
    %c1_73 = arith.constant 1 : index
    %c2_74 = arith.constant 2 : index
    %c0_75 = arith.constant 0 : index
    %c0_76 = arith.constant 0 : index
    %147 = vector.load %arg4[%c1_73, %c2_74, %c0_75, %c0_76] : memref<6x3x16x16xbf16, #tpu.memory_space<vmem>>, vector<1x1x16x16xbf16>
    %148 = vector.shape_cast %147 : vector<1x1x16x16xbf16> to vector<16x16xbf16>
    %cst_77 = arith.constant dense<0.000000e+00> : vector<16x256xf32>
    %149 = tpu.matmul %148, %139, %cst_77 {dimension_numbers = #tpu.dot_dimension_numbers<[1], [0], [0], [1], [0, 0, 1, 1], [], []>} : vector<16x16xbf16>, vector<16x256xbf16>, vector<16x256xf32> -> vector<16x256xf32>
    %150 = arith.addf %146, %149 : vector<16x256xf32>
    %151 = arith.addf %150, %122 : vector<16x256xf32>
    %cst_78 = arith.constant 0.000000e+00 : f32
    %152 = vector.broadcast %cst_78 : f32 to vector<16x256xf32>
    %153 = arith.cmpf oge, %151, %152 : vector<16x256xf32>
    %cst_79 = arith.constant 2.000000e-01 : f32
    %154 = vector.broadcast %cst_79 : f32 to vector<16x256xf32>
    %155 = arith.mulf %154, %151 : vector<16x256xf32>
    %156 = arith.select %153, %151, %155 : vector<16x256xi1>, vector<16x256xf32>
    %157 = arith.truncf %156 : vector<16x256xf32> to vector<16x256xbf16>
    %c9_i32_80 = arith.constant 9 : i32
    %158 = vector.broadcast %c9_i32_80 : i32 to vector<1x256xi32>
    %159 = arith.cmpi sge, %0, %158 : vector<1x256xi32>
    %c9_i32_81 = arith.constant 9 : i32
    %160 = tpu.dynamic_rotate %156 by %c9_i32_81 dim 1 : vector<16x256xf32>, i32 -> vector<16x256xf32>
    %cst_82 = arith.constant 0.000000e+00 : f32
    %161 = vector.shape_cast %159 : vector<1x256xi1> to vector<1x256xi1>
    %162 = vector.broadcast %161 : vector<1x256xi1> to vector<16x256xi1>
    %163 = vector.broadcast %cst_82 : f32 to vector<16x256xf32>
    %164 = arith.select %162, %160, %163 : vector<16x256xi1>, vector<16x256xf32>
    %165 = arith.truncf %164 : vector<16x256xf32> to vector<16x256xbf16>
    %c247_i32 = arith.constant 247 : i32
    %166 = vector.broadcast %c247_i32 : i32 to vector<1x256xi32>
    %167 = arith.cmpi slt, %0, %166 : vector<1x256xi32>
    %c247_i32_83 = arith.constant 247 : i32
    %168 = tpu.dynamic_rotate %156 by %c247_i32_83 dim 1 : vector<16x256xf32>, i32 -> vector<16x256xf32>
    %cst_84 = arith.constant 0.000000e+00 : f32
    %169 = vector.shape_cast %167 : vector<1x256xi1> to vector<1x256xi1>
    %170 = vector.broadcast %169 : vector<1x256xi1> to vector<16x256xi1>
    %171 = vector.broadcast %cst_84 : f32 to vector<16x256xf32>
    %172 = arith.select %170, %168, %171 : vector<16x256xi1>, vector<16x256xf32>
    %173 = arith.truncf %172 : vector<16x256xf32> to vector<16x256xbf16>
    %c2_85 = arith.constant 2 : index
    %c0_86 = arith.constant 0 : index
    %c0_87 = arith.constant 0 : index
    %c0_88 = arith.constant 0 : index
    %174 = vector.load %arg4[%c2_85, %c0_86, %c0_87, %c0_88] : memref<6x3x16x16xbf16, #tpu.memory_space<vmem>>, vector<1x1x16x16xbf16>
    %175 = vector.shape_cast %174 : vector<1x1x16x16xbf16> to vector<16x16xbf16>
    %cst_89 = arith.constant dense<0.000000e+00> : vector<16x256xf32>
    %176 = tpu.matmul %175, %165, %cst_89 {dimension_numbers = #tpu.dot_dimension_numbers<[1], [0], [0], [1], [0, 0, 1, 1], [], []>} : vector<16x16xbf16>, vector<16x256xbf16>, vector<16x256xf32> -> vector<16x256xf32>
    %c2_90 = arith.constant 2 : index
    %c1_91 = arith.constant 1 : index
    %c0_92 = arith.constant 0 : index
    %c0_93 = arith.constant 0 : index
    %177 = vector.load %arg4[%c2_90, %c1_91, %c0_92, %c0_93] : memref<6x3x16x16xbf16, #tpu.memory_space<vmem>>, vector<1x1x16x16xbf16>
    %178 = vector.shape_cast %177 : vector<1x1x16x16xbf16> to vector<16x16xbf16>
    %cst_94 = arith.constant dense<0.000000e+00> : vector<16x256xf32>
    %179 = tpu.matmul %178, %157, %cst_94 {dimension_numbers = #tpu.dot_dimension_numbers<[1], [0], [0], [1], [0, 0, 1, 1], [], []>} : vector<16x16xbf16>, vector<16x256xbf16>, vector<16x256xf32> -> vector<16x256xf32>
    %180 = arith.addf %176, %179 : vector<16x256xf32>
    %c2_95 = arith.constant 2 : index
    %c2_96 = arith.constant 2 : index
    %c0_97 = arith.constant 0 : index
    %c0_98 = arith.constant 0 : index
    %181 = vector.load %arg4[%c2_95, %c2_96, %c0_97, %c0_98] : memref<6x3x16x16xbf16, #tpu.memory_space<vmem>>, vector<1x1x16x16xbf16>
    %182 = vector.shape_cast %181 : vector<1x1x16x16xbf16> to vector<16x16xbf16>
    %cst_99 = arith.constant dense<0.000000e+00> : vector<16x256xf32>
    %183 = tpu.matmul %182, %173, %cst_99 {dimension_numbers = #tpu.dot_dimension_numbers<[1], [0], [0], [1], [0, 0, 1, 1], [], []>} : vector<16x16xbf16>, vector<16x256xbf16>, vector<16x256xf32> -> vector<16x256xf32>
    %184 = arith.addf %180, %183 : vector<16x256xf32>
    %185 = arith.addf %184, %156 : vector<16x256xf32>
    %cst_100 = arith.constant 0.000000e+00 : f32
    %186 = vector.broadcast %cst_100 : f32 to vector<16x256xf32>
    %187 = arith.cmpf oge, %185, %186 : vector<16x256xf32>
    %cst_101 = arith.constant 2.000000e-01 : f32
    %188 = vector.broadcast %cst_101 : f32 to vector<16x256xf32>
    %189 = arith.mulf %188, %185 : vector<16x256xf32>
    %190 = arith.select %187, %185, %189 : vector<16x256xi1>, vector<16x256xf32>
    %191 = arith.truncf %190 : vector<16x256xf32> to vector<16x256xbf16>
    %c27_i32 = arith.constant 27 : i32
    %192 = vector.broadcast %c27_i32 : i32 to vector<1x256xi32>
    %193 = arith.cmpi sge, %0, %192 : vector<1x256xi32>
    %c27_i32_102 = arith.constant 27 : i32
    %194 = tpu.dynamic_rotate %190 by %c27_i32_102 dim 1 : vector<16x256xf32>, i32 -> vector<16x256xf32>
    %cst_103 = arith.constant 0.000000e+00 : f32
    %195 = vector.shape_cast %193 : vector<1x256xi1> to vector<1x256xi1>
    %196 = vector.broadcast %195 : vector<1x256xi1> to vector<16x256xi1>
    %197 = vector.broadcast %cst_103 : f32 to vector<16x256xf32>
    %198 = arith.select %196, %194, %197 : vector<16x256xi1>, vector<16x256xf32>
    %199 = arith.truncf %198 : vector<16x256xf32> to vector<16x256xbf16>
    %c229_i32 = arith.constant 229 : i32
    %200 = vector.broadcast %c229_i32 : i32 to vector<1x256xi32>
    %201 = arith.cmpi slt, %0, %200 : vector<1x256xi32>
    %c229_i32_104 = arith.constant 229 : i32
    %202 = tpu.dynamic_rotate %190 by %c229_i32_104 dim 1 : vector<16x256xf32>, i32 -> vector<16x256xf32>
    %cst_105 = arith.constant 0.000000e+00 : f32
    %203 = vector.shape_cast %201 : vector<1x256xi1> to vector<1x256xi1>
    %204 = vector.broadcast %203 : vector<1x256xi1> to vector<16x256xi1>
    %205 = vector.broadcast %cst_105 : f32 to vector<16x256xf32>
    %206 = arith.select %204, %202, %205 : vector<16x256xi1>, vector<16x256xf32>
    %207 = arith.truncf %206 : vector<16x256xf32> to vector<16x256xbf16>
    %c3 = arith.constant 3 : index
    %c0_106 = arith.constant 0 : index
    %c0_107 = arith.constant 0 : index
    %c0_108 = arith.constant 0 : index
    %208 = vector.load %arg4[%c3, %c0_106, %c0_107, %c0_108] : memref<6x3x16x16xbf16, #tpu.memory_space<vmem>>, vector<1x1x16x16xbf16>
    %209 = vector.shape_cast %208 : vector<1x1x16x16xbf16> to vector<16x16xbf16>
    %cst_109 = arith.constant dense<0.000000e+00> : vector<16x256xf32>
    %210 = tpu.matmul %209, %199, %cst_109 {dimension_numbers = #tpu.dot_dimension_numbers<[1], [0], [0], [1], [0, 0, 1, 1], [], []>} : vector<16x16xbf16>, vector<16x256xbf16>, vector<16x256xf32> -> vector<16x256xf32>
    %c3_110 = arith.constant 3 : index
    %c1_111 = arith.constant 1 : index
    %c0_112 = arith.constant 0 : index
    %c0_113 = arith.constant 0 : index
    %211 = vector.load %arg4[%c3_110, %c1_111, %c0_112, %c0_113] : memref<6x3x16x16xbf16, #tpu.memory_space<vmem>>, vector<1x1x16x16xbf16>
    %212 = vector.shape_cast %211 : vector<1x1x16x16xbf16> to vector<16x16xbf16>
    %cst_114 = arith.constant dense<0.000000e+00> : vector<16x256xf32>
    %213 = tpu.matmul %212, %191, %cst_114 {dimension_numbers = #tpu.dot_dimension_numbers<[1], [0], [0], [1], [0, 0, 1, 1], [], []>} : vector<16x16xbf16>, vector<16x256xbf16>, vector<16x256xf32> -> vector<16x256xf32>
    %214 = arith.addf %210, %213 : vector<16x256xf32>
    %c3_115 = arith.constant 3 : index
    %c2_116 = arith.constant 2 : index
    %c0_117 = arith.constant 0 : index
    %c0_118 = arith.constant 0 : index
    %215 = vector.load %arg4[%c3_115, %c2_116, %c0_117, %c0_118] : memref<6x3x16x16xbf16, #tpu.memory_space<vmem>>, vector<1x1x16x16xbf16>
    %216 = vector.shape_cast %215 : vector<1x1x16x16xbf16> to vector<16x16xbf16>
    %cst_119 = arith.constant dense<0.000000e+00> : vector<16x256xf32>
    %217 = tpu.matmul %216, %207, %cst_119 {dimension_numbers = #tpu.dot_dimension_numbers<[1], [0], [0], [1], [0, 0, 1, 1], [], []>} : vector<16x16xbf16>, vector<16x256xbf16>, vector<16x256xf32> -> vector<16x256xf32>
    %218 = arith.addf %214, %217 : vector<16x256xf32>
    %219 = arith.addf %218, %190 : vector<16x256xf32>
    %cst_120 = arith.constant 0.000000e+00 : f32
    %220 = vector.broadcast %cst_120 : f32 to vector<16x256xf32>
    %221 = arith.cmpf oge, %219, %220 : vector<16x256xf32>
    %cst_121 = arith.constant 2.000000e-01 : f32
    %222 = vector.broadcast %cst_121 : f32 to vector<16x256xf32>
    %223 = arith.mulf %222, %219 : vector<16x256xf32>
    %224 = arith.select %221, %219, %223 : vector<16x256xi1>, vector<16x256xf32>
    %225 = arith.truncf %224 : vector<16x256xf32> to vector<16x256xbf16>
    %c81_i32 = arith.constant 81 : i32
    %226 = vector.broadcast %c81_i32 : i32 to vector<1x256xi32>
    %227 = arith.cmpi sge, %0, %226 : vector<1x256xi32>
    %c81_i32_122 = arith.constant 81 : i32
    %228 = tpu.dynamic_rotate %224 by %c81_i32_122 dim 1 : vector<16x256xf32>, i32 -> vector<16x256xf32>
    %cst_123 = arith.constant 0.000000e+00 : f32
    %229 = vector.shape_cast %227 : vector<1x256xi1> to vector<1x256xi1>
    %230 = vector.broadcast %229 : vector<1x256xi1> to vector<16x256xi1>
    %231 = vector.broadcast %cst_123 : f32 to vector<16x256xf32>
    %232 = arith.select %230, %228, %231 : vector<16x256xi1>, vector<16x256xf32>
    %233 = arith.truncf %232 : vector<16x256xf32> to vector<16x256xbf16>
    %c175_i32 = arith.constant 175 : i32
    %234 = vector.broadcast %c175_i32 : i32 to vector<1x256xi32>
    %235 = arith.cmpi slt, %0, %234 : vector<1x256xi32>
    %c175_i32_124 = arith.constant 175 : i32
    %236 = tpu.dynamic_rotate %224 by %c175_i32_124 dim 1 : vector<16x256xf32>, i32 -> vector<16x256xf32>
    %cst_125 = arith.constant 0.000000e+00 : f32
    %237 = vector.shape_cast %235 : vector<1x256xi1> to vector<1x256xi1>
    %238 = vector.broadcast %237 : vector<1x256xi1> to vector<16x256xi1>
    %239 = vector.broadcast %cst_125 : f32 to vector<16x256xf32>
    %240 = arith.select %238, %236, %239 : vector<16x256xi1>, vector<16x256xf32>
    %241 = arith.truncf %240 : vector<16x256xf32> to vector<16x256xbf16>
    %c4 = arith.constant 4 : index
    %c0_126 = arith.constant 0 : index
    %c0_127 = arith.constant 0 : index
    %c0_128 = arith.constant 0 : index
    %242 = vector.load %arg4[%c4, %c0_126, %c0_127, %c0_128] : memref<6x3x16x16xbf16, #tpu.memory_space<vmem>>, vector<1x1x16x16xbf16>
    %243 = vector.shape_cast %242 : vector<1x1x16x16xbf16> to vector<16x16xbf16>
    %cst_129 = arith.constant dense<0.000000e+00> : vector<16x256xf32>
    %244 = tpu.matmul %243, %233, %cst_129 {dimension_numbers = #tpu.dot_dimension_numbers<[1], [0], [0], [1], [0, 0, 1, 1], [], []>} : vector<16x16xbf16>, vector<16x256xbf16>, vector<16x256xf32> -> vector<16x256xf32>
    %c4_130 = arith.constant 4 : index
    %c1_131 = arith.constant 1 : index
    %c0_132 = arith.constant 0 : index
    %c0_133 = arith.constant 0 : index
    %245 = vector.load %arg4[%c4_130, %c1_131, %c0_132, %c0_133] : memref<6x3x16x16xbf16, #tpu.memory_space<vmem>>, vector<1x1x16x16xbf16>
    %246 = vector.shape_cast %245 : vector<1x1x16x16xbf16> to vector<16x16xbf16>
    %cst_134 = arith.constant dense<0.000000e+00> : vector<16x256xf32>
    %247 = tpu.matmul %246, %225, %cst_134 {dimension_numbers = #tpu.dot_dimension_numbers<[1], [0], [0], [1], [0, 0, 1, 1], [], []>} : vector<16x16xbf16>, vector<16x256xbf16>, vector<16x256xf32> -> vector<16x256xf32>
    %248 = arith.addf %244, %247 : vector<16x256xf32>
    %c4_135 = arith.constant 4 : index
    %c2_136 = arith.constant 2 : index
    %c0_137 = arith.constant 0 : index
    %c0_138 = arith.constant 0 : index
    %249 = vector.load %arg4[%c4_135, %c2_136, %c0_137, %c0_138] : memref<6x3x16x16xbf16, #tpu.memory_space<vmem>>, vector<1x1x16x16xbf16>
    %250 = vector.shape_cast %249 : vector<1x1x16x16xbf16> to vector<16x16xbf16>
    %cst_139 = arith.constant dense<0.000000e+00> : vector<16x256xf32>
    %251 = tpu.matmul %250, %241, %cst_139 {dimension_numbers = #tpu.dot_dimension_numbers<[1], [0], [0], [1], [0, 0, 1, 1], [], []>} : vector<16x16xbf16>, vector<16x256xbf16>, vector<16x256xf32> -> vector<16x256xf32>
    %252 = arith.addf %248, %251 : vector<16x256xf32>
    %253 = arith.addf %252, %224 : vector<16x256xf32>
    %cst_140 = arith.constant 0.000000e+00 : f32
    %254 = vector.broadcast %cst_140 : f32 to vector<16x256xf32>
    %255 = arith.cmpf oge, %253, %254 : vector<16x256xf32>
    %cst_141 = arith.constant 2.000000e-01 : f32
    %256 = vector.broadcast %cst_141 : f32 to vector<16x256xf32>
    %257 = arith.mulf %256, %253 : vector<16x256xf32>
    %258 = arith.select %255, %253, %257 : vector<16x256xi1>, vector<16x256xf32>
    %259 = arith.truncf %258 : vector<16x256xf32> to vector<16x256xbf16>
    %c1_i32_142 = arith.constant 1 : i32
    %260 = vector.broadcast %c1_i32_142 : i32 to vector<1x256xi32>
    %261 = arith.cmpi sge, %0, %260 : vector<1x256xi32>
    %c1_i32_143 = arith.constant 1 : i32
    %262 = tpu.dynamic_rotate %258 by %c1_i32_143 dim 1 : vector<16x256xf32>, i32 -> vector<16x256xf32>
    %cst_144 = arith.constant 0.000000e+00 : f32
    %263 = vector.shape_cast %261 : vector<1x256xi1> to vector<1x256xi1>
    %264 = vector.broadcast %263 : vector<1x256xi1> to vector<16x256xi1>
    %265 = vector.broadcast %cst_144 : f32 to vector<16x256xf32>
    %266 = arith.select %264, %262, %265 : vector<16x256xi1>, vector<16x256xf32>
    %267 = arith.truncf %266 : vector<16x256xf32> to vector<16x256xbf16>
    %c255_i32_145 = arith.constant 255 : i32
    %268 = vector.broadcast %c255_i32_145 : i32 to vector<1x256xi32>
    %269 = arith.cmpi slt, %0, %268 : vector<1x256xi32>
    %c255_i32_146 = arith.constant 255 : i32
    %270 = tpu.dynamic_rotate %258 by %c255_i32_146 dim 1 : vector<16x256xf32>, i32 -> vector<16x256xf32>
    %cst_147 = arith.constant 0.000000e+00 : f32
    %271 = vector.shape_cast %269 : vector<1x256xi1> to vector<1x256xi1>
    %272 = vector.broadcast %271 : vector<1x256xi1> to vector<16x256xi1>
    %273 = vector.broadcast %cst_147 : f32 to vector<16x256xf32>
    %274 = arith.select %272, %270, %273 : vector<16x256xi1>, vector<16x256xf32>
    %275 = arith.truncf %274 : vector<16x256xf32> to vector<16x256xbf16>
    %c5 = arith.constant 5 : index
    %c0_148 = arith.constant 0 : index
    %c0_149 = arith.constant 0 : index
    %c0_150 = arith.constant 0 : index
    %276 = vector.load %arg4[%c5, %c0_148, %c0_149, %c0_150] : memref<6x3x16x16xbf16, #tpu.memory_space<vmem>>, vector<1x1x16x16xbf16>
    %277 = vector.shape_cast %276 : vector<1x1x16x16xbf16> to vector<16x16xbf16>
    %cst_151 = arith.constant dense<0.000000e+00> : vector<16x256xf32>
    %278 = tpu.matmul %277, %267, %cst_151 {dimension_numbers = #tpu.dot_dimension_numbers<[1], [0], [0], [1], [0, 0, 1, 1], [], []>} : vector<16x16xbf16>, vector<16x256xbf16>, vector<16x256xf32> -> vector<16x256xf32>
    %c5_152 = arith.constant 5 : index
    %c1_153 = arith.constant 1 : index
    %c0_154 = arith.constant 0 : index
    %c0_155 = arith.constant 0 : index
    %279 = vector.load %arg4[%c5_152, %c1_153, %c0_154, %c0_155] : memref<6x3x16x16xbf16, #tpu.memory_space<vmem>>, vector<1x1x16x16xbf16>
    %280 = vector.shape_cast %279 : vector<1x1x16x16xbf16> to vector<16x16xbf16>
    %cst_156 = arith.constant dense<0.000000e+00> : vector<16x256xf32>
    %281 = tpu.matmul %280, %259, %cst_156 {dimension_numbers = #tpu.dot_dimension_numbers<[1], [0], [0], [1], [0, 0, 1, 1], [], []>} : vector<16x16xbf16>, vector<16x256xbf16>, vector<16x256xf32> -> vector<16x256xf32>
    %282 = arith.addf %278, %281 : vector<16x256xf32>
    %c5_157 = arith.constant 5 : index
    %c2_158 = arith.constant 2 : index
    %c0_159 = arith.constant 0 : index
    %c0_160 = arith.constant 0 : index
    %283 = vector.load %arg4[%c5_157, %c2_158, %c0_159, %c0_160] : memref<6x3x16x16xbf16, #tpu.memory_space<vmem>>, vector<1x1x16x16xbf16>
    %284 = vector.shape_cast %283 : vector<1x1x16x16xbf16> to vector<16x16xbf16>
    %cst_161 = arith.constant dense<0.000000e+00> : vector<16x256xf32>
    %285 = tpu.matmul %284, %275, %cst_161 {dimension_numbers = #tpu.dot_dimension_numbers<[1], [0], [0], [1], [0, 0, 1, 1], [], []>} : vector<16x16xbf16>, vector<16x256xbf16>, vector<16x256xf32> -> vector<16x256xf32>
    %286 = arith.addf %282, %285 : vector<16x256xf32>
    %287 = arith.addf %286, %258 : vector<16x256xf32>
    %cst_162 = arith.constant 0.000000e+00 : f32
    %288 = vector.broadcast %cst_162 : f32 to vector<16x256xf32>
    %289 = arith.cmpf oge, %287, %288 : vector<16x256xf32>
    %cst_163 = arith.constant 2.000000e-01 : f32
    %290 = vector.broadcast %cst_163 : f32 to vector<16x256xf32>
    %291 = arith.mulf %290, %287 : vector<16x256xf32>
    %292 = arith.select %289, %287, %291 : vector<16x256xi1>, vector<16x256xf32>
    %cst_164 = arith.constant dense<0xFF800000> : vector<16xf32>
    %293 = vector.multi_reduction <maximumf>, %292, %cst_164 [1] : vector<16x256xf32> to vector<16xf32>
    %294 = vector.shape_cast %293 : vector<16xf32> to vector<16x1xf32>
    %c0_165 = arith.constant 0 : index
    %c0_166 = arith.constant 0 : index
    %c0_167 = arith.constant 0 : index
    %295 = vector.load %arg7[%c0_165, %c0_166, %c0_167] : memref<1x16x1xf32, #tpu.memory_space<vmem>>, vector<1x16x1xf32>
    %296 = vector.shape_cast %295 : vector<1x16x1xf32> to vector<16x1xf32>
    %297 = vector.shape_cast %294 : vector<16x1xf32> to vector<1x16x1xf32>
    tpu.vector_store %arg7[%c0_165, %c0_166, %c0_167], %297 {strides = array<i32>} : memref<1x16x1xf32, #tpu.memory_space<vmem>>, vector<1x16x1xf32>,
    %c0_168 = arith.constant 0 : index
    %c0_169 = arith.constant 0 : index
    %298 = vector.load %arg5[%c0_168, %c0_169] : memref<32x16xbf16, #tpu.memory_space<vmem>>, vector<32x16xbf16>
    %299 = arith.truncf %292 : vector<16x256xf32> to vector<16x256xbf16>
    %cst_170 = arith.constant dense<0.000000e+00> : vector<32x256xf32>
    %300 = tpu.matmul %298, %299, %cst_170 {dimension_numbers = #tpu.dot_dimension_numbers<[1], [0], [0], [1], [0, 0, 1, 1], [], []>} : vector<32x16xbf16>, vector<16x256xbf16>, vector<32x256xf32> -> vector<32x256xf32>
    %cst_171 = arith.constant 0.000000e+00 : f32
    %301 = vector.broadcast %cst_171 : f32 to vector<32x256xf32>
    %302 = arith.maximumf %300, %301 : vector<32x256xf32>
    %c0_172 = arith.constant 0 : index
    %c0_173 = arith.constant 0 : index
    %c0_174 = arith.constant 0 : index
    %303 = vector.load %arg6[%c0_172, %c0_173, %c0_174] : memref<1x32x256xf32, #tpu.memory_space<vmem>>, vector<1x32x256xf32>
    %304 = vector.shape_cast %303 : vector<1x32x256xf32> to vector<32x256xf32>
    %305 = vector.shape_cast %302 : vector<32x256xf32> to vector<1x32x256xf32>
    tpu.vector_store %arg6[%c0_172, %c0_173, %c0_174], %305 {strides = array<i32>} : memref<1x32x256xf32, #tpu.memory_space<vmem>>, vector<1x32x256xf32>,
    return
  }
  func.func @transform_0(%arg0: i32) -> (i32, i32, i32) {
    %c0_i32 = arith.constant 0 : i32
    %c0_i32_0 = arith.constant 0 : i32
    %c0_i32_1 = arith.constant 0 : i32
    return %arg0, %c0_i32, %c0_i32_0 : i32, i32, i32
  }
  func.func @transform_1(%arg0: i32) -> (i32, i32) {
    %c0_i32 = arith.constant 0 : i32
    %c0_i32_0 = arith.constant 0 : i32
    %c0_i32_1 = arith.constant 0 : i32
    return %c0_i32, %c0_i32_0 : i32, i32
  }
  func.func @transform_2(%arg0: i32) -> (i32, i32) {
    %c0_i32 = arith.constant 0 : i32
    %c0_i32_0 = arith.constant 0 : i32
    %c0_i32_1 = arith.constant 0 : i32
    return %c0_i32, %c0_i32_0 : i32, i32
  }
  func.func @transform_3(%arg0: i32) -> (i32, i32, i32, i32) {
    %c0_i32 = arith.constant 0 : i32
    %c0_i32_0 = arith.constant 0 : i32
    %c0_i32_1 = arith.constant 0 : i32
    %c0_i32_2 = arith.constant 0 : i32
    %c0_i32_3 = arith.constant 0 : i32
    return %c0_i32, %c0_i32_0, %c0_i32_1, %c0_i32_2 : i32, i32, i32, i32
  }
  func.func @transform_4(%arg0: i32) -> (i32, i32) {
    %c0_i32 = arith.constant 0 : i32
    %c0_i32_0 = arith.constant 0 : i32
    %c0_i32_1 = arith.constant 0 : i32
    return %c0_i32, %c0_i32_0 : i32, i32
  }
  func.func @transform_5(%arg0: i32) -> (i32, i32, i32) {
    %c0_i32 = arith.constant 0 : i32
    %c0_i32_0 = arith.constant 0 : i32
    %c0_i32_1 = arith.constant 0 : i32
    return %arg0, %c0_i32, %c0_i32_0 : i32, i32, i32
  }
  func.func @transform_6(%arg0: i32) -> (i32, i32, i32) {
    %c0_i32 = arith.constant 0 : i32
    %c0_i32_0 = arith.constant 0 : i32
    %c0_i32_1 = arith.constant 0 : i32
    return %arg0, %c0_i32, %c0_i32_0 : i32, i32, i32
  }
}

module attributes {stable_mosaic.version = 11 : i64} {
  func.func @_sparse_synth_kernel(%arg0: i32, %arg1: memref<2x4xi32, #tpu.memory_space<smem>>, %arg2: memref<1x32x4xf32, #tpu.memory_space<vmem>>, %arg3: memref<1x384x1xf32, #tpu.memory_space<vmem>>) attributes {dimension_semantics = [#tpu.dimension_semantics<arbitrary>], iteration_bounds = array<i64: 2>, scalar_prefetch = 1 : i64, scratch_operands = 0 : i64, tpu.core_type = #tpu.core_type<tc>, window_params = [{transform_indices = @transform_0, window_bounds = array<i64: 1, 32, 4>}, {transform_indices = @transform_1, window_bounds = array<i64: 1, 384, 1>}]} {
    %cst = arith.constant 0.000000e+00 : f32
    %0 = vector.broadcast %cst : f32 to vector<1x384x1xf32>
    %c0 = arith.constant 0 : index
    %c0_0 = arith.constant 0 : index
    %c0_1 = arith.constant 0 : index
    %1 = vector.load %arg3[%c0, %c0_0, %c0_1] : memref<1x384x1xf32, #tpu.memory_space<vmem>>, vector<1x384x1xf32>
    tpu.vector_store %arg3[%c0, %c0_0, %c0_1], %0 {strides = array<i32>} : memref<1x384x1xf32, #tpu.memory_space<vmem>>, vector<1x384x1xf32>,
    %c0_2 = arith.constant 0 : index
    %c0_3 = arith.constant 0 : index
    %c0_4 = arith.constant 0 : index
    %2 = vector.load %arg2[%c0_2, %c0_3, %c0_4] : memref<1x32x4xf32, #tpu.memory_space<vmem>>, vector<1x32x4xf32>
    %3 = vector.shape_cast %2 : vector<1x32x4xf32> to vector<32x4xf32>
    %4 = arith.index_cast %arg0 : i32 to index
    %c0_5 = arith.constant 0 : index
    %5 = memref.load %arg1[%4, %c0_5] : memref<2x4xi32, #tpu.memory_space<smem>>
    %c32_i32 = arith.constant 32 : i32
    %6 = arith.addi %5, %c32_i32 : i32
    %c0_6 = arith.constant 0 : index
    %7 = arith.index_cast %6 : i32 to index
    %c0_7 = arith.constant 0 : index
    %8 = vector.load %arg3[%c0_6, %7, %c0_7] : memref<1x384x1xf32, #tpu.memory_space<vmem>>, vector<1x32x1xf32>
    %9 = vector.shape_cast %8 : vector<1x32x1xf32> to vector<32x1xf32>
    %10 = vector.extract_strided_slice %3 {offsets = [0, 0], sizes = [32, 1], strides = [1, 1]} : vector<32x4xf32> to vector<32x1xf32>
    %11 = arith.addf %9, %10 : vector<32x1xf32>
    %c0_8 = arith.constant 0 : index
    %12 = arith.index_cast %6 : i32 to index
    %c0_9 = arith.constant 0 : index
    %13 = vector.load %arg3[%c0_8, %12, %c0_9] : memref<1x384x1xf32, #tpu.memory_space<vmem>>, vector<1x32x1xf32>
    %14 = vector.shape_cast %13 : vector<1x32x1xf32> to vector<32x1xf32>
    %15 = vector.shape_cast %11 : vector<32x1xf32> to vector<1x32x1xf32>
    tpu.vector_store %arg3[%c0_8, %12, %c0_9], %15 {strides = array<i32>} : memref<1x384x1xf32, #tpu.memory_space<vmem>>, vector<1x32x1xf32>,
    %16 = arith.index_cast %arg0 : i32 to index
    %c1 = arith.constant 1 : index
    %17 = memref.load %arg1[%16, %c1] : memref<2x4xi32, #tpu.memory_space<smem>>
    %c32_i32_10 = arith.constant 32 : i32
    %18 = arith.addi %17, %c32_i32_10 : i32
    %c0_11 = arith.constant 0 : index
    %19 = arith.index_cast %18 : i32 to index
    %c0_12 = arith.constant 0 : index
    %20 = vector.load %arg3[%c0_11, %19, %c0_12] : memref<1x384x1xf32, #tpu.memory_space<vmem>>, vector<1x32x1xf32>
    %21 = vector.shape_cast %20 : vector<1x32x1xf32> to vector<32x1xf32>
    %22 = vector.extract_strided_slice %3 {offsets = [0, 1], sizes = [32, 1], strides = [1, 1]} : vector<32x4xf32> to vector<32x1xf32>
    %23 = arith.addf %21, %22 : vector<32x1xf32>
    %c0_13 = arith.constant 0 : index
    %24 = arith.index_cast %18 : i32 to index
    %c0_14 = arith.constant 0 : index
    %25 = vector.load %arg3[%c0_13, %24, %c0_14] : memref<1x384x1xf32, #tpu.memory_space<vmem>>, vector<1x32x1xf32>
    %26 = vector.shape_cast %25 : vector<1x32x1xf32> to vector<32x1xf32>
    %27 = vector.shape_cast %23 : vector<32x1xf32> to vector<1x32x1xf32>
    tpu.vector_store %arg3[%c0_13, %24, %c0_14], %27 {strides = array<i32>} : memref<1x384x1xf32, #tpu.memory_space<vmem>>, vector<1x32x1xf32>,
    %28 = arith.index_cast %arg0 : i32 to index
    %c2 = arith.constant 2 : index
    %29 = memref.load %arg1[%28, %c2] : memref<2x4xi32, #tpu.memory_space<smem>>
    %c32_i32_15 = arith.constant 32 : i32
    %30 = arith.addi %29, %c32_i32_15 : i32
    %c0_16 = arith.constant 0 : index
    %31 = arith.index_cast %30 : i32 to index
    %c0_17 = arith.constant 0 : index
    %32 = vector.load %arg3[%c0_16, %31, %c0_17] : memref<1x384x1xf32, #tpu.memory_space<vmem>>, vector<1x32x1xf32>
    %33 = vector.shape_cast %32 : vector<1x32x1xf32> to vector<32x1xf32>
    %34 = vector.extract_strided_slice %3 {offsets = [0, 2], sizes = [32, 1], strides = [1, 1]} : vector<32x4xf32> to vector<32x1xf32>
    %35 = arith.addf %33, %34 : vector<32x1xf32>
    %c0_18 = arith.constant 0 : index
    %36 = arith.index_cast %30 : i32 to index
    %c0_19 = arith.constant 0 : index
    %37 = vector.load %arg3[%c0_18, %36, %c0_19] : memref<1x384x1xf32, #tpu.memory_space<vmem>>, vector<1x32x1xf32>
    %38 = vector.shape_cast %37 : vector<1x32x1xf32> to vector<32x1xf32>
    %39 = vector.shape_cast %35 : vector<32x1xf32> to vector<1x32x1xf32>
    tpu.vector_store %arg3[%c0_18, %36, %c0_19], %39 {strides = array<i32>} : memref<1x384x1xf32, #tpu.memory_space<vmem>>, vector<1x32x1xf32>,
    %40 = arith.index_cast %arg0 : i32 to index
    %c3 = arith.constant 3 : index
    %41 = memref.load %arg1[%40, %c3] : memref<2x4xi32, #tpu.memory_space<smem>>
    %c32_i32_20 = arith.constant 32 : i32
    %42 = arith.addi %41, %c32_i32_20 : i32
    %c0_21 = arith.constant 0 : index
    %43 = arith.index_cast %42 : i32 to index
    %c0_22 = arith.constant 0 : index
    %44 = vector.load %arg3[%c0_21, %43, %c0_22] : memref<1x384x1xf32, #tpu.memory_space<vmem>>, vector<1x32x1xf32>
    %45 = vector.shape_cast %44 : vector<1x32x1xf32> to vector<32x1xf32>
    %46 = vector.extract_strided_slice %3 {offsets = [0, 3], sizes = [32, 1], strides = [1, 1]} : vector<32x4xf32> to vector<32x1xf32>
    %47 = arith.addf %45, %46 : vector<32x1xf32>
    %c0_23 = arith.constant 0 : index
    %48 = arith.index_cast %42 : i32 to index
    %c0_24 = arith.constant 0 : index
    %49 = vector.load %arg3[%c0_23, %48, %c0_24] : memref<1x384x1xf32, #tpu.memory_space<vmem>>, vector<1x32x1xf32>
    %50 = vector.shape_cast %49 : vector<1x32x1xf32> to vector<32x1xf32>
    %51 = vector.shape_cast %47 : vector<32x1xf32> to vector<1x32x1xf32>
    tpu.vector_store %arg3[%c0_23, %48, %c0_24], %51 {strides = array<i32>} : memref<1x384x1xf32, #tpu.memory_space<vmem>>, vector<1x32x1xf32>,
    return
  }
  func.func @transform_0(%arg0: i32, %arg1: memref<2x4xi32, #tpu.memory_space<smem>>) -> (i32, i32, i32) {
    %c0_i32 = arith.constant 0 : i32
    %c0_i32_0 = arith.constant 0 : i32
    %c0_i32_1 = arith.constant 0 : i32
    return %arg0, %c0_i32, %c0_i32_0 : i32, i32, i32
  }
  func.func @transform_1(%arg0: i32, %arg1: memref<2x4xi32, #tpu.memory_space<smem>>) -> (i32, i32, i32) {
    %c0_i32 = arith.constant 0 : i32
    %c0_i32_0 = arith.constant 0 : i32
    %c0_i32_1 = arith.constant 0 : i32
    return %arg0, %c0_i32, %c0_i32_0 : i32, i32, i32
  }
}

</mosaic_0001>

<llo_original>
// kernel: reverse.4
$region0: #{reverse.4}
  %s0 = inlined_call_operand.vmem [shape: f32[2,1,63], index: 0, kind: input, shape index: {}]
  %s1 = inlined_call_operand.vmem [shape: f32[2,1,63], index: 1, kind: output, shape index: {}]
  %v2 = vlaneseq
  %v3 = vsub.s32 62, %v2
  %4 = vset.pattern.permute.xlu0 %v3
  $region1: #{reverse.4} parent=0
    #allocation0 [shape = 'u8[4096]{0}', space=vmem, size = 0x1000, scoped, tag = 'operand span for operand 0']
    #allocation1 [shape = 'u8[1024]{0}', space=vmem, size = 0x400, scoped, tag = 'packed  for operand 0']
    #allocation2 [shape = 'u8[4096]{0}', space=vmem, size = 0x1000, scoped, tag = 'operand span for operand 1']
    #allocation3 [shape = 'u8[1024]{0}', space=vmem, size = 0x400, scoped, tag = 'packed  for operand 1']
    // Predicated region
    $region2: #{reverse.4} parent=1 // pred_check
      _
    $region3: #{reverse.4} parent=1 // pred_check_branch
      %6 = sbr.rel (0) target = $region5
    $region4: #{reverse.4} parent=1 // pred_region
      // Predicated region
      $region6: #{reverse.4} parent=4 // pred_check
        _
      $region7: #{reverse.4} parent=4 // pred_check_branch
        %8 = sbr.rel target = $region9
      $region8: #{reverse.4} parent=4 // pred_region
        // Predicated region
        $region21: #{reverse.4} parent=8 // pred_check
          _
        $region22: #{reverse.4} parent=8 // pred_check_branch
          %23 = sbr.rel (0) target = $region24
        $region23: #{reverse.4} parent=8 // pred_region
          loop: start=0, step=1, limit=1
          $region25: #{reverse.4} parent=23 // loop_pre_header
            _
          $region26: #{reverse.4} parent=23 // loop_header
            %s26 = sphi 0, %s30
            %p27 = scmp.ge.s32.totalorder %s26, 1
            %s31 = sphi %s0, %s0
            %s32 = sphi [#allocation1], [#allocation1]
          $region27: #{reverse.4} parent=23 // loop_header_branch
            %29 = sbr.rel (%p27) target = $region31
          $region28: #{reverse.4} parent=23 // loop_body
            %v33 = vld [vmem:[%s31] sm:$0x3]
            %34 = vst [vmem:[%s32] sm:$0x3] %v33
          $region29: #{reverse.4} parent=23 // loop_footer
            %s30 = sadd.s32 1, %s26
          $region30: #{reverse.4} parent=23 // loop_footer_branch
            %25 = sbr.rel target = $region26
          $region31: #{reverse.4} parent=23 // loop_exit
            _
        $region24: #{reverse.4} parent=8 // pred_fallthru
          _
      $region9: #{reverse.4} parent=4 // pred_fallthru
        _
      // Predicated region
      $region10: #{reverse.4} parent=4 // pred_check
        _
      $region11: #{reverse.4} parent=4 // pred_check_branch
        %10 = sbr.rel (0) target = $region13
      $region12: #{reverse.4} parent=4 // pred_region
        loop: start=0, step=1, limit=1
        $region14: #{reverse.4} parent=12 // loop_pre_header
          _
        $region15: #{reverse.4} parent=12 // loop_header
          %s13 = sphi 0, %s17
          %p14 = scmp.ge.s32.totalorder %s13, 1
          %s18 = sphi %s0, %s0
          %s19 = sphi [#allocation1], [#allocation1]
        $region16: #{reverse.4} parent=12 // loop_header_branch
          %16 = sbr.rel (%p14) target = $region20
        $region17: #{reverse.4} parent=12 // loop_body
          %v20 = vld [vmem:[%s18] sm:$0x3]
          %21 = vst [vmem:[%s19] sm:$0x3] %v20
        $region18: #{reverse.4} parent=12 // loop_footer
          %s17 = sadd.s32 1, %s13
        $region19: #{reverse.4} parent=12 // loop_footer_branch
          %12 = sbr.rel target = $region15
        $region20: #{reverse.4} parent=12 // loop_exit
          _
      $region13: #{reverse.4} parent=4 // pred_fallthru
        _
    $region5: #{reverse.4} parent=1 // pred_fallthru
      _
    %35 = vnop
    %s37 = sshllo.u32 0, 2
    %v38 = vld [vmem:[#allocation1] sm:%s37]
    %39 = vst [vmem:[#allocation0] sm:%s37] %v38
    %v40 = vld [vmem:[#allocation0] sm:$0xff]
    %41 = vperm.xlu0 %4, %v40
    %v42 = vpop.permute.xlu0 %41
    %43 = vst [vmem:[#allocation2] sm:$0xff] %v42
    %s45 = sshllo.u32 0, 2
    %v47 = vld [vmem:[#allocation2] sm:%s45]
    %s48 = sshllo.u32 0, 2
    %49 = vst [vmem:[#allocation3] sm:%s48] %v47
    // Predicated region
    $region32: #{reverse.4} parent=1 // pred_check
      _
    $region33: #{reverse.4} parent=1 // pred_check_branch
      %51 = sbr.rel (0) target = $region35
    $region34: #{reverse.4} parent=1 // pred_region
      // Predicated region
      $region36: #{reverse.4} parent=34 // pred_check
        _
      $region37: #{reverse.4} parent=34 // pred_check_branch
        %53 = sbr.rel target = $region39
      $region38: #{reverse.4} parent=34 // pred_region
        // Predicated region
        $region51: #{reverse.4} parent=38 // pred_check
          _
        $region52: #{reverse.4} parent=38 // pred_check_branch
          %68 = sbr.rel (0) target = $region54
        $region53: #{reverse.4} parent=38 // pred_region
          loop: start=0, step=1, limit=1
          $region55: #{reverse.4} parent=53 // loop_pre_header
            _
          $region56: #{reverse.4} parent=53 // loop_header
            %s71 = sphi 0, %s75
            %p72 = scmp.ge.s32.totalorder %s71, 1
            %s76 = sphi [#allocation3], [#allocation3]
            %s77 = sphi %s1, %s1
          $region57: #{reverse.4} parent=53 // loop_header_branch
            %74 = sbr.rel (%p72) target = $region61
          $region58: #{reverse.4} parent=53 // loop_body
            %v78 = vld [vmem:[%s76] sm:$0x3]
            %79 = vst [vmem:[%s77] sm:$0x3] %v78
          $region59: #{reverse.4} parent=53 // loop_footer
            %s75 = sadd.s32 1, %s71
          $region60: #{reverse.4} parent=53 // loop_footer_branch
            %70 = sbr.rel target = $region56
          $region61: #{reverse.4} parent=53 // loop_exit
            _
        $region54: #{reverse.4} parent=38 // pred_fallthru
          _
      $region39: #{reverse.4} parent=34 // pred_fallthru
        _
      // Predicated region
      $region40: #{reverse.4} parent=34 // pred_check
        _
      $region41: #{reverse.4} parent=34 // pred_check_branch
        %55 = sbr.rel (0) target = $region43
      $region42: #{reverse.4} parent=34 // pred_region
        loop: start=0, step=1, limit=1
        $region44: #{reverse.4} parent=42 // loop_pre_header
          _
        $region45: #{reverse.4} parent=42 // loop_header
          %s58 = sphi 0, %s62
          %p59 = scmp.ge.s32.totalorder %s58, 1
          %s63 = sphi [#allocation3], [#allocation3]
          %s64 = sphi %s1, %s1
        $region46: #{reverse.4} parent=42 // loop_header_branch
          %61 = sbr.rel (%p59) target = $region50
        $region47: #{reverse.4} parent=42 // loop_body
          %v65 = vld [vmem:[%s63] sm:$0x3]
          %66 = vst [vmem:[%s64] sm:$0x3] %v65
        $region48: #{reverse.4} parent=42 // loop_footer
          %s62 = sadd.s32 1, %s58
        $region49: #{reverse.4} parent=42 // loop_footer_branch
          %57 = sbr.rel target = $region45
        $region50: #{reverse.4} parent=42 // loop_exit
          _
      $region43: #{reverse.4} parent=34 // pred_fallthru
        _
    $region35: #{reverse.4} parent=1 // pred_fallthru
      _
    %80 = vnop

// kernel: _lambda_.4
$region0: #{_lambda_.4}
  #allocation0 [shape = 'u32[]', space=smem, size = 0x4, offset = 0x4, fixed_abs, tag = 'smem constant byte address 0x4 - core index']
  #allocation1 [shape = 'u32[144,128]{1,0:T(1,128)}', space=vmem, size = 0x12000, scoped, tag = 'internal scratch']
  %s0 = inlined_call_operand.vmem [shape: f32[2,1,128], index: 0, kind: input, shape index: {}]
  %s1 = inlined_call_operand.vmem [shape: bf16[16,16], index: 1, kind: input, shape index: {}]
  %s2 = inlined_call_operand.vmem [shape: f32[16,128], index: 2, kind: input, shape index: {}]
  %s3 = inlined_call_operand.vmem [shape: bf16[6,3,16,16], index: 3, kind: input, shape index: {}]
  %s4 = inlined_call_operand.vmem [shape: bf16[32,16], index: 4, kind: input, shape index: {}]
  %s5 = inlined_call_operand.vmem [shape: f32[2,32,128], index: 5, kind: output, shape index: {0}]
  %s6 = inlined_call_operand.vmem [shape: f32[2,16,1], index: 6, kind: output, shape index: {1}]
  %7 = xla_tuple %s5, %s6
  %s8 = sld [smem:[#allocation0]]
  $region61: #{_lambda_.4} parent=0
    _
  %s10 = ssub.s32 1, %s8
  %s11 = scalar_select 0, %s10, %s8
  loop: start=0, step=1, limit=4
  $region2: #{_lambda_.4} parent=0 // loop_pre_header
    _
  $region3: #{_lambda_.4} parent=0 // loop_header
    %s13 = sphi 0, %s17
    %p14 = scmp.ge.s32.totalorder %s13, 4
    %s23 = sphi 0, %s25
    %s26 = sphi 0, %s23
    %s27 = sphi 0, %s26
    %s43 = sphi 0, %s27
    %s47 = sphi 0, %s47
    %s49 = sphi 0, %s47
    %s50 = sphi 0, %s49
    %s64 = sphi 0, %s50
    %s68 = sphi 0, %s68
    %s70 = sphi 0, %s68
    %s71 = sphi 0, %s70
    %s85 = sphi 0, %s71
    %s89 = sphi 0, %s89
    %s91 = sphi 0, %s89
    %s92 = sphi 0, %s91
    %s106 = sphi 0, %s92
    %s110 = sphi 0, %s110
    %s112 = sphi 0, %s110
    %s113 = sphi 0, %s112
    %s127 = sphi 0, %s113
    %s133 = sphi 0, %s135
    %s136 = sphi 0, %s133
    %s137 = sphi 0, %s136
    %s153 = sphi 0, %s137
    %s159 = sphi 0, %s161
    %s162 = sphi 0, %s159
    %s163 = sphi 0, %s162
    %s179 = sphi 0, %s163
  $region4: #{_lambda_.4} parent=0 // loop_header_branch
    %16 = sbr.rel (%p14) target = $region8
  $region5: #{_lambda_.4} parent=0 // loop_body
    %s18 = ssub.s32 %s13, 1
    %s19 = ssub.s32 %s13, 2
    %s20 = sadd.s32 %s13, 1
    %s21 = ssub.s32 %s13, %s20
    %p22 = scmp.eq.s32.totalorder %s21, 0
    %s24 = sadd.s32 %s23, 1
    %s25 = scalar_select %p22, %s23, %s24
    %p28 = pneg %p22
    %p29 = scmp.eq.s32.totalorder %s13, 1
    %p30 = por %p28, %p29
    %p31 = scmp.ne.s32.totalorder %s23, %s26
    %p32 = scmp.eq.s32.totalorder %s13, 0
    %p33 = por %p31, %p32
    %p34 = scmp.ne.s32.totalorder %s23, %s26
    %p35 = scmp.eq.s32.totalorder %s18, 1
    %p36 = por %p34, %p35
    %p37 = scmp.ne.s32.totalorder %s26, %s27
    %p38 = scmp.eq.s32.totalorder %s18, 0
    %p39 = por %p37, %p38
    %p40 = scmp.ne.s32.totalorder %s26, %s27
    %p41 = scmp.eq.s32.totalorder %s19, 1
    %p42 = por %p40, %p41
    %p44 = scmp.ne.s32.totalorder %s27, %s43
    %p45 = scmp.eq.s32.totalorder %s19, 0
    %p46 = por %p44, %p45
    %s48 = sadd.s32 %s47, 1
    %p51 = scmp.eq.s32.totalorder %s13, 1
    %p52 = scmp.ne.s32.totalorder %s47, %s49
    %p53 = scmp.eq.s32.totalorder %s13, 0
    %p54 = por %p52, %p53
    %p55 = scmp.ne.s32.totalorder %s47, %s49
    %p56 = scmp.eq.s32.totalorder %s18, 1
    %p57 = por %p55, %p56
    %p58 = scmp.ne.s32.totalorder %s49, %s50
    %p59 = scmp.eq.s32.totalorder %s18, 0
    %p60 = por %p58, %p59
    %p61 = scmp.ne.s32.totalorder %s49, %s50
    %p62 = scmp.eq.s32.totalorder %s19, 1
    %p63 = por %p61, %p62
    %p65 = scmp.ne.s32.totalorder %s50, %s64
    %p66 = scmp.eq.s32.totalorder %s19, 0
    %p67 = por %p65, %p66
    %s69 = sadd.s32 %s68, 1
    %p72 = scmp.eq.s32.totalorder %s13, 1
    %p73 = scmp.ne.s32.totalorder %s68, %s70
    %p74 = scmp.eq.s32.totalorder %s13, 0
    %p75 = por %p73, %p74
    %p76 = scmp.ne.s32.totalorder %s68, %s70
    %p77 = scmp.eq.s32.totalorder %s18, 1
    %p78 = por %p76, %p77
    %p79 = scmp.ne.s32.totalorder %s70, %s71
    %p80 = scmp.eq.s32.totalorder %s18, 0
    %p81 = por %p79, %p80
    %p82 = scmp.ne.s32.totalorder %s70, %s71
    %p83 = scmp.eq.s32.totalorder %s19, 1
    %p84 = por %p82, %p83
    %p86 = scmp.ne.s32.totalorder %s71, %s85
    %p87 = scmp.eq.s32.totalorder %s19, 0
    %p88 = por %p86, %p87
    %s90 = sadd.s32 %s89, 1
    %p93 = scmp.eq.s32.totalorder %s13, 1
    %p94 = scmp.ne.s32.totalorder %s89, %s91
    %p95 = scmp.eq.s32.totalorder %s13, 0
    %p96 = por %p94, %p95
    %p97 = scmp.ne.s32.totalorder %s89, %s91
    %p98 = scmp.eq.s32.totalorder %s18, 1
    %p99 = por %p97, %p98
    %p100 = scmp.ne.s32.totalorder %s91, %s92
    %p101 = scmp.eq.s32.totalorder %s18, 0
    %p102 = por %p100, %p101
    %p103 = scmp.ne.s32.totalorder %s91, %s92
    %p104 = scmp.eq.s32.totalorder %s19, 1
    %p105 = por %p103, %p104
    %p107 = scmp.ne.s32.totalorder %s92, %s106
    %p108 = scmp.eq.s32.totalorder %s19, 0
    %p109 = por %p107, %p108
    %s111 = sadd.s32 %s110, 1
    %p114 = scmp.eq.s32.totalorder %s13, 1
    %p115 = scmp.ne.s32.totalorder %s110, %s112
    %p116 = scmp.eq.s32.totalorder %s13, 0
    %p117 = por %p115, %p116
    %p118 = scmp.ne.s32.totalorder %s110, %s112
    %p119 = scmp.eq.s32.totalorder %s18, 1
    %p120 = por %p118, %p119
    %p121 = scmp.ne.s32.totalorder %s112, %s113
    %p122 = scmp.eq.s32.totalorder %s18, 0
    %p123 = por %p121, %p122
    %p124 = scmp.ne.s32.totalorder %s112, %s113
    %p125 = scmp.eq.s32.totalorder %s19, 1
    %p126 = por %p124, %p125
    %p128 = scmp.ne.s32.totalorder %s113, %s127
    %p129 = scmp.eq.s32.totalorder %s19, 0
    %p130 = por %p128, %p129
    %s131 = ssub.s32 %s13, %s20
    %p132 = scmp.eq.s32.totalorder %s131, 0
    %s134 = sadd.s32 %s133, 1
    %s135 = scalar_select %p132, %s133, %s134
    %p138 = pneg %p132
    %p139 = scmp.eq.s32.totalorder %s13, 1
    %p140 = por %p138, %p139
    %p141 = scmp.ne.s32.totalorder %s133, %s136
    %p142 = scmp.eq.s32.totalorder %s13, 0
    %p143 = por %p141, %p142
    %p144 = scmp.ne.s32.totalorder %s133, %s136
    %p145 = scmp.eq.s32.totalorder %s18, 1
    %p146 = por %p144, %p145
    %p147 = scmp.ne.s32.totalorder %s136, %s137
    %p148 = scmp.eq.s32.totalorder %s18, 0
    %p149 = por %p147, %p148
    %p150 = scmp.ne.s32.totalorder %s136, %s137
    %p151 = scmp.eq.s32.totalorder %s19, 1
    %p152 = por %p150, %p151
    %p154 = scmp.ne.s32.totalorder %s137, %s153
    %p155 = scmp.eq.s32.totalorder %s19, 0
    %p156 = por %p154, %p155
    %s157 = ssub.s32 %s13, %s20
    %p158 = scmp.eq.s32.totalorder %s157, 0
    %s160 = sadd.s32 %s159, 1
    %s161 = scalar_select %p158, %s159, %s160
    %p164 = pneg %p158
    %p165 = scmp.eq.s32.totalorder %s13, 1
    %p166 = por %p164, %p165
    %p167 = scmp.ne.s32.totalorder %s159, %s162
    %p168 = scmp.eq.s32.totalorder %s13, 0
    %p169 = por %p167, %p168
    %p170 = scmp.ne.s32.totalorder %s159, %s162
    %p171 = scmp.eq.s32.totalorder %s18, 1
    %p172 = por %p170, %p171
    %p173 = scmp.ne.s32.totalorder %s162, %s163
    %p174 = scmp.eq.s32.totalorder %s18, 0
    %p175 = por %p173, %p174
    %p176 = scmp.ne.s32.totalorder %s162, %s163
    %p177 = scmp.eq.s32.totalorder %s19, 1
    %p178 = por %p176, %p177
    %p180 = scmp.ne.s32.totalorder %s163, %s179
    %p181 = scmp.eq.s32.totalorder %s19, 0
    %p182 = por %p180, %p181
    %p183 = scmp.le.s32.totalorder 1, %s13
    %p184 = scmp.lt.s32.totalorder %s13, 3
    %p185 = pnand %p183, %p184
    %p186 = pneg %p185
    // Predicated region
    $region9: #{_lambda_.4} parent=5 // pred_check
      _
    $region10: #{_lambda_.4} parent=5 // pred_check_branch
      %188 = sbr.rel (%p185) target = $region12
    $region11: #{_lambda_.4} parent=5 // pred_region
      %s189 = ssub.s32 %s13, 1
      // Predicated region
      $region13: #{_lambda_.4} parent=11 // pred_check
        %p190 = pneg %p60
      $region14: #{_lambda_.4} parent=11 // pred_check_branch
        %192 = sbr.rel (%p190) target = $region16
      $region15: #{_lambda_.4} parent=11 // pred_region
        _
      $region16: #{_lambda_.4} parent=11 // pred_fallthru
        _
      // Predicated region
      $region17: #{_lambda_.4} parent=11 // pred_check
        %p193 = pneg %p81
      $region18: #{_lambda_.4} parent=11 // pred_check_branch
        %195 = sbr.rel (%p193) target = $region20
      $region19: #{_lambda_.4} parent=11 // pred_region
        _
      $region20: #{_lambda_.4} parent=11 // pred_fallthru
        _
      // Predicated region
      $region21: #{_lambda_.4} parent=11 // pred_check
        %p196 = pneg %p102
      $region22: #{_lambda_.4} parent=11 // pred_check_branch
        %198 = sbr.rel (%p196) target = $region24
      $region23: #{_lambda_.4} parent=11 // pred_region
        _
      $region24: #{_lambda_.4} parent=11 // pred_fallthru
        _
      // Predicated region
      $region25: #{_lambda_.4} parent=11 // pred_check
        %p199 = pneg %p123
      $region26: #{_lambda_.4} parent=11 // pred_check_branch
        %201 = sbr.rel (%p199) target = $region28
      $region27: #{_lambda_.4} parent=11 // pred_region
        _
      $region28: #{_lambda_.4} parent=11 // pred_fallthru
        _
    $region12: #{_lambda_.4} parent=5 // pred_fallthru
      _
    %p202 = scmp.lt.s32.totalorder %s13, 2
    // Predicated region
    $region29: #{_lambda_.4} parent=5 // pred_check
      %p203 = pneg %p202
    $region30: #{_lambda_.4} parent=5 // pred_check_branch
      %205 = sbr.rel (%p203) target = $region32
    $region31: #{_lambda_.4} parent=5 // pred_region
      // Predicated region
      $region33: #{_lambda_.4} parent=31 // pred_check
        %p206 = pneg %p33
      $region34: #{_lambda_.4} parent=31 // pred_check_branch
        %208 = sbr.rel (%p206) target = $region36
      $region35: #{_lambda_.4} parent=31 // pred_region
        %p209 = scmp.lt.s32.totalorder %s13, 1
        %s210 = scalar_select %p209, %s13, 1
        %s211 = scalar_lea.vmem %s0, %s210
      $region36: #{_lambda_.4} parent=31 // pred_fallthru
        _
    $region32: #{_lambda_.4} parent=5 // pred_fallthru
      _
    %p212 = scmp.le.s32.totalorder 1, %s13
    %p213 = scmp.lt.s32.totalorder %s13, 3
    %p214 = pnand %p212, %p213
    %p215 = pneg %p214
    // Predicated region
    $region37: #{_lambda_.4} parent=5 // pred_check
      _
    $region38: #{_lambda_.4} parent=5 // pred_check_branch
      %217 = sbr.rel (%p214) target = $region40
    $region39: #{_lambda_.4} parent=5 // pred_region
      %s218 = ssub.s32 %s13, 1
      %p219 = scmp.lt.s32.totalorder %s18, 1
      %s220 = scalar_select %p219, %s18, 1
      %s221 = scalar_lea.vmem %s0, %s220
      %p222 = pneg %p39
      %p223 = pneg %p36
      %p224 = pneg %p60
      %p225 = pneg %p57
      %p226 = pneg %p81
      %p227 = pneg %p78
      %p228 = pneg %p102
      %p229 = pneg %p99
      %p230 = pneg %p123
      %p231 = pneg %p120
      %p232 = pneg %p149
      %p233 = pneg %p146
      %p234 = scmp.lt.s32.totalorder %s18, 1
      %s235 = scalar_select %p234, %s18, 1
      %s236 = smul.addr %s235, 4
      %s237 = smul.addr %s236, 8
      %s238 = scalar_lea.vmem %s5, %s237
      %p239 = pneg %p175
      %p240 = pneg %p172
      %p241 = scmp.lt.s32.totalorder %s18, 1
      %s242 = scalar_select %p241, %s18, 1
      %s243 = smul.addr %s242, 2
      %s244 = smul.addr %s243, 8
      %s245 = scalar_lea.vmem %s6, %s244
      %p246 = scmp.lt.s32.totalorder %s18, 1
      %s247 = scalar_select %p246, %s18, 1
      %s248 = scalar_lea.vmem %s0, %s247
      %p249 = scmp.lt.s32.totalorder %s18, 1
      %s250 = scalar_select %p249, %s18, 1
      %s251 = smul.addr %s250, 4
      %s252 = smul.addr %s251, 8
      %s253 = scalar_lea.vmem %s5, %s252
      %p254 = scmp.lt.s32.totalorder %s18, 1
      %s255 = scalar_select %p254, %s18, 1
      %s256 = smul.addr %s255, 2
      %s257 = smul.addr %s256, 8
      %s258 = scalar_lea.vmem %s6, %s257
      %v260 = vlaneseq
      %v261 = vand.u32 %v260, 127
      %v262 = vld [vmem:[%s248] sm:$0x1]
      %263 = vrot.lane.b32.xlu0 %v262, 16
      %v264 = vpop.permute.xlu0 %263
      %vm265 = vcmp.ge.s32.totalorder %v261, 16
      %v266 = vsel %vm265, %v264, 0.0
      %267 = vrot.lane.b32.xlu0 %v262, 15
      %v268 = vpop.permute.xlu0 %267
      %vm269 = vcmp.ge.s32.totalorder %v261, 15
      %v270 = vsel %vm269, %v268, 0.0
      %271 = vrot.lane.b32.xlu0 %v262, 14
      %v272 = vpop.permute.xlu0 %271
      %vm273 = vcmp.ge.s32.totalorder %v261, 14
      %v274 = vsel %vm273, %v272, 0.0
      %275 = vrot.lane.b32.xlu0 %v262, 13
      %v276 = vpop.permute.xlu0 %275
      %vm277 = vcmp.ge.s32.totalorder %v261, 13
      %v278 = vsel %vm277, %v276, 0.0
      %279 = vrot.lane.b32.xlu0 %v262, 12
      %v280 = vpop.permute.xlu0 %279
      %vm281 = vcmp.ge.s32.totalorder %v261, 12
      %v282 = vsel %vm281, %v280, 0.0
      %283 = vrot.lane.b32.xlu0 %v262, 11
      %v284 = vpop.permute.xlu0 %283
      %vm285 = vcmp.ge.s32.totalorder %v261, 11
      %v286 = vsel %vm285, %v284, 0.0
      %287 = vrot.lane.b32.xlu0 %v262, 10
      %v288 = vpop.permute.xlu0 %287
      %vm289 = vcmp.ge.s32.totalorder %v261, 10
      %v290 = vsel %vm289, %v288, 0.0
      %291 = vrot.lane.b32.xlu0 %v262, 9
      %v292 = vpop.permute.xlu0 %291
      %vm293 = vcmp.ge.s32.totalorder %v261, 9
      %v294 = vsel %vm293, %v292, 0.0
      %295 = vrot.lane.b32.xlu0 %v262, 8
      %v296 = vpop.permute.xlu0 %295
      %vm297 = vcmp.ge.s32.totalorder %v261, 8
      %v298 = vsel %vm297, %v296, 0.0
      %299 = vrot.lane.b32.xlu0 %v262, 7
      %v300 = vpop.permute.xlu0 %299
      %vm301 = vcmp.ge.s32.totalorder %v261, 7
      %v302 = vsel %vm301, %v300, 0.0
      %303 = vrot.lane.b32.xlu0 %v262, 6
      %v304 = vpop.permute.xlu0 %303
      %vm305 = vcmp.ge.s32.totalorder %v261, 6
      %v306 = vsel %vm305, %v304, 0.0
      %307 = vrot.lane.b32.xlu0 %v262, 5
      %v308 = vpop.permute.xlu0 %307
      %vm309 = vcmp.ge.s32.totalorder %v261, 5
      %v310 = vsel %vm309, %v308, 0.0
      %311 = vrot.lane.b32.xlu0 %v262, 4
      %v312 = vpop.permute.xlu0 %311
      %vm313 = vcmp.ge.s32.totalorder %v261, 4
      %v314 = vsel %vm313, %v312, 0.0
      %315 = vrot.lane.b32.xlu0 %v262, 3
      %v316 = vpop.permute.xlu0 %315
      %vm317 = vcmp.ge.s32.totalorder %v261, 3
      %v318 = vsel %vm317, %v316, 0.0
      %319 = vrot.lane.b32.xlu0 %v262, 2
      %v320 = vpop.permute.xlu0 %319
      %vm321 = vcmp.ge.s32.totalorder %v261, 2
      %v322 = vsel %vm321, %v320, 0.0
      %323 = vrot.lane.b32.xlu0 %v262, 1
      %v324 = vpop.permute.xlu0 %323
      %vm325 = vcmp.ge.s32.totalorder %v261, 1
      %v326 = vsel %vm325, %v324, 0.0
      %v328 = vrot.slane %v270, 7
      %v331 = vrot.slane %v274, 6
      %v334 = vrot.slane %v278, 5
      %v337 = vrot.slane %v282, 4
      %v340 = vrot.slane %v286, 3
      %v343 = vrot.slane %v290, 2
      %v346 = vrot.slane %v294, 1
      %v349 = vrot.slane %v302, 7
      %v352 = vrot.slane %v306, 6
      %v355 = vrot.slane %v310, 5
      %v358 = vrot.slane %v314, 4
      %v361 = vrot.slane %v318, 3
      %v364 = vrot.slane %v322, 2
      %v367 = vrot.slane %v326, 1
      %vm369 = vcmask 1040384
      %v370 = vsel %vm369, %v266, %v328
      %vm371 = vcmask 1041408
      %v372 = vsel %vm371, %v370, %v331
      %vm373 = vcmask 1042432
      %v374 = vsel %vm373, %v372, %v334
      %vm375 = vcmask 1043456
      %v376 = vsel %vm375, %v374, %v337
      %vm377 = vcmask 1044480
      %v378 = vsel %vm377, %v376, %v340
      %vm379 = vcmask 1045504
      %v380 = vsel %vm379, %v378, %v343
      %vm381 = vcmask 1046528
      %v382 = vsel %vm381, %v380, %v346
      %v383 = vsel %vm369, %v298, %v349
      %v384 = vsel %vm371, %v383, %v352
      %v385 = vsel %vm373, %v384, %v355
      %v386 = vsel %vm375, %v385, %v358
      %v387 = vsel %vm377, %v386, %v361
      %v388 = vsel %vm379, %v387, %v364
      %v389 = vsel %vm381, %v388, %v367
      %v390 = vpack.c.bf16 %v389, %v382
      %v391 = vld [vmem:[%s1] sm:$0xf]
      %v392 = vld [vmem:[%s1 + $0x4] sm:$0xf]
      %v393 = vld [vmem:[%s2] sm:$0xff]
      %v394 = vld [vmem:[%s2 + $0x8] sm:$0xff]
      %v397 = vunpack.c.l.b16 %v391
      %v398 = vunpack.c.l.b16 %v392
      %v399 = vpack.c.b16 %v398, %v397
      %vm400 = vcmask 130048
      %v402 = vsel %vm400, %v399, 0
      %404 = vmatprep.subr.bf16.mxu0 0
      %405 = vmatpush1.bf16.msra.mxu0 %v390
      %406 = vmatprep.subr.bf16.mxu0 0
      %407 = vmatpush1.bf16.msra.mxu0 0
      %408 = vmatprep.subr.bf16.mxu0 0
      %409 = vmatpush1.bf16.msra.mxu0 0
      %410 = vmatprep.subr.bf16.mxu0 0
      %411 = vmatpush1.bf16.msra.mxu0 0
      %412 = vmatprep.subr.bf16.mxu0 0
      %413 = vmatpush1.bf16.msra.mxu0 0
      %414 = vmatprep.subr.bf16.mxu0 0
      %415 = vmatpush1.bf16.msra.mxu0 0
      %416 = vmatprep.subr.bf16.mxu0 0
      %417 = vmatpush1.bf16.msra.mxu0 0
      %418 = vmatprep.subr.bf16.mxu0 0
      %419 = vmatpush1.bf16.msra.mxu0 0
      %420 = vmatprep.subr.bf16.mxu0 0
      %421 = vmatpush1.bf16.msra.mxu0 0
      %422 = vmatprep.subr.bf16.mxu0 0
      %423 = vmatpush1.bf16.msra.mxu0 0
      %424 = vmatprep.subr.bf16.mxu0 0
      %425 = vmatpush1.bf16.msra.mxu0 0
      %426 = vmatprep.subr.bf16.mxu0 0
      %427 = vmatpush1.bf16.msra.mxu0 0
      %428 = vmatprep.subr.bf16.mxu0 0
      %429 = vmatpush1.bf16.msra.mxu0 0
      %430 = vmatprep.subr.bf16.mxu0 0
      %431 = vmatpush1.bf16.msra.mxu0 0
      %432 = vmatprep.subr.bf16.mxu0 0
      %433 = vmatpush1.bf16.msra.mxu0 0
      %434 = vmatprep.subr.bf16.mxu0 0
      %435 = vmatpush1.bf16.msra.mxu0 0
      %436 = vmatprep.mubr.bf16.mxu0 0
      %437 = vmatmul.mubr.bf16.gmra.mrb[0].mxu0 %v402
      %v438 = vpop.f32.mrb[0].mxu0
      %v439 = vadd.f32 %v393, %v438
      %v440 = vpop.f32.mrb[0].mxu0
      %v441 = vpop.f32.mrb[0].mxu0
      %v442 = vadd.f32 %v394, %v441
      %v443 = vpop.f32.mrb[0].mxu0
      %444 = vdwg.mxu0
      %v445 = vpack.c.bf16 %v442, %v439
      %446 = vrot.lane.b32.xlu0 %v439, 1
      %v447 = vpop.permute.xlu0 %446
      %448 = vrot.lane.b32.xlu0 %v442, 1
      %v449 = vpop.permute.xlu0 %448
      %v450 = vsel %vm325, 1, 0
      %vm451 = vcmp.eq.s32.totalorder %v450, 1
      %v452 = vsel %vm451, %v447, 0.0
      %v453 = vsel %vm451, %v449, 0.0
      %v454 = vpack.c.bf16 %v453, %v452
      %vm455 = vcmp.lt.s32.totalorder %v261, 127
      %456 = vrot.lane.b32.xlu0 %v439, 127
      %v457 = vpop.permute.xlu0 %456
      %458 = vrot.lane.b32.xlu0 %v442, 127
      %v459 = vpop.permute.xlu0 %458
      %v460 = vsel %vm455, 1, 0
      %vm461 = vcmp.eq.s32.totalorder %v460, 1
      %v462 = vsel %vm461, %v457, 0.0
      %v463 = vsel %vm461, %v459, 0.0
      %v464 = vpack.c.bf16 %v463, %v462
      %v465 = vld [vmem:[%s3] sm:$0xf]
      %v466 = vld [vmem:[%s3 + $0x4] sm:$0xf]
      %s467 = scalar_lea.vmem %s3, 8
      %v468 = vld [vmem:[%s467] sm:$0xf]
      %v469 = vld [vmem:[%s467 + $0x4] sm:$0xf]
      %v472 = vunpack.c.l.b16 %v468
      %v473 = vunpack.c.l.b16 %v469
      %v474 = vpack.c.b16 %v473, %v472
      %v476 = vsel %vm400, %v474, 0
      %478 = vmatprep.subr.bf16.mxu0 0
      %479 = vmatpush1.bf16.msra.mxu0 %v445
      %480 = vmatprep.subr.bf16.mxu0 0
      %481 = vmatpush1.bf16.msra.mxu0 0
      %482 = vmatprep.subr.bf16.mxu0 0
      %483 = vmatpush1.bf16.msra.mxu0 0
      %484 = vmatprep.subr.bf16.mxu0 0
      %485 = vmatpush1.bf16.msra.mxu0 0
      %486 = vmatprep.subr.bf16.mxu0 0
      %487 = vmatpush1.bf16.msra.mxu0 0
      %488 = vmatprep.subr.bf16.mxu0 0
      %489 = vmatpush1.bf16.msra.mxu0 0
      %490 = vmatprep.subr.bf16.mxu0 0
      %491 = vmatpush1.bf16.msra.mxu0 0
      %492 = vmatprep.subr.bf16.mxu0 0
      %493 = vmatpush1.bf16.msra.mxu0 0
      %494 = vmatprep.subr.bf16.mxu0 0
      %495 = vmatpush1.bf16.msra.mxu0 0
      %496 = vmatprep.subr.bf16.mxu0 0
      %497 = vmatpush1.bf16.msra.mxu0 0
      %498 = vmatprep.subr.bf16.mxu0 0
      %499 = vmatpush1.bf16.msra.mxu0 0
      %500 = vmatprep.subr.bf16.mxu0 0
      %501 = vmatpush1.bf16.msra.mxu0 0
      %502 = vmatprep.subr.bf16.mxu0 0
      %503 = vmatpush1.bf16.msra.mxu0 0
      %504 = vmatprep.subr.bf16.mxu0 0
      %505 = vmatpush1.bf16.msra.mxu0 0
      %506 = vmatprep.subr.bf16.mxu0 0
      %507 = vmatpush1.bf16.msra.mxu0 0
      %508 = vmatprep.subr.bf16.mxu0 0
      %509 = vmatpush1.bf16.msra.mxu0 0
      %510 = vmatprep.mubr.bf16.mxu0 0
      %511 = vmatmul.mubr.bf16.gmra.mrb[0].mxu0 %v476
      %v512 = vpop.f32.mrb[0].mxu0
      %v513 = vadd.f32 0.0, %v512
      %v514 = vpop.f32.mrb[0].mxu0
      %v515 = vpop.f32.mrb[0].mxu0
      %v516 = vadd.f32 0.0, %v515
      %v517 = vpop.f32.mrb[0].mxu0
      %518 = vdwg.mxu0
      %v521 = vunpack.c.l.b16 %v465
      %v522 = vunpack.c.l.b16 %v466
      %v523 = vpack.c.b16 %v522, %v521
      %v525 = vsel %vm400, %v523, 0
      %527 = vmatprep.subr.bf16.mxu0 0
      %528 = vmatpush1.bf16.msra.mxu0 %v454
      %529 = vmatprep.subr.bf16.mxu0 0
      %530 = vmatpush1.bf16.msra.mxu0 0
      %531 = vmatprep.subr.bf16.mxu0 0
      %532 = vmatpush1.bf16.msra.mxu0 0
      %533 = vmatprep.subr.bf16.mxu0 0
      %534 = vmatpush1.bf16.msra.mxu0 0
      %535 = vmatprep.subr.bf16.mxu0 0
      %536 = vmatpush1.bf16.msra.mxu0 0
      %537 = vmatprep.subr.bf16.mxu0 0
      %538 = vmatpush1.bf16.msra.mxu0 0
      %539 = vmatprep.subr.bf16.mxu0 0
      %540 = vmatpush1.bf16.msra.mxu0 0
      %541 = vmatprep.subr.bf16.mxu0 0
      %542 = vmatpush1.bf16.msra.mxu0 0
      %543 = vmatprep.subr.bf16.mxu0 0
      %544 = vmatpush1.bf16.msra.mxu0 0
      %545 = vmatprep.subr.bf16.mxu0 0
      %546 = vmatpush1.bf16.msra.mxu0 0
      %547 = vmatprep.subr.bf16.mxu0 0
      %548 = vmatpush1.bf16.msra.mxu0 0
      %549 = vmatprep.subr.bf16.mxu0 0
      %550 = vmatpush1.bf16.msra.mxu0 0
      %551 = vmatprep.subr.bf16.mxu0 0
      %552 = vmatpush1.bf16.msra.mxu0 0
      %553 = vmatprep.subr.bf16.mxu0 0
      %554 = vmatpush1.bf16.msra.mxu0 0
      %555 = vmatprep.subr.bf16.mxu0 0
      %556 = vmatpush1.bf16.msra.mxu0 0
      %557 = vmatprep.subr.bf16.mxu0 0
      %558 = vmatpush1.bf16.msra.mxu0 0
      %559 = vmatprep.mubr.bf16.mxu0 0
      %560 = vmatmul.mubr.bf16.gmra.mrb[0].mxu0 %v525
      %v561 = vpop.f32.mrb[0].mxu0
      %v562 = vadd.f32 %v513, %v561
      %v563 = vpop.f32.mrb[0].mxu0
      %v564 = vpop.f32.mrb[0].mxu0
      %v565 = vadd.f32 %v516, %v564
      %v566 = vpop.f32.mrb[0].mxu0
      %567 = vdwg.mxu0
      %s568 = scalar_lea.vmem %s3, 16
      %v569 = vld [vmem:[%s568] sm:$0xf]
      %v570 = vld [vmem:[%s568 + $0x4] sm:$0xf]
      %v573 = vunpack.c.l.b16 %v569
      %v574 = vunpack.c.l.b16 %v570
      %v575 = vpack.c.b16 %v574, %v573
      %v577 = vsel %vm400, %v575, 0
      %579 = vmatprep.subr.bf16.mxu0 0
      %580 = vmatpush1.bf16.msra.mxu0 %v464
      %581 = vmatprep.subr.bf16.mxu0 0
      %582 = vmatpush1.bf16.msra.mxu0 0
      %583 = vmatprep.subr.bf16.mxu0 0
      %584 = vmatpush1.bf16.msra.mxu0 0
      %585 = vmatprep.subr.bf16.mxu0 0
      %586 = vmatpush1.bf16.msra.mxu0 0
      %587 = vmatprep.subr.bf16.mxu0 0
      %588 = vmatpush1.bf16.msra.mxu0 0
      %589 = vmatprep.subr.bf16.mxu0 0
      %590 = vmatpush1.bf16.msra.mxu0 0
      %591 = vmatprep.subr.bf16.mxu0 0
      %592 = vmatpush1.bf16.msra.mxu0 0
      %593 = vmatprep.subr.bf16.mxu0 0
      %594 = vmatpush1.bf16.msra.mxu0 0
      %595 = vmatprep.subr.bf16.mxu0 0
      %596 = vmatpush1.bf16.msra.mxu0 0
      %597 = vmatprep.subr.bf16.mxu0 0
      %598 = vmatpush1.bf16.msra.mxu0 0
      %599 = vmatprep.subr.bf16.mxu0 0
      %600 = vmatpush1.bf16.msra.mxu0 0
      %601 = vmatprep.subr.bf16.mxu0 0
      %602 = vmatpush1.bf16.msra.mxu0 0
      %603 = vmatprep.subr.bf16.mxu0 0
      %604 = vmatpush1.bf16.msra.mxu0 0
      %605 = vmatprep.subr.bf16.mxu0 0
      %606 = vmatpush1.bf16.msra.mxu0 0
      %607 = vmatprep.subr.bf16.mxu0 0
      %608 = vmatpush1.bf16.msra.mxu0 0
      %609 = vmatprep.subr.bf16.mxu0 0
      %610 = vmatpush1.bf16.msra.mxu0 0
      %611 = vmatprep.mubr.bf16.mxu0 0
      %612 = vmatmul.mubr.bf16.gmra.mrb[0].mxu0 %v577
      %v613 = vpop.f32.mrb[0].mxu0
      %v614 = vadd.f32 0.0, %v613
      %v615 = vpop.f32.mrb[0].mxu0
      %v616 = vpop.f32.mrb[0].mxu0
      %v617 = vadd.f32 0.0, %v616
      %v618 = vpop.f32.mrb[0].mxu0
      %619 = vdwg.mxu0
      %v620 = vadd.f32 %v562, %v614
      %v621 = vadd.f32 %v565, %v617
      %v622 = vadd.f32 %v620, %v439
      %v623 = vadd.f32 %v621, %v442
      %vm624 = vcmp.ge.f32.partialorder %v622, 0.0
      %vm625 = vcmp.ge.f32.partialorder %v623, 0.0
      %v626 = vmul.f32 %v622, 0.2
      %v627 = vmul.f32 %v623, 0.2
      %v628 = vsel %vm624, %v622, %v626
      %v629 = vsel %vm625, %v623, %v627
      %v630 = vpack.c.bf16 %v629, %v628
      %631 = vrot.lane.b32.xlu0 %v628, 3
      %v632 = vpop.permute.xlu0 %631
      %633 = vrot.lane.b32.xlu0 %v629, 3
      %v634 = vpop.permute.xlu0 %633
      %v635 = vsel %vm317, 1, 0
      %vm636 = vcmp.eq.s32.totalorder %v635, 1
      %v637 = vsel %vm636, %v632, 0.0
      %v638 = vsel %vm636, %v634, 0.0
      %v639 = vpack.c.bf16 %v638, %v637
      %vm640 = vcmp.lt.s32.totalorder %v261, 125
      %641 = vrot.lane.b32.xlu0 %v628, 125
      %v642 = vpop.permute.xlu0 %641
      %643 = vrot.lane.b32.xlu0 %v629, 125
      %v644 = vpop.permute.xlu0 %643
      %v645 = vsel %vm640, 1, 0
      %vm646 = vcmp.eq.s32.totalorder %v645, 1
      %v647 = vsel %vm646, %v642, 0.0
      %v648 = vsel %vm646, %v644, 0.0
      %v649 = vpack.c.bf16 %v648, %v647
      %s650 = scalar_lea.vmem %s3, 24
      %v651 = vld [vmem:[%s650] sm:$0xf]
      %v652 = vld [vmem:[%s650 + $0x4] sm:$0xf]
      %s653 = scalar_lea.vmem %s3, 32
      %v654 = vld [vmem:[%s653] sm:$0xf]
      %v655 = vld [vmem:[%s653 + $0x4] sm:$0xf]
      %v658 = vunpack.c.l.b16 %v654
      %v659 = vunpack.c.l.b16 %v655
      %v660 = vpack.c.b16 %v659, %v658
      %v662 = vsel %vm400, %v660, 0
      %664 = vmatprep.subr.bf16.mxu0 0
      %665 = vmatpush1.bf16.msra.mxu0 %v630
      %666 = vmatprep.subr.bf16.mxu0 0
      %667 = vmatpush1.bf16.msra.mxu0 0
      %668 = vmatprep.subr.bf16.mxu0 0
      %669 = vmatpush1.bf16.msra.mxu0 0
      %670 = vmatprep.subr.bf16.mxu0 0
      %671 = vmatpush1.bf16.msra.mxu0 0
      %672 = vmatprep.subr.bf16.mxu0 0
      %673 = vmatpush1.bf16.msra.mxu0 0
      %674 = vmatprep.subr.bf16.mxu0 0
      %675 = vmatpush1.bf16.msra.mxu0 0
      %676 = vmatprep.subr.bf16.mxu0 0
      %677 = vmatpush1.bf16.msra.mxu0 0
      %678 = vmatprep.subr.bf16.mxu0 0
      %679 = vmatpush1.bf16.msra.mxu0 0
      %680 = vmatprep.subr.bf16.mxu0 0
      %681 = vmatpush1.bf16.msra.mxu0 0
      %682 = vmatprep.subr.bf16.mxu0 0
      %683 = vmatpush1.bf16.msra.mxu0 0
      %684 = vmatprep.subr.bf16.mxu0 0
      %685 = vmatpush1.bf16.msra.mxu0 0
      %686 = vmatprep.subr.bf16.mxu0 0
      %687 = vmatpush1.bf16.msra.mxu0 0
      %688 = vmatprep.subr.bf16.mxu0 0
      %689 = vmatpush1.bf16.msra.mxu0 0
      %690 = vmatprep.subr.bf16.mxu0 0
      %691 = vmatpush1.bf16.msra.mxu0 0
      %692 = vmatprep.subr.bf16.mxu0 0
      %693 = vmatpush1.bf16.msra.mxu0 0
      %694 = vmatprep.subr.bf16.mxu0 0
      %695 = vmatpush1.bf16.msra.mxu0 0
      %696 = vmatprep.mubr.bf16.mxu0 0
      %697 = vmatmul.mubr.bf16.gmra.mrb[0].mxu0 %v662
      %v698 = vpop.f32.mrb[0].mxu0
      %v699 = vadd.f32 0.0, %v698
      %v700 = vpop.f32.mrb[0].mxu0
      %v701 = vpop.f32.mrb[0].mxu0
      %v702 = vadd.f32 0.0, %v701
      %v703 = vpop.f32.mrb[0].mxu0
      %704 = vdwg.mxu0
      %v707 = vunpack.c.l.b16 %v651
      %v708 = vunpack.c.l.b16 %v652
      %v709 = vpack.c.b16 %v708, %v707
      %v711 = vsel %vm400, %v709, 0
      %713 = vmatprep.subr.bf16.mxu0 0
      %714 = vmatpush1.bf16.msra.mxu0 %v639
      %715 = vmatprep.subr.bf16.mxu0 0
      %716 = vmatpush1.bf16.msra.mxu0 0
      %717 = vmatprep.subr.bf16.mxu0 0
      %718 = vmatpush1.bf16.msra.mxu0 0
      %719 = vmatprep.subr.bf16.mxu0 0
      %720 = vmatpush1.bf16.msra.mxu0 0
      %721 = vmatprep.subr.bf16.mxu0 0
      %722 = vmatpush1.bf16.msra.mxu0 0
      %723 = vmatprep.subr.bf16.mxu0 0
      %724 = vmatpush1.bf16.msra.mxu0 0
      %725 = vmatprep.subr.bf16.mxu0 0
      %726 = vmatpush1.bf16.msra.mxu0 0
      %727 = vmatprep.subr.bf16.mxu0 0
      %728 = vmatpush1.bf16.msra.mxu0 0
      %729 = vmatprep.subr.bf16.mxu0 0
      %730 = vmatpush1.bf16.msra.mxu0 0
      %731 = vmatprep.subr.bf16.mxu0 0
      %732 = vmatpush1.bf16.msra.mxu0 0
      %733 = vmatprep.subr.bf16.mxu0 0
      %734 = vmatpush1.bf16.msra.mxu0 0
      %735 = vmatprep.subr.bf16.mxu0 0
      %736 = vmatpush1.bf16.msra.mxu0 0
      %737 = vmatprep.subr.bf16.mxu0 0
      %738 = vmatpush1.bf16.msra.mxu0 0
      %739 = vmatprep.subr.bf16.mxu0 0
      %740 = vmatpush1.bf16.msra.mxu0 0
      %741 = vmatprep.subr.bf16.mxu0 0
      %742 = vmatpush1.bf16.msra.mxu0 0
      %743 = vmatprep.subr.bf16.mxu0 0
      %744 = vmatpush1.bf16.msra.mxu0 0
      %745 = vmatprep.mubr.bf16.mxu0 0
      %746 = vmatmul.mubr.bf16.gmra.mrb[0].mxu0 %v711
      %v747 = vpop.f32.mrb[0].mxu0
      %v748 = vadd.f32 %v699, %v747
      %v749 = vpop.f32.mrb[0].mxu0
      %v750 = vpop.f32.mrb[0].mxu0
      %v751 = vadd.f32 %v702, %v750
      %v752 = vpop.f32.mrb[0].mxu0
      %753 = vdwg.mxu0
      %s754 = scalar_lea.vmem %s3, 40
      %v755 = vld [vmem:[%s754] sm:$0xf]
      %v756 = vld [vmem:[%s754 + $0x4] sm:$0xf]
      %v759 = vunpack.c.l.b16 %v755
      %v760 = vunpack.c.l.b16 %v756
      %v761 = vpack.c.b16 %v760, %v759
      %v763 = vsel %vm400, %v761, 0
      %765 = vmatprep.subr.bf16.mxu0 0
      %766 = vmatpush1.bf16.msra.mxu0 %v649
      %767 = vmatprep.subr.bf16.mxu0 0
      %768 = vmatpush1.bf16.msra.mxu0 0
      %769 = vmatprep.subr.bf16.mxu0 0
      %770 = vmatpush1.bf16.msra.mxu0 0
      %771 = vmatprep.subr.bf16.mxu0 0
      %772 = vmatpush1.bf16.msra.mxu0 0
      %773 = vmatprep.subr.bf16.mxu0 0
      %774 = vmatpush1.bf16.msra.mxu0 0
      %775 = vmatprep.subr.bf16.mxu0 0
      %776 = vmatpush1.bf16.msra.mxu0 0
      %777 = vmatprep.subr.bf16.mxu0 0
      %778 = vmatpush1.bf16.msra.mxu0 0
      %779 = vmatprep.subr.bf16.mxu0 0
      %780 = vmatpush1.bf16.msra.mxu0 0
      %781 = vmatprep.subr.bf16.mxu0 0
      %782 = vmatpush1.bf16.msra.mxu0 0
      %783 = vmatprep.subr.bf16.mxu0 0
      %784 = vmatpush1.bf16.msra.mxu0 0
      %785 = vmatprep.subr.bf16.mxu0 0
      %786 = vmatpush1.bf16.msra.mxu0 0
      %787 = vmatprep.subr.bf16.mxu0 0
      %788 = vmatpush1.bf16.msra.mxu0 0
      %789 = vmatprep.subr.bf16.mxu0 0
      %790 = vmatpush1.bf16.msra.mxu0 0
      %791 = vmatprep.subr.bf16.mxu0 0
      %792 = vmatpush1.bf16.msra.mxu0 0
      %793 = vmatprep.subr.bf16.mxu0 0
      %794 = vmatpush1.bf16.msra.mxu0 0
      %795 = vmatprep.subr.bf16.mxu0 0
      %796 = vmatpush1.bf16.msra.mxu0 0
      %797 = vmatprep.mubr.bf16.mxu0 0
      %798 = vmatmul.mubr.bf16.gmra.mrb[0].mxu0 %v763
      %v799 = vpop.f32.mrb[0].mxu0
      %v800 = vadd.f32 0.0, %v799
      %v801 = vpop.f32.mrb[0].mxu0
      %v802 = vpop.f32.mrb[0].mxu0
      %v803 = vadd.f32 0.0, %v802
      %v804 = vpop.f32.mrb[0].mxu0
      %805 = vdwg.mxu0
      %v806 = vadd.f32 %v748, %v800
      %v807 = vadd.f32 %v751, %v803
      %v808 = vadd.f32 %v806, %v628
      %v809 = vadd.f32 %v807, %v629
      %vm810 = vcmp.ge.f32.partialorder %v808, 0.0
      %vm811 = vcmp.ge.f32.partialorder %v809, 0.0
      %v812 = vmul.f32 %v808, 0.2
      %v813 = vmul.f32 %v809, 0.2
      %v814 = vsel %vm810, %v808, %v812
      %v815 = vsel %vm811, %v809, %v813
      %v816 = vpack.c.bf16 %v815, %v814
      %817 = vrot.lane.b32.xlu0 %v814, 9
      %v818 = vpop.permute.xlu0 %817
      %819 = vrot.lane.b32.xlu0 %v815, 9
      %v820 = vpop.permute.xlu0 %819
      %v821 = vsel %vm293, 1, 0
      %vm822 = vcmp.eq.s32.totalorder %v821, 1
      %v823 = vsel %vm822, %v818, 0.0
      %v824 = vsel %vm822, %v820, 0.0
      %v825 = vpack.c.bf16 %v824, %v823
      %vm826 = vcmp.lt.s32.totalorder %v261, 119
      %827 = vrot.lane.b32.xlu0 %v814, 119
      %v828 = vpop.permute.xlu0 %827
      %829 = vrot.lane.b32.xlu0 %v815, 119
      %v830 = vpop.permute.xlu0 %829
      %v831 = vsel %vm826, 1, 0
      %vm832 = vcmp.eq.s32.totalorder %v831, 1
      %v833 = vsel %vm832, %v828, 0.0
      %v834 = vsel %vm832, %v830, 0.0
      %v835 = vpack.c.bf16 %v834, %v833
      %s836 = scalar_lea.vmem %s3, 48
      %v837 = vld [vmem:[%s836] sm:$0xf]
      %v838 = vld [vmem:[%s836 + $0x4] sm:$0xf]
      %s839 = scalar_lea.vmem %s3, 56
      %v840 = vld [vmem:[%s839] sm:$0xf]
      %v841 = vld [vmem:[%s839 + $0x4] sm:$0xf]
      %v844 = vunpack.c.l.b16 %v840
      %v845 = vunpack.c.l.b16 %v841
      %v846 = vpack.c.b16 %v845, %v844
      %v848 = vsel %vm400, %v846, 0
      %850 = vmatprep.subr.bf16.mxu0 0
      %851 = vmatpush1.bf16.msra.mxu0 %v816
      %852 = vmatprep.subr.bf16.mxu0 0
      %853 = vmatpush1.bf16.msra.mxu0 0
      %854 = vmatprep.subr.bf16.mxu0 0
      %855 = vmatpush1.bf16.msra.mxu0 0
      %856 = vmatprep.subr.bf16.mxu0 0
      %857 = vmatpush1.bf16.msra.mxu0 0
      %858 = vmatprep.subr.bf16.mxu0 0
      %859 = vmatpush1.bf16.msra.mxu0 0
      %860 = vmatprep.subr.bf16.mxu0 0
      %861 = vmatpush1.bf16.msra.mxu0 0
      %862 = vmatprep.subr.bf16.mxu0 0
      %863 = vmatpush1.bf16.msra.mxu0 0
      %864 = vmatprep.subr.bf16.mxu0 0
      %865 = vmatpush1.bf16.msra.mxu0 0
      %866 = vmatprep.subr.bf16.mxu0 0
      %867 = vmatpush1.bf16.msra.mxu0 0
      %868 = vmatprep.subr.bf16.mxu0 0
      %869 = vmatpush1.bf16.msra.mxu0 0
      %870 = vmatprep.subr.bf16.mxu0 0
      %871 = vmatpush1.bf16.msra.mxu0 0
      %872 = vmatprep.subr.bf16.mxu0 0
      %873 = vmatpush1.bf16.msra.mxu0 0
      %874 = vmatprep.subr.bf16.mxu0 0
      %875 = vmatpush1.bf16.msra.mxu0 0
      %876 = vmatprep.subr.bf16.mxu0 0
      %877 = vmatpush1.bf16.msra.mxu0 0
      %878 = vmatprep.subr.bf16.mxu0 0
      %879 = vmatpush1.bf16.msra.mxu0 0
      %880 = vmatprep.subr.bf16.mxu0 0
      %881 = vmatpush1.bf16.msra.mxu0 0
      %882 = vmatprep.mubr.bf16.mxu0 0
      %883 = vmatmul.mubr.bf16.gmra.mrb[0].mxu0 %v848
      %v884 = vpop.f32.mrb[0].mxu0
      %v885 = vadd.f32 0.0, %v884
      %v886 = vpop.f32.mrb[0].mxu0
      %v887 = vpop.f32.mrb[0].mxu0
      %v888 = vadd.f32 0.0, %v887
      %v889 = vpop.f32.mrb[0].mxu0
      %890 = vdwg.mxu0
      %v893 = vunpack.c.l.b16 %v837
      %v894 = vunpack.c.l.b16 %v838
      %v895 = vpack.c.b16 %v894, %v893
      %v897 = vsel %vm400, %v895, 0
      %899 = vmatprep.subr.bf16.mxu0 0
      %900 = vmatpush1.bf16.msra.mxu0 %v825
      %901 = vmatprep.subr.bf16.mxu0 0
      %902 = vmatpush1.bf16.msra.mxu0 0
      %903 = vmatprep.subr.bf16.mxu0 0
      %904 = vmatpush1.bf16.msra.mxu0 0
      %905 = vmatprep.subr.bf16.mxu0 0
      %906 = vmatpush1.bf16.msra.mxu0 0
      %907 = vmatprep.subr.bf16.mxu0 0
      %908 = vmatpush1.bf16.msra.mxu0 0
      %909 = vmatprep.subr.bf16.mxu0 0
      %910 = vmatpush1.bf16.msra.mxu0 0
      %911 = vmatprep.subr.bf16.mxu0 0
      %912 = vmatpush1.bf16.msra.mxu0 0
      %913 = vmatprep.subr.bf16.mxu0 0
      %914 = vmatpush1.bf16.msra.mxu0 0
      %915 = vmatprep.subr.bf16.mxu0 0
      %916 = vmatpush1.bf16.msra.mxu0 0
      %917 = vmatprep.subr.bf16.mxu0 0
      %918 = vmatpush1.bf16.msra.mxu0 0
      %919 = vmatprep.subr.bf16.mxu0 0
      %920 = vmatpush1.bf16.msra.mxu0 0
      %921 = vmatprep.subr.bf16.mxu0 0
      %922 = vmatpush1.bf16.msra.mxu0 0
      %923 = vmatprep.subr.bf16.mxu0 0
      %924 = vmatpush1.bf16.msra.mxu0 0
      %925 = vmatprep.subr.bf16.mxu0 0
      %926 = vmatpush1.bf16.msra.mxu0 0
      %927 = vmatprep.subr.bf16.mxu0 0
      %928 = vmatpush1.bf16.msra.mxu0 0
      %929 = vmatprep.subr.bf16.mxu0 0
      %930 = vmatpush1.bf16.msra.mxu0 0
      %931 = vmatprep.mubr.bf16.mxu0 0
      %932 = vmatmul.mubr.bf16.gmra.mrb[0].mxu0 %v897
      %v933 = vpop.f32.mrb[0].mxu0
      %v934 = vadd.f32 %v885, %v933
      %v935 = vpop.f32.mrb[0].mxu0
      %v936 = vpop.f32.mrb[0].mxu0
      %v937 = vadd.f32 %v888, %v936
      %v938 = vpop.f32.mrb[0].mxu0
      %939 = vdwg.mxu0
      %s940 = scalar_lea.vmem %s3, 64
      %v941 = vld [vmem:[%s940] sm:$0xf]
      %v942 = vld [vmem:[%s940 + $0x4] sm:$0xf]
      %v945 = vunpack.c.l.b16 %v941
      %v946 = vunpack.c.l.b16 %v942
      %v947 = vpack.c.b16 %v946, %v945
      %v949 = vsel %vm400, %v947, 0
      %951 = vmatprep.subr.bf16.mxu0 0
      %952 = vmatpush1.bf16.msra.mxu0 %v835
      %953 = vmatprep.subr.bf16.mxu0 0
      %954 = vmatpush1.bf16.msra.mxu0 0
      %955 = vmatprep.subr.bf16.mxu0 0
      %956 = vmatpush1.bf16.msra.mxu0 0
      %957 = vmatprep.subr.bf16.mxu0 0
      %958 = vmatpush1.bf16.msra.mxu0 0
      %959 = vmatprep.subr.bf16.mxu0 0
      %960 = vmatpush1.bf16.msra.mxu0 0
      %961 = vmatprep.subr.bf16.mxu0 0
      %962 = vmatpush1.bf16.msra.mxu0 0
      %963 = vmatprep.subr.bf16.mxu0 0
      %964 = vmatpush1.bf16.msra.mxu0 0
      %965 = vmatprep.subr.bf16.mxu0 0
      %966 = vmatpush1.bf16.msra.mxu0 0
      %967 = vmatprep.subr.bf16.mxu0 0
      %968 = vmatpush1.bf16.msra.mxu0 0
      %969 = vmatprep.subr.bf16.mxu0 0
      %970 = vmatpush1.bf16.msra.mxu0 0
      %971 = vmatprep.subr.bf16.mxu0 0
      %972 = vmatpush1.bf16.msra.mxu0 0
      %973 = vmatprep.subr.bf16.mxu0 0
      %974 = vmatpush1.bf16.msra.mxu0 0
      %975 = vmatprep.subr.bf16.mxu0 0
      %976 = vmatpush1.bf16.msra.mxu0 0
      %977 = vmatprep.subr.bf16.mxu0 0
      %978 = vmatpush1.bf16.msra.mxu0 0
      %979 = vmatprep.subr.bf16.mxu0 0
      %980 = vmatpush1.bf16.msra.mxu0 0
      %981 = vmatprep.subr.bf16.mxu0 0
      %982 = vmatpush1.bf16.msra.mxu0 0
      %983 = vmatprep.mubr.bf16.mxu0 0
      %984 = vmatmul.mubr.bf16.gmra.mrb[0].mxu0 %v949
      %v985 = vpop.f32.mrb[0].mxu0
      %v986 = vadd.f32 0.0, %v985
      %v987 = vpop.f32.mrb[0].mxu0
      %v988 = vpop.f32.mrb[0].mxu0
      %v989 = vadd.f32 0.0, %v988
      %v990 = vpop.f32.mrb[0].mxu0
      %991 = vdwg.mxu0
      %v992 = vadd.f32 %v934, %v986
      %v993 = vadd.f32 %v937, %v989
      %v994 = vadd.f32 %v992, %v814
      %v995 = vadd.f32 %v993, %v815
      %vm996 = vcmp.ge.f32.partialorder %v994, 0.0
      %vm997 = vcmp.ge.f32.partialorder %v995, 0.0
      %v998 = vmul.f32 %v994, 0.2
      %v999 = vmul.f32 %v995, 0.2
      %v1000 = vsel %vm996, %v994, %v998
      %v1001 = vsel %vm997, %v995, %v999
      %v1002 = vpack.c.bf16 %v1001, %v1000
      %vm1003 = vcmp.ge.s32.totalorder %v261, 27
      %1004 = vrot.lane.b32.xlu0 %v1000, 27
      %v1005 = vpop.permute.xlu0 %1004
      %1006 = vrot.lane.b32.xlu0 %v1001, 27
      %v1007 = vpop.permute.xlu0 %1006
      %v1008 = vsel %vm1003, 1, 0
      %vm1009 = vcmp.eq.s32.totalorder %v1008, 1
      %v1010 = vsel %vm1009, %v1005, 0.0
      %v1011 = vsel %vm1009, %v1007, 0.0
      %v1012 = vpack.c.bf16 %v1011, %v1010
      %vm1013 = vcmp.lt.s32.totalorder %v261, 101
      %1014 = vrot.lane.b32.xlu0 %v1000, 101
      %v1015 = vpop.permute.xlu0 %1014
      %1016 = vrot.lane.b32.xlu0 %v1001, 101
      %v1017 = vpop.permute.xlu0 %1016
      %v1018 = vsel %vm1013, 1, 0
      %vm1019 = vcmp.eq.s32.totalorder %v1018, 1
      %v1020 = vsel %vm1019, %v1015, 0.0
      %v1021 = vsel %vm1019, %v1017, 0.0
      %v1022 = vpack.c.bf16 %v1021, %v1020
      %s1023 = scalar_lea.vmem %s3, 72
      %v1024 = vld [vmem:[%s1023] sm:$0xf]
      %v1025 = vld [vmem:[%s1023 + $0x4] sm:$0xf]
      %s1026 = scalar_lea.vmem %s3, 80
      %v1027 = vld [vmem:[%s1026] sm:$0xf]
      %v1028 = vld [vmem:[%s1026 + $0x4] sm:$0xf]
      %v1031 = vunpack.c.l.b16 %v1027
      %v1032 = vunpack.c.l.b16 %v1028
      %v1033 = vpack.c.b16 %v1032, %v1031
      %v1035 = vsel %vm400, %v1033, 0
      %1037 = vmatprep.subr.bf16.mxu0 0
      %1038 = vmatpush1.bf16.msra.mxu0 %v1002
      %1039 = vmatprep.subr.bf16.mxu0 0
      %1040 = vmatpush1.bf16.msra.mxu0 0
      %1041 = vmatprep.subr.bf16.mxu0 0
      %1042 = vmatpush1.bf16.msra.mxu0 0
      %1043 = vmatprep.subr.bf16.mxu0 0
      %1044 = vmatpush1.bf16.msra.mxu0 0
      %1045 = vmatprep.subr.bf16.mxu0 0
      %1046 = vmatpush1.bf16.msra.mxu0 0
      %1047 = vmatprep.subr.bf16.mxu0 0
      %1048 = vmatpush1.bf16.msra.mxu0 0
      %1049 = vmatprep.subr.bf16.mxu0 0
      %1050 = vmatpush1.bf16.msra.mxu0 0
      %1051 = vmatprep.subr.bf16.mxu0 0
      %1052 = vmatpush1.bf16.msra.mxu0 0
      %1053 = vmatprep.subr.bf16.mxu0 0
      %1054 = vmatpush1.bf16.msra.mxu0 0
      %1055 = vmatprep.subr.bf16.mxu0 0
      %1056 = vmatpush1.bf16.msra.mxu0 0
      %1057 = vmatprep.subr.bf16.mxu0 0
      %1058 = vmatpush1.bf16.msra.mxu0 0
      %1059 = vmatprep.subr.bf16.mxu0 0
      %1060 = vmatpush1.bf16.msra.mxu0 0
      %1061 = vmatprep.subr.bf16.mxu0 0
      %1062 = vmatpush1.bf16.msra.mxu0 0
      %1063 = vmatprep.subr.bf16.mxu0 0
      %1064 = vmatpush1.bf16.msra.mxu0 0
      %1065 = vmatprep.subr.bf16.mxu0 0
      %1066 = vmatpush1.bf16.msra.mxu0 0
      %1067 = vmatprep.subr.bf16.mxu0 0
      %1068 = vmatpush1.bf16.msra.mxu0 0
      %1069 = vmatprep.mubr.bf16.mxu0 0
      %1070 = vmatmul.mubr.bf16.gmra.mrb[0].mxu0 %v1035
      %v1071 = vpop.f32.mrb[0].mxu0
      %v1072 = vadd.f32 0.0, %v1071
      %v1073 = vpop.f32.mrb[0].mxu0
      %v1074 = vpop.f32.mrb[0].mxu0
      %v1075 = vadd.f32 0.0, %v1074
      %v1076 = vpop.f32.mrb[0].mxu0
      %1077 = vdwg.mxu0
      %v1080 = vunpack.c.l.b16 %v1024
      %v1081 = vunpack.c.l.b16 %v1025
      %v1082 = vpack.c.b16 %v1081, %v1080
      %v1084 = vsel %vm400, %v1082, 0
      %1086 = vmatprep.subr.bf16.mxu0 0
      %1087 = vmatpush1.bf16.msra.mxu0 %v1012
      %1088 = vmatprep.subr.bf16.mxu0 0
      %1089 = vmatpush1.bf16.msra.mxu0 0
      %1090 = vmatprep.subr.bf16.mxu0 0
      %1091 = vmatpush1.bf16.msra.mxu0 0
      %1092 = vmatprep.subr.bf16.mxu0 0
      %1093 = vmatpush1.bf16.msra.mxu0 0
      %1094 = vmatprep.subr.bf16.mxu0 0
      %1095 = vmatpush1.bf16.msra.mxu0 0
      %1096 = vmatprep.subr.bf16.mxu0 0
      %1097 = vmatpush1.bf16.msra.mxu0 0
      %1098 = vmatprep.subr.bf16.mxu0 0
      %1099 = vmatpush1.bf16.msra.mxu0 0
      %1100 = vmatprep.subr.bf16.mxu0 0
      %1101 = vmatpush1.bf16.msra.mxu0 0
      %1102 = vmatprep.subr.bf16.mxu0 0
      %1103 = vmatpush1.bf16.msra.mxu0 0
      %1104 = vmatprep.subr.bf16.mxu0 0
      %1105 = vmatpush1.bf16.msra.mxu0 0
      %1106 = vmatprep.subr.bf16.mxu0 0
      %1107 = vmatpush1.bf16.msra.mxu0 0
      %1108 = vmatprep.subr.bf16.mxu0 0
      %1109 = vmatpush1.bf16.msra.mxu0 0
      %1110 = vmatprep.subr.bf16.mxu0 0
      %1111 = vmatpush1.bf16.msra.mxu0 0
      %1112 = vmatprep.subr.bf16.mxu0 0
      %1113 = vmatpush1.bf16.msra.mxu0 0
      %1114 = vmatprep.subr.bf16.mxu0 0
      %1115 = vmatpush1.bf16.msra.mxu0 0
      %1116 = vmatprep.subr.bf16.mxu0 0
      %1117 = vmatpush1.bf16.msra.mxu0 0
      %1118 = vmatprep.mubr.bf16.mxu0 0
      %1119 = vmatmul.mubr.bf16.gmra.mrb[0].mxu0 %v1084
      %v1120 = vpop.f32.mrb[0].mxu0
      %v1121 = vadd.f32 %v1072, %v1120
      %v1122 = vpop.f32.mrb[0].mxu0
      %v1123 = vpop.f32.mrb[0].mxu0
      %v1124 = vadd.f32 %v1075, %v1123
      %v1125 = vpop.f32.mrb[0].mxu0
      %1126 = vdwg.mxu0
      %s1127 = scalar_lea.vmem %s3, 88
      %v1128 = vld [vmem:[%s1127] sm:$0xf]
      %v1129 = vld [vmem:[%s1127 + $0x4] sm:$0xf]
      %v1132 = vunpack.c.l.b16 %v1128
      %v1133 = vunpack.c.l.b16 %v1129
      %v1134 = vpack.c.b16 %v1133, %v1132
      %v1136 = vsel %vm400, %v1134, 0
      %1138 = vmatprep.subr.bf16.mxu0 0
      %1139 = vmatpush1.bf16.msra.mxu0 %v1022
      %1140 = vmatprep.subr.bf16.mxu0 0
      %1141 = vmatpush1.bf16.msra.mxu0 0
      %1142 = vmatprep.subr.bf16.mxu0 0
      %1143 = vmatpush1.bf16.msra.mxu0 0
      %1144 = vmatprep.subr.bf16.mxu0 0
      %1145 = vmatpush1.bf16.msra.mxu0 0
      %1146 = vmatprep.subr.bf16.mxu0 0
      %1147 = vmatpush1.bf16.msra.mxu0 0
      %1148 = vmatprep.subr.bf16.mxu0 0
      %1149 = vmatpush1.bf16.msra.mxu0 0
      %1150 = vmatprep.subr.bf16.mxu0 0
      %1151 = vmatpush1.bf16.msra.mxu0 0
      %1152 = vmatprep.subr.bf16.mxu0 0
      %1153 = vmatpush1.bf16.msra.mxu0 0
      %1154 = vmatprep.subr.bf16.mxu0 0
      %1155 = vmatpush1.bf16.msra.mxu0 0
      %1156 = vmatprep.subr.bf16.mxu0 0
      %1157 = vmatpush1.bf16.msra.mxu0 0
      %1158 = vmatprep.subr.bf16.mxu0 0
      %1159 = vmatpush1.bf16.msra.mxu0 0
      %1160 = vmatprep.subr.bf16.mxu0 0
      %1161 = vmatpush1.bf16.msra.mxu0 0
      %1162 = vmatprep.subr.bf16.mxu0 0
      %1163 = vmatpush1.bf16.msra.mxu0 0
      %1164 = vmatprep.subr.bf16.mxu0 0
      %1165 = vmatpush1.bf16.msra.mxu0 0
      %1166 = vmatprep.subr.bf16.mxu0 0
      %1167 = vmatpush1.bf16.msra.mxu0 0
      %1168 = vmatprep.subr.bf16.mxu0 0
      %1169 = vmatpush1.bf16.msra.mxu0 0
      %1170 = vmatprep.mubr.bf16.mxu0 0
      %1171 = vmatmul.mubr.bf16.gmra.mrb[0].mxu0 %v1136
      %v1172 = vpop.f32.mrb[0].mxu0
      %v1173 = vadd.f32 0.0, %v1172
      %v1174 = vpop.f32.mrb[0].mxu0
      %v1175 = vpop.f32.mrb[0].mxu0
      %v1176 = vadd.f32 0.0, %v1175
      %v1177 = vpop.f32.mrb[0].mxu0
      %1178 = vdwg.mxu0
      %v1179 = vadd.f32 %v1121, %v1173
      %v1180 = vadd.f32 %v1124, %v1176
      %v1181 = vadd.f32 %v1179, %v1000
      %v1182 = vadd.f32 %v1180, %v1001
      %vm1183 = vcmp.ge.f32.partialorder %v1181, 0.0
      %vm1184 = vcmp.ge.f32.partialorder %v1182, 0.0
      %v1185 = vmul.f32 %v1181, 0.2
      %v1186 = vmul.f32 %v1182, 0.2
      %v1187 = vsel %vm1183, %v1181, %v1185
      %v1188 = vsel %vm1184, %v1182, %v1186
      %v1189 = vpack.c.bf16 %v1188, %v1187
      %vm1190 = vcmp.ge.s32.totalorder %v261, 81
      %1191 = vrot.lane.b32.xlu0 %v1187, 81
      %v1192 = vpop.permute.xlu0 %1191
      %1193 = vrot.lane.b32.xlu0 %v1188, 81
      %v1194 = vpop.permute.xlu0 %1193
      %v1195 = vsel %vm1190, 1, 0
      %vm1196 = vcmp.eq.s32.totalorder %v1195, 1
      %v1197 = vsel %vm1196, %v1192, 0.0
      %v1198 = vsel %vm1196, %v1194, 0.0
      %v1199 = vpack.c.bf16 %v1198, %v1197
      %vm1200 = vcmp.lt.s32.totalorder %v261, 47
      %1201 = vrot.lane.b32.xlu0 %v1187, 47
      %v1202 = vpop.permute.xlu0 %1201
      %1203 = vrot.lane.b32.xlu0 %v1188, 47
      %v1204 = vpop.permute.xlu0 %1203
      %v1205 = vsel %vm1200, 1, 0
      %vm1206 = vcmp.eq.s32.totalorder %v1205, 1
      %v1207 = vsel %vm1206, %v1202, 0.0
      %v1208 = vsel %vm1206, %v1204, 0.0
      %v1209 = vpack.c.bf16 %v1208, %v1207
      %s1210 = scalar_lea.vmem %s3, 96
      %v1211 = vld [vmem:[%s1210] sm:$0xf]
      %v1212 = vld [vmem:[%s1210 + $0x4] sm:$0xf]
      %s1213 = scalar_lea.vmem %s3, 104
      %v1214 = vld [vmem:[%s1213] sm:$0xf]
      %v1215 = vld [vmem:[%s1213 + $0x4] sm:$0xf]
      %v1218 = vunpack.c.l.b16 %v1214
      %v1219 = vunpack.c.l.b16 %v1215
      %v1220 = vpack.c.b16 %v1219, %v1218
      %v1222 = vsel %vm400, %v1220, 0
      %1224 = vmatprep.subr.bf16.mxu0 0
      %1225 = vmatpush1.bf16.msra.mxu0 %v1189
      %1226 = vmatprep.subr.bf16.mxu0 0
      %1227 = vmatpush1.bf16.msra.mxu0 0
      %1228 = vmatprep.subr.bf16.mxu0 0
      %1229 = vmatpush1.bf16.msra.mxu0 0
      %1230 = vmatprep.subr.bf16.mxu0 0
      %1231 = vmatpush1.bf16.msra.mxu0 0
      %1232 = vmatprep.subr.bf16.mxu0 0
      %1233 = vmatpush1.bf16.msra.mxu0 0
      %1234 = vmatprep.subr.bf16.mxu0 0
      %1235 = vmatpush1.bf16.msra.mxu0 0
      %1236 = vmatprep.subr.bf16.mxu0 0
      %1237 = vmatpush1.bf16.msra.mxu0 0
      %1238 = vmatprep.subr.bf16.mxu0 0
      %1239 = vmatpush1.bf16.msra.mxu0 0
      %1240 = vmatprep.subr.bf16.mxu0 0
      %1241 = vmatpush1.bf16.msra.mxu0 0
      %1242 = vmatprep.subr.bf16.mxu0 0
      %1243 = vmatpush1.bf16.msra.mxu0 0
      %1244 = vmatprep.subr.bf16.mxu0 0
      %1245 = vmatpush1.bf16.msra.mxu0 0
      %1246 = vmatprep.subr.bf16.mxu0 0
      %1247 = vmatpush1.bf16.msra.mxu0 0
      %1248 = vmatprep.subr.bf16.mxu0 0
      %1249 = vmatpush1.bf16.msra.mxu0 0
      %1250 = vmatprep.subr.bf16.mxu0 0
      %1251 = vmatpush1.bf16.msra.mxu0 0
      %1252 = vmatprep.subr.bf16.mxu0 0
      %1253 = vmatpush1.bf16.msra.mxu0 0
      %1254 = vmatprep.subr.bf16.mxu0 0
      %1255 = vmatpush1.bf16.msra.mxu0 0
      %1256 = vmatprep.mubr.bf16.mxu0 0
      %1257 = vmatmul.mubr.bf16.gmra.mrb[0].mxu0 %v1222
      %v1258 = vpop.f32.mrb[0].mxu0
      %v1259 = vadd.f32 0.0, %v1258
      %v1260 = vpop.f32.mrb[0].mxu0
      %v1261 = vpop.f32.mrb[0].mxu0
      %v1262 = vadd.f32 0.0, %v1261
      %v1263 = vpop.f32.mrb[0].mxu0
      %1264 = vdwg.mxu0
      %v1267 = vunpack.c.l.b16 %v1211
      %v1268 = vunpack.c.l.b16 %v1212
      %v1269 = vpack.c.b16 %v1268, %v1267
      %v1271 = vsel %vm400, %v1269, 0
      %1273 = vmatprep.subr.bf16.mxu0 0
      %1274 = vmatpush1.bf16.msra.mxu0 %v1199
      %1275 = vmatprep.subr.bf16.mxu0 0
      %1276 = vmatpush1.bf16.msra.mxu0 0
      %1277 = vmatprep.subr.bf16.mxu0 0
      %1278 = vmatpush1.bf16.msra.mxu0 0
      %1279 = vmatprep.subr.bf16.mxu0 0
      %1280 = vmatpush1.bf16.msra.mxu0 0
      %1281 = vmatprep.subr.bf16.mxu0 0
      %1282 = vmatpush1.bf16.msra.mxu0 0
      %1283 = vmatprep.subr.bf16.mxu0 0
      %1284 = vmatpush1.bf16.msra.mxu0 0
      %1285 = vmatprep.subr.bf16.mxu0 0
      %1286 = vmatpush1.bf16.msra.mxu0 0
      %1287 = vmatprep.subr.bf16.mxu0 0
      %1288 = vmatpush1.bf16.msra.mxu0 0
      %1289 = vmatprep.subr.bf16.mxu0 0
      %1290 = vmatpush1.bf16.msra.mxu0 0
      %1291 = vmatprep.subr.bf16.mxu0 0
      %1292 = vmatpush1.bf16.msra.mxu0 0
      %1293 = vmatprep.subr.bf16.mxu0 0
      %1294 = vmatpush1.bf16.msra.mxu0 0
      %1295 = vmatprep.subr.bf16.mxu0 0
      %1296 = vmatpush1.bf16.msra.mxu0 0
      %1297 = vmatprep.subr.bf16.mxu0 0
      %1298 = vmatpush1.bf16.msra.mxu0 0
      %1299 = vmatprep.subr.bf16.mxu0 0
      %1300 = vmatpush1.bf16.msra.mxu0 0
      %1301 = vmatprep.subr.bf16.mxu0 0
      %1302 = vmatpush1.bf16.msra.mxu0 0
      %1303 = vmatprep.subr.bf16.mxu0 0
      %1304 = vmatpush1.bf16.msra.mxu0 0
      %1305 = vmatprep.mubr.bf16.mxu0 0
      %1306 = vmatmul.mubr.bf16.gmra.mrb[0].mxu0 %v1271
      %v1307 = vpop.f32.mrb[0].mxu0
      %v1308 = vadd.f32 %v1259, %v1307
      %v1309 = vpop.f32.mrb[0].mxu0
      %v1310 = vpop.f32.mrb[0].mxu0
      %v1311 = vadd.f32 %v1262, %v1310
      %v1312 = vpop.f32.mrb[0].mxu0
      %1313 = vdwg.mxu0
      %s1314 = scalar_lea.vmem %s3, 112
      %v1315 = vld [vmem:[%s1314] sm:$0xf]
      %v1316 = vld [vmem:[%s1314 + $0x4] sm:$0xf]
      %v1319 = vunpack.c.l.b16 %v1315
      %v1320 = vunpack.c.l.b16 %v1316
      %v1321 = vpack.c.b16 %v1320, %v1319
      %v1323 = vsel %vm400, %v1321, 0
      %1325 = vmatprep.subr.bf16.mxu0 0
      %1326 = vmatpush1.bf16.msra.mxu0 %v1209
      %1327 = vmatprep.subr.bf16.mxu0 0
      %1328 = vmatpush1.bf16.msra.mxu0 0
      %1329 = vmatprep.subr.bf16.mxu0 0
      %1330 = vmatpush1.bf16.msra.mxu0 0
      %1331 = vmatprep.subr.bf16.mxu0 0
      %1332 = vmatpush1.bf16.msra.mxu0 0
      %1333 = vmatprep.subr.bf16.mxu0 0
      %1334 = vmatpush1.bf16.msra.mxu0 0
      %1335 = vmatprep.subr.bf16.mxu0 0
      %1336 = vmatpush1.bf16.msra.mxu0 0
      %1337 = vmatprep.subr.bf16.mxu0 0
      %1338 = vmatpush1.bf16.msra.mxu0 0
      %1339 = vmatprep.subr.bf16.mxu0 0
      %1340 = vmatpush1.bf16.msra.mxu0 0
      %1341 = vmatprep.subr.bf16.mxu0 0
      %1342 = vmatpush1.bf16.msra.mxu0 0
      %1343 = vmatprep.subr.bf16.mxu0 0
      %1344 = vmatpush1.bf16.msra.mxu0 0
      %1345 = vmatprep.subr.bf16.mxu0 0
      %1346 = vmatpush1.bf16.msra.mxu0 0
      %1347 = vmatprep.subr.bf16.mxu0 0
      %1348 = vmatpush1.bf16.msra.mxu0 0
      %1349 = vmatprep.subr.bf16.mxu0 0
      %1350 = vmatpush1.bf16.msra.mxu0 0
      %1351 = vmatprep.subr.bf16.mxu0 0
      %1352 = vmatpush1.bf16.msra.mxu0 0
      %1353 = vmatprep.subr.bf16.mxu0 0
      %1354 = vmatpush1.bf16.msra.mxu0 0
      %1355 = vmatprep.subr.bf16.mxu0 0
      %1356 = vmatpush1.bf16.msra.mxu0 0
      %1357 = vmatprep.mubr.bf16.mxu0 0
      %1358 = vmatmul.mubr.bf16.gmra.mrb[0].mxu0 %v1323
      %v1359 = vpop.f32.mrb[0].mxu0
      %v1360 = vadd.f32 0.0, %v1359
      %v1361 = vpop.f32.mrb[0].mxu0
      %v1362 = vpop.f32.mrb[0].mxu0
      %v1363 = vadd.f32 0.0, %v1362
      %v1364 = vpop.f32.mrb[0].mxu0
      %1365 = vdwg.mxu0
      %v1366 = vadd.f32 %v1308, %v1360
      %v1367 = vadd.f32 %v1311, %v1363
      %v1368 = vadd.f32 %v1366, %v1187
      %v1369 = vadd.f32 %v1367, %v1188
      %vm1370 = vcmp.ge.f32.partialorder %v1368, 0.0
      %vm1371 = vcmp.ge.f32.partialorder %v1369, 0.0
      %v1372 = vmul.f32 %v1368, 0.2
      %v1373 = vmul.f32 %v1369, 0.2
      %v1374 = vsel %vm1370, %v1368, %v1372
      %v1375 = vsel %vm1371, %v1369, %v1373
      %v1376 = vpack.c.bf16 %v1375, %v1374
      %1377 = vrot.lane.b32.xlu0 %v1374, 1
      %v1378 = vpop.permute.xlu0 %1377
      %1379 = vrot.lane.b32.xlu0 %v1375, 1
      %v1380 = vpop.permute.xlu0 %1379
      %v1381 = vsel %vm451, %v1378, 0.0
      %v1382 = vsel %vm451, %v1380, 0.0
      %v1383 = vpack.c.bf16 %v1382, %v1381
      %1384 = vrot.lane.b32.xlu0 %v1374, 127
      %v1385 = vpop.permute.xlu0 %1384
      %1386 = vrot.lane.b32.xlu0 %v1375, 127
      %v1387 = vpop.permute.xlu0 %1386
      %v1388 = vsel %vm461, %v1385, 0.0
      %v1389 = vsel %vm461, %v1387, 0.0
      %v1390 = vpack.c.bf16 %v1389, %v1388
      %s1391 = scalar_lea.vmem %s3, 120
      %v1392 = vld [vmem:[%s1391] sm:$0xf]
      %v1393 = vld [vmem:[%s1391 + $0x4] sm:$0xf]
      %s1394 = scalar_lea.vmem %s3, 128
      %v1395 = vld [vmem:[%s1394] sm:$0xf]
      %v1396 = vld [vmem:[%s1394 + $0x4] sm:$0xf]
      %v1399 = vunpack.c.l.b16 %v1395
      %v1400 = vunpack.c.l.b16 %v1396
      %v1401 = vpack.c.b16 %v1400, %v1399
      %v1403 = vsel %vm400, %v1401, 0
      %1405 = vmatprep.subr.bf16.mxu0 0
      %1406 = vmatpush1.bf16.msra.mxu0 %v1376
      %1407 = vmatprep.subr.bf16.mxu0 0
      %1408 = vmatpush1.bf16.msra.mxu0 0
      %1409 = vmatprep.subr.bf16.mxu0 0
      %1410 = vmatpush1.bf16.msra.mxu0 0
      %1411 = vmatprep.subr.bf16.mxu0 0
      %1412 = vmatpush1.bf16.msra.mxu0 0
      %1413 = vmatprep.subr.bf16.mxu0 0
      %1414 = vmatpush1.bf16.msra.mxu0 0
      %1415 = vmatprep.subr.bf16.mxu0 0
      %1416 = vmatpush1.bf16.msra.mxu0 0
      %1417 = vmatprep.subr.bf16.mxu0 0
      %1418 = vmatpush1.bf16.msra.mxu0 0
      %1419 = vmatprep.subr.bf16.mxu0 0
      %1420 = vmatpush1.bf16.msra.mxu0 0
      %1421 = vmatprep.subr.bf16.mxu0 0
      %1422 = vmatpush1.bf16.msra.mxu0 0
      %1423 = vmatprep.subr.bf16.mxu0 0
      %1424 = vmatpush1.bf16.msra.mxu0 0
      %1425 = vmatprep.subr.bf16.mxu0 0
      %1426 = vmatpush1.bf16.msra.mxu0 0
      %1427 = vmatprep.subr.bf16.mxu0 0
      %1428 = vmatpush1.bf16.msra.mxu0 0
      %1429 = vmatprep.subr.bf16.mxu0 0
      %1430 = vmatpush1.bf16.msra.mxu0 0
      %1431 = vmatprep.subr.bf16.mxu0 0
      %1432 = vmatpush1.bf16.msra.mxu0 0
      %1433 = vmatprep.subr.bf16.mxu0 0
      %1434 = vmatpush1.bf16.msra.mxu0 0
      %1435 = vmatprep.subr.bf16.mxu0 0
      %1436 = vmatpush1.bf16.msra.mxu0 0
      %1437 = vmatprep.mubr.bf16.mxu0 0
      %1438 = vmatmul.mubr.bf16.gmra.mrb[0].mxu0 %v1403
      %v1439 = vpop.f32.mrb[0].mxu0
      %v1440 = vadd.f32 0.0, %v1439
      %v1441 = vpop.f32.mrb[0].mxu0
      %v1442 = vpop.f32.mrb[0].mxu0
      %v1443 = vadd.f32 0.0, %v1442
      %v1444 = vpop.f32.mrb[0].mxu0
      %1445 = vdwg.mxu0
      %v1448 = vunpack.c.l.b16 %v1392
      %v1449 = vunpack.c.l.b16 %v1393
      %v1450 = vpack.c.b16 %v1449, %v1448
      %v1452 = vsel %vm400, %v1450, 0
      %1454 = vmatprep.subr.bf16.mxu0 0
      %1455 = vmatpush1.bf16.msra.mxu0 %v1383
      %1456 = vmatprep.subr.bf16.mxu0 0
      %1457 = vmatpush1.bf16.msra.mxu0 0
      %1458 = vmatprep.subr.bf16.mxu0 0
      %1459 = vmatpush1.bf16.msra.mxu0 0
      %1460 = vmatprep.subr.bf16.mxu0 0
      %1461 = vmatpush1.bf16.msra.mxu0 0
      %1462 = vmatprep.subr.bf16.mxu0 0
      %1463 = vmatpush1.bf16.msra.mxu0 0
      %1464 = vmatprep.subr.bf16.mxu0 0
      %1465 = vmatpush1.bf16.msra.mxu0 0
      %1466 = vmatprep.subr.bf16.mxu0 0
      %1467 = vmatpush1.bf16.msra.mxu0 0
      %1468 = vmatprep.subr.bf16.mxu0 0
      %1469 = vmatpush1.bf16.msra.mxu0 0
      %1470 = vmatprep.subr.bf16.mxu0 0
      %1471 = vmatpush1.bf16.msra.mxu0 0
      %1472 = vmatprep.subr.bf16.mxu0 0
      %1473 = vmatpush1.bf16.msra.mxu0 0
      %1474 = vmatprep.subr.bf16.mxu0 0
      %1475 = vmatpush1.bf16.msra.mxu0 0
      %1476 = vmatprep.subr.bf16.mxu0 0
      %1477 = vmatpush1.bf16.msra.mxu0 0
      %1478 = vmatprep.subr.bf16.mxu0 0
      %1479 = vmatpush1.bf16.msra.mxu0 0
      %1480 = vmatprep.subr.bf16.mxu0 0
      %1481 = vmatpush1.bf16.msra.mxu0 0
      %1482 = vmatprep.subr.bf16.mxu0 0
      %1483 = vmatpush1.bf16.msra.mxu0 0
      %1484 = vmatprep.subr.bf16.mxu0 0
      %1485 = vmatpush1.bf16.msra.mxu0 0
      %1486 = vmatprep.mubr.bf16.mxu0 0
      %1487 = vmatmul.mubr.bf16.gmra.mrb[0].mxu0 %v1452
      %v1488 = vpop.f32.mrb[0].mxu0
      %v1489 = vadd.f32 %v1440, %v1488
      %v1490 = vpop.f32.mrb[0].mxu0
      %v1491 = vpop.f32.mrb[0].mxu0
      %v1492 = vadd.f32 %v1443, %v1491
      %v1493 = vpop.f32.mrb[0].mxu0
      %1494 = vdwg.mxu0
      %s1495 = scalar_lea.vmem %s3, 136
      %v1496 = vld [vmem:[%s1495] sm:$0xf]
      %v1497 = vld [vmem:[%s1495 + $0x4] sm:$0xf]
      %v1500 = vunpack.c.l.b16 %v1496
      %v1501 = vunpack.c.l.b16 %v1497
      %v1502 = vpack.c.b16 %v1501, %v1500
      %v1504 = vsel %vm400, %v1502, 0
      %1506 = vmatprep.subr.bf16.mxu0 0
      %1507 = vmatpush1.bf16.msra.mxu0 %v1390
      %1508 = vmatprep.subr.bf16.mxu0 0
      %1509 = vmatpush1.bf16.msra.mxu0 0
      %1510 = vmatprep.subr.bf16.mxu0 0
      %1511 = vmatpush1.bf16.msra.mxu0 0
      %1512 = vmatprep.subr.bf16.mxu0 0
      %1513 = vmatpush1.bf16.msra.mxu0 0
      %1514 = vmatprep.subr.bf16.mxu0 0
      %1515 = vmatpush1.bf16.msra.mxu0 0
      %1516 = vmatprep.subr.bf16.mxu0 0
      %1517 = vmatpush1.bf16.msra.mxu0 0
      %1518 = vmatprep.subr.bf16.mxu0 0
      %1519 = vmatpush1.bf16.msra.mxu0 0
      %1520 = vmatprep.subr.bf16.mxu0 0
      %1521 = vmatpush1.bf16.msra.mxu0 0
      %1522 = vmatprep.subr.bf16.mxu0 0
      %1523 = vmatpush1.bf16.msra.mxu0 0
      %1524 = vmatprep.subr.bf16.mxu0 0
      %1525 = vmatpush1.bf16.msra.mxu0 0
      %1526 = vmatprep.subr.bf16.mxu0 0
      %1527 = vmatpush1.bf16.msra.mxu0 0
      %1528 = vmatprep.subr.bf16.mxu0 0
      %1529 = vmatpush1.bf16.msra.mxu0 0
      %1530 = vmatprep.subr.bf16.mxu0 0
      %1531 = vmatpush1.bf16.msra.mxu0 0
      %1532 = vmatprep.subr.bf16.mxu0 0
      %1533 = vmatpush1.bf16.msra.mxu0 0
      %1534 = vmatprep.subr.bf16.mxu0 0
      %1535 = vmatpush1.bf16.msra.mxu0 0
      %1536 = vmatprep.subr.bf16.mxu0 0
      %1537 = vmatpush1.bf16.msra.mxu0 0
      %1538 = vmatprep.mubr.bf16.mxu0 0
      %1539 = vmatmul.mubr.bf16.gmra.mrb[0].mxu0 %v1504
      %v1540 = vpop.f32.mrb[0].mxu0
      %v1541 = vadd.f32 0.0, %v1540
      %v1542 = vpop.f32.mrb[0].mxu0
      %v1543 = vpop.f32.mrb[0].mxu0
      %v1544 = vadd.f32 0.0, %v1543
      %v1545 = vpop.f32.mrb[0].mxu0
      %1546 = vdwg.mxu0
      %v1547 = vadd.f32 %v1489, %v1541
      %v1548 = vadd.f32 %v1492, %v1544
      %v1549 = vadd.f32 %v1547, %v1374
      %v1550 = vadd.f32 %v1548, %v1375
      %vm1551 = vcmp.ge.f32.partialorder %v1549, 0.0
      %vm1552 = vcmp.ge.f32.partialorder %v1550, 0.0
      %v1553 = vmul.f32 %v1549, 0.2
      %v1554 = vmul.f32 %v1550, 0.2
      %v1555 = vsel %vm1551, %v1549, %v1553
      %v1556 = vsel %vm1552, %v1550, %v1554
      %1557 = vmax.xlane.f32.xlu0 %v1555
      %v1558 = vpop.xlane.xlu0 %1557
      %1559 = vmax.xlane.f32.xlu0 %v1556
      %v1560 = vpop.xlane.xlu0 %1559
      %vm1561 = vcmask 7168
      %1562 = vst.msk [vmem:[%s258] sm:$0xff] %vm1561, %v1558
      %1563 = vst.msk [vmem:[%s258 + $0x8] sm:$0xff] %vm1561, %v1560
      %v1564 = vld [vmem:[%s4] sm:$0xf]
      %v1565 = vld [vmem:[%s4 + $0x4] sm:$0xf]
      %v1566 = vld [vmem:[%s4 + $0x8] sm:$0xf]
      %v1567 = vld [vmem:[%s4 + $0xc] sm:$0xf]
      %v1568 = vpack.c.bf16 %v1556, %v1555
      %v1573 = vunpack.c.l.b16 %v1564
      %v1574 = vunpack.c.l.b16 %v1565
      %v1575 = vunpack.c.l.b16 %v1566
      %v1576 = vunpack.c.l.b16 %v1567
      %v1577 = vpack.c.b16 %v1574, %v1573
      %v1578 = vpack.c.b16 %v1576, %v1575
      %v1580 = vsel %vm400, %v1577, 0
      %v1583 = vsel %vm400, %v1578, 0
      %1585 = vmatprep.subr.bf16.mxu0 0
      %1586 = vmatpush1.bf16.msra.mxu0 %v1568
      %1587 = vmatprep.subr.bf16.mxu0 0
      %1588 = vmatpush1.bf16.msra.mxu0 0
      %1589 = vmatprep.subr.bf16.mxu0 0
      %1590 = vmatpush1.bf16.msra.mxu0 0
      %1591 = vmatprep.subr.bf16.mxu0 0
      %1592 = vmatpush1.bf16.msra.mxu0 0
      %1593 = vmatprep.subr.bf16.mxu0 0
      %1594 = vmatpush1.bf16.msra.mxu0 0
      %1595 = vmatprep.subr.bf16.mxu0 0
      %1596 = vmatpush1.bf16.msra.mxu0 0
      %1597 = vmatprep.subr.bf16.mxu0 0
      %1598 = vmatpush1.bf16.msra.mxu0 0
      %1599 = vmatprep.subr.bf16.mxu0 0
      %1600 = vmatpush1.bf16.msra.mxu0 0
      %1601 = vmatprep.subr.bf16.mxu0 0
      %1602 = vmatpush1.bf16.msra.mxu0 0
      %1603 = vmatprep.subr.bf16.mxu0 0
      %1604 = vmatpush1.bf16.msra.mxu0 0
      %1605 = vmatprep.subr.bf16.mxu0 0
      %1606 = vmatpush1.bf16.msra.mxu0 0
      %1607 = vmatprep.subr.bf16.mxu0 0
      %1608 = vmatpush1.bf16.msra.mxu0 0
      %1609 = vmatprep.subr.bf16.mxu0 0
      %1610 = vmatpush1.bf16.msra.mxu0 0
      %1611 = vmatprep.subr.bf16.mxu0 0
      %1612 = vmatpush1.bf16.msra.mxu0 0
      %1613 = vmatprep.subr.bf16.mxu0 0
      %1614 = vmatpush1.bf16.msra.mxu0 0
      %1615 = vmatprep.subr.bf16.mxu0 0
      %1616 = vmatpush1.bf16.msra.mxu0 0
      %1617 = vmatprep.mubr.bf16.mxu0 0
      %1618 = vmatmul.mubr.bf16.gmra.mrb[0].mxu0 %v1580
      %v1619 = vpop.f32.mrb[0].mxu0
      %v1620 = vadd.f32 0.0, %v1619
      %v1621 = vpop.f32.mrb[0].mxu0
      %v1622 = vpop.f32.mrb[0].mxu0
      %v1623 = vadd.f32 0.0, %v1622
      %v1624 = vpop.f32.mrb[0].mxu0
      %1625 = vmatprep.mubr.bf16.mxu0 0
      %1626 = vmatmul.mubr.bf16.gmra.mrb[0].mxu0 %v1583
      %v1627 = vpop.f32.mrb[0].mxu0
      %v1628 = vadd.f32 0.0, %v1627
      %v1629 = vpop.f32.mrb[0].mxu0
      %v1630 = vpop.f32.mrb[0].mxu0
      %v1631 = vadd.f32 0.0, %v1630
      %v1632 = vpop.f32.mrb[0].mxu0
      %1633 = vdwg.mxu0
      %v1634 = vmax.f32 %v1620, 0.0
      %v1635 = vmax.f32 %v1623, 0.0
      %v1636 = vmax.f32 %v1628, 0.0
      %v1637 = vmax.f32 %v1631, 0.0
      %1638 = vst [vmem:[%s253] sm:$0xff] %v1634
      %1639 = vst [vmem:[%s253 + $0x8] sm:$0xff] %v1635
      %1640 = vst [vmem:[%s253 + $0x10] sm:$0xff] %v1636
      %1641 = vst [vmem:[%s253 + $0x18] sm:$0xff] %v1637
      %p1642 = scmp.lt.s32.totalorder %s18, 1
      %s1643 = scalar_select %p1642, %s18, 1
      %s1644 = smul.addr %s1643, 4
      %s1645 = smul.addr %s1644, 8
      %s1646 = scalar_lea.vmem %s5, %s1645
      %p1647 = scmp.lt.s32.totalorder %s18, 1
      %s1648 = scalar_select %p1647, %s18, 1
      %s1649 = smul.addr %s1648, 2
      %s1650 = smul.addr %s1649, 8
      %s1651 = scalar_lea.vmem %s6, %s1650
      // Predicated region
      $region41: #{_lambda_.4} parent=39 // pred_check
        %p1652 = pneg %p146
      $region42: #{_lambda_.4} parent=39 // pred_check_branch
        %1654 = sbr.rel (%p1652) target = $region44
      $region43: #{_lambda_.4} parent=39 // pred_region
        _
      $region44: #{_lambda_.4} parent=39 // pred_fallthru
        _
      // Predicated region
      $region45: #{_lambda_.4} parent=39 // pred_check
        %p1655 = pneg %p172
      $region46: #{_lambda_.4} parent=39 // pred_check_branch
        %1657 = sbr.rel (%p1655) target = $region48
      $region47: #{_lambda_.4} parent=39 // pred_region
        _
      $region48: #{_lambda_.4} parent=39 // pred_fallthru
        _
    $region40: #{_lambda_.4} parent=5 // pred_fallthru
      _
    %p1658 = scmp.le.s32.totalorder 2, %s13
    // Predicated region
    $region49: #{_lambda_.4} parent=5 // pred_check
      %p1659 = pneg %p1658
    $region50: #{_lambda_.4} parent=5 // pred_check_branch
      %1661 = sbr.rel (%p1659) target = $region52
    $region51: #{_lambda_.4} parent=5 // pred_region
      %s1662 = ssub.s32 %s13, 2
      // Predicated region
      $region53: #{_lambda_.4} parent=51 // pred_check
        %p1663 = pneg %p152
      $region54: #{_lambda_.4} parent=51 // pred_check_branch
        %1665 = sbr.rel (%p1663) target = $region56
      $region55: #{_lambda_.4} parent=51 // pred_region
        %p1666 = scmp.lt.s32.totalorder %s19, 1
        %s1667 = scalar_select %p1666, %s19, 1
        %s1668 = smul.addr %s1667, 4
        %s1669 = smul.addr %s1668, 8
        %s1670 = scalar_lea.vmem %s5, %s1669
      $region56: #{_lambda_.4} parent=51 // pred_fallthru
        _
      // Predicated region
      $region57: #{_lambda_.4} parent=51 // pred_check
        %p1671 = pneg %p178
      $region58: #{_lambda_.4} parent=51 // pred_check_branch
        %1673 = sbr.rel (%p1671) target = $region60
      $region59: #{_lambda_.4} parent=51 // pred_region
        %p1674 = scmp.lt.s32.totalorder %s19, 1
        %s1675 = scalar_select %p1674, %s19, 1
        %s1676 = smul.addr %s1675, 2
        %s1677 = smul.addr %s1676, 8
        %s1678 = scalar_lea.vmem %s6, %s1677
      $region60: #{_lambda_.4} parent=51 // pred_fallthru
        _
    $region52: #{_lambda_.4} parent=5 // pred_fallthru
      _
  $region6: #{_lambda_.4} parent=0 // loop_footer
    %s17 = sadd.s32 1, %s13
  $region7: #{_lambda_.4} parent=0 // loop_footer_branch
    %12 = sbr.rel target = $region3
  $region8: #{_lambda_.4} parent=0 // loop_exit
    _

// kernel: _lambda_.5
$region0: #{_lambda_.5}
  #allocation0 [shape = 'u32[]', space=smem, size = 0x4, offset = 0x4, fixed_abs, tag = 'smem constant byte address 0x4 - core index']
  #allocation1 [shape = 'u32[144,128]{1,0:T(1,128)}', space=vmem, size = 0x12000, scoped, tag = 'internal scratch']
  #allocation2 [shape = 's32[1]{0}', space=sflag, size = 0x4, scoped, tag = 'scoped memory for _lambda_.5']
  #allocation3 [shape = 'u8[1024]{0}', space=smem, size = 0x400, scoped, tag = 'prefetched SMEM operand 0']
  %s0 = inlined_call_operand.vmem [shape: s32[2,4], index: 0, kind: input, shape index: {}]
  %s1 = inlined_call_operand.vmem [shape: f32[2,16,4], index: 1, kind: input, shape index: {}]
  %s2 = inlined_call_operand.vmem [shape: f32[2,256,1], index: 2, kind: output, shape index: {}]
  %s3 = sld [smem:[#allocation0]]
  $region37: #{_lambda_.5} parent=0
    _
  %s5 = ssub.s32 1, %s3
  %s6 = scalar_select 0, %s5, %s3
  %s7 = sshll.u32 %s0, 4
  %s8 = int_to_ptr.vmem [resolvable:$true] %s7
  %10 = dma.vmem_to_smem %s8, 32, [#allocation3], [#allocation2]
  %11 = dma.done [#allocation2], 32
  %12 = sfence
  loop: start=0, step=1, limit=4
  $region2: #{_lambda_.5} parent=0 // loop_pre_header
    _
  $region3: #{_lambda_.5} parent=0 // loop_header
    %s14 = sphi 0, %s18
    %p15 = scmp.ge.s32.totalorder %s14, 4
    %s24 = sphi 0, %s26
    %s27 = sphi 0, %s24
    %s28 = sphi 0, %s27
    %s44 = sphi 0, %s28
    %s50 = sphi 0, %s52
    %s53 = sphi 0, %s50
    %s54 = sphi 0, %s53
    %s70 = sphi 0, %s54
  $region4: #{_lambda_.5} parent=0 // loop_header_branch
    %17 = sbr.rel (%p15) target = $region8
  $region5: #{_lambda_.5} parent=0 // loop_body
    %s19 = ssub.s32 %s14, 1
    %s20 = ssub.s32 %s14, 2
    %s21 = sadd.s32 %s14, 1
    %s22 = ssub.s32 %s14, %s21
    %p23 = scmp.eq.s32.totalorder %s22, 0
    %s25 = sadd.s32 %s24, 1
    %s26 = scalar_select %p23, %s24, %s25
    %p29 = pneg %p23
    %p30 = scmp.eq.s32.totalorder %s14, 1
    %p31 = por %p29, %p30
    %p32 = scmp.ne.s32.totalorder %s24, %s27
    %p33 = scmp.eq.s32.totalorder %s14, 0
    %p34 = por %p32, %p33
    %p35 = scmp.ne.s32.totalorder %s24, %s27
    %p36 = scmp.eq.s32.totalorder %s19, 1
    %p37 = por %p35, %p36
    %p38 = scmp.ne.s32.totalorder %s27, %s28
    %p39 = scmp.eq.s32.totalorder %s19, 0
    %p40 = por %p38, %p39
    %p41 = scmp.ne.s32.totalorder %s27, %s28
    %p42 = scmp.eq.s32.totalorder %s20, 1
    %p43 = por %p41, %p42
    %p45 = scmp.ne.s32.totalorder %s28, %s44
    %p46 = scmp.eq.s32.totalorder %s20, 0
    %p47 = por %p45, %p46
    %s48 = ssub.s32 %s14, %s21
    %p49 = scmp.eq.s32.totalorder %s48, 0
    %s51 = sadd.s32 %s50, 1
    %s52 = scalar_select %p49, %s50, %s51
    %p55 = pneg %p49
    %p56 = scmp.eq.s32.totalorder %s14, 1
    %p57 = por %p55, %p56
    %p58 = scmp.ne.s32.totalorder %s50, %s53
    %p59 = scmp.eq.s32.totalorder %s14, 0
    %p60 = por %p58, %p59
    %p61 = scmp.ne.s32.totalorder %s50, %s53
    %p62 = scmp.eq.s32.totalorder %s19, 1
    %p63 = por %p61, %p62
    %p64 = scmp.ne.s32.totalorder %s53, %s54
    %p65 = scmp.eq.s32.totalorder %s19, 0
    %p66 = por %p64, %p65
    %p67 = scmp.ne.s32.totalorder %s53, %s54
    %p68 = scmp.eq.s32.totalorder %s20, 1
    %p69 = por %p67, %p68
    %p71 = scmp.ne.s32.totalorder %s54, %s70
    %p72 = scmp.eq.s32.totalorder %s20, 0
    %p73 = por %p71, %p72
    %p74 = scmp.le.s32.totalorder 1, %s14
    %p75 = scmp.lt.s32.totalorder %s14, 3
    %p76 = pnand %p74, %p75
    %p77 = pneg %p76
    // Predicated region
    $region9: #{_lambda_.5} parent=5 // pred_check
      _
    $region10: #{_lambda_.5} parent=5 // pred_check_branch
      %79 = sbr.rel (%p76) target = $region12
    $region11: #{_lambda_.5} parent=5 // pred_region
      %s80 = ssub.s32 %s14, 1
    $region12: #{_lambda_.5} parent=5 // pred_fallthru
      _
    %p81 = scmp.lt.s32.totalorder %s14, 2
    // Predicated region
    $region13: #{_lambda_.5} parent=5 // pred_check
      %p82 = pneg %p81
    $region14: #{_lambda_.5} parent=5 // pred_check_branch
      %84 = sbr.rel (%p82) target = $region16
    $region15: #{_lambda_.5} parent=5 // pred_region
      // Predicated region
      $region17: #{_lambda_.5} parent=15 // pred_check
        %p85 = pneg %p34
      $region18: #{_lambda_.5} parent=15 // pred_check_branch
        %87 = sbr.rel (%p85) target = $region20
      $region19: #{_lambda_.5} parent=15 // pred_region
        %p88 = scmp.lt.s32.totalorder %s14, 1
        %s89 = scalar_select %p88, %s14, 1
        %s90 = smul.addr %s89, 2
        %s91 = smul.addr %s90, 8
        %s92 = scalar_lea.vmem %s1, %s91
      $region20: #{_lambda_.5} parent=15 // pred_fallthru
        _
    $region16: #{_lambda_.5} parent=5 // pred_fallthru
      _
    %p93 = scmp.le.s32.totalorder 1, %s14
    %p94 = scmp.lt.s32.totalorder %s14, 3
    %p95 = pnand %p93, %p94
    %p96 = pneg %p95
    // Predicated region
    $region21: #{_lambda_.5} parent=5 // pred_check
      _
    $region22: #{_lambda_.5} parent=5 // pred_check_branch
      %98 = sbr.rel (%p95) target = $region24
    $region23: #{_lambda_.5} parent=5 // pred_region
      %s99 = ssub.s32 %s14, 1
      %p100 = scmp.lt.s32.totalorder %s19, 1
      %s101 = scalar_select %p100, %s19, 1
      %s102 = smul.addr %s101, 2
      %s103 = smul.addr %s102, 8
      %s104 = scalar_lea.vmem %s1, %s103
      %p105 = pneg %p40
      %p106 = pneg %p37
      %p107 = pneg %p66
      %p108 = pneg %p63
      %p109 = scmp.lt.s32.totalorder %s19, 1
      %s110 = scalar_select %p109, %s19, 1
      %s111 = smul.addr %s110, 32
      %s112 = smul.addr %s111, 8
      %s113 = scalar_lea.vmem %s2, %s112
      %p114 = scmp.lt.s32.totalorder %s19, 1
      %s115 = scalar_select %p114, %s19, 1
      %s116 = smul.addr %s115, 2
      %s117 = smul.addr %s116, 8
      %s118 = scalar_lea.vmem %s1, %s117
      %p119 = scmp.lt.s32.totalorder %s19, 1
      %s120 = scalar_select %p119, %s19, 1
      %s121 = smul.addr %s120, 32
      %s122 = smul.addr %s121, 8
      %s123 = scalar_lea.vmem %s2, %s122
      %vm124 = vcmask 7168
      %125 = vst.msk [vmem:[%s123] sm:$0xff] %vm124, 0.0
      %126 = vst.msk [vmem:[%s123 + $0x8] sm:$0xff] %vm124, 0.0
      %127 = vst.msk [vmem:[%s123 + $0x10] sm:$0xff] %vm124, 0.0
      %128 = vst.msk [vmem:[%s123 + $0x18] sm:$0xff] %vm124, 0.0
      %129 = vst.msk [vmem:[%s123 + $0x20] sm:$0xff] %vm124, 0.0
      %130 = vst.msk [vmem:[%s123 + $0x28] sm:$0xff] %vm124, 0.0
      %131 = vst.msk [vmem:[%s123 + $0x30] sm:$0xff] %vm124, 0.0
      %132 = vst.msk [vmem:[%s123 + $0x38] sm:$0xff] %vm124, 0.0
      %133 = vst.msk [vmem:[%s123 + $0x40] sm:$0xff] %vm124, 0.0
      %134 = vst.msk [vmem:[%s123 + $0x48] sm:$0xff] %vm124, 0.0
      %135 = vst.msk [vmem:[%s123 + $0x50] sm:$0xff] %vm124, 0.0
      %136 = vst.msk [vmem:[%s123 + $0x58] sm:$0xff] %vm124, 0.0
      %137 = vst.msk [vmem:[%s123 + $0x60] sm:$0xff] %vm124, 0.0
      %138 = vst.msk [vmem:[%s123 + $0x68] sm:$0xff] %vm124, 0.0
      %139 = vst.msk [vmem:[%s123 + $0x70] sm:$0xff] %vm124, 0.0
      %140 = vst.msk [vmem:[%s123 + $0x78] sm:$0xff] %vm124, 0.0
      %141 = vst.msk [vmem:[%s123 + $0x80] sm:$0xff] %vm124, 0.0
      %142 = vst.msk [vmem:[%s123 + $0x88] sm:$0xff] %vm124, 0.0
      %143 = vst.msk [vmem:[%s123 + $0x90] sm:$0xff] %vm124, 0.0
      %144 = vst.msk [vmem:[%s123 + $0x98] sm:$0xff] %vm124, 0.0
      %145 = vst.msk [vmem:[%s123 + $0xa0] sm:$0xff] %vm124, 0.0
      %146 = vst.msk [vmem:[%s123 + $0xa8] sm:$0xff] %vm124, 0.0
      %147 = vst.msk [vmem:[%s123 + $0xb0] sm:$0xff] %vm124, 0.0
      %148 = vst.msk [vmem:[%s123 + $0xb8] sm:$0xff] %vm124, 0.0
      %149 = vst.msk [vmem:[%s123 + $0xc0] sm:$0xff] %vm124, 0.0
      %150 = vst.msk [vmem:[%s123 + $0xc8] sm:$0xff] %vm124, 0.0
      %151 = vst.msk [vmem:[%s123 + $0xd0] sm:$0xff] %vm124, 0.0
      %152 = vst.msk [vmem:[%s123 + $0xd8] sm:$0xff] %vm124, 0.0
      %153 = vst.msk [vmem:[%s123 + $0xe0] sm:$0xff] %vm124, 0.0
      %154 = vst.msk [vmem:[%s123 + $0xe8] sm:$0xff] %vm124, 0.0
      %155 = vst.msk [vmem:[%s123 + $0xf0] sm:$0xff] %vm124, 0.0
      %156 = vst.msk [vmem:[%s123 + $0xf8] sm:$0xff] %vm124, 0.0
      %v157 = vld [vmem:[%s118] sm:$0xff]
      %v158 = vld [vmem:[%s118 + $0x8] sm:$0xff]
      %s159 = smul.u32 %s19, 128
      %s160 = sld [smem:[#allocation3 + %s159]]
      %s161 = sadd.s32 %s160, 16
      %s162 = scalar_lea.vmem %s123, %s161
      %v163 = vld [vmem:[%s162] sm:$0xff]
      %v164 = vld [vmem:[%s162 + $0x8] sm:$0xff]
      %v165 = vadd.f32 %v163, %v157
      %v166 = vadd.f32 %v164, %v158
      %167 = vst.msk [vmem:[%s162] sm:$0xff] %vm124, %v165
      %168 = vst.msk [vmem:[%s162 + $0x8] sm:$0xff] %vm124, %v166
      %s169 = sadd.s32 %s159, 1
      %s170 = sld [smem:[#allocation3 + %s169]]
      %s171 = sadd.s32 %s170, 16
      %s172 = scalar_lea.vmem %s123, %s171
      %v173 = vld [vmem:[%s172] sm:$0xff]
      %v174 = vld [vmem:[%s172 + $0x8] sm:$0xff]
      %177 = vrot.lane.b32.xlu0 %v157, 127
      %v178 = vpop.permute.xlu0 %177
      %179 = vrot.lane.b32.xlu0 %v158, 127
      %v180 = vpop.permute.xlu0 %179
      %v183 = vadd.f32 %v173, %v178
      %v184 = vadd.f32 %v174, %v180
      %185 = vst.msk [vmem:[%s172] sm:$0xff] %vm124, %v183
      %186 = vst.msk [vmem:[%s172 + $0x8] sm:$0xff] %vm124, %v184
      %s187 = sadd.s32 %s159, 2
      %s188 = sld [smem:[#allocation3 + %s187]]
      %s189 = sadd.s32 %s188, 16
      %s190 = scalar_lea.vmem %s123, %s189
      %v191 = vld [vmem:[%s190] sm:$0xff]
      %v192 = vld [vmem:[%s190 + $0x8] sm:$0xff]
      %193 = vrot.lane.b32.xlu0 %v157, 126
      %v194 = vpop.permute.xlu0 %193
      %195 = vrot.lane.b32.xlu0 %v158, 126
      %v196 = vpop.permute.xlu0 %195
      %v199 = vadd.f32 %v191, %v194
      %v200 = vadd.f32 %v192, %v196
      %201 = vst.msk [vmem:[%s190] sm:$0xff] %vm124, %v199
      %202 = vst.msk [vmem:[%s190 + $0x8] sm:$0xff] %vm124, %v200
      %s203 = sadd.s32 %s159, 3
      %s204 = sld [smem:[#allocation3 + %s203]]
      %s205 = sadd.s32 %s204, 16
      %s206 = scalar_lea.vmem %s123, %s205
      %v207 = vld [vmem:[%s206] sm:$0xff]
      %v208 = vld [vmem:[%s206 + $0x8] sm:$0xff]
      %209 = vrot.lane.b32.xlu0 %v157, 125
      %v210 = vpop.permute.xlu0 %209
      %211 = vrot.lane.b32.xlu0 %v158, 125
      %v212 = vpop.permute.xlu0 %211
      %v215 = vadd.f32 %v207, %v210
      %v216 = vadd.f32 %v208, %v212
      %217 = vst.msk [vmem:[%s206] sm:$0xff] %vm124, %v215
      %218 = vst.msk [vmem:[%s206 + $0x8] sm:$0xff] %vm124, %v216
      %p219 = scmp.lt.s32.totalorder %s19, 1
      %s220 = scalar_select %p219, %s19, 1
      %s221 = smul.addr %s220, 32
      %s222 = smul.addr %s221, 8
      %s223 = scalar_lea.vmem %s2, %s222
      // Predicated region
      $region25: #{_lambda_.5} parent=23 // pred_check
        %p224 = pneg %p63
      $region26: #{_lambda_.5} parent=23 // pred_check_branch
        %226 = sbr.rel (%p224) target = $region28
      $region27: #{_lambda_.5} parent=23 // pred_region
        _
      $region28: #{_lambda_.5} parent=23 // pred_fallthru
        _
    $region24: #{_lambda_.5} parent=5 // pred_fallthru
      _
    %p227 = scmp.le.s32.totalorder 2, %s14
    // Predicated region
    $region29: #{_lambda_.5} parent=5 // pred_check
      %p228 = pneg %p227
    $region30: #{_lambda_.5} parent=5 // pred_check_branch
      %230 = sbr.rel (%p228) target = $region32
    $region31: #{_lambda_.5} parent=5 // pred_region
      %s231 = ssub.s32 %s14, 2
      // Predicated region
      $region33: #{_lambda_.5} parent=31 // pred_check
        %p232 = pneg %p69
      $region34: #{_lambda_.5} parent=31 // pred_check_branch
        %234 = sbr.rel (%p232) target = $region36
      $region35: #{_lambda_.5} parent=31 // pred_region
        %p235 = scmp.lt.s32.totalorder %s20, 1
        %s236 = scalar_select %p235, %s20, 1
        %s237 = smul.addr %s236, 32
        %s238 = smul.addr %s237, 8
        %s239 = scalar_lea.vmem %s2, %s238
      $region36: #{_lambda_.5} parent=31 // pred_fallthru
        _
    $region32: #{_lambda_.5} parent=5 // pred_fallthru
      _
  $region6: #{_lambda_.5} parent=0 // loop_footer
    %s18 = sadd.s32 1, %s14
  $region7: #{_lambda_.5} parent=0 // loop_footer_branch
    %13 = sbr.rel target = $region3
  $region8: #{_lambda_.5} parent=0 // loop_exit
    _

// kernel: reverse.14
$region0: #{reverse.14}
  %s0 = inlined_call_operand.vmem [shape: f32[2,1,256], index: 0, kind: input, shape index: {}]
  %s1 = inlined_call_operand.vmem [shape: f32[2,1,256], index: 1, kind: output, shape index: {}]
  %v2 = vlaneseq
  %v3 = vsub.s32 127, %v2
  %4 = vset.pattern.permute.xlu0 %v3
  $region1: #{reverse.14} parent=0
    #allocation0 [shape = 'u8[4096]{0}', space=vmem, size = 0x1000, scoped, tag = 'operand span for operand 0']
    #allocation1 [shape = 'u8[2048]{0}', space=vmem, size = 0x800, scoped, tag = 'packed  for operand 0']
    #allocation2 [shape = 'u8[4096]{0}', space=vmem, size = 0x1000, scoped, tag = 'operand span for operand 1']
    #allocation3 [shape = 'u8[2048]{0}', space=vmem, size = 0x800, scoped, tag = 'packed  for operand 1']
    loop: start=0, step=1, limit=4
    $region2: #{reverse.14} parent=1 // loop_pre_header
      _
    $region3: #{reverse.14} parent=1 // loop_header
      %s6 = sphi 0, %s10
      %p7 = scmp.ge.s32.totalorder %s6, 4
      %s13 = sphi 0, %s32
      %s14 = sphi 0, %s28
      %s15 = sphi 0, %s24
      %s16 = sphi 0, %s13
      %s17 = sphi 0, %s14
      %s18 = sphi 0, %s15
      %s19 = sphi 0, %s16
      %s20 = sphi 0, %s17
      %s21 = sphi 0, %s18
    $region4: #{reverse.14} parent=1 // loop_header_branch
      %9 = sbr.rel (%p7) target = $region8
    $region5: #{reverse.14} parent=1 // loop_body
      %s11 = ssub.s32 %s6, 1
      %s12 = ssub.s32 %s6, 2
      %s22 = sadd.s32 1, %s15
      %p23 = scmp.ge.s32.totalorder %s22, 2
      %s24 = scalar_select %p23, 0, %s22
      %s25 = sadd.s32 1, %s14
      %s26 = scalar_select %p23, %s25, %s14
      %p27 = scmp.ge.s32.totalorder %s26, 1
      %s28 = scalar_select %p27, 0, %s26
      %s29 = sadd.s32 1, %s13
      %s30 = scalar_select %p27, %s29, %s13
      %p31 = scmp.ge.s32.totalorder %s30, 1
      %s32 = scalar_select %p31, 0, %s30
      %p33 = scmp.le.s32.totalorder 1, %s6
      %p34 = scmp.lt.s32.totalorder %s6, 3
      %p35 = pnand %p33, %p34
      %p36 = pneg %p35
      // Predicated region
      $region9: #{reverse.14} parent=5 // pred_check
        _
      $region10: #{reverse.14} parent=5 // pred_check_branch
        %38 = sbr.rel (%p35) target = $region12
      $region11: #{reverse.14} parent=5 // pred_region
        %s39 = ssub.s32 %s6, 1
      $region12: #{reverse.14} parent=5 // pred_fallthru
        _
      %p40 = scmp.lt.s32.totalorder %s6, 2
      // Predicated region
      $region13: #{reverse.14} parent=5 // pred_check
        %p41 = pneg %p40
      $region14: #{reverse.14} parent=5 // pred_check_branch
        %43 = sbr.rel (%p41) target = $region16
      $region15: #{reverse.14} parent=5 // pred_region
        %s44 = sand.u32 %s6, 1
        %s45 = sand.u32 %s6, 1
        %s46 = smul.addr %s45, 2
        %s47 = scalar_lea.vmem [#allocation1], %s46
        %s48 = ssub.s32 1, %s15
        %s49 = smul.addr %s14, 2
        %s50 = sadd.s32 %s48, %s49
        %s51 = smul.addr %s13, 2
        %s52 = sadd.s32 %s50, %s51
        %s53 = smul.addr %s52, 2
        %s54 = scalar_lea.vmem %s0, %s53
        // Predicated region
        $region17: #{reverse.14} parent=15 // pred_check
          _
        $region18: #{reverse.14} parent=15 // pred_check_branch
          %56 = sbr.rel (0) target = $region20
        $region19: #{reverse.14} parent=15 // pred_region
          // Predicated region
          $region21: #{reverse.14} parent=19 // pred_check
            _
          $region22: #{reverse.14} parent=19 // pred_check_branch
            %58 = sbr.rel target = $region24
          $region23: #{reverse.14} parent=19 // pred_region
            // Predicated region
            $region36: #{reverse.14} parent=23 // pred_check
              _
            $region37: #{reverse.14} parent=23 // pred_check_branch
              %73 = sbr.rel (0) target = $region39
            $region38: #{reverse.14} parent=23 // pred_region
              loop: start=0, step=1, limit=1
              $region40: #{reverse.14} parent=38 // loop_pre_header
                _
              $region41: #{reverse.14} parent=38 // loop_header
                %s76 = sphi 0, %s80
                %p77 = scmp.ge.s32.totalorder %s76, 1
                %s81 = sphi %s54, %s54
                %s82 = sphi %s47, %s47
              $region42: #{reverse.14} parent=38 // loop_header_branch
                %79 = sbr.rel (%p77) target = $region46
              $region43: #{reverse.14} parent=38 // loop_body
                %v83 = vld [vmem:[%s81] sm:$0x3]
                %84 = vst [vmem:[%s82] sm:$0x3] %v83
              $region44: #{reverse.14} parent=38 // loop_footer
                %s80 = sadd.s32 1, %s76
              $region45: #{reverse.14} parent=38 // loop_footer_branch
                %75 = sbr.rel target = $region41
              $region46: #{reverse.14} parent=38 // loop_exit
                _
            $region39: #{reverse.14} parent=23 // pred_fallthru
              _
          $region24: #{reverse.14} parent=19 // pred_fallthru
            _
          // Predicated region
          $region25: #{reverse.14} parent=19 // pred_check
            _
          $region26: #{reverse.14} parent=19 // pred_check_branch
            %60 = sbr.rel (0) target = $region28
          $region27: #{reverse.14} parent=19 // pred_region
            loop: start=0, step=1, limit=1
            $region29: #{reverse.14} parent=27 // loop_pre_header
              _
            $region30: #{reverse.14} parent=27 // loop_header
              %s63 = sphi 0, %s67
              %p64 = scmp.ge.s32.totalorder %s63, 1
              %s68 = sphi %s54, %s54
              %s69 = sphi %s47, %s47
            $region31: #{reverse.14} parent=27 // loop_header_branch
              %66 = sbr.rel (%p64) target = $region35
            $region32: #{reverse.14} parent=27 // loop_body
              %v70 = vld [vmem:[%s68] sm:$0x3]
              %71 = vst [vmem:[%s69] sm:$0x3] %v70
            $region33: #{reverse.14} parent=27 // loop_footer
              %s67 = sadd.s32 1, %s63
            $region34: #{reverse.14} parent=27 // loop_footer_branch
              %62 = sbr.rel target = $region30
            $region35: #{reverse.14} parent=27 // loop_exit
              _
          $region28: #{reverse.14} parent=19 // pred_fallthru
            _
        $region20: #{reverse.14} parent=15 // pred_fallthru
          _
        %85 = vnop
      $region16: #{reverse.14} parent=5 // pred_fallthru
        _
      %p86 = scmp.le.s32.totalorder 1, %s6
      %p87 = scmp.lt.s32.totalorder %s6, 3
      %p88 = pnand %p86, %p87
      %p89 = pneg %p88
      // Predicated region
      $region47: #{reverse.14} parent=5 // pred_check
        _
      $region48: #{reverse.14} parent=5 // pred_check_branch
        %91 = sbr.rel (%p88) target = $region50
      $region49: #{reverse.14} parent=5 // pred_region
        %s92 = ssub.s32 %s6, 1
        %s93 = sand.u32 %s11, 1
        %s94 = sand.u32 %s11, 1
        %s95 = smul.addr %s94, 2
        %s96 = scalar_lea.vmem [#allocation1], %s95
        %s97 = sand.u32 %s11, 1
        %s98 = sand.u32 %s11, 1
        %s99 = smul.addr %s98, 2
        %s100 = scalar_lea.vmem [#allocation1], %s99
        %s101 = sand.u32 %s11, 1
        %s102 = sand.u32 %s11, 1
        %s103 = smul.addr %s102, 2
        %s104 = scalar_lea.vmem [#allocation3], %s103
        %s106 = sshllo.u32 0, 2
        %v107 = vld [vmem:[%s100] sm:%s106]
        %108 = vst [vmem:[#allocation0] sm:%s106] %v107
        %s109 = ssub.s32 1, %s18
        %v110 = vld [vmem:[#allocation0] sm:$0xff]
        %111 = vperm.xlu0 %4, %v110
        %v112 = vpop.permute.xlu0 %111
        %113 = vst [vmem:[#allocation2] sm:$0xff] %v112
        %s115 = sshllo.u32 0, 2
        %v117 = vld [vmem:[#allocation2] sm:%s115]
        %s118 = sshllo.u32 0, 2
        %119 = vst [vmem:[%s104] sm:%s118] %v117
        %s120 = sand.u32 %s11, 1
        %s121 = sand.u32 %s11, 1
        %s122 = smul.addr %s121, 2
        %s123 = scalar_lea.vmem [#allocation3], %s122
        %s124 = smul.addr %s17, 2
        %s125 = sadd.s32 %s18, %s124
        %s126 = smul.addr %s16, 2
        %s127 = sadd.s32 %s125, %s126
        %s128 = smul.addr %s127, 2
        %s129 = scalar_lea.vmem %s1, %s128
        // Predicated region
        $region51: #{reverse.14} parent=49 // pred_check
          _
        $region52: #{reverse.14} parent=49 // pred_check_branch
          %131 = sbr.rel (0) target = $region54
        $region53: #{reverse.14} parent=49 // pred_region
          // Predicated region
          $region55: #{reverse.14} parent=53 // pred_check
            _
          $region56: #{reverse.14} parent=53 // pred_check_branch
            %133 = sbr.rel target = $region58
          $region57: #{reverse.14} parent=53 // pred_region
            // Predicated region
            $region70: #{reverse.14} parent=57 // pred_check
              _
            $region71: #{reverse.14} parent=57 // pred_check_branch
              %148 = sbr.rel (0) target = $region73
            $region72: #{reverse.14} parent=57 // pred_region
              loop: start=0, step=1, limit=1
              $region74: #{reverse.14} parent=72 // loop_pre_header
                _
              $region75: #{reverse.14} parent=72 // loop_header
                %s151 = sphi 0, %s155
                %p152 = scmp.ge.s32.totalorder %s151, 1
                %s156 = sphi %s123, %s123
                %s157 = sphi %s129, %s129
              $region76: #{reverse.14} parent=72 // loop_header_branch
                %154 = sbr.rel (%p152) target = $region80
              $region77: #{reverse.14} parent=72 // loop_body
                %v158 = vld [vmem:[%s156] sm:$0x3]
                %159 = vst [vmem:[%s157] sm:$0x3] %v158
              $region78: #{reverse.14} parent=72 // loop_footer
                %s155 = sadd.s32 1, %s151
              $region79: #{reverse.14} parent=72 // loop_footer_branch
                %150 = sbr.rel target = $region75
              $region80: #{reverse.14} parent=72 // loop_exit
                _
            $region73: #{reverse.14} parent=57 // pred_fallthru
              _
          $region58: #{reverse.14} parent=53 // pred_fallthru
            _
          // Predicated region
          $region59: #{reverse.14} parent=53 // pred_check
            _
          $region60: #{reverse.14} parent=53 // pred_check_branch
            %135 = sbr.rel (0) target = $region62
          $region61: #{reverse.14} parent=53 // pred_region
            loop: start=0, step=1, limit=1
            $region63: #{reverse.14} parent=61 // loop_pre_header
              _
            $region64: #{reverse.14} parent=61 // loop_header
              %s138 = sphi 0, %s142
              %p139 = scmp.ge.s32.totalorder %s138, 1
              %s143 = sphi %s123, %s123
              %s144 = sphi %s129, %s129
            $region65: #{reverse.14} parent=61 // loop_header_branch
              %141 = sbr.rel (%p139) target = $region69
            $region66: #{reverse.14} parent=61 // loop_body
              %v145 = vld [vmem:[%s143] sm:$0x3]
              %146 = vst [vmem:[%s144] sm:$0x3] %v145
            $region67: #{reverse.14} parent=61 // loop_footer
              %s142 = sadd.s32 1, %s138
            $region68: #{reverse.14} parent=61 // loop_footer_branch
              %137 = sbr.rel target = $region64
            $region69: #{reverse.14} parent=61 // loop_exit
              _
          $region62: #{reverse.14} parent=53 // pred_fallthru
            _
        $region54: #{reverse.14} parent=49 // pred_fallthru
          _
        %160 = vnop
      $region50: #{reverse.14} parent=5 // pred_fallthru
        _
      %p161 = scmp.le.s32.totalorder 2, %s6
      // Predicated region
      $region81: #{reverse.14} parent=5 // pred_check
        %p162 = pneg %p161
      $region82: #{reverse.14} parent=5 // pred_check_branch
        %164 = sbr.rel (%p162) target = $region84
      $region83: #{reverse.14} parent=5 // pred_region
        %s165 = ssub.s32 %s6, 2
        %s166 = sand.u32 %s12, 1
        %s167 = sand.u32 %s12, 1
        %s168 = smul.addr %s167, 2
        %s169 = scalar_lea.vmem [#allocation3], %s168
      $region84: #{reverse.14} parent=5 // pred_fallthru
        _
    $region6: #{reverse.14} parent=1 // loop_footer
      %s10 = sadd.s32 1, %s6
    $region7: #{reverse.14} parent=1 // loop_footer_branch
      %5 = sbr.rel target = $region3
    $region8: #{reverse.14} parent=1 // loop_exit
      _

// kernel: reverse.5
$region0: #{reverse.5}
  %s0 = inlined_call_operand.vmem [shape: f32[2,1,127], index: 0, kind: input, shape index: {}]
  %s1 = inlined_call_operand.vmem [shape: f32[2,1,127], index: 1, kind: output, shape index: {}]
  %v2 = vlaneseq
  %v3 = vsub.s32 126, %v2
  %4 = vset.pattern.permute.xlu0 %v3
  $region1: #{reverse.5} parent=0
    #allocation0 [shape = 'u8[4096]{0}', space=vmem, size = 0x1000, scoped, tag = 'operand span for operand 0']
    #allocation1 [shape = 'u8[1024]{0}', space=vmem, size = 0x400, scoped, tag = 'packed  for operand 0']
    #allocation2 [shape = 'u8[4096]{0}', space=vmem, size = 0x1000, scoped, tag = 'operand span for operand 1']
    #allocation3 [shape = 'u8[1024]{0}', space=vmem, size = 0x400, scoped, tag = 'packed  for operand 1']
    // Predicated region
    $region2: #{reverse.5} parent=1 // pred_check
      _
    $region3: #{reverse.5} parent=1 // pred_check_branch
      %6 = sbr.rel (0) target = $region5
    $region4: #{reverse.5} parent=1 // pred_region
      // Predicated region
      $region6: #{reverse.5} parent=4 // pred_check
        _
      $region7: #{reverse.5} parent=4 // pred_check_branch
        %8 = sbr.rel target = $region9
      $region8: #{reverse.5} parent=4 // pred_region
        // Predicated region
        $region21: #{reverse.5} parent=8 // pred_check
          _
        $region22: #{reverse.5} parent=8 // pred_check_branch
          %23 = sbr.rel (0) target = $region24
        $region23: #{reverse.5} parent=8 // pred_region
          loop: start=0, step=1, limit=1
          $region25: #{reverse.5} parent=23 // loop_pre_header
            _
          $region26: #{reverse.5} parent=23 // loop_header
            %s26 = sphi 0, %s30
            %p27 = scmp.ge.s32.totalorder %s26, 1
            %s31 = sphi %s0, %s0
            %s32 = sphi [#allocation1], [#allocation1]
          $region27: #{reverse.5} parent=23 // loop_header_branch
            %29 = sbr.rel (%p27) target = $region31
          $region28: #{reverse.5} parent=23 // loop_body
            %v33 = vld [vmem:[%s31] sm:$0x3]
            %34 = vst [vmem:[%s32] sm:$0x3] %v33
          $region29: #{reverse.5} parent=23 // loop_footer
            %s30 = sadd.s32 1, %s26
          $region30: #{reverse.5} parent=23 // loop_footer_branch
            %25 = sbr.rel target = $region26
          $region31: #{reverse.5} parent=23 // loop_exit
            _
        $region24: #{reverse.5} parent=8 // pred_fallthru
          _
      $region9: #{reverse.5} parent=4 // pred_fallthru
        _
      // Predicated region
      $region10: #{reverse.5} parent=4 // pred_check
        _
      $region11: #{reverse.5} parent=4 // pred_check_branch
        %10 = sbr.rel (0) target = $region13
      $region12: #{reverse.5} parent=4 // pred_region
        loop: start=0, step=1, limit=1
        $region14: #{reverse.5} parent=12 // loop_pre_header
          _
        $region15: #{reverse.5} parent=12 // loop_header
          %s13 = sphi 0, %s17
          %p14 = scmp.ge.s32.totalorder %s13, 1
          %s18 = sphi %s0, %s0
          %s19 = sphi [#allocation1], [#allocation1]
        $region16: #{reverse.5} parent=12 // loop_header_branch
          %16 = sbr.rel (%p14) target = $region20
        $region17: #{reverse.5} parent=12 // loop_body
          %v20 = vld [vmem:[%s18] sm:$0x3]
          %21 = vst [vmem:[%s19] sm:$0x3] %v20
        $region18: #{reverse.5} parent=12 // loop_footer
          %s17 = sadd.s32 1, %s13
        $region19: #{reverse.5} parent=12 // loop_footer_branch
          %12 = sbr.rel target = $region15
        $region20: #{reverse.5} parent=12 // loop_exit
          _
      $region13: #{reverse.5} parent=4 // pred_fallthru
        _
    $region5: #{reverse.5} parent=1 // pred_fallthru
      _
    %35 = vnop
    %s37 = sshllo.u32 0, 2
    %v38 = vld [vmem:[#allocation1] sm:%s37]
    %39 = vst [vmem:[#allocation0] sm:%s37] %v38
    %v40 = vld [vmem:[#allocation0] sm:$0xff]
    %41 = vperm.xlu0 %4, %v40
    %v42 = vpop.permute.xlu0 %41
    %43 = vst [vmem:[#allocation2] sm:$0xff] %v42
    %s45 = sshllo.u32 0, 2
    %v47 = vld [vmem:[#allocation2] sm:%s45]
    %s48 = sshllo.u32 0, 2
    %49 = vst [vmem:[#allocation3] sm:%s48] %v47
    // Predicated region
    $region32: #{reverse.5} parent=1 // pred_check
      _
    $region33: #{reverse.5} parent=1 // pred_check_branch
      %51 = sbr.rel (0) target = $region35
    $region34: #{reverse.5} parent=1 // pred_region
      // Predicated region
      $region36: #{reverse.5} parent=34 // pred_check
        _
      $region37: #{reverse.5} parent=34 // pred_check_branch
        %53 = sbr.rel target = $region39
      $region38: #{reverse.5} parent=34 // pred_region
        // Predicated region
        $region51: #{reverse.5} parent=38 // pred_check
          _
        $region52: #{reverse.5} parent=38 // pred_check_branch
          %68 = sbr.rel (0) target = $region54
        $region53: #{reverse.5} parent=38 // pred_region
          loop: start=0, step=1, limit=1
          $region55: #{reverse.5} parent=53 // loop_pre_header
            _
          $region56: #{reverse.5} parent=53 // loop_header
            %s71 = sphi 0, %s75
            %p72 = scmp.ge.s32.totalorder %s71, 1
            %s76 = sphi [#allocation3], [#allocation3]
            %s77 = sphi %s1, %s1
          $region57: #{reverse.5} parent=53 // loop_header_branch
            %74 = sbr.rel (%p72) target = $region61
          $region58: #{reverse.5} parent=53 // loop_body
            %v78 = vld [vmem:[%s76] sm:$0x3]
            %79 = vst [vmem:[%s77] sm:$0x3] %v78
          $region59: #{reverse.5} parent=53 // loop_footer
            %s75 = sadd.s32 1, %s71
          $region60: #{reverse.5} parent=53 // loop_footer_branch
            %70 = sbr.rel target = $region56
          $region61: #{reverse.5} parent=53 // loop_exit
            _
        $region54: #{reverse.5} parent=38 // pred_fallthru
          _
      $region39: #{reverse.5} parent=34 // pred_fallthru
        _
      // Predicated region
      $region40: #{reverse.5} parent=34 // pred_check
        _
      $region41: #{reverse.5} parent=34 // pred_check_branch
        %55 = sbr.rel (0) target = $region43
      $region42: #{reverse.5} parent=34 // pred_region
        loop: start=0, step=1, limit=1
        $region44: #{reverse.5} parent=42 // loop_pre_header
          _
        $region45: #{reverse.5} parent=42 // loop_header
          %s58 = sphi 0, %s62
          %p59 = scmp.ge.s32.totalorder %s58, 1
          %s63 = sphi [#allocation3], [#allocation3]
          %s64 = sphi %s1, %s1
        $region46: #{reverse.5} parent=42 // loop_header_branch
          %61 = sbr.rel (%p59) target = $region50
        $region47: #{reverse.5} parent=42 // loop_body
          %v65 = vld [vmem:[%s63] sm:$0x3]
          %66 = vst [vmem:[%s64] sm:$0x3] %v65
        $region48: #{reverse.5} parent=42 // loop_footer
          %s62 = sadd.s32 1, %s58
        $region49: #{reverse.5} parent=42 // loop_footer_branch
          %57 = sbr.rel target = $region45
        $region50: #{reverse.5} parent=42 // loop_exit
          _
      $region43: #{reverse.5} parent=34 // pred_fallthru
        _
    $region35: #{reverse.5} parent=1 // pred_fallthru
      _
    %80 = vnop

// kernel: _lambda_.6
$region0: #{_lambda_.6}
  #allocation0 [shape = 'u32[]', space=smem, size = 0x4, offset = 0x4, fixed_abs, tag = 'smem constant byte address 0x4 - core index']
  #allocation1 [shape = 'u32[144,128]{1,0:T(1,128)}', space=vmem, size = 0x12000, scoped, tag = 'internal scratch']
  %s0 = inlined_call_operand.vmem [shape: f32[2,1,256], index: 0, kind: input, shape index: {}]
  %s1 = inlined_call_operand.vmem [shape: bf16[16,16], index: 1, kind: input, shape index: {}]
  %s2 = inlined_call_operand.vmem [shape: f32[16,256], index: 2, kind: input, shape index: {}]
  %s3 = inlined_call_operand.vmem [shape: bf16[6,3,16,16], index: 3, kind: input, shape index: {}]
  %s4 = inlined_call_operand.vmem [shape: bf16[32,16], index: 4, kind: input, shape index: {}]
  %s5 = inlined_call_operand.vmem [shape: f32[2,32,256], index: 5, kind: output, shape index: {0}]
  %s6 = inlined_call_operand.vmem [shape: f32[2,16,1], index: 6, kind: output, shape index: {1}]
  %7 = xla_tuple %s5, %s6
  %s8 = sld [smem:[#allocation0]]
  $region61: #{_lambda_.6} parent=0
    _
  %s10 = ssub.s32 1, %s8
  %s11 = scalar_select 0, %s10, %s8
  loop: start=0, step=1, limit=4
  $region2: #{_lambda_.6} parent=0 // loop_pre_header
    _
  $region3: #{_lambda_.6} parent=0 // loop_header
    %s13 = sphi 0, %s17
    %p14 = scmp.ge.s32.totalorder %s13, 4
    %s23 = sphi 0, %s25
    %s26 = sphi 0, %s23
    %s27 = sphi 0, %s26
    %s43 = sphi 0, %s27
    %s47 = sphi 0, %s47
    %s49 = sphi 0, %s47
    %s50 = sphi 0, %s49
    %s64 = sphi 0, %s50
    %s68 = sphi 0, %s68
    %s70 = sphi 0, %s68
    %s71 = sphi 0, %s70
    %s85 = sphi 0, %s71
    %s89 = sphi 0, %s89
    %s91 = sphi 0, %s89
    %s92 = sphi 0, %s91
    %s106 = sphi 0, %s92
    %s110 = sphi 0, %s110
    %s112 = sphi 0, %s110
    %s113 = sphi 0, %s112
    %s127 = sphi 0, %s113
    %s133 = sphi 0, %s135
    %s136 = sphi 0, %s133
    %s137 = sphi 0, %s136
    %s153 = sphi 0, %s137
    %s159 = sphi 0, %s161
    %s162 = sphi 0, %s159
    %s163 = sphi 0, %s162
    %s179 = sphi 0, %s163
  $region4: #{_lambda_.6} parent=0 // loop_header_branch
    %16 = sbr.rel (%p14) target = $region8
  $region5: #{_lambda_.6} parent=0 // loop_body
    %s18 = ssub.s32 %s13, 1
    %s19 = ssub.s32 %s13, 2
    %s20 = sadd.s32 %s13, 1
    %s21 = ssub.s32 %s13, %s20
    %p22 = scmp.eq.s32.totalorder %s21, 0
    %s24 = sadd.s32 %s23, 1
    %s25 = scalar_select %p22, %s23, %s24
    %p28 = pneg %p22
    %p29 = scmp.eq.s32.totalorder %s13, 1
    %p30 = por %p28, %p29
    %p31 = scmp.ne.s32.totalorder %s23, %s26
    %p32 = scmp.eq.s32.totalorder %s13, 0
    %p33 = por %p31, %p32
    %p34 = scmp.ne.s32.totalorder %s23, %s26
    %p35 = scmp.eq.s32.totalorder %s18, 1
    %p36 = por %p34, %p35
    %p37 = scmp.ne.s32.totalorder %s26, %s27
    %p38 = scmp.eq.s32.totalorder %s18, 0
    %p39 = por %p37, %p38
    %p40 = scmp.ne.s32.totalorder %s26, %s27
    %p41 = scmp.eq.s32.totalorder %s19, 1
    %p42 = por %p40, %p41
    %p44 = scmp.ne.s32.totalorder %s27, %s43
    %p45 = scmp.eq.s32.totalorder %s19, 0
    %p46 = por %p44, %p45
    %s48 = sadd.s32 %s47, 1
    %p51 = scmp.eq.s32.totalorder %s13, 1
    %p52 = scmp.ne.s32.totalorder %s47, %s49
    %p53 = scmp.eq.s32.totalorder %s13, 0
    %p54 = por %p52, %p53
    %p55 = scmp.ne.s32.totalorder %s47, %s49
    %p56 = scmp.eq.s32.totalorder %s18, 1
    %p57 = por %p55, %p56
    %p58 = scmp.ne.s32.totalorder %s49, %s50
    %p59 = scmp.eq.s32.totalorder %s18, 0
    %p60 = por %p58, %p59
    %p61 = scmp.ne.s32.totalorder %s49, %s50
    %p62 = scmp.eq.s32.totalorder %s19, 1
    %p63 = por %p61, %p62
    %p65 = scmp.ne.s32.totalorder %s50, %s64
    %p66 = scmp.eq.s32.totalorder %s19, 0
    %p67 = por %p65, %p66
    %s69 = sadd.s32 %s68, 1
    %p72 = scmp.eq.s32.totalorder %s13, 1
    %p73 = scmp.ne.s32.totalorder %s68, %s70
    %p74 = scmp.eq.s32.totalorder %s13, 0
    %p75 = por %p73, %p74
    %p76 = scmp.ne.s32.totalorder %s68, %s70
    %p77 = scmp.eq.s32.totalorder %s18, 1
    %p78 = por %p76, %p77
    %p79 = scmp.ne.s32.totalorder %s70, %s71
    %p80 = scmp.eq.s32.totalorder %s18, 0
    %p81 = por %p79, %p80
    %p82 = scmp.ne.s32.totalorder %s70, %s71
    %p83 = scmp.eq.s32.totalorder %s19, 1
    %p84 = por %p82, %p83
    %p86 = scmp.ne.s32.totalorder %s71, %s85
    %p87 = scmp.eq.s32.totalorder %s19, 0
    %p88 = por %p86, %p87
    %s90 = sadd.s32 %s89, 1
    %p93 = scmp.eq.s32.totalorder %s13, 1
    %p94 = scmp.ne.s32.totalorder %s89, %s91
    %p95 = scmp.eq.s32.totalorder %s13, 0
    %p96 = por %p94, %p95
    %p97 = scmp.ne.s32.totalorder %s89, %s91
    %p98 = scmp.eq.s32.totalorder %s18, 1
    %p99 = por %p97, %p98
    %p100 = scmp.ne.s32.totalorder %s91, %s92
    %p101 = scmp.eq.s32.totalorder %s18, 0
    %p102 = por %p100, %p101
    %p103 = scmp.ne.s32.totalorder %s91, %s92
    %p104 = scmp.eq.s32.totalorder %s19, 1
    %p105 = por %p103, %p104
    %p107 = scmp.ne.s32.totalorder %s92, %s106
    %p108 = scmp.eq.s32.totalorder %s19, 0
    %p109 = por %p107, %p108
    %s111 = sadd.s32 %s110, 1
    %p114 = scmp.eq.s32.totalorder %s13, 1
    %p115 = scmp.ne.s32.totalorder %s110, %s112
    %p116 = scmp.eq.s32.totalorder %s13, 0
    %p117 = por %p115, %p116
    %p118 = scmp.ne.s32.totalorder %s110, %s112
    %p119 = scmp.eq.s32.totalorder %s18, 1
    %p120 = por %p118, %p119
    %p121 = scmp.ne.s32.totalorder %s112, %s113
    %p122 = scmp.eq.s32.totalorder %s18, 0
    %p123 = por %p121, %p122
    %p124 = scmp.ne.s32.totalorder %s112, %s113
    %p125 = scmp.eq.s32.totalorder %s19, 1
    %p126 = por %p124, %p125
    %p128 = scmp.ne.s32.totalorder %s113, %s127
    %p129 = scmp.eq.s32.totalorder %s19, 0
    %p130 = por %p128, %p129
    %s131 = ssub.s32 %s13, %s20
    %p132 = scmp.eq.s32.totalorder %s131, 0
    %s134 = sadd.s32 %s133, 1
    %s135 = scalar_select %p132, %s133, %s134
    %p138 = pneg %p132
    %p139 = scmp.eq.s32.totalorder %s13, 1
    %p140 = por %p138, %p139
    %p141 = scmp.ne.s32.totalorder %s133, %s136
    %p142 = scmp.eq.s32.totalorder %s13, 0
    %p143 = por %p141, %p142
    %p144 = scmp.ne.s32.totalorder %s133, %s136
    %p145 = scmp.eq.s32.totalorder %s18, 1
    %p146 = por %p144, %p145
    %p147 = scmp.ne.s32.totalorder %s136, %s137
    %p148 = scmp.eq.s32.totalorder %s18, 0
    %p149 = por %p147, %p148
    %p150 = scmp.ne.s32.totalorder %s136, %s137
    %p151 = scmp.eq.s32.totalorder %s19, 1
    %p152 = por %p150, %p151
    %p154 = scmp.ne.s32.totalorder %s137, %s153
    %p155 = scmp.eq.s32.totalorder %s19, 0
    %p156 = por %p154, %p155
    %s157 = ssub.s32 %s13, %s20
    %p158 = scmp.eq.s32.totalorder %s157, 0
    %s160 = sadd.s32 %s159, 1
    %s161 = scalar_select %p158, %s159, %s160
    %p164 = pneg %p158
    %p165 = scmp.eq.s32.totalorder %s13, 1
    %p166 = por %p164, %p165
    %p167 = scmp.ne.s32.totalorder %s159, %s162
    %p168 = scmp.eq.s32.totalorder %s13, 0
    %p169 = por %p167, %p168
    %p170 = scmp.ne.s32.totalorder %s159, %s162
    %p171 = scmp.eq.s32.totalorder %s18, 1
    %p172 = por %p170, %p171
    %p173 = scmp.ne.s32.totalorder %s162, %s163
    %p174 = scmp.eq.s32.totalorder %s18, 0
    %p175 = por %p173, %p174
    %p176 = scmp.ne.s32.totalorder %s162, %s163
    %p177 = scmp.eq.s32.totalorder %s19, 1
    %p178 = por %p176, %p177
    %p180 = scmp.ne.s32.totalorder %s163, %s179
    %p181 = scmp.eq.s32.totalorder %s19, 0
    %p182 = por %p180, %p181
    %p183 = scmp.le.s32.totalorder 1, %s13
    %p184 = scmp.lt.s32.totalorder %s13, 3
    %p185 = pnand %p183, %p184
    %p186 = pneg %p185
    // Predicated region
    $region9: #{_lambda_.6} parent=5 // pred_check
      _
    $region10: #{_lambda_.6} parent=5 // pred_check_branch
      %188 = sbr.rel (%p185) target = $region12
    $region11: #{_lambda_.6} parent=5 // pred_region
      %s189 = ssub.s32 %s13, 1
      // Predicated region
      $region13: #{_lambda_.6} parent=11 // pred_check
        %p190 = pneg %p60
      $region14: #{_lambda_.6} parent=11 // pred_check_branch
        %192 = sbr.rel (%p190) target = $region16
      $region15: #{_lambda_.6} parent=11 // pred_region
        _
      $region16: #{_lambda_.6} parent=11 // pred_fallthru
        _
      // Predicated region
      $region17: #{_lambda_.6} parent=11 // pred_check
        %p193 = pneg %p81
      $region18: #{_lambda_.6} parent=11 // pred_check_branch
        %195 = sbr.rel (%p193) target = $region20
      $region19: #{_lambda_.6} parent=11 // pred_region
        _
      $region20: #{_lambda_.6} parent=11 // pred_fallthru
        _
      // Predicated region
      $region21: #{_lambda_.6} parent=11 // pred_check
        %p196 = pneg %p102
      $region22: #{_lambda_.6} parent=11 // pred_check_branch
        %198 = sbr.rel (%p196) target = $region24
      $region23: #{_lambda_.6} parent=11 // pred_region
        _
      $region24: #{_lambda_.6} parent=11 // pred_fallthru
        _
      // Predicated region
      $region25: #{_lambda_.6} parent=11 // pred_check
        %p199 = pneg %p123
      $region26: #{_lambda_.6} parent=11 // pred_check_branch
        %201 = sbr.rel (%p199) target = $region28
      $region27: #{_lambda_.6} parent=11 // pred_region
        _
      $region28: #{_lambda_.6} parent=11 // pred_fallthru
        _
    $region12: #{_lambda_.6} parent=5 // pred_fallthru
      _
    %p202 = scmp.lt.s32.totalorder %s13, 2
    // Predicated region
    $region29: #{_lambda_.6} parent=5 // pred_check
      %p203 = pneg %p202
    $region30: #{_lambda_.6} parent=5 // pred_check_branch
      %205 = sbr.rel (%p203) target = $region32
    $region31: #{_lambda_.6} parent=5 // pred_region
      // Predicated region
      $region33: #{_lambda_.6} parent=31 // pred_check
        %p206 = pneg %p33
      $region34: #{_lambda_.6} parent=31 // pred_check_branch
        %208 = sbr.rel (%p206) target = $region36
      $region35: #{_lambda_.6} parent=31 // pred_region
        %p209 = scmp.lt.s32.totalorder %s13, 1
        %s210 = scalar_select %p209, %s13, 1
        %s211 = smul.addr %s210, 2
        %s212 = scalar_lea.vmem %s0, %s211
      $region36: #{_lambda_.6} parent=31 // pred_fallthru
        _
    $region32: #{_lambda_.6} parent=5 // pred_fallthru
      _
    %p213 = scmp.le.s32.totalorder 1, %s13
    %p214 = scmp.lt.s32.totalorder %s13, 3
    %p215 = pnand %p213, %p214
    %p216 = pneg %p215
    // Predicated region
    $region37: #{_lambda_.6} parent=5 // pred_check
      _
    $region38: #{_lambda_.6} parent=5 // pred_check_branch
      %218 = sbr.rel (%p215) target = $region40
    $region39: #{_lambda_.6} parent=5 // pred_region
      %s219 = ssub.s32 %s13, 1
      %p220 = scmp.lt.s32.totalorder %s18, 1
      %s221 = scalar_select %p220, %s18, 1
      %s222 = smul.addr %s221, 2
      %s223 = scalar_lea.vmem %s0, %s222
      %p224 = pneg %p39
      %p225 = pneg %p36
      %p226 = pneg %p60
      %p227 = pneg %p57
      %p228 = pneg %p81
      %p229 = pneg %p78
      %p230 = pneg %p102
      %p231 = pneg %p99
      %p232 = pneg %p123
      %p233 = pneg %p120
      %p234 = pneg %p149
      %p235 = pneg %p146
      %p236 = scmp.lt.s32.totalorder %s18, 1
      %s237 = scalar_select %p236, %s18, 1
      %s238 = smul.addr %s237, 8
      %s239 = smul.addr %s238, 8
      %s240 = scalar_lea.vmem %s5, %s239
      %p241 = pneg %p175
      %p242 = pneg %p172
      %p243 = scmp.lt.s32.totalorder %s18, 1
      %s244 = scalar_select %p243, %s18, 1
      %s245 = smul.addr %s244, 2
      %s246 = smul.addr %s245, 8
      %s247 = scalar_lea.vmem %s6, %s246
      %p248 = scmp.lt.s32.totalorder %s18, 1
      %s249 = scalar_select %p248, %s18, 1
      %s250 = smul.addr %s249, 2
      %s251 = scalar_lea.vmem %s0, %s250
      %p252 = scmp.lt.s32.totalorder %s18, 1
      %s253 = scalar_select %p252, %s18, 1
      %s254 = smul.addr %s253, 8
      %s255 = smul.addr %s254, 8
      %s256 = scalar_lea.vmem %s5, %s255
      %p257 = scmp.lt.s32.totalorder %s18, 1
      %s258 = scalar_select %p257, %s18, 1
      %s259 = smul.addr %s258, 2
      %s260 = smul.addr %s259, 8
      %s261 = scalar_lea.vmem %s6, %s260
      %v263 = vlaneseq
      %v264 = vand.u32 %v263, 127
      %v265 = vadd.s32 %v264, 128
      %v266 = vld [vmem:[%s251] sm:$0x3]
      %v268 = vlaneseq
      %v269 = vshrl.u32 %v268, 7
      %v270 = vsub.s32 0, %v269
      %v271 = vrot.slane %v266, %v270
      %v272 = vlaneseq
      %v273 = vshrl.u32 %v272, 7
      %v274 = vsub.s32 1, %v273
      %v275 = vrot.slane %v266, %v274
      %278 = vrot.lane.b32.xlu0 %v271, 16
      %v279 = vpop.permute.xlu0 %278
      %280 = vrot.lane.b32.xlu0 %v275, 16
      %v281 = vpop.permute.xlu0 %280
      %vm282 = vcmp.lt.s32.totalorder %v264, 16
      %v283 = vsel %vm282, %v279, %v281
      %v284 = vsel %vm282, %v281, %v279
      %vm285 = vcmp.ge.s32.totalorder %v264, 16
      %vm286 = vcmp.ge.s32.totalorder %v265, 16
      %v287 = vsel %vm285, %v284, 0.0
      %v288 = vsel %vm286, %v283, 0.0
      %289 = vrot.lane.b32.xlu0 %v271, 15
      %v290 = vpop.permute.xlu0 %289
      %291 = vrot.lane.b32.xlu0 %v275, 15
      %v292 = vpop.permute.xlu0 %291
      %vm293 = vcmp.lt.s32.totalorder %v264, 15
      %v294 = vsel %vm293, %v290, %v292
      %v295 = vsel %vm293, %v292, %v290
      %vm296 = vcmp.ge.s32.totalorder %v264, 15
      %vm297 = vcmp.ge.s32.totalorder %v265, 15
      %v298 = vsel %vm296, %v295, 0.0
      %v299 = vsel %vm297, %v294, 0.0
      %300 = vrot.lane.b32.xlu0 %v271, 14
      %v301 = vpop.permute.xlu0 %300
      %302 = vrot.lane.b32.xlu0 %v275, 14
      %v303 = vpop.permute.xlu0 %302
      %vm304 = vcmp.lt.s32.totalorder %v264, 14
      %v305 = vsel %vm304, %v301, %v303
      %v306 = vsel %vm304, %v303, %v301
      %vm307 = vcmp.ge.s32.totalorder %v264, 14
      %vm308 = vcmp.ge.s32.totalorder %v265, 14
      %v309 = vsel %vm307, %v306, 0.0
      %v310 = vsel %vm308, %v305, 0.0
      %311 = vrot.lane.b32.xlu0 %v271, 13
      %v312 = vpop.permute.xlu0 %311
      %313 = vrot.lane.b32.xlu0 %v275, 13
      %v314 = vpop.permute.xlu0 %313
      %vm315 = vcmp.lt.s32.totalorder %v264, 13
      %v316 = vsel %vm315, %v312, %v314
      %v317 = vsel %vm315, %v314, %v312
      %vm318 = vcmp.ge.s32.totalorder %v264, 13
      %vm319 = vcmp.ge.s32.totalorder %v265, 13
      %v320 = vsel %vm318, %v317, 0.0
      %v321 = vsel %vm319, %v316, 0.0
      %322 = vrot.lane.b32.xlu0 %v271, 12
      %v323 = vpop.permute.xlu0 %322
      %324 = vrot.lane.b32.xlu0 %v275, 12
      %v325 = vpop.permute.xlu0 %324
      %vm326 = vcmp.lt.s32.totalorder %v264, 12
      %v327 = vsel %vm326, %v323, %v325
      %v328 = vsel %vm326, %v325, %v323
      %vm329 = vcmp.ge.s32.totalorder %v264, 12
      %vm330 = vcmp.ge.s32.totalorder %v265, 12
      %v331 = vsel %vm329, %v328, 0.0
      %v332 = vsel %vm330, %v327, 0.0
      %333 = vrot.lane.b32.xlu0 %v271, 11
      %v334 = vpop.permute.xlu0 %333
      %335 = vrot.lane.b32.xlu0 %v275, 11
      %v336 = vpop.permute.xlu0 %335
      %vm337 = vcmp.lt.s32.totalorder %v264, 11
      %v338 = vsel %vm337, %v334, %v336
      %v339 = vsel %vm337, %v336, %v334
      %vm340 = vcmp.ge.s32.totalorder %v264, 11
      %vm341 = vcmp.ge.s32.totalorder %v265, 11
      %v342 = vsel %vm340, %v339, 0.0
      %v343 = vsel %vm341, %v338, 0.0
      %344 = vrot.lane.b32.xlu0 %v271, 10
      %v345 = vpop.permute.xlu0 %344
      %346 = vrot.lane.b32.xlu0 %v275, 10
      %v347 = vpop.permute.xlu0 %346
      %vm348 = vcmp.lt.s32.totalorder %v264, 10
      %v349 = vsel %vm348, %v345, %v347
      %v350 = vsel %vm348, %v347, %v345
      %vm351 = vcmp.ge.s32.totalorder %v264, 10
      %vm352 = vcmp.ge.s32.totalorder %v265, 10
      %v353 = vsel %vm351, %v350, 0.0
      %v354 = vsel %vm352, %v349, 0.0
      %355 = vrot.lane.b32.xlu0 %v271, 9
      %v356 = vpop.permute.xlu0 %355
      %357 = vrot.lane.b32.xlu0 %v275, 9
      %v358 = vpop.permute.xlu0 %357
      %vm359 = vcmp.lt.s32.totalorder %v264, 9
      %v360 = vsel %vm359, %v356, %v358
      %v361 = vsel %vm359, %v358, %v356
      %vm362 = vcmp.ge.s32.totalorder %v264, 9
      %vm363 = vcmp.ge.s32.totalorder %v265, 9
      %v364 = vsel %vm362, %v361, 0.0
      %v365 = vsel %vm363, %v360, 0.0
      %366 = vrot.lane.b32.xlu0 %v271, 8
      %v367 = vpop.permute.xlu0 %366
      %368 = vrot.lane.b32.xlu0 %v275, 8
      %v369 = vpop.permute.xlu0 %368
      %vm370 = vcmp.lt.s32.totalorder %v264, 8
      %v371 = vsel %vm370, %v367, %v369
      %v372 = vsel %vm370, %v369, %v367
      %vm373 = vcmp.ge.s32.totalorder %v264, 8
      %vm374 = vcmp.ge.s32.totalorder %v265, 8
      %v375 = vsel %vm373, %v372, 0.0
      %v376 = vsel %vm374, %v371, 0.0
      %377 = vrot.lane.b32.xlu0 %v271, 7
      %v378 = vpop.permute.xlu0 %377
      %379 = vrot.lane.b32.xlu0 %v275, 7
      %v380 = vpop.permute.xlu0 %379
      %vm381 = vcmp.lt.s32.totalorder %v264, 7
      %v382 = vsel %vm381, %v378, %v380
      %v383 = vsel %vm381, %v380, %v378
      %vm384 = vcmp.ge.s32.totalorder %v264, 7
      %vm385 = vcmp.ge.s32.totalorder %v265, 7
      %v386 = vsel %vm384, %v383, 0.0
      %v387 = vsel %vm385, %v382, 0.0
      %388 = vrot.lane.b32.xlu0 %v271, 6
      %v389 = vpop.permute.xlu0 %388
      %390 = vrot.lane.b32.xlu0 %v275, 6
      %v391 = vpop.permute.xlu0 %390
      %vm392 = vcmp.lt.s32.totalorder %v264, 6
      %v393 = vsel %vm392, %v389, %v391
      %v394 = vsel %vm392, %v391, %v389
      %vm395 = vcmp.ge.s32.totalorder %v264, 6
      %vm396 = vcmp.ge.s32.totalorder %v265, 6
      %v397 = vsel %vm395, %v394, 0.0
      %v398 = vsel %vm396, %v393, 0.0
      %399 = vrot.lane.b32.xlu0 %v271, 5
      %v400 = vpop.permute.xlu0 %399
      %401 = vrot.lane.b32.xlu0 %v275, 5
      %v402 = vpop.permute.xlu0 %401
      %vm403 = vcmp.lt.s32.totalorder %v264, 5
      %v404 = vsel %vm403, %v400, %v402
      %v405 = vsel %vm403, %v402, %v400
      %vm406 = vcmp.ge.s32.totalorder %v264, 5
      %vm407 = vcmp.ge.s32.totalorder %v265, 5
      %v408 = vsel %vm406, %v405, 0.0
      %v409 = vsel %vm407, %v404, 0.0
      %410 = vrot.lane.b32.xlu0 %v271, 4
      %v411 = vpop.permute.xlu0 %410
      %412 = vrot.lane.b32.xlu0 %v275, 4
      %v413 = vpop.permute.xlu0 %412
      %vm414 = vcmp.lt.s32.totalorder %v264, 4
      %v415 = vsel %vm414, %v411, %v413
      %v416 = vsel %vm414, %v413, %v411
      %vm417 = vcmp.ge.s32.totalorder %v264, 4
      %vm418 = vcmp.ge.s32.totalorder %v265, 4
      %v419 = vsel %vm417, %v416, 0.0
      %v420 = vsel %vm418, %v415, 0.0
      %421 = vrot.lane.b32.xlu0 %v271, 3
      %v422 = vpop.permute.xlu0 %421
      %423 = vrot.lane.b32.xlu0 %v275, 3
      %v424 = vpop.permute.xlu0 %423
      %vm425 = vcmp.lt.s32.totalorder %v264, 3
      %v426 = vsel %vm425, %v422, %v424
      %v427 = vsel %vm425, %v424, %v422
      %vm428 = vcmp.ge.s32.totalorder %v264, 3
      %vm429 = vcmp.ge.s32.totalorder %v265, 3
      %v430 = vsel %vm428, %v427, 0.0
      %v431 = vsel %vm429, %v426, 0.0
      %432 = vrot.lane.b32.xlu0 %v271, 2
      %v433 = vpop.permute.xlu0 %432
      %434 = vrot.lane.b32.xlu0 %v275, 2
      %v435 = vpop.permute.xlu0 %434
      %vm436 = vcmp.lt.s32.totalorder %v264, 2
      %v437 = vsel %vm436, %v433, %v435
      %v438 = vsel %vm436, %v435, %v433
      %vm439 = vcmp.ge.s32.totalorder %v264, 2
      %vm440 = vcmp.ge.s32.totalorder %v265, 2
      %v441 = vsel %vm439, %v438, 0.0
      %v442 = vsel %vm440, %v437, 0.0
      %443 = vrot.lane.b32.xlu0 %v271, 1
      %v444 = vpop.permute.xlu0 %443
      %445 = vrot.lane.b32.xlu0 %v275, 1
      %v446 = vpop.permute.xlu0 %445
      %vm447 = vcmp.lt.s32.totalorder %v264, 1
      %v448 = vsel %vm447, %v444, %v446
      %v449 = vsel %vm447, %v446, %v444
      %vm450 = vcmp.ge.s32.totalorder %v264, 1
      %vm451 = vcmp.ge.s32.totalorder %v265, 1
      %v452 = vsel %vm450, %v449, 0.0
      %v453 = vsel %vm451, %v448, 0.0
      %v456 = vrot.slane %v298, 7
      %v457 = vrot.slane %v299, 7
      %v462 = vrot.slane %v309, 6
      %v463 = vrot.slane %v310, 6
      %v468 = vrot.slane %v320, 5
      %v469 = vrot.slane %v321, 5
      %v474 = vrot.slane %v331, 4
      %v475 = vrot.slane %v332, 4
      %v480 = vrot.slane %v342, 3
      %v481 = vrot.slane %v343, 3
      %v486 = vrot.slane %v353, 2
      %v487 = vrot.slane %v354, 2
      %v492 = vrot.slane %v364, 1
      %v493 = vrot.slane %v365, 1
      %v498 = vrot.slane %v386, 7
      %v499 = vrot.slane %v387, 7
      %v504 = vrot.slane %v397, 6
      %v505 = vrot.slane %v398, 6
      %v510 = vrot.slane %v408, 5
      %v511 = vrot.slane %v409, 5
      %v516 = vrot.slane %v419, 4
      %v517 = vrot.slane %v420, 4
      %v522 = vrot.slane %v430, 3
      %v523 = vrot.slane %v431, 3
      %v528 = vrot.slane %v441, 2
      %v529 = vrot.slane %v442, 2
      %v534 = vrot.slane %v452, 1
      %v535 = vrot.slane %v453, 1
      %vm538 = vcmask 1040384
      %v539 = vsel %vm538, %v287, %v456
      %v540 = vsel %vm538, %v288, %v457
      %vm541 = vcmask 1041408
      %v542 = vsel %vm541, %v539, %v462
      %v543 = vsel %vm541, %v540, %v463
      %vm544 = vcmask 1042432
      %v545 = vsel %vm544, %v542, %v468
      %v546 = vsel %vm544, %v543, %v469
      %vm547 = vcmask 1043456
      %v548 = vsel %vm547, %v545, %v474
      %v549 = vsel %vm547, %v546, %v475
      %vm550 = vcmask 1044480
      %v551 = vsel %vm550, %v548, %v480
      %v552 = vsel %vm550, %v549, %v481
      %vm553 = vcmask 1045504
      %v554 = vsel %vm553, %v551, %v486
      %v555 = vsel %vm553, %v552, %v487
      %vm556 = vcmask 1046528
      %v557 = vsel %vm556, %v554, %v492
      %v558 = vsel %vm556, %v555, %v493
      %v559 = vsel %vm538, %v375, %v498
      %v560 = vsel %vm538, %v376, %v499
      %v561 = vsel %vm541, %v559, %v504
      %v562 = vsel %vm541, %v560, %v505
      %v563 = vsel %vm544, %v561, %v510
      %v564 = vsel %vm544, %v562, %v511
      %v565 = vsel %vm547, %v563, %v516
      %v566 = vsel %vm547, %v564, %v517
      %v567 = vsel %vm550, %v565, %v522
      %v568 = vsel %vm550, %v566, %v523
      %v569 = vsel %vm553, %v567, %v528
      %v570 = vsel %vm553, %v568, %v529
      %v571 = vsel %vm556, %v569, %v534
      %v572 = vsel %vm556, %v570, %v535
      %v573 = vpack.c.bf16 %v571, %v557
      %v574 = vpack.c.bf16 %v572, %v558
      %v575 = vld [vmem:[%s1] sm:$0xf]
      %v576 = vld [vmem:[%s1 + $0x4] sm:$0xf]
      %v577 = vld [vmem:[%s2] sm:$0xff]
      %v578 = vld [vmem:[%s2 + $0x8] sm:$0xff]
      %v579 = vld [vmem:[%s2 + $0x10] sm:$0xff]
      %v580 = vld [vmem:[%s2 + $0x18] sm:$0xff]
      %v583 = vunpack.c.l.b16 %v575
      %v584 = vunpack.c.l.b16 %v576
      %v585 = vpack.c.b16 %v584, %v583
      %vm586 = vcmask 130048
      %v588 = vsel %vm586, %v585, 0
      %590 = vmatprep.subr.bf16.mxu0 %v574
      %591 = vmatpush1.bf16.msra.mxu0 %v573
      %592 = vmatprep.subr.bf16.mxu0 0
      %593 = vmatpush1.bf16.msra.mxu0 0
      %594 = vmatprep.subr.bf16.mxu0 0
      %595 = vmatpush1.bf16.msra.mxu0 0
      %596 = vmatprep.subr.bf16.mxu0 0
      %597 = vmatpush1.bf16.msra.mxu0 0
      %598 = vmatprep.subr.bf16.mxu0 0
      %599 = vmatpush1.bf16.msra.mxu0 0
      %600 = vmatprep.subr.bf16.mxu0 0
      %601 = vmatpush1.bf16.msra.mxu0 0
      %602 = vmatprep.subr.bf16.mxu0 0
      %603 = vmatpush1.bf16.msra.mxu0 0
      %604 = vmatprep.subr.bf16.mxu0 0
      %605 = vmatpush1.bf16.msra.mxu0 0
      %606 = vmatprep.subr.bf16.mxu0 0
      %607 = vmatpush1.bf16.msra.mxu0 0
      %608 = vmatprep.subr.bf16.mxu0 0
      %609 = vmatpush1.bf16.msra.mxu0 0
      %610 = vmatprep.subr.bf16.mxu0 0
      %611 = vmatpush1.bf16.msra.mxu0 0
      %612 = vmatprep.subr.bf16.mxu0 0
      %613 = vmatpush1.bf16.msra.mxu0 0
      %614 = vmatprep.subr.bf16.mxu0 0
      %615 = vmatpush1.bf16.msra.mxu0 0
      %616 = vmatprep.subr.bf16.mxu0 0
      %617 = vmatpush1.bf16.msra.mxu0 0
      %618 = vmatprep.subr.bf16.mxu0 0
      %619 = vmatpush1.bf16.msra.mxu0 0
      %620 = vmatprep.subr.bf16.mxu0 0
      %621 = vmatpush1.bf16.msra.mxu0 0
      %622 = vmatprep.mubr.bf16.mxu0 0
      %623 = vmatmul.mubr.bf16.gmra.mrb[0].mxu0 %v588
      %v624 = vpop.f32.mrb[0].mxu0
      %v625 = vadd.f32 %v577, %v624
      %v626 = vpop.f32.mrb[0].mxu0
      %v627 = vadd.f32 %v578, %v626
      %v628 = vpop.f32.mrb[0].mxu0
      %v629 = vadd.f32 %v579, %v628
      %v630 = vpop.f32.mrb[0].mxu0
      %v631 = vadd.f32 %v580, %v630
      %632 = vdwg.mxu0
      %v633 = vpack.c.bf16 %v629, %v625
      %v634 = vpack.c.bf16 %v631, %v627
      %635 = vrot.lane.b32.xlu0 %v625, 1
      %v636 = vpop.permute.xlu0 %635
      %637 = vrot.lane.b32.xlu0 %v629, 1
      %v638 = vpop.permute.xlu0 %637
      %639 = vrot.lane.b32.xlu0 %v627, 1
      %v640 = vpop.permute.xlu0 %639
      %641 = vrot.lane.b32.xlu0 %v631, 1
      %v642 = vpop.permute.xlu0 %641
      %v643 = vsel %vm447, %v636, %v640
      %v644 = vsel %vm447, %v638, %v642
      %v645 = vsel %vm447, %v640, %v636
      %v646 = vsel %vm447, %v642, %v638
      %v647 = vsel %vm450, 1, 0
      %v648 = vsel %vm451, 1, 0
      %vm649 = vcmp.eq.s32.totalorder %v647, 1
      %vm650 = vcmp.eq.s32.totalorder %v648, 1
      %v651 = vsel %vm649, %v645, 0.0
      %v652 = vsel %vm650, %v643, 0.0
      %v653 = vsel %vm649, %v646, 0.0
      %v654 = vsel %vm650, %v644, 0.0
      %v655 = vpack.c.bf16 %v653, %v651
      %v656 = vpack.c.bf16 %v654, %v652
      %vm657 = vcmp.lt.s32.totalorder %v264, 255
      %vm658 = vcmp.lt.s32.totalorder %v265, 255
      %659 = vrot.lane.b32.xlu0 %v625, 127
      %v660 = vpop.permute.xlu0 %659
      %661 = vrot.lane.b32.xlu0 %v629, 127
      %v662 = vpop.permute.xlu0 %661
      %663 = vrot.lane.b32.xlu0 %v627, 127
      %v664 = vpop.permute.xlu0 %663
      %665 = vrot.lane.b32.xlu0 %v631, 127
      %v666 = vpop.permute.xlu0 %665
      %vm667 = vcmp.lt.s32.totalorder %v264, 127
      %v668 = vsel %vm667, %v660, %v664
      %v669 = vsel %vm667, %v662, %v666
      %v670 = vsel %vm667, %v664, %v660
      %v671 = vsel %vm667, %v666, %v662
      %v672 = vsel %vm657, 1, 0
      %v673 = vsel %vm658, 1, 0
      %vm674 = vcmp.eq.s32.totalorder %v672, 1
      %vm675 = vcmp.eq.s32.totalorder %v673, 1
      %v676 = vsel %vm674, %v668, 0.0
      %v677 = vsel %vm675, %v670, 0.0
      %v678 = vsel %vm674, %v669, 0.0
      %v679 = vsel %vm675, %v671, 0.0
      %v680 = vpack.c.bf16 %v678, %v676
      %v681 = vpack.c.bf16 %v679, %v677
      %v682 = vld [vmem:[%s3] sm:$0xf]
      %v683 = vld [vmem:[%s3 + $0x4] sm:$0xf]
      %s684 = scalar_lea.vmem %s3, 8
      %v685 = vld [vmem:[%s684] sm:$0xf]
      %v686 = vld [vmem:[%s684 + $0x4] sm:$0xf]
      %v689 = vunpack.c.l.b16 %v685
      %v690 = vunpack.c.l.b16 %v686
      %v691 = vpack.c.b16 %v690, %v689
      %v693 = vsel %vm586, %v691, 0
      %695 = vmatprep.subr.bf16.mxu0 %v634
      %696 = vmatpush1.bf16.msra.mxu0 %v633
      %697 = vmatprep.subr.bf16.mxu0 0
      %698 = vmatpush1.bf16.msra.mxu0 0
      %699 = vmatprep.subr.bf16.mxu0 0
      %700 = vmatpush1.bf16.msra.mxu0 0
      %701 = vmatprep.subr.bf16.mxu0 0
      %702 = vmatpush1.bf16.msra.mxu0 0
      %703 = vmatprep.subr.bf16.mxu0 0
      %704 = vmatpush1.bf16.msra.mxu0 0
      %705 = vmatprep.subr.bf16.mxu0 0
      %706 = vmatpush1.bf16.msra.mxu0 0
      %707 = vmatprep.subr.bf16.mxu0 0
      %708 = vmatpush1.bf16.msra.mxu0 0
      %709 = vmatprep.subr.bf16.mxu0 0
      %710 = vmatpush1.bf16.msra.mxu0 0
      %711 = vmatprep.subr.bf16.mxu0 0
      %712 = vmatpush1.bf16.msra.mxu0 0
      %713 = vmatprep.subr.bf16.mxu0 0
      %714 = vmatpush1.bf16.msra.mxu0 0
      %715 = vmatprep.subr.bf16.mxu0 0
      %716 = vmatpush1.bf16.msra.mxu0 0
      %717 = vmatprep.subr.bf16.mxu0 0
      %718 = vmatpush1.bf16.msra.mxu0 0
      %719 = vmatprep.subr.bf16.mxu0 0
      %720 = vmatpush1.bf16.msra.mxu0 0
      %721 = vmatprep.subr.bf16.mxu0 0
      %722 = vmatpush1.bf16.msra.mxu0 0
      %723 = vmatprep.subr.bf16.mxu0 0
      %724 = vmatpush1.bf16.msra.mxu0 0
      %725 = vmatprep.subr.bf16.mxu0 0
      %726 = vmatpush1.bf16.msra.mxu0 0
      %727 = vmatprep.mubr.bf16.mxu0 0
      %728 = vmatmul.mubr.bf16.gmra.mrb[0].mxu0 %v693
      %v729 = vpop.f32.mrb[0].mxu0
      %v730 = vadd.f32 0.0, %v729
      %v731 = vpop.f32.mrb[0].mxu0
      %v732 = vadd.f32 0.0, %v731
      %v733 = vpop.f32.mrb[0].mxu0
      %v734 = vadd.f32 0.0, %v733
      %v735 = vpop.f32.mrb[0].mxu0
      %v736 = vadd.f32 0.0, %v735
      %737 = vdwg.mxu0
      %v740 = vunpack.c.l.b16 %v682
      %v741 = vunpack.c.l.b16 %v683
      %v742 = vpack.c.b16 %v741, %v740
      %v744 = vsel %vm586, %v742, 0
      %746 = vmatprep.subr.bf16.mxu0 %v656
      %747 = vmatpush1.bf16.msra.mxu0 %v655
      %748 = vmatprep.subr.bf16.mxu0 0
      %749 = vmatpush1.bf16.msra.mxu0 0
      %750 = vmatprep.subr.bf16.mxu0 0
      %751 = vmatpush1.bf16.msra.mxu0 0
      %752 = vmatprep.subr.bf16.mxu0 0
      %753 = vmatpush1.bf16.msra.mxu0 0
      %754 = vmatprep.subr.bf16.mxu0 0
      %755 = vmatpush1.bf16.msra.mxu0 0
      %756 = vmatprep.subr.bf16.mxu0 0
      %757 = vmatpush1.bf16.msra.mxu0 0
      %758 = vmatprep.subr.bf16.mxu0 0
      %759 = vmatpush1.bf16.msra.mxu0 0
      %760 = vmatprep.subr.bf16.mxu0 0
      %761 = vmatpush1.bf16.msra.mxu0 0
      %762 = vmatprep.subr.bf16.mxu0 0
      %763 = vmatpush1.bf16.msra.mxu0 0
      %764 = vmatprep.subr.bf16.mxu0 0
      %765 = vmatpush1.bf16.msra.mxu0 0
      %766 = vmatprep.subr.bf16.mxu0 0
      %767 = vmatpush1.bf16.msra.mxu0 0
      %768 = vmatprep.subr.bf16.mxu0 0
      %769 = vmatpush1.bf16.msra.mxu0 0
      %770 = vmatprep.subr.bf16.mxu0 0
      %771 = vmatpush1.bf16.msra.mxu0 0
      %772 = vmatprep.subr.bf16.mxu0 0
      %773 = vmatpush1.bf16.msra.mxu0 0
      %774 = vmatprep.subr.bf16.mxu0 0
      %775 = vmatpush1.bf16.msra.mxu0 0
      %776 = vmatprep.subr.bf16.mxu0 0
      %777 = vmatpush1.bf16.msra.mxu0 0
      %778 = vmatprep.mubr.bf16.mxu0 0
      %779 = vmatmul.mubr.bf16.gmra.mrb[0].mxu0 %v744
      %v780 = vpop.f32.mrb[0].mxu0
      %v781 = vadd.f32 %v730, %v780
      %v782 = vpop.f32.mrb[0].mxu0
      %v783 = vadd.f32 %v732, %v782
      %v784 = vpop.f32.mrb[0].mxu0
      %v785 = vadd.f32 %v734, %v784
      %v786 = vpop.f32.mrb[0].mxu0
      %v787 = vadd.f32 %v736, %v786
      %788 = vdwg.mxu0
      %s789 = scalar_lea.vmem %s3, 16
      %v790 = vld [vmem:[%s789] sm:$0xf]
      %v791 = vld [vmem:[%s789 + $0x4] sm:$0xf]
      %v794 = vunpack.c.l.b16 %v790
      %v795 = vunpack.c.l.b16 %v791
      %v796 = vpack.c.b16 %v795, %v794
      %v798 = vsel %vm586, %v796, 0
      %800 = vmatprep.subr.bf16.mxu0 %v681
      %801 = vmatpush1.bf16.msra.mxu0 %v680
      %802 = vmatprep.subr.bf16.mxu0 0
      %803 = vmatpush1.bf16.msra.mxu0 0
      %804 = vmatprep.subr.bf16.mxu0 0
      %805 = vmatpush1.bf16.msra.mxu0 0
      %806 = vmatprep.subr.bf16.mxu0 0
      %807 = vmatpush1.bf16.msra.mxu0 0
      %808 = vmatprep.subr.bf16.mxu0 0
      %809 = vmatpush1.bf16.msra.mxu0 0
      %810 = vmatprep.subr.bf16.mxu0 0
      %811 = vmatpush1.bf16.msra.mxu0 0
      %812 = vmatprep.subr.bf16.mxu0 0
      %813 = vmatpush1.bf16.msra.mxu0 0
      %814 = vmatprep.subr.bf16.mxu0 0
      %815 = vmatpush1.bf16.msra.mxu0 0
      %816 = vmatprep.subr.bf16.mxu0 0
      %817 = vmatpush1.bf16.msra.mxu0 0
      %818 = vmatprep.subr.bf16.mxu0 0
      %819 = vmatpush1.bf16.msra.mxu0 0
      %820 = vmatprep.subr.bf16.mxu0 0
      %821 = vmatpush1.bf16.msra.mxu0 0
      %822 = vmatprep.subr.bf16.mxu0 0
      %823 = vmatpush1.bf16.msra.mxu0 0
      %824 = vmatprep.subr.bf16.mxu0 0
      %825 = vmatpush1.bf16.msra.mxu0 0
      %826 = vmatprep.subr.bf16.mxu0 0
      %827 = vmatpush1.bf16.msra.mxu0 0
      %828 = vmatprep.subr.bf16.mxu0 0
      %829 = vmatpush1.bf16.msra.mxu0 0
      %830 = vmatprep.subr.bf16.mxu0 0
      %831 = vmatpush1.bf16.msra.mxu0 0
      %832 = vmatprep.mubr.bf16.mxu0 0
      %833 = vmatmul.mubr.bf16.gmra.mrb[0].mxu0 %v798
      %v834 = vpop.f32.mrb[0].mxu0
      %v835 = vadd.f32 0.0, %v834
      %v836 = vpop.f32.mrb[0].mxu0
      %v837 = vadd.f32 0.0, %v836
      %v838 = vpop.f32.mrb[0].mxu0
      %v839 = vadd.f32 0.0, %v838
      %v840 = vpop.f32.mrb[0].mxu0
      %v841 = vadd.f32 0.0, %v840
      %842 = vdwg.mxu0
      %v843 = vadd.f32 %v781, %v835
      %v844 = vadd.f32 %v783, %v837
      %v845 = vadd.f32 %v785, %v839
      %v846 = vadd.f32 %v787, %v841
      %v847 = vadd.f32 %v843, %v625
      %v848 = vadd.f32 %v844, %v627
      %v849 = vadd.f32 %v845, %v629
      %v850 = vadd.f32 %v846, %v631
      %vm851 = vcmp.ge.f32.partialorder %v847, 0.0
      %vm852 = vcmp.ge.f32.partialorder %v848, 0.0
      %vm853 = vcmp.ge.f32.partialorder %v849, 0.0
      %vm854 = vcmp.ge.f32.partialorder %v850, 0.0
      %v855 = vmul.f32 %v847, 0.2
      %v856 = vmul.f32 %v848, 0.2
      %v857 = vmul.f32 %v849, 0.2
      %v858 = vmul.f32 %v850, 0.2
      %v859 = vsel %vm851, %v847, %v855
      %v860 = vsel %vm852, %v848, %v856
      %v861 = vsel %vm853, %v849, %v857
      %v862 = vsel %vm854, %v850, %v858
      %v863 = vpack.c.bf16 %v861, %v859
      %v864 = vpack.c.bf16 %v862, %v860
      %865 = vrot.lane.b32.xlu0 %v859, 3
      %v866 = vpop.permute.xlu0 %865
      %867 = vrot.lane.b32.xlu0 %v861, 3
      %v868 = vpop.permute.xlu0 %867
      %869 = vrot.lane.b32.xlu0 %v860, 3
      %v870 = vpop.permute.xlu0 %869
      %871 = vrot.lane.b32.xlu0 %v862, 3
      %v872 = vpop.permute.xlu0 %871
      %v873 = vsel %vm425, %v866, %v870
      %v874 = vsel %vm425, %v868, %v872
      %v875 = vsel %vm425, %v870, %v866
      %v876 = vsel %vm425, %v872, %v868
      %v877 = vsel %vm428, 1, 0
      %v878 = vsel %vm429, 1, 0
      %vm879 = vcmp.eq.s32.totalorder %v877, 1
      %vm880 = vcmp.eq.s32.totalorder %v878, 1
      %v881 = vsel %vm879, %v875, 0.0
      %v882 = vsel %vm880, %v873, 0.0
      %v883 = vsel %vm879, %v876, 0.0
      %v884 = vsel %vm880, %v874, 0.0
      %v885 = vpack.c.bf16 %v883, %v881
      %v886 = vpack.c.bf16 %v884, %v882
      %vm887 = vcmp.lt.s32.totalorder %v264, 253
      %vm888 = vcmp.lt.s32.totalorder %v265, 253
      %889 = vrot.lane.b32.xlu0 %v859, 125
      %v890 = vpop.permute.xlu0 %889
      %891 = vrot.lane.b32.xlu0 %v861, 125
      %v892 = vpop.permute.xlu0 %891
      %893 = vrot.lane.b32.xlu0 %v860, 125
      %v894 = vpop.permute.xlu0 %893
      %895 = vrot.lane.b32.xlu0 %v862, 125
      %v896 = vpop.permute.xlu0 %895
      %vm897 = vcmp.lt.s32.totalorder %v264, 125
      %v898 = vsel %vm897, %v890, %v894
      %v899 = vsel %vm897, %v892, %v896
      %v900 = vsel %vm897, %v894, %v890
      %v901 = vsel %vm897, %v896, %v892
      %v902 = vsel %vm887, 1, 0
      %v903 = vsel %vm888, 1, 0
      %vm904 = vcmp.eq.s32.totalorder %v902, 1
      %vm905 = vcmp.eq.s32.totalorder %v903, 1
      %v906 = vsel %vm904, %v898, 0.0
      %v907 = vsel %vm905, %v900, 0.0
      %v908 = vsel %vm904, %v899, 0.0
      %v909 = vsel %vm905, %v901, 0.0
      %v910 = vpack.c.bf16 %v908, %v906
      %v911 = vpack.c.bf16 %v909, %v907
      %s912 = scalar_lea.vmem %s3, 24
      %v913 = vld [vmem:[%s912] sm:$0xf]
      %v914 = vld [vmem:[%s912 + $0x4] sm:$0xf]
      %s915 = scalar_lea.vmem %s3, 32
      %v916 = vld [vmem:[%s915] sm:$0xf]
      %v917 = vld [vmem:[%s915 + $0x4] sm:$0xf]
      %v920 = vunpack.c.l.b16 %v916
      %v921 = vunpack.c.l.b16 %v917
      %v922 = vpack.c.b16 %v921, %v920
      %v924 = vsel %vm586, %v922, 0
      %926 = vmatprep.subr.bf16.mxu0 %v864
      %927 = vmatpush1.bf16.msra.mxu0 %v863
      %928 = vmatprep.subr.bf16.mxu0 0
      %929 = vmatpush1.bf16.msra.mxu0 0
      %930 = vmatprep.subr.bf16.mxu0 0
      %931 = vmatpush1.bf16.msra.mxu0 0
      %932 = vmatprep.subr.bf16.mxu0 0
      %933 = vmatpush1.bf16.msra.mxu0 0
      %934 = vmatprep.subr.bf16.mxu0 0
      %935 = vmatpush1.bf16.msra.mxu0 0
      %936 = vmatprep.subr.bf16.mxu0 0
      %937 = vmatpush1.bf16.msra.mxu0 0
      %938 = vmatprep.subr.bf16.mxu0 0
      %939 = vmatpush1.bf16.msra.mxu0 0
      %940 = vmatprep.subr.bf16.mxu0 0
      %941 = vmatpush1.bf16.msra.mxu0 0
      %942 = vmatprep.subr.bf16.mxu0 0
      %943 = vmatpush1.bf16.msra.mxu0 0
      %944 = vmatprep.subr.bf16.mxu0 0
      %945 = vmatpush1.bf16.msra.mxu0 0
      %946 = vmatprep.subr.bf16.mxu0 0
      %947 = vmatpush1.bf16.msra.mxu0 0
      %948 = vmatprep.subr.bf16.mxu0 0
      %949 = vmatpush1.bf16.msra.mxu0 0
      %950 = vmatprep.subr.bf16.mxu0 0
      %951 = vmatpush1.bf16.msra.mxu0 0
      %952 = vmatprep.subr.bf16.mxu0 0
      %953 = vmatpush1.bf16.msra.mxu0 0
      %954 = vmatprep.subr.bf16.mxu0 0
      %955 = vmatpush1.bf16.msra.mxu0 0
      %956 = vmatprep.subr.bf16.mxu0 0
      %957 = vmatpush1.bf16.msra.mxu0 0
      %958 = vmatprep.mubr.bf16.mxu0 0
      %959 = vmatmul.mubr.bf16.gmra.mrb[0].mxu0 %v924
      %v960 = vpop.f32.mrb[0].mxu0
      %v961 = vadd.f32 0.0, %v960
      %v962 = vpop.f32.mrb[0].mxu0
      %v963 = vadd.f32 0.0, %v962
      %v964 = vpop.f32.mrb[0].mxu0
      %v965 = vadd.f32 0.0, %v964
      %v966 = vpop.f32.mrb[0].mxu0
      %v967 = vadd.f32 0.0, %v966
      %968 = vdwg.mxu0
      %v971 = vunpack.c.l.b16 %v913
      %v972 = vunpack.c.l.b16 %v914
      %v973 = vpack.c.b16 %v972, %v971
      %v975 = vsel %vm586, %v973, 0
      %977 = vmatprep.subr.bf16.mxu0 %v886
      %978 = vmatpush1.bf16.msra.mxu0 %v885
      %979 = vmatprep.subr.bf16.mxu0 0
      %980 = vmatpush1.bf16.msra.mxu0 0
      %981 = vmatprep.subr.bf16.mxu0 0
      %982 = vmatpush1.bf16.msra.mxu0 0
      %983 = vmatprep.subr.bf16.mxu0 0
      %984 = vmatpush1.bf16.msra.mxu0 0
      %985 = vmatprep.subr.bf16.mxu0 0
      %986 = vmatpush1.bf16.msra.mxu0 0
      %987 = vmatprep.subr.bf16.mxu0 0
      %988 = vmatpush1.bf16.msra.mxu0 0
      %989 = vmatprep.subr.bf16.mxu0 0
      %990 = vmatpush1.bf16.msra.mxu0 0
      %991 = vmatprep.subr.bf16.mxu0 0
      %992 = vmatpush1.bf16.msra.mxu0 0
      %993 = vmatprep.subr.bf16.mxu0 0
      %994 = vmatpush1.bf16.msra.mxu0 0
      %995 = vmatprep.subr.bf16.mxu0 0
      %996 = vmatpush1.bf16.msra.mxu0 0
      %997 = vmatprep.subr.bf16.mxu0 0
      %998 = vmatpush1.bf16.msra.mxu0 0
      %999 = vmatprep.subr.bf16.mxu0 0
      %1000 = vmatpush1.bf16.msra.mxu0 0
      %1001 = vmatprep.subr.bf16.mxu0 0
      %1002 = vmatpush1.bf16.msra.mxu0 0
      %1003 = vmatprep.subr.bf16.mxu0 0
      %1004 = vmatpush1.bf16.msra.mxu0 0
      %1005 = vmatprep.subr.bf16.mxu0 0
      %1006 = vmatpush1.bf16.msra.mxu0 0
      %1007 = vmatprep.subr.bf16.mxu0 0
      %1008 = vmatpush1.bf16.msra.mxu0 0
      %1009 = vmatprep.mubr.bf16.mxu0 0
      %1010 = vmatmul.mubr.bf16.gmra.mrb[0].mxu0 %v975
      %v1011 = vpop.f32.mrb[0].mxu0
      %v1012 = vadd.f32 %v961, %v1011
      %v1013 = vpop.f32.mrb[0].mxu0
      %v1014 = vadd.f32 %v963, %v1013
      %v1015 = vpop.f32.mrb[0].mxu0
      %v1016 = vadd.f32 %v965, %v1015
      %v1017 = vpop.f32.mrb[0].mxu0
      %v1018 = vadd.f32 %v967, %v1017
      %1019 = vdwg.mxu0
      %s1020 = scalar_lea.vmem %s3, 40
      %v1021 = vld [vmem:[%s1020] sm:$0xf]
      %v1022 = vld [vmem:[%s1020 + $0x4] sm:$0xf]
      %v1025 = vunpack.c.l.b16 %v1021
      %v1026 = vunpack.c.l.b16 %v1022
      %v1027 = vpack.c.b16 %v1026, %v1025
      %v1029 = vsel %vm586, %v1027, 0
      %1031 = vmatprep.subr.bf16.mxu0 %v911
      %1032 = vmatpush1.bf16.msra.mxu0 %v910
      %1033 = vmatprep.subr.bf16.mxu0 0
      %1034 = vmatpush1.bf16.msra.mxu0 0
      %1035 = vmatprep.subr.bf16.mxu0 0
      %1036 = vmatpush1.bf16.msra.mxu0 0
      %1037 = vmatprep.subr.bf16.mxu0 0
      %1038 = vmatpush1.bf16.msra.mxu0 0
      %1039 = vmatprep.subr.bf16.mxu0 0
      %1040 = vmatpush1.bf16.msra.mxu0 0
      %1041 = vmatprep.subr.bf16.mxu0 0
      %1042 = vmatpush1.bf16.msra.mxu0 0
      %1043 = vmatprep.subr.bf16.mxu0 0
      %1044 = vmatpush1.bf16.msra.mxu0 0
      %1045 = vmatprep.subr.bf16.mxu0 0
      %1046 = vmatpush1.bf16.msra.mxu0 0
      %1047 = vmatprep.subr.bf16.mxu0 0
      %1048 = vmatpush1.bf16.msra.mxu0 0
      %1049 = vmatprep.subr.bf16.mxu0 0
      %1050 = vmatpush1.bf16.msra.mxu0 0
      %1051 = vmatprep.subr.bf16.mxu0 0
      %1052 = vmatpush1.bf16.msra.mxu0 0
      %1053 = vmatprep.subr.bf16.mxu0 0
      %1054 = vmatpush1.bf16.msra.mxu0 0
      %1055 = vmatprep.subr.bf16.mxu0 0
      %1056 = vmatpush1.bf16.msra.mxu0 0
      %1057 = vmatprep.subr.bf16.mxu0 0
      %1058 = vmatpush1.bf16.msra.mxu0 0
      %1059 = vmatprep.subr.bf16.mxu0 0
      %1060 = vmatpush1.bf16.msra.mxu0 0
      %1061 = vmatprep.subr.bf16.mxu0 0
      %1062 = vmatpush1.bf16.msra.mxu0 0
      %1063 = vmatprep.mubr.bf16.mxu0 0
      %1064 = vmatmul.mubr.bf16.gmra.mrb[0].mxu0 %v1029
      %v1065 = vpop.f32.mrb[0].mxu0
      %v1066 = vadd.f32 0.0, %v1065
      %v1067 = vpop.f32.mrb[0].mxu0
      %v1068 = vadd.f32 0.0, %v1067
      %v1069 = vpop.f32.mrb[0].mxu0
      %v1070 = vadd.f32 0.0, %v1069
      %v1071 = vpop.f32.mrb[0].mxu0
      %v1072 = vadd.f32 0.0, %v1071
      %1073 = vdwg.mxu0
      %v1074 = vadd.f32 %v1012, %v1066
      %v1075 = vadd.f32 %v1014, %v1068
      %v1076 = vadd.f32 %v1016, %v1070
      %v1077 = vadd.f32 %v1018, %v1072
      %v1078 = vadd.f32 %v1074, %v859
      %v1079 = vadd.f32 %v1075, %v860
      %v1080 = vadd.f32 %v1076, %v861
      %v1081 = vadd.f32 %v1077, %v862
      %vm1082 = vcmp.ge.f32.partialorder %v1078, 0.0
      %vm1083 = vcmp.ge.f32.partialorder %v1079, 0.0
      %vm1084 = vcmp.ge.f32.partialorder %v1080, 0.0
      %vm1085 = vcmp.ge.f32.partialorder %v1081, 0.0
      %v1086 = vmul.f32 %v1078, 0.2
      %v1087 = vmul.f32 %v1079, 0.2
      %v1088 = vmul.f32 %v1080, 0.2
      %v1089 = vmul.f32 %v1081, 0.2
      %v1090 = vsel %vm1082, %v1078, %v1086
      %v1091 = vsel %vm1083, %v1079, %v1087
      %v1092 = vsel %vm1084, %v1080, %v1088
      %v1093 = vsel %vm1085, %v1081, %v1089
      %v1094 = vpack.c.bf16 %v1092, %v1090
      %v1095 = vpack.c.bf16 %v1093, %v1091
      %1096 = vrot.lane.b32.xlu0 %v1090, 9
      %v1097 = vpop.permute.xlu0 %1096
      %1098 = vrot.lane.b32.xlu0 %v1092, 9
      %v1099 = vpop.permute.xlu0 %1098
      %1100 = vrot.lane.b32.xlu0 %v1091, 9
      %v1101 = vpop.permute.xlu0 %1100
      %1102 = vrot.lane.b32.xlu0 %v1093, 9
      %v1103 = vpop.permute.xlu0 %1102
      %v1104 = vsel %vm359, %v1097, %v1101
      %v1105 = vsel %vm359, %v1099, %v1103
      %v1106 = vsel %vm359, %v1101, %v1097
      %v1107 = vsel %vm359, %v1103, %v1099
      %v1108 = vsel %vm362, 1, 0
      %v1109 = vsel %vm363, 1, 0
      %vm1110 = vcmp.eq.s32.totalorder %v1108, 1
      %vm1111 = vcmp.eq.s32.totalorder %v1109, 1
      %v1112 = vsel %vm1110, %v1106, 0.0
      %v1113 = vsel %vm1111, %v1104, 0.0
      %v1114 = vsel %vm1110, %v1107, 0.0
      %v1115 = vsel %vm1111, %v1105, 0.0
      %v1116 = vpack.c.bf16 %v1114, %v1112
      %v1117 = vpack.c.bf16 %v1115, %v1113
      %vm1118 = vcmp.lt.s32.totalorder %v264, 247
      %vm1119 = vcmp.lt.s32.totalorder %v265, 247
      %1120 = vrot.lane.b32.xlu0 %v1090, 119
      %v1121 = vpop.permute.xlu0 %1120
      %1122 = vrot.lane.b32.xlu0 %v1092, 119
      %v1123 = vpop.permute.xlu0 %1122
      %1124 = vrot.lane.b32.xlu0 %v1091, 119
      %v1125 = vpop.permute.xlu0 %1124
      %1126 = vrot.lane.b32.xlu0 %v1093, 119
      %v1127 = vpop.permute.xlu0 %1126
      %vm1128 = vcmp.lt.s32.totalorder %v264, 119
      %v1129 = vsel %vm1128, %v1121, %v1125
      %v1130 = vsel %vm1128, %v1123, %v1127
      %v1131 = vsel %vm1128, %v1125, %v1121
      %v1132 = vsel %vm1128, %v1127, %v1123
      %v1133 = vsel %vm1118, 1, 0
      %v1134 = vsel %vm1119, 1, 0
      %vm1135 = vcmp.eq.s32.totalorder %v1133, 1
      %vm1136 = vcmp.eq.s32.totalorder %v1134, 1
      %v1137 = vsel %vm1135, %v1129, 0.0
      %v1138 = vsel %vm1136, %v1131, 0.0
      %v1139 = vsel %vm1135, %v1130, 0.0
      %v1140 = vsel %vm1136, %v1132, 0.0
      %v1141 = vpack.c.bf16 %v1139, %v1137
      %v1142 = vpack.c.bf16 %v1140, %v1138
      %s1143 = scalar_lea.vmem %s3, 48
      %v1144 = vld [vmem:[%s1143] sm:$0xf]
      %v1145 = vld [vmem:[%s1143 + $0x4] sm:$0xf]
      %s1146 = scalar_lea.vmem %s3, 56
      %v1147 = vld [vmem:[%s1146] sm:$0xf]
      %v1148 = vld [vmem:[%s1146 + $0x4] sm:$0xf]
      %v1151 = vunpack.c.l.b16 %v1147
      %v1152 = vunpack.c.l.b16 %v1148
      %v1153 = vpack.c.b16 %v1152, %v1151
      %v1155 = vsel %vm586, %v1153, 0
      %1157 = vmatprep.subr.bf16.mxu0 %v1095
      %1158 = vmatpush1.bf16.msra.mxu0 %v1094
      %1159 = vmatprep.subr.bf16.mxu0 0
      %1160 = vmatpush1.bf16.msra.mxu0 0
      %1161 = vmatprep.subr.bf16.mxu0 0
      %1162 = vmatpush1.bf16.msra.mxu0 0
      %1163 = vmatprep.subr.bf16.mxu0 0
      %1164 = vmatpush1.bf16.msra.mxu0 0
      %1165 = vmatprep.subr.bf16.mxu0 0
      %1166 = vmatpush1.bf16.msra.mxu0 0
      %1167 = vmatprep.subr.bf16.mxu0 0
      %1168 = vmatpush1.bf16.msra.mxu0 0
      %1169 = vmatprep.subr.bf16.mxu0 0
      %1170 = vmatpush1.bf16.msra.mxu0 0
      %1171 = vmatprep.subr.bf16.mxu0 0
      %1172 = vmatpush1.bf16.msra.mxu0 0
      %1173 = vmatprep.subr.bf16.mxu0 0
      %1174 = vmatpush1.bf16.msra.mxu0 0
      %1175 = vmatprep.subr.bf16.mxu0 0
      %1176 = vmatpush1.bf16.msra.mxu0 0
      %1177 = vmatprep.subr.bf16.mxu0 0
      %1178 = vmatpush1.bf16.msra.mxu0 0
      %1179 = vmatprep.subr.bf16.mxu0 0
      %1180 = vmatpush1.bf16.msra.mxu0 0
      %1181 = vmatprep.subr.bf16.mxu0 0
      %1182 = vmatpush1.bf16.msra.mxu0 0
      %1183 = vmatprep.subr.bf16.mxu0 0
      %1184 = vmatpush1.bf16.msra.mxu0 0
      %1185 = vmatprep.subr.bf16.mxu0 0
      %1186 = vmatpush1.bf16.msra.mxu0 0
      %1187 = vmatprep.subr.bf16.mxu0 0
      %1188 = vmatpush1.bf16.msra.mxu0 0
      %1189 = vmatprep.mubr.bf16.mxu0 0
      %1190 = vmatmul.mubr.bf16.gmra.mrb[0].mxu0 %v1155
      %v1191 = vpop.f32.mrb[0].mxu0
      %v1192 = vadd.f32 0.0, %v1191
      %v1193 = vpop.f32.mrb[0].mxu0
      %v1194 = vadd.f32 0.0, %v1193
      %v1195 = vpop.f32.mrb[0].mxu0
      %v1196 = vadd.f32 0.0, %v1195
      %v1197 = vpop.f32.mrb[0].mxu0
      %v1198 = vadd.f32 0.0, %v1197
      %1199 = vdwg.mxu0
      %v1202 = vunpack.c.l.b16 %v1144
      %v1203 = vunpack.c.l.b16 %v1145
      %v1204 = vpack.c.b16 %v1203, %v1202
      %v1206 = vsel %vm586, %v1204, 0
      %1208 = vmatprep.subr.bf16.mxu0 %v1117
      %1209 = vmatpush1.bf16.msra.mxu0 %v1116
      %1210 = vmatprep.subr.bf16.mxu0 0
      %1211 = vmatpush1.bf16.msra.mxu0 0
      %1212 = vmatprep.subr.bf16.mxu0 0
      %1213 = vmatpush1.bf16.msra.mxu0 0
      %1214 = vmatprep.subr.bf16.mxu0 0
      %1215 = vmatpush1.bf16.msra.mxu0 0
      %1216 = vmatprep.subr.bf16.mxu0 0
      %1217 = vmatpush1.bf16.msra.mxu0 0
      %1218 = vmatprep.subr.bf16.mxu0 0
      %1219 = vmatpush1.bf16.msra.mxu0 0
      %1220 = vmatprep.subr.bf16.mxu0 0
      %1221 = vmatpush1.bf16.msra.mxu0 0
      %1222 = vmatprep.subr.bf16.mxu0 0
      %1223 = vmatpush1.bf16.msra.mxu0 0
      %1224 = vmatprep.subr.bf16.mxu0 0
      %1225 = vmatpush1.bf16.msra.mxu0 0
      %1226 = vmatprep.subr.bf16.mxu0 0
      %1227 = vmatpush1.bf16.msra.mxu0 0
      %1228 = vmatprep.subr.bf16.mxu0 0
      %1229 = vmatpush1.bf16.msra.mxu0 0
      %1230 = vmatprep.subr.bf16.mxu0 0
      %1231 = vmatpush1.bf16.msra.mxu0 0
      %1232 = vmatprep.subr.bf16.mxu0 0
      %1233 = vmatpush1.bf16.msra.mxu0 0
      %1234 = vmatprep.subr.bf16.mxu0 0
      %1235 = vmatpush1.bf16.msra.mxu0 0
      %1236 = vmatprep.subr.bf16.mxu0 0
      %1237 = vmatpush1.bf16.msra.mxu0 0
      %1238 = vmatprep.subr.bf16.mxu0 0
      %1239 = vmatpush1.bf16.msra.mxu0 0
      %1240 = vmatprep.mubr.bf16.mxu0 0
      %1241 = vmatmul.mubr.bf16.gmra.mrb[0].mxu0 %v1206
      %v1242 = vpop.f32.mrb[0].mxu0
      %v1243 = vadd.f32 %v1192, %v1242
      %v1244 = vpop.f32.mrb[0].mxu0
      %v1245 = vadd.f32 %v1194, %v1244
      %v1246 = vpop.f32.mrb[0].mxu0
      %v1247 = vadd.f32 %v1196, %v1246
      %v1248 = vpop.f32.mrb[0].mxu0
      %v1249 = vadd.f32 %v1198, %v1248
      %1250 = vdwg.mxu0
      %s1251 = scalar_lea.vmem %s3, 64
      %v1252 = vld [vmem:[%s1251] sm:$0xf]
      %v1253 = vld [vmem:[%s1251 + $0x4] sm:$0xf]
      %v1256 = vunpack.c.l.b16 %v1252
      %v1257 = vunpack.c.l.b16 %v1253
      %v1258 = vpack.c.b16 %v1257, %v1256
      %v1260 = vsel %vm586, %v1258, 0
      %1262 = vmatprep.subr.bf16.mxu0 %v1142
      %1263 = vmatpush1.bf16.msra.mxu0 %v1141
      %1264 = vmatprep.subr.bf16.mxu0 0
      %1265 = vmatpush1.bf16.msra.mxu0 0
      %1266 = vmatprep.subr.bf16.mxu0 0
      %1267 = vmatpush1.bf16.msra.mxu0 0
      %1268 = vmatprep.subr.bf16.mxu0 0
      %1269 = vmatpush1.bf16.msra.mxu0 0
      %1270 = vmatprep.subr.bf16.mxu0 0
      %1271 = vmatpush1.bf16.msra.mxu0 0
      %1272 = vmatprep.subr.bf16.mxu0 0
      %1273 = vmatpush1.bf16.msra.mxu0 0
      %1274 = vmatprep.subr.bf16.mxu0 0
      %1275 = vmatpush1.bf16.msra.mxu0 0
      %1276 = vmatprep.subr.bf16.mxu0 0
      %1277 = vmatpush1.bf16.msra.mxu0 0
      %1278 = vmatprep.subr.bf16.mxu0 0
      %1279 = vmatpush1.bf16.msra.mxu0 0
      %1280 = vmatprep.subr.bf16.mxu0 0
      %1281 = vmatpush1.bf16.msra.mxu0 0
      %1282 = vmatprep.subr.bf16.mxu0 0
      %1283 = vmatpush1.bf16.msra.mxu0 0
      %1284 = vmatprep.subr.bf16.mxu0 0
      %1285 = vmatpush1.bf16.msra.mxu0 0
      %1286 = vmatprep.subr.bf16.mxu0 0
      %1287 = vmatpush1.bf16.msra.mxu0 0
      %1288 = vmatprep.subr.bf16.mxu0 0
      %1289 = vmatpush1.bf16.msra.mxu0 0
      %1290 = vmatprep.subr.bf16.mxu0 0
      %1291 = vmatpush1.bf16.msra.mxu0 0
      %1292 = vmatprep.subr.bf16.mxu0 0
      %1293 = vmatpush1.bf16.msra.mxu0 0
      %1294 = vmatprep.mubr.bf16.mxu0 0
      %1295 = vmatmul.mubr.bf16.gmra.mrb[0].mxu0 %v1260
      %v1296 = vpop.f32.mrb[0].mxu0
      %v1297 = vadd.f32 0.0, %v1296
      %v1298 = vpop.f32.mrb[0].mxu0
      %v1299 = vadd.f32 0.0, %v1298
      %v1300 = vpop.f32.mrb[0].mxu0
      %v1301 = vadd.f32 0.0, %v1300
      %v1302 = vpop.f32.mrb[0].mxu0
      %v1303 = vadd.f32 0.0, %v1302
      %1304 = vdwg.mxu0
      %v1305 = vadd.f32 %v1243, %v1297
      %v1306 = vadd.f32 %v1245, %v1299
      %v1307 = vadd.f32 %v1247, %v1301
      %v1308 = vadd.f32 %v1249, %v1303
      %v1309 = vadd.f32 %v1305, %v1090
      %v1310 = vadd.f32 %v1306, %v1091
      %v1311 = vadd.f32 %v1307, %v1092
      %v1312 = vadd.f32 %v1308, %v1093
      %vm1313 = vcmp.ge.f32.partialorder %v1309, 0.0
      %vm1314 = vcmp.ge.f32.partialorder %v1310, 0.0
      %vm1315 = vcmp.ge.f32.partialorder %v1311, 0.0
      %vm1316 = vcmp.ge.f32.partialorder %v1312, 0.0
      %v1317 = vmul.f32 %v1309, 0.2
      %v1318 = vmul.f32 %v1310, 0.2
      %v1319 = vmul.f32 %v1311, 0.2
      %v1320 = vmul.f32 %v1312, 0.2
      %v1321 = vsel %vm1313, %v1309, %v1317
      %v1322 = vsel %vm1314, %v1310, %v1318
      %v1323 = vsel %vm1315, %v1311, %v1319
      %v1324 = vsel %vm1316, %v1312, %v1320
      %v1325 = vpack.c.bf16 %v1323, %v1321
      %v1326 = vpack.c.bf16 %v1324, %v1322
      %vm1327 = vcmp.ge.s32.totalorder %v264, 27
      %vm1328 = vcmp.ge.s32.totalorder %v265, 27
      %1329 = vrot.lane.b32.xlu0 %v1321, 27
      %v1330 = vpop.permute.xlu0 %1329
      %1331 = vrot.lane.b32.xlu0 %v1323, 27
      %v1332 = vpop.permute.xlu0 %1331
      %1333 = vrot.lane.b32.xlu0 %v1322, 27
      %v1334 = vpop.permute.xlu0 %1333
      %1335 = vrot.lane.b32.xlu0 %v1324, 27
      %v1336 = vpop.permute.xlu0 %1335
      %vm1337 = vcmp.lt.s32.totalorder %v264, 27
      %v1338 = vsel %vm1337, %v1330, %v1334
      %v1339 = vsel %vm1337, %v1332, %v1336
      %v1340 = vsel %vm1337, %v1334, %v1330
      %v1341 = vsel %vm1337, %v1336, %v1332
      %v1342 = vsel %vm1327, 1, 0
      %v1343 = vsel %vm1328, 1, 0
      %vm1344 = vcmp.eq.s32.totalorder %v1342, 1
      %vm1345 = vcmp.eq.s32.totalorder %v1343, 1
      %v1346 = vsel %vm1344, %v1340, 0.0
      %v1347 = vsel %vm1345, %v1338, 0.0
      %v1348 = vsel %vm1344, %v1341, 0.0
      %v1349 = vsel %vm1345, %v1339, 0.0
      %v1350 = vpack.c.bf16 %v1348, %v1346
      %v1351 = vpack.c.bf16 %v1349, %v1347
      %vm1352 = vcmp.lt.s32.totalorder %v264, 229
      %vm1353 = vcmp.lt.s32.totalorder %v265, 229
      %1354 = vrot.lane.b32.xlu0 %v1321, 101
      %v1355 = vpop.permute.xlu0 %1354
      %1356 = vrot.lane.b32.xlu0 %v1323, 101
      %v1357 = vpop.permute.xlu0 %1356
      %1358 = vrot.lane.b32.xlu0 %v1322, 101
      %v1359 = vpop.permute.xlu0 %1358
      %1360 = vrot.lane.b32.xlu0 %v1324, 101
      %v1361 = vpop.permute.xlu0 %1360
      %vm1362 = vcmp.lt.s32.totalorder %v264, 101
      %v1363 = vsel %vm1362, %v1355, %v1359
      %v1364 = vsel %vm1362, %v1357, %v1361
      %v1365 = vsel %vm1362, %v1359, %v1355
      %v1366 = vsel %vm1362, %v1361, %v1357
      %v1367 = vsel %vm1352, 1, 0
      %v1368 = vsel %vm1353, 1, 0
      %vm1369 = vcmp.eq.s32.totalorder %v1367, 1
      %vm1370 = vcmp.eq.s32.totalorder %v1368, 1
      %v1371 = vsel %vm1369, %v1363, 0.0
      %v1372 = vsel %vm1370, %v1365, 0.0
      %v1373 = vsel %vm1369, %v1364, 0.0
      %v1374 = vsel %vm1370, %v1366, 0.0
      %v1375 = vpack.c.bf16 %v1373, %v1371
      %v1376 = vpack.c.bf16 %v1374, %v1372
      %s1377 = scalar_lea.vmem %s3, 72
      %v1378 = vld [vmem:[%s1377] sm:$0xf]
      %v1379 = vld [vmem:[%s1377 + $0x4] sm:$0xf]
      %s1380 = scalar_lea.vmem %s3, 80
      %v1381 = vld [vmem:[%s1380] sm:$0xf]
      %v1382 = vld [vmem:[%s1380 + $0x4] sm:$0xf]
      %v1385 = vunpack.c.l.b16 %v1381
      %v1386 = vunpack.c.l.b16 %v1382
      %v1387 = vpack.c.b16 %v1386, %v1385
      %v1389 = vsel %vm586, %v1387, 0
      %1391 = vmatprep.subr.bf16.mxu0 %v1326
      %1392 = vmatpush1.bf16.msra.mxu0 %v1325
      %1393 = vmatprep.subr.bf16.mxu0 0
      %1394 = vmatpush1.bf16.msra.mxu0 0
      %1395 = vmatprep.subr.bf16.mxu0 0
      %1396 = vmatpush1.bf16.msra.mxu0 0
      %1397 = vmatprep.subr.bf16.mxu0 0
      %1398 = vmatpush1.bf16.msra.mxu0 0
      %1399 = vmatprep.subr.bf16.mxu0 0
      %1400 = vmatpush1.bf16.msra.mxu0 0
      %1401 = vmatprep.subr.bf16.mxu0 0
      %1402 = vmatpush1.bf16.msra.mxu0 0
      %1403 = vmatprep.subr.bf16.mxu0 0
      %1404 = vmatpush1.bf16.msra.mxu0 0
      %1405 = vmatprep.subr.bf16.mxu0 0
      %1406 = vmatpush1.bf16.msra.mxu0 0
      %1407 = vmatprep.subr.bf16.mxu0 0
      %1408 = vmatpush1.bf16.msra.mxu0 0
      %1409 = vmatprep.subr.bf16.mxu0 0
      %1410 = vmatpush1.bf16.msra.mxu0 0
      %1411 = vmatprep.subr.bf16.mxu0 0
      %1412 = vmatpush1.bf16.msra.mxu0 0
      %1413 = vmatprep.subr.bf16.mxu0 0
      %1414 = vmatpush1.bf16.msra.mxu0 0
      %1415 = vmatprep.subr.bf16.mxu0 0
      %1416 = vmatpush1.bf16.msra.mxu0 0
      %1417 = vmatprep.subr.bf16.mxu0 0
      %1418 = vmatpush1.bf16.msra.mxu0 0
      %1419 = vmatprep.subr.bf16.mxu0 0
      %1420 = vmatpush1.bf16.msra.mxu0 0
      %1421 = vmatprep.subr.bf16.mxu0 0
      %1422 = vmatpush1.bf16.msra.mxu0 0
      %1423 = vmatprep.mubr.bf16.mxu0 0
      %1424 = vmatmul.mubr.bf16.gmra.mrb[0].mxu0 %v1389
      %v1425 = vpop.f32.mrb[0].mxu0
      %v1426 = vadd.f32 0.0, %v1425
      %v1427 = vpop.f32.mrb[0].mxu0
      %v1428 = vadd.f32 0.0, %v1427
      %v1429 = vpop.f32.mrb[0].mxu0
      %v1430 = vadd.f32 0.0, %v1429
      %v1431 = vpop.f32.mrb[0].mxu0
      %v1432 = vadd.f32 0.0, %v1431
      %1433 = vdwg.mxu0
      %v1436 = vunpack.c.l.b16 %v1378
      %v1437 = vunpack.c.l.b16 %v1379
      %v1438 = vpack.c.b16 %v1437, %v1436
      %v1440 = vsel %vm586, %v1438, 0
      %1442 = vmatprep.subr.bf16.mxu0 %v1351
      %1443 = vmatpush1.bf16.msra.mxu0 %v1350
      %1444 = vmatprep.subr.bf16.mxu0 0
      %1445 = vmatpush1.bf16.msra.mxu0 0
      %1446 = vmatprep.subr.bf16.mxu0 0
      %1447 = vmatpush1.bf16.msra.mxu0 0
      %1448 = vmatprep.subr.bf16.mxu0 0
      %1449 = vmatpush1.bf16.msra.mxu0 0
      %1450 = vmatprep.subr.bf16.mxu0 0
      %1451 = vmatpush1.bf16.msra.mxu0 0
      %1452 = vmatprep.subr.bf16.mxu0 0
      %1453 = vmatpush1.bf16.msra.mxu0 0
      %1454 = vmatprep.subr.bf16.mxu0 0
      %1455 = vmatpush1.bf16.msra.mxu0 0
      %1456 = vmatprep.subr.bf16.mxu0 0
      %1457 = vmatpush1.bf16.msra.mxu0 0
      %1458 = vmatprep.subr.bf16.mxu0 0
      %1459 = vmatpush1.bf16.msra.mxu0 0
      %1460 = vmatprep.subr.bf16.mxu0 0
      %1461 = vmatpush1.bf16.msra.mxu0 0
      %1462 = vmatprep.subr.bf16.mxu0 0
      %1463 = vmatpush1.bf16.msra.mxu0 0
      %1464 = vmatprep.subr.bf16.mxu0 0
      %1465 = vmatpush1.bf16.msra.mxu0 0
      %1466 = vmatprep.subr.bf16.mxu0 0
      %1467 = vmatpush1.bf16.msra.mxu0 0
      %1468 = vmatprep.subr.bf16.mxu0 0
      %1469 = vmatpush1.bf16.msra.mxu0 0
      %1470 = vmatprep.subr.bf16.mxu0 0
      %1471 = vmatpush1.bf16.msra.mxu0 0
      %1472 = vmatprep.subr.bf16.mxu0 0
      %1473 = vmatpush1.bf16.msra.mxu0 0
      %1474 = vmatprep.mubr.bf16.mxu0 0
      %1475 = vmatmul.mubr.bf16.gmra.mrb[0].mxu0 %v1440
      %v1476 = vpop.f32.mrb[0].mxu0
      %v1477 = vadd.f32 %v1426, %v1476
      %v1478 = vpop.f32.mrb[0].mxu0
      %v1479 = vadd.f32 %v1428, %v1478
      %v1480 = vpop.f32.mrb[0].mxu0
      %v1481 = vadd.f32 %v1430, %v1480
      %v1482 = vpop.f32.mrb[0].mxu0
      %v1483 = vadd.f32 %v1432, %v1482
      %1484 = vdwg.mxu0
      %s1485 = scalar_lea.vmem %s3, 88
      %v1486 = vld [vmem:[%s1485] sm:$0xf]
      %v1487 = vld [vmem:[%s1485 + $0x4] sm:$0xf]
      %v1490 = vunpack.c.l.b16 %v1486
      %v1491 = vunpack.c.l.b16 %v1487
      %v1492 = vpack.c.b16 %v1491, %v1490
      %v1494 = vsel %vm586, %v1492, 0
      %1496 = vmatprep.subr.bf16.mxu0 %v1376
      %1497 = vmatpush1.bf16.msra.mxu0 %v1375
      %1498 = vmatprep.subr.bf16.mxu0 0
      %1499 = vmatpush1.bf16.msra.mxu0 0
      %1500 = vmatprep.subr.bf16.mxu0 0
      %1501 = vmatpush1.bf16.msra.mxu0 0
      %1502 = vmatprep.subr.bf16.mxu0 0
      %1503 = vmatpush1.bf16.msra.mxu0 0
      %1504 = vmatprep.subr.bf16.mxu0 0
      %1505 = vmatpush1.bf16.msra.mxu0 0
      %1506 = vmatprep.subr.bf16.mxu0 0
      %1507 = vmatpush1.bf16.msra.mxu0 0
      %1508 = vmatprep.subr.bf16.mxu0 0
      %1509 = vmatpush1.bf16.msra.mxu0 0
      %1510 = vmatprep.subr.bf16.mxu0 0
      %1511 = vmatpush1.bf16.msra.mxu0 0
      %1512 = vmatprep.subr.bf16.mxu0 0
      %1513 = vmatpush1.bf16.msra.mxu0 0
      %1514 = vmatprep.subr.bf16.mxu0 0
      %1515 = vmatpush1.bf16.msra.mxu0 0
      %1516 = vmatprep.subr.bf16.mxu0 0
      %1517 = vmatpush1.bf16.msra.mxu0 0
      %1518 = vmatprep.subr.bf16.mxu0 0
      %1519 = vmatpush1.bf16.msra.mxu0 0
      %1520 = vmatprep.subr.bf16.mxu0 0
      %1521 = vmatpush1.bf16.msra.mxu0 0
      %1522 = vmatprep.subr.bf16.mxu0 0
      %1523 = vmatpush1.bf16.msra.mxu0 0
      %1524 = vmatprep.subr.bf16.mxu0 0
      %1525 = vmatpush1.bf16.msra.mxu0 0
      %1526 = vmatprep.subr.bf16.mxu0 0
      %1527 = vmatpush1.bf16.msra.mxu0 0
      %1528 = vmatprep.mubr.bf16.mxu0 0
      %1529 = vmatmul.mubr.bf16.gmra.mrb[0].mxu0 %v1494
      %v1530 = vpop.f32.mrb[0].mxu0
      %v1531 = vadd.f32 0.0, %v1530
      %v1532 = vpop.f32.mrb[0].mxu0
      %v1533 = vadd.f32 0.0, %v1532
      %v1534 = vpop.f32.mrb[0].mxu0
      %v1535 = vadd.f32 0.0, %v1534
      %v1536 = vpop.f32.mrb[0].mxu0
      %v1537 = vadd.f32 0.0, %v1536
      %1538 = vdwg.mxu0
      %v1539 = vadd.f32 %v1477, %v1531
      %v1540 = vadd.f32 %v1479, %v1533
      %v1541 = vadd.f32 %v1481, %v1535
      %v1542 = vadd.f32 %v1483, %v1537
      %v1543 = vadd.f32 %v1539, %v1321
      %v1544 = vadd.f32 %v1540, %v1322
      %v1545 = vadd.f32 %v1541, %v1323
      %v1546 = vadd.f32 %v1542, %v1324
      %vm1547 = vcmp.ge.f32.partialorder %v1543, 0.0
      %vm1548 = vcmp.ge.f32.partialorder %v1544, 0.0
      %vm1549 = vcmp.ge.f32.partialorder %v1545, 0.0
      %vm1550 = vcmp.ge.f32.partialorder %v1546, 0.0
      %v1551 = vmul.f32 %v1543, 0.2
      %v1552 = vmul.f32 %v1544, 0.2
      %v1553 = vmul.f32 %v1545, 0.2
      %v1554 = vmul.f32 %v1546, 0.2
      %v1555 = vsel %vm1547, %v1543, %v1551
      %v1556 = vsel %vm1548, %v1544, %v1552
      %v1557 = vsel %vm1549, %v1545, %v1553
      %v1558 = vsel %vm1550, %v1546, %v1554
      %v1559 = vpack.c.bf16 %v1557, %v1555
      %v1560 = vpack.c.bf16 %v1558, %v1556
      %vm1561 = vcmp.ge.s32.totalorder %v264, 81
      %vm1562 = vcmp.ge.s32.totalorder %v265, 81
      %1563 = vrot.lane.b32.xlu0 %v1555, 81
      %v1564 = vpop.permute.xlu0 %1563
      %1565 = vrot.lane.b32.xlu0 %v1557, 81
      %v1566 = vpop.permute.xlu0 %1565
      %1567 = vrot.lane.b32.xlu0 %v1556, 81
      %v1568 = vpop.permute.xlu0 %1567
      %1569 = vrot.lane.b32.xlu0 %v1558, 81
      %v1570 = vpop.permute.xlu0 %1569
      %vm1571 = vcmp.lt.s32.totalorder %v264, 81
      %v1572 = vsel %vm1571, %v1564, %v1568
      %v1573 = vsel %vm1571, %v1566, %v1570
      %v1574 = vsel %vm1571, %v1568, %v1564
      %v1575 = vsel %vm1571, %v1570, %v1566
      %v1576 = vsel %vm1561, 1, 0
      %v1577 = vsel %vm1562, 1, 0
      %vm1578 = vcmp.eq.s32.totalorder %v1576, 1
      %vm1579 = vcmp.eq.s32.totalorder %v1577, 1
      %v1580 = vsel %vm1578, %v1574, 0.0
      %v1581 = vsel %vm1579, %v1572, 0.0
      %v1582 = vsel %vm1578, %v1575, 0.0
      %v1583 = vsel %vm1579, %v1573, 0.0
      %v1584 = vpack.c.bf16 %v1582, %v1580
      %v1585 = vpack.c.bf16 %v1583, %v1581
      %vm1586 = vcmp.lt.s32.totalorder %v264, 175
      %vm1587 = vcmp.lt.s32.totalorder %v265, 175
      %1588 = vrot.lane.b32.xlu0 %v1555, 47
      %v1589 = vpop.permute.xlu0 %1588
      %1590 = vrot.lane.b32.xlu0 %v1557, 47
      %v1591 = vpop.permute.xlu0 %1590
      %1592 = vrot.lane.b32.xlu0 %v1556, 47
      %v1593 = vpop.permute.xlu0 %1592
      %1594 = vrot.lane.b32.xlu0 %v1558, 47
      %v1595 = vpop.permute.xlu0 %1594
      %vm1596 = vcmp.lt.s32.totalorder %v264, 47
      %v1597 = vsel %vm1596, %v1589, %v1593
      %v1598 = vsel %vm1596, %v1591, %v1595
      %v1599 = vsel %vm1596, %v1593, %v1589
      %v1600 = vsel %vm1596, %v1595, %v1591
      %v1601 = vsel %vm1586, 1, 0
      %v1602 = vsel %vm1587, 1, 0
      %vm1603 = vcmp.eq.s32.totalorder %v1601, 1
      %vm1604 = vcmp.eq.s32.totalorder %v1602, 1
      %v1605 = vsel %vm1603, %v1597, 0.0
      %v1606 = vsel %vm1604, %v1599, 0.0
      %v1607 = vsel %vm1603, %v1598, 0.0
      %v1608 = vsel %vm1604, %v1600, 0.0
      %v1609 = vpack.c.bf16 %v1607, %v1605
      %v1610 = vpack.c.bf16 %v1608, %v1606
      %s1611 = scalar_lea.vmem %s3, 96
      %v1612 = vld [vmem:[%s1611] sm:$0xf]
      %v1613 = vld [vmem:[%s1611 + $0x4] sm:$0xf]
      %s1614 = scalar_lea.vmem %s3, 104
      %v1615 = vld [vmem:[%s1614] sm:$0xf]
      %v1616 = vld [vmem:[%s1614 + $0x4] sm:$0xf]
      %v1619 = vunpack.c.l.b16 %v1615
      %v1620 = vunpack.c.l.b16 %v1616
      %v1621 = vpack.c.b16 %v1620, %v1619
      %v1623 = vsel %vm586, %v1621, 0
      %1625 = vmatprep.subr.bf16.mxu0 %v1560
      %1626 = vmatpush1.bf16.msra.mxu0 %v1559
      %1627 = vmatprep.subr.bf16.mxu0 0
      %1628 = vmatpush1.bf16.msra.mxu0 0
      %1629 = vmatprep.subr.bf16.mxu0 0
      %1630 = vmatpush1.bf16.msra.mxu0 0
      %1631 = vmatprep.subr.bf16.mxu0 0
      %1632 = vmatpush1.bf16.msra.mxu0 0
      %1633 = vmatprep.subr.bf16.mxu0 0
      %1634 = vmatpush1.bf16.msra.mxu0 0
      %1635 = vmatprep.subr.bf16.mxu0 0
      %1636 = vmatpush1.bf16.msra.mxu0 0
      %1637 = vmatprep.subr.bf16.mxu0 0
      %1638 = vmatpush1.bf16.msra.mxu0 0
      %1639 = vmatprep.subr.bf16.mxu0 0
      %1640 = vmatpush1.bf16.msra.mxu0 0
      %1641 = vmatprep.subr.bf16.mxu0 0
      %1642 = vmatpush1.bf16.msra.mxu0 0
      %1643 = vmatprep.subr.bf16.mxu0 0
      %1644 = vmatpush1.bf16.msra.mxu0 0
      %1645 = vmatprep.subr.bf16.mxu0 0
      %1646 = vmatpush1.bf16.msra.mxu0 0
      %1647 = vmatprep.subr.bf16.mxu0 0
      %1648 = vmatpush1.bf16.msra.mxu0 0
      %1649 = vmatprep.subr.bf16.mxu0 0
      %1650 = vmatpush1.bf16.msra.mxu0 0
      %1651 = vmatprep.subr.bf16.mxu0 0
      %1652 = vmatpush1.bf16.msra.mxu0 0
      %1653 = vmatprep.subr.bf16.mxu0 0
      %1654 = vmatpush1.bf16.msra.mxu0 0
      %1655 = vmatprep.subr.bf16.mxu0 0
      %1656 = vmatpush1.bf16.msra.mxu0 0
      %1657 = vmatprep.mubr.bf16.mxu0 0
      %1658 = vmatmul.mubr.bf16.gmra.mrb[0].mxu0 %v1623
      %v1659 = vpop.f32.mrb[0].mxu0
      %v1660 = vadd.f32 0.0, %v1659
      %v1661 = vpop.f32.mrb[0].mxu0
      %v1662 = vadd.f32 0.0, %v1661
      %v1663 = vpop.f32.mrb[0].mxu0
      %v1664 = vadd.f32 0.0, %v1663
      %v1665 = vpop.f32.mrb[0].mxu0
      %v1666 = vadd.f32 0.0, %v1665
      %1667 = vdwg.mxu0
      %v1670 = vunpack.c.l.b16 %v1612
      %v1671 = vunpack.c.l.b16 %v1613
      %v1672 = vpack.c.b16 %v1671, %v1670
      %v1674 = vsel %vm586, %v1672, 0
      %1676 = vmatprep.subr.bf16.mxu0 %v1585
      %1677 = vmatpush1.bf16.msra.mxu0 %v1584
      %1678 = vmatprep.subr.bf16.mxu0 0
      %1679 = vmatpush1.bf16.msra.mxu0 0
      %1680 = vmatprep.subr.bf16.mxu0 0
      %1681 = vmatpush1.bf16.msra.mxu0 0
      %1682 = vmatprep.subr.bf16.mxu0 0
      %1683 = vmatpush1.bf16.msra.mxu0 0
      %1684 = vmatprep.subr.bf16.mxu0 0
      %1685 = vmatpush1.bf16.msra.mxu0 0
      %1686 = vmatprep.subr.bf16.mxu0 0
      %1687 = vmatpush1.bf16.msra.mxu0 0
      %1688 = vmatprep.subr.bf16.mxu0 0
      %1689 = vmatpush1.bf16.msra.mxu0 0
      %1690 = vmatprep.subr.bf16.mxu0 0
      %1691 = vmatpush1.bf16.msra.mxu0 0
      %1692 = vmatprep.subr.bf16.mxu0 0
      %1693 = vmatpush1.bf16.msra.mxu0 0
      %1694 = vmatprep.subr.bf16.mxu0 0
      %1695 = vmatpush1.bf16.msra.mxu0 0
      %1696 = vmatprep.subr.bf16.mxu0 0
      %1697 = vmatpush1.bf16.msra.mxu0 0
      %1698 = vmatprep.subr.bf16.mxu0 0
      %1699 = vmatpush1.bf16.msra.mxu0 0
      %1700 = vmatprep.subr.bf16.mxu0 0
      %1701 = vmatpush1.bf16.msra.mxu0 0
      %1702 = vmatprep.subr.bf16.mxu0 0
      %1703 = vmatpush1.bf16.msra.mxu0 0
      %1704 = vmatprep.subr.bf16.mxu0 0
      %1705 = vmatpush1.bf16.msra.mxu0 0
      %1706 = vmatprep.subr.bf16.mxu0 0
      %1707 = vmatpush1.bf16.msra.mxu0 0
      %1708 = vmatprep.mubr.bf16.mxu0 0
      %1709 = vmatmul.mubr.bf16.gmra.mrb[0].mxu0 %v1674
      %v1710 = vpop.f32.mrb[0].mxu0
      %v1711 = vadd.f32 %v1660, %v1710
      %v1712 = vpop.f32.mrb[0].mxu0
      %v1713 = vadd.f32 %v1662, %v1712
      %v1714 = vpop.f32.mrb[0].mxu0
      %v1715 = vadd.f32 %v1664, %v1714
      %v1716 = vpop.f32.mrb[0].mxu0
      %v1717 = vadd.f32 %v1666, %v1716
      %1718 = vdwg.mxu0
      %s1719 = scalar_lea.vmem %s3, 112
      %v1720 = vld [vmem:[%s1719] sm:$0xf]
      %v1721 = vld [vmem:[%s1719 + $0x4] sm:$0xf]
      %v1724 = vunpack.c.l.b16 %v1720
      %v1725 = vunpack.c.l.b16 %v1721
      %v1726 = vpack.c.b16 %v1725, %v1724
      %v1728 = vsel %vm586, %v1726, 0
      %1730 = vmatprep.subr.bf16.mxu0 %v1610
      %1731 = vmatpush1.bf16.msra.mxu0 %v1609
      %1732 = vmatprep.subr.bf16.mxu0 0
      %1733 = vmatpush1.bf16.msra.mxu0 0
      %1734 = vmatprep.subr.bf16.mxu0 0
      %1735 = vmatpush1.bf16.msra.mxu0 0
      %1736 = vmatprep.subr.bf16.mxu0 0
      %1737 = vmatpush1.bf16.msra.mxu0 0
      %1738 = vmatprep.subr.bf16.mxu0 0
      %1739 = vmatpush1.bf16.msra.mxu0 0
      %1740 = vmatprep.subr.bf16.mxu0 0
      %1741 = vmatpush1.bf16.msra.mxu0 0
      %1742 = vmatprep.subr.bf16.mxu0 0
      %1743 = vmatpush1.bf16.msra.mxu0 0
      %1744 = vmatprep.subr.bf16.mxu0 0
      %1745 = vmatpush1.bf16.msra.mxu0 0
      %1746 = vmatprep.subr.bf16.mxu0 0
      %1747 = vmatpush1.bf16.msra.mxu0 0
      %1748 = vmatprep.subr.bf16.mxu0 0
      %1749 = vmatpush1.bf16.msra.mxu0 0
      %1750 = vmatprep.subr.bf16.mxu0 0
      %1751 = vmatpush1.bf16.msra.mxu0 0
      %1752 = vmatprep.subr.bf16.mxu0 0
      %1753 = vmatpush1.bf16.msra.mxu0 0
      %1754 = vmatprep.subr.bf16.mxu0 0
      %1755 = vmatpush1.bf16.msra.mxu0 0
      %1756 = vmatprep.subr.bf16.mxu0 0
      %1757 = vmatpush1.bf16.msra.mxu0 0
      %1758 = vmatprep.subr.bf16.mxu0 0
      %1759 = vmatpush1.bf16.msra.mxu0 0
      %1760 = vmatprep.subr.bf16.mxu0 0
      %1761 = vmatpush1.bf16.msra.mxu0 0
      %1762 = vmatprep.mubr.bf16.mxu0 0
      %1763 = vmatmul.mubr.bf16.gmra.mrb[0].mxu0 %v1728
      %v1764 = vpop.f32.mrb[0].mxu0
      %v1765 = vadd.f32 0.0, %v1764
      %v1766 = vpop.f32.mrb[0].mxu0
      %v1767 = vadd.f32 0.0, %v1766
      %v1768 = vpop.f32.mrb[0].mxu0
      %v1769 = vadd.f32 0.0, %v1768
      %v1770 = vpop.f32.mrb[0].mxu0
      %v1771 = vadd.f32 0.0, %v1770
      %1772 = vdwg.mxu0
      %v1773 = vadd.f32 %v1711, %v1765
      %v1774 = vadd.f32 %v1713, %v1767
      %v1775 = vadd.f32 %v1715, %v1769
      %v1776 = vadd.f32 %v1717, %v1771
      %v1777 = vadd.f32 %v1773, %v1555
      %v1778 = vadd.f32 %v1774, %v1556
      %v1779 = vadd.f32 %v1775, %v1557
      %v1780 = vadd.f32 %v1776, %v1558
      %vm1781 = vcmp.ge.f32.partialorder %v1777, 0.0
      %vm1782 = vcmp.ge.f32.partialorder %v1778, 0.0
      %vm1783 = vcmp.ge.f32.partialorder %v1779, 0.0
      %vm1784 = vcmp.ge.f32.partialorder %v1780, 0.0
      %v1785 = vmul.f32 %v1777, 0.2
      %v1786 = vmul.f32 %v1778, 0.2
      %v1787 = vmul.f32 %v1779, 0.2
      %v1788 = vmul.f32 %v1780, 0.2
      %v1789 = vsel %vm1781, %v1777, %v1785
      %v1790 = vsel %vm1782, %v1778, %v1786
      %v1791 = vsel %vm1783, %v1779, %v1787
      %v1792 = vsel %vm1784, %v1780, %v1788
      %v1793 = vpack.c.bf16 %v1791, %v1789
      %v1794 = vpack.c.bf16 %v1792, %v1790
      %1795 = vrot.lane.b32.xlu0 %v1789, 1
      %v1796 = vpop.permute.xlu0 %1795
      %1797 = vrot.lane.b32.xlu0 %v1791, 1
      %v1798 = vpop.permute.xlu0 %1797
      %1799 = vrot.lane.b32.xlu0 %v1790, 1
      %v1800 = vpop.permute.xlu0 %1799
      %1801 = vrot.lane.b32.xlu0 %v1792, 1
      %v1802 = vpop.permute.xlu0 %1801
      %v1803 = vsel %vm447, %v1796, %v1800
      %v1804 = vsel %vm447, %v1798, %v1802
      %v1805 = vsel %vm447, %v1800, %v1796
      %v1806 = vsel %vm447, %v1802, %v1798
      %v1807 = vsel %vm649, %v1805, 0.0
      %v1808 = vsel %vm650, %v1803, 0.0
      %v1809 = vsel %vm649, %v1806, 0.0
      %v1810 = vsel %vm650, %v1804, 0.0
      %v1811 = vpack.c.bf16 %v1809, %v1807
      %v1812 = vpack.c.bf16 %v1810, %v1808
      %1813 = vrot.lane.b32.xlu0 %v1789, 127
      %v1814 = vpop.permute.xlu0 %1813
      %1815 = vrot.lane.b32.xlu0 %v1791, 127
      %v1816 = vpop.permute.xlu0 %1815
      %1817 = vrot.lane.b32.xlu0 %v1790, 127
      %v1818 = vpop.permute.xlu0 %1817
      %1819 = vrot.lane.b32.xlu0 %v1792, 127
      %v1820 = vpop.permute.xlu0 %1819
      %v1821 = vsel %vm667, %v1814, %v1818
      %v1822 = vsel %vm667, %v1816, %v1820
      %v1823 = vsel %vm667, %v1818, %v1814
      %v1824 = vsel %vm667, %v1820, %v1816
      %v1825 = vsel %vm674, %v1821, 0.0
      %v1826 = vsel %vm675, %v1823, 0.0
      %v1827 = vsel %vm674, %v1822, 0.0
      %v1828 = vsel %vm675, %v1824, 0.0
      %v1829 = vpack.c.bf16 %v1827, %v1825
      %v1830 = vpack.c.bf16 %v1828, %v1826
      %s1831 = scalar_lea.vmem %s3, 120
      %v1832 = vld [vmem:[%s1831] sm:$0xf]
      %v1833 = vld [vmem:[%s1831 + $0x4] sm:$0xf]
      %s1834 = scalar_lea.vmem %s3, 128
      %v1835 = vld [vmem:[%s1834] sm:$0xf]
      %v1836 = vld [vmem:[%s1834 + $0x4] sm:$0xf]
      %v1839 = vunpack.c.l.b16 %v1835
      %v1840 = vunpack.c.l.b16 %v1836
      %v1841 = vpack.c.b16 %v1840, %v1839
      %v1843 = vsel %vm586, %v1841, 0
      %1845 = vmatprep.subr.bf16.mxu0 %v1794
      %1846 = vmatpush1.bf16.msra.mxu0 %v1793
      %1847 = vmatprep.subr.bf16.mxu0 0
      %1848 = vmatpush1.bf16.msra.mxu0 0
      %1849 = vmatprep.subr.bf16.mxu0 0
      %1850 = vmatpush1.bf16.msra.mxu0 0
      %1851 = vmatprep.subr.bf16.mxu0 0
      %1852 = vmatpush1.bf16.msra.mxu0 0
      %1853 = vmatprep.subr.bf16.mxu0 0
      %1854 = vmatpush1.bf16.msra.mxu0 0
      %1855 = vmatprep.subr.bf16.mxu0 0
      %1856 = vmatpush1.bf16.msra.mxu0 0
      %1857 = vmatprep.subr.bf16.mxu0 0
      %1858 = vmatpush1.bf16.msra.mxu0 0
      %1859 = vmatprep.subr.bf16.mxu0 0
      %1860 = vmatpush1.bf16.msra.mxu0 0
      %1861 = vmatprep.subr.bf16.mxu0 0
      %1862 = vmatpush1.bf16.msra.mxu0 0
      %1863 = vmatprep.subr.bf16.mxu0 0
      %1864 = vmatpush1.bf16.msra.mxu0 0
      %1865 = vmatprep.subr.bf16.mxu0 0
      %1866 = vmatpush1.bf16.msra.mxu0 0
      %1867 = vmatprep.subr.bf16.mxu0 0
      %1868 = vmatpush1.bf16.msra.mxu0 0
      %1869 = vmatprep.subr.bf16.mxu0 0
      %1870 = vmatpush1.bf16.msra.mxu0 0
      %1871 = vmatprep.subr.bf16.mxu0 0
      %1872 = vmatpush1.bf16.msra.mxu0 0
      %1873 = vmatprep.subr.bf16.mxu0 0
      %1874 = vmatpush1.bf16.msra.mxu0 0
      %1875 = vmatprep.subr.bf16.mxu0 0
      %1876 = vmatpush1.bf16.msra.mxu0 0
      %1877 = vmatprep.mubr.bf16.mxu0 0
      %1878 = vmatmul.mubr.bf16.gmra.mrb[0].mxu0 %v1843
      %v1879 = vpop.f32.mrb[0].mxu0
      %v1880 = vadd.f32 0.0, %v1879
      %v1881 = vpop.f32.mrb[0].mxu0
      %v1882 = vadd.f32 0.0, %v1881
      %v1883 = vpop.f32.mrb[0].mxu0
      %v1884 = vadd.f32 0.0, %v1883
      %v1885 = vpop.f32.mrb[0].mxu0
      %v1886 = vadd.f32 0.0, %v1885
      %1887 = vdwg.mxu0
      %v1890 = vunpack.c.l.b16 %v1832
      %v1891 = vunpack.c.l.b16 %v1833
      %v1892 = vpack.c.b16 %v1891, %v1890
      %v1894 = vsel %vm586, %v1892, 0
      %1896 = vmatprep.subr.bf16.mxu0 %v1812
      %1897 = vmatpush1.bf16.msra.mxu0 %v1811
      %1898 = vmatprep.subr.bf16.mxu0 0
      %1899 = vmatpush1.bf16.msra.mxu0 0
      %1900 = vmatprep.subr.bf16.mxu0 0
      %1901 = vmatpush1.bf16.msra.mxu0 0
      %1902 = vmatprep.subr.bf16.mxu0 0
      %1903 = vmatpush1.bf16.msra.mxu0 0
      %1904 = vmatprep.subr.bf16.mxu0 0
      %1905 = vmatpush1.bf16.msra.mxu0 0
      %1906 = vmatprep.subr.bf16.mxu0 0
      %1907 = vmatpush1.bf16.msra.mxu0 0
      %1908 = vmatprep.subr.bf16.mxu0 0
      %1909 = vmatpush1.bf16.msra.mxu0 0
      %1910 = vmatprep.subr.bf16.mxu0 0
      %1911 = vmatpush1.bf16.msra.mxu0 0
      %1912 = vmatprep.subr.bf16.mxu0 0
      %1913 = vmatpush1.bf16.msra.mxu0 0
      %1914 = vmatprep.subr.bf16.mxu0 0
      %1915 = vmatpush1.bf16.msra.mxu0 0
      %1916 = vmatprep.subr.bf16.mxu0 0
      %1917 = vmatpush1.bf16.msra.mxu0 0
      %1918 = vmatprep.subr.bf16.mxu0 0
      %1919 = vmatpush1.bf16.msra.mxu0 0
      %1920 = vmatprep.subr.bf16.mxu0 0
      %1921 = vmatpush1.bf16.msra.mxu0 0
      %1922 = vmatprep.subr.bf16.mxu0 0
      %1923 = vmatpush1.bf16.msra.mxu0 0
      %1924 = vmatprep.subr.bf16.mxu0 0
      %1925 = vmatpush1.bf16.msra.mxu0 0
      %1926 = vmatprep.subr.bf16.mxu0 0
      %1927 = vmatpush1.bf16.msra.mxu0 0
      %1928 = vmatprep.mubr.bf16.mxu0 0
      %1929 = vmatmul.mubr.bf16.gmra.mrb[0].mxu0 %v1894
      %v1930 = vpop.f32.mrb[0].mxu0
      %v1931 = vadd.f32 %v1880, %v1930
      %v1932 = vpop.f32.mrb[0].mxu0
      %v1933 = vadd.f32 %v1882, %v1932
      %v1934 = vpop.f32.mrb[0].mxu0
      %v1935 = vadd.f32 %v1884, %v1934
      %v1936 = vpop.f32.mrb[0].mxu0
      %v1937 = vadd.f32 %v1886, %v1936
      %1938 = vdwg.mxu0
      %s1939 = scalar_lea.vmem %s3, 136
      %v1940 = vld [vmem:[%s1939] sm:$0xf]
      %v1941 = vld [vmem:[%s1939 + $0x4] sm:$0xf]
      %v1944 = vunpack.c.l.b16 %v1940
      %v1945 = vunpack.c.l.b16 %v1941
      %v1946 = vpack.c.b16 %v1945, %v1944
      %v1948 = vsel %vm586, %v1946, 0
      %1950 = vmatprep.subr.bf16.mxu0 %v1830
      %1951 = vmatpush1.bf16.msra.mxu0 %v1829
      %1952 = vmatprep.subr.bf16.mxu0 0
      %1953 = vmatpush1.bf16.msra.mxu0 0
      %1954 = vmatprep.subr.bf16.mxu0 0
      %1955 = vmatpush1.bf16.msra.mxu0 0
      %1956 = vmatprep.subr.bf16.mxu0 0
      %1957 = vmatpush1.bf16.msra.mxu0 0
      %1958 = vmatprep.subr.bf16.mxu0 0
      %1959 = vmatpush1.bf16.msra.mxu0 0
      %1960 = vmatprep.subr.bf16.mxu0 0
      %1961 = vmatpush1.bf16.msra.mxu0 0
      %1962 = vmatprep.subr.bf16.mxu0 0
      %1963 = vmatpush1.bf16.msra.mxu0 0
      %1964 = vmatprep.subr.bf16.mxu0 0
      %1965 = vmatpush1.bf16.msra.mxu0 0
      %1966 = vmatprep.subr.bf16.mxu0 0
      %1967 = vmatpush1.bf16.msra.mxu0 0
      %1968 = vmatprep.subr.bf16.mxu0 0
      %1969 = vmatpush1.bf16.msra.mxu0 0
      %1970 = vmatprep.subr.bf16.mxu0 0
      %1971 = vmatpush1.bf16.msra.mxu0 0
      %1972 = vmatprep.subr.bf16.mxu0 0
      %1973 = vmatpush1.bf16.msra.mxu0 0
      %1974 = vmatprep.subr.bf16.mxu0 0
      %1975 = vmatpush1.bf16.msra.mxu0 0
      %1976 = vmatprep.subr.bf16.mxu0 0
      %1977 = vmatpush1.bf16.msra.mxu0 0
      %1978 = vmatprep.subr.bf16.mxu0 0
      %1979 = vmatpush1.bf16.msra.mxu0 0
      %1980 = vmatprep.subr.bf16.mxu0 0
      %1981 = vmatpush1.bf16.msra.mxu0 0
      %1982 = vmatprep.mubr.bf16.mxu0 0
      %1983 = vmatmul.mubr.bf16.gmra.mrb[0].mxu0 %v1948
      %v1984 = vpop.f32.mrb[0].mxu0
      %v1985 = vadd.f32 0.0, %v1984
      %v1986 = vpop.f32.mrb[0].mxu0
      %v1987 = vadd.f32 0.0, %v1986
      %v1988 = vpop.f32.mrb[0].mxu0
      %v1989 = vadd.f32 0.0, %v1988
      %v1990 = vpop.f32.mrb[0].mxu0
      %v1991 = vadd.f32 0.0, %v1990
      %1992 = vdwg.mxu0
      %v1993 = vadd.f32 %v1931, %v1985
      %v1994 = vadd.f32 %v1933, %v1987
      %v1995 = vadd.f32 %v1935, %v1989
      %v1996 = vadd.f32 %v1937, %v1991
      %v1997 = vadd.f32 %v1993, %v1789
      %v1998 = vadd.f32 %v1994, %v1790
      %v1999 = vadd.f32 %v1995, %v1791
      %v2000 = vadd.f32 %v1996, %v1792
      %vm2001 = vcmp.ge.f32.partialorder %v1997, 0.0
      %vm2002 = vcmp.ge.f32.partialorder %v1998, 0.0
      %vm2003 = vcmp.ge.f32.partialorder %v1999, 0.0
      %vm2004 = vcmp.ge.f32.partialorder %v2000, 0.0
      %v2005 = vmul.f32 %v1997, 0.2
      %v2006 = vmul.f32 %v1998, 0.2
      %v2007 = vmul.f32 %v1999, 0.2
      %v2008 = vmul.f32 %v2000, 0.2
      %v2009 = vsel %vm2001, %v1997, %v2005
      %v2010 = vsel %vm2002, %v1998, %v2006
      %v2011 = vsel %vm2003, %v1999, %v2007
      %v2012 = vsel %vm2004, %v2000, %v2008
      %v2013 = vmax.f32 %v2009, %v2010
      %2014 = vmax.xlane.f32.xlu0 %v2013
      %v2015 = vpop.xlane.xlu0 %2014
      %v2016 = vmax.f32 %v2011, %v2012
      %2017 = vmax.xlane.f32.xlu0 %v2016
      %v2018 = vpop.xlane.xlu0 %2017
      %vm2019 = vcmask 7168
      %2020 = vst.msk [vmem:[%s261] sm:$0xff] %vm2019, %v2015
      %2021 = vst.msk [vmem:[%s261 + $0x8] sm:$0xff] %vm2019, %v2018
      %v2022 = vld [vmem:[%s4] sm:$0xf]
      %v2023 = vld [vmem:[%s4 + $0x4] sm:$0xf]
      %v2024 = vld [vmem:[%s4 + $0x8] sm:$0xf]
      %v2025 = vld [vmem:[%s4 + $0xc] sm:$0xf]
      %v2026 = vpack.c.bf16 %v2011, %v2009
      %v2027 = vpack.c.bf16 %v2012, %v2010
      %v2032 = vunpack.c.l.b16 %v2022
      %v2033 = vunpack.c.l.b16 %v2023
      %v2034 = vunpack.c.l.b16 %v2024
      %v2035 = vunpack.c.l.b16 %v2025
      %v2036 = vpack.c.b16 %v2033, %v2032
      %v2037 = vpack.c.b16 %v2035, %v2034
      %v2039 = vsel %vm586, %v2036, 0
      %v2042 = vsel %vm586, %v2037, 0
      %2044 = vmatprep.subr.bf16.mxu0 %v2027
      %2045 = vmatpush1.bf16.msra.mxu0 %v2026
      %2046 = vmatprep.subr.bf16.mxu0 0
      %2047 = vmatpush1.bf16.msra.mxu0 0
      %2048 = vmatprep.subr.bf16.mxu0 0
      %2049 = vmatpush1.bf16.msra.mxu0 0
      %2050 = vmatprep.subr.bf16.mxu0 0
      %2051 = vmatpush1.bf16.msra.mxu0 0
      %2052 = vmatprep.subr.bf16.mxu0 0
      %2053 = vmatpush1.bf16.msra.mxu0 0
      %2054 = vmatprep.subr.bf16.mxu0 0
      %2055 = vmatpush1.bf16.msra.mxu0 0
      %2056 = vmatprep.subr.bf16.mxu0 0
      %2057 = vmatpush1.bf16.msra.mxu0 0
      %2058 = vmatprep.subr.bf16.mxu0 0
      %2059 = vmatpush1.bf16.msra.mxu0 0
      %2060 = vmatprep.subr.bf16.mxu0 0
      %2061 = vmatpush1.bf16.msra.mxu0 0
      %2062 = vmatprep.subr.bf16.mxu0 0
      %2063 = vmatpush1.bf16.msra.mxu0 0
      %2064 = vmatprep.subr.bf16.mxu0 0
      %2065 = vmatpush1.bf16.msra.mxu0 0
      %2066 = vmatprep.subr.bf16.mxu0 0
      %2067 = vmatpush1.bf16.msra.mxu0 0
      %2068 = vmatprep.subr.bf16.mxu0 0
      %2069 = vmatpush1.bf16.msra.mxu0 0
      %2070 = vmatprep.subr.bf16.mxu0 0
      %2071 = vmatpush1.bf16.msra.mxu0 0
      %2072 = vmatprep.subr.bf16.mxu0 0
      %2073 = vmatpush1.bf16.msra.mxu0 0
      %2074 = vmatprep.subr.bf16.mxu0 0
      %2075 = vmatpush1.bf16.msra.mxu0 0
      %2076 = vmatprep.mubr.bf16.mxu0 0
      %2077 = vmatmul.mubr.bf16.gmra.mrb[0].mxu0 %v2039
      %v2078 = vpop.f32.mrb[0].mxu0
      %v2079 = vadd.f32 0.0, %v2078
      %v2080 = vpop.f32.mrb[0].mxu0
      %v2081 = vadd.f32 0.0, %v2080
      %v2082 = vpop.f32.mrb[0].mxu0
      %v2083 = vadd.f32 0.0, %v2082
      %v2084 = vpop.f32.mrb[0].mxu0
      %v2085 = vadd.f32 0.0, %v2084
      %2086 = vmatprep.mubr.bf16.mxu0 0
      %2087 = vmatmul.mubr.bf16.gmra.mrb[0].mxu0 %v2042
      %v2088 = vpop.f32.mrb[0].mxu0
      %v2089 = vadd.f32 0.0, %v2088
      %v2090 = vpop.f32.mrb[0].mxu0
      %v2091 = vadd.f32 0.0, %v2090
      %v2092 = vpop.f32.mrb[0].mxu0
      %v2093 = vadd.f32 0.0, %v2092
      %v2094 = vpop.f32.mrb[0].mxu0
      %v2095 = vadd.f32 0.0, %v2094
      %2096 = vdwg.mxu0
      %v2097 = vmax.f32 %v2079, 0.0
      %v2098 = vmax.f32 %v2081, 0.0
      %v2099 = vmax.f32 %v2083, 0.0
      %v2100 = vmax.f32 %v2085, 0.0
      %v2101 = vmax.f32 %v2089, 0.0
      %v2102 = vmax.f32 %v2091, 0.0
      %v2103 = vmax.f32 %v2093, 0.0
      %v2104 = vmax.f32 %v2095, 0.0
      %2105 = vst [vmem:[%s256] sm:$0xff] %v2097
      %2106 = vst [vmem:[%s256 + $0x8] sm:$0xff] %v2098
      %2107 = vst [vmem:[%s256 + $0x10] sm:$0xff] %v2099
      %2108 = vst [vmem:[%s256 + $0x18] sm:$0xff] %v2100
      %2109 = vst [vmem:[%s256 + $0x20] sm:$0xff] %v2101
      %2110 = vst [vmem:[%s256 + $0x28] sm:$0xff] %v2102
      %2111 = vst [vmem:[%s256 + $0x30] sm:$0xff] %v2103
      %2112 = vst [vmem:[%s256 + $0x38] sm:$0xff] %v2104
      %p2113 = scmp.lt.s32.totalorder %s18, 1
      %s2114 = scalar_select %p2113, %s18, 1
      %s2115 = smul.addr %s2114, 8
      %s2116 = smul.addr %s2115, 8
      %s2117 = scalar_lea.vmem %s5, %s2116
      %p2118 = scmp.lt.s32.totalorder %s18, 1
      %s2119 = scalar_select %p2118, %s18, 1
      %s2120 = smul.addr %s2119, 2
      %s2121 = smul.addr %s2120, 8
      %s2122 = scalar_lea.vmem %s6, %s2121
      // Predicated region
      $region41: #{_lambda_.6} parent=39 // pred_check
        %p2123 = pneg %p146
      $region42: #{_lambda_.6} parent=39 // pred_check_branch
        %2125 = sbr.rel (%p2123) target = $region44
      $region43: #{_lambda_.6} parent=39 // pred_region
        _
      $region44: #{_lambda_.6} parent=39 // pred_fallthru
        _
      // Predicated region
      $region45: #{_lambda_.6} parent=39 // pred_check
        %p2126 = pneg %p172
      $region46: #{_lambda_.6} parent=39 // pred_check_branch
        %2128 = sbr.rel (%p2126) target = $region48
      $region47: #{_lambda_.6} parent=39 // pred_region
        _
      $region48: #{_lambda_.6} parent=39 // pred_fallthru
        _
    $region40: #{_lambda_.6} parent=5 // pred_fallthru
      _
    %p2129 = scmp.le.s32.totalorder 2, %s13
    // Predicated region
    $region49: #{_lambda_.6} parent=5 // pred_check
      %p2130 = pneg %p2129
    $region50: #{_lambda_.6} parent=5 // pred_check_branch
      %2132 = sbr.rel (%p2130) target = $region52
    $region51: #{_lambda_.6} parent=5 // pred_region
      %s2133 = ssub.s32 %s13, 2
      // Predicated region
      $region53: #{_lambda_.6} parent=51 // pred_check
        %p2134 = pneg %p152
      $region54: #{_lambda_.6} parent=51 // pred_check_branch
        %2136 = sbr.rel (%p2134) target = $region56
      $region55: #{_lambda_.6} parent=51 // pred_region
        %p2137 = scmp.lt.s32.totalorder %s19, 1
        %s2138 = scalar_select %p2137, %s19, 1
        %s2139 = smul.addr %s2138, 8
        %s2140 = smul.addr %s2139, 8
        %s2141 = scalar_lea.vmem %s5, %s2140
      $region56: #{_lambda_.6} parent=51 // pred_fallthru
        _
      // Predicated region
      $region57: #{_lambda_.6} parent=51 // pred_check
        %p2142 = pneg %p178
      $region58: #{_lambda_.6} parent=51 // pred_check_branch
        %2144 = sbr.rel (%p2142) target = $region60
      $region59: #{_lambda_.6} parent=51 // pred_region
        %p2145 = scmp.lt.s32.totalorder %s19, 1
        %s2146 = scalar_select %p2145, %s19, 1
        %s2147 = smul.addr %s2146, 2
        %s2148 = smul.addr %s2147, 8
        %s2149 = scalar_lea.vmem %s6, %s2148
      $region60: #{_lambda_.6} parent=51 // pred_fallthru
        _
    $region52: #{_lambda_.6} parent=5 // pred_fallthru
      _
  $region6: #{_lambda_.6} parent=0 // loop_footer
    %s17 = sadd.s32 1, %s13
  $region7: #{_lambda_.6} parent=0 // loop_footer_branch
    %12 = sbr.rel target = $region3
  $region8: #{_lambda_.6} parent=0 // loop_exit
    _

// kernel: custom-call.1
$region0: #{custom-call.1}
  #allocation0 [shape = 'u32[8,128]{1,0}', space=vmem, size = 0x1000, scoped, tag = 'scratch']
  #allocation1 [shape = 'u32[8,128]{1,0}', space=vmem, size = 0x1000, scoped, tag = 'scratch']
  #allocation2 [shape = 'u32[8,128]{1,0}', space=vmem, size = 0x1000, scoped, tag = 'scratch']
  #allocation3 [shape = 'u32[8,128]{1,0}', space=vmem, size = 0x1000, scoped, tag = 'scratch']
  #allocation4 [shape = 'u32[8,128]{1,0}', space=vmem, size = 0x1000, scoped, tag = 'scratch']
  #allocation5 [shape = 'u32[8,128]{1,0}', space=vmem, size = 0x1000, scoped, tag = 'scratch']
  #allocation6 [shape = 'u32[8,128]{1,0}', space=vmem, size = 0x1000, scoped, tag = 'scratch']
  %s0 = inlined_call_operand.vmem [shape: f32[2,8192], index: 0, kind: input, shape index: {}]
  %s1 = inlined_call_operand.vmem [shape: f32[2,4], index: 1, kind: output, shape index: {0}]
  %s2 = inlined_call_operand.vmem [shape: s32[2,4], index: 2, kind: output, shape index: {1}]
  %3 = xla_tuple %s1, %s2
  %4 = xla_tuple 2147483648, 2147483647
  $region1: #{custom-call.1} parent=0
    #allocation7 [shape = 'u8[4096]{0}', space=vmem, size = 0x1000, scoped, tag = 'operand span for operand 1']
    #allocation8 [shape = 'u8[1024]{0}', space=vmem, size = 0x400, scoped, tag = 'packed  for operand 1']
    #allocation9 [shape = 'u8[4096]{0}', space=vmem, size = 0x1000, scoped, tag = 'operand span for operand 2']
    #allocation10 [shape = 'u8[1024]{0}', space=vmem, size = 0x400, scoped, tag = 'packed  for operand 2']
    #allocation11 [shape = 'f32[4,2]{1,0:T(8,128)}', space=vmem, size = 0x1000, scoped, tag = 'scoped memory for custom-call.1']
    #allocation12 [shape = 'f32[4,2]{1,0:T(8,128)}', space=vmem, size = 0x1000, scoped, tag = 'scoped memory for custom-call.1']
    #allocation13 [shape = 's32[4,2]{1,0:T(8,128)}', space=vmem, size = 0x1000, scoped, tag = 'scoped memory for custom-call.1']
    #allocation14 [shape = 's32[4,2]{1,0:T(8,128)}', space=vmem, size = 0x1000, scoped, tag = 'scoped memory for custom-call.1']
    %5 = xla_tuple [#allocation7], [#allocation9]
    %6 = vst [vmem:[#allocation11] sm:$0xff] 2147483648
    %7 = vst [vmem:[#allocation13] sm:$0xff] 2147483647
    %8 = xla_tuple [#allocation11], [#allocation13]
    %9 = xla_tuple [#allocation12], [#allocation14]
    $region2: #{custom-call.1} parent=1
      #allocation15 [shape = 'u8[65536]{0}', space=vmem, size = 0x10000, scoped, tag = 'operand span for operand 0']
      #allocation16 [shape = 's32[16384]{0}', space=vmem, size = 0x10000, scoped, tag = 'scoped memory for custom-call.1']
      // Predicated region
      $region3: #{custom-call.1} parent=2 // pred_check
        _
      $region4: #{custom-call.1} parent=2 // pred_check_branch
        %11 = sbr.rel (0) target = $region6
      $region5: #{custom-call.1} parent=2 // pred_region
        // Predicated region
        $region7: #{custom-call.1} parent=5 // pred_check
          _
        $region8: #{custom-call.1} parent=5 // pred_check_branch
          %13 = sbr.rel (0) target = $region10
        $region9: #{custom-call.1} parent=5 // pred_region
          // Predicated region
          $region11: #{custom-call.1} parent=9 // pred_check
            _
          $region12: #{custom-call.1} parent=9 // pred_check_branch
            %15 = sbr.rel (0) target = $region14
          $region13: #{custom-call.1} parent=9 // pred_region
            loop: start=0, step=1, limit=1
            $region15: #{custom-call.1} parent=13 // loop_pre_header
              _
            $region16: #{custom-call.1} parent=13 // loop_header
              %s17 = sphi 0, %s21
              %p18 = scmp.ge.s32.totalorder %s17, 1
              %s22 = sphi %s0, %s0
              %s23 = sphi [#allocation15], [#allocation15]
            $region17: #{custom-call.1} parent=13 // loop_header_branch
              %20 = sbr.rel (%p18) target = $region21
            $region18: #{custom-call.1} parent=13 // loop_body
              %v24 = vld [vmem:[%s22] sm:$0xff]
              %25 = vst [vmem:[%s23] sm:$0xff] %v24
              %v26 = vld [vmem:[%s22 + $0x8] sm:$0xff]
              %27 = vst [vmem:[%s23 + $0x8] sm:$0xff] %v26
              %v28 = vld [vmem:[%s22 + $0x10] sm:$0xff]
              %29 = vst [vmem:[%s23 + $0x10] sm:$0xff] %v28
              %v30 = vld [vmem:[%s22 + $0x18] sm:$0xff]
              %31 = vst [vmem:[%s23 + $0x18] sm:$0xff] %v30
              %v32 = vld [vmem:[%s22 + $0x20] sm:$0xff]
              %33 = vst [vmem:[%s23 + $0x20] sm:$0xff] %v32
              %v34 = vld [vmem:[%s22 + $0x28] sm:$0xff]
              %35 = vst [vmem:[%s23 + $0x28] sm:$0xff] %v34
              %v36 = vld [vmem:[%s22 + $0x30] sm:$0xff]
              %37 = vst [vmem:[%s23 + $0x30] sm:$0xff] %v36
              %v38 = vld [vmem:[%s22 + $0x38] sm:$0xff]
              %39 = vst [vmem:[%s23 + $0x38] sm:$0xff] %v38
              %v40 = vld [vmem:[%s22 + $0x40] sm:$0xff]
              %41 = vst [vmem:[%s23 + $0x40] sm:$0xff] %v40
              %v42 = vld [vmem:[%s22 + $0x48] sm:$0xff]
              %43 = vst [vmem:[%s23 + $0x48] sm:$0xff] %v42
              %v44 = vld [vmem:[%s22 + $0x50] sm:$0xff]
              %45 = vst [vmem:[%s23 + $0x50] sm:$0xff] %v44
              %v46 = vld [vmem:[%s22 + $0x58] sm:$0xff]
              %47 = vst [vmem:[%s23 + $0x58] sm:$0xff] %v46
              %v48 = vld [vmem:[%s22 + $0x60] sm:$0xff]
              %49 = vst [vmem:[%s23 + $0x60] sm:$0xff] %v48
              %v50 = vld [vmem:[%s22 + $0x68] sm:$0xff]
              %51 = vst [vmem:[%s23 + $0x68] sm:$0xff] %v50
              %v52 = vld [vmem:[%s22 + $0x70] sm:$0xff]
              %53 = vst [vmem:[%s23 + $0x70] sm:$0xff] %v52
              %v54 = vld [vmem:[%s22 + $0x78] sm:$0xff]
              %55 = vst [vmem:[%s23 + $0x78] sm:$0xff] %v54
            $region19: #{custom-call.1} parent=13 // loop_footer
              %s21 = sadd.s32 1, %s17
            $region20: #{custom-call.1} parent=13 // loop_footer_branch
              %16 = sbr.rel target = $region16
            $region21: #{custom-call.1} parent=13 // loop_exit
              _
          $region14: #{custom-call.1} parent=9 // pred_fallthru
            _
          // Predicated region
          $region22: #{custom-call.1} parent=9 // pred_check
            _
          $region23: #{custom-call.1} parent=9 // pred_check_branch
            %57 = sbr.rel target = $region25
          $region24: #{custom-call.1} parent=9 // pred_region
            _
          $region25: #{custom-call.1} parent=9 // pred_fallthru
            _
        $region10: #{custom-call.1} parent=5 // pred_fallthru
          _
        %58 = vnop
      $region6: #{custom-call.1} parent=2 // pred_fallthru
        _
      // Predicated region
      $region26: #{custom-call.1} parent=2 // pred_check
        _
      $region27: #{custom-call.1} parent=2 // pred_check_branch
        %60 = sbr.rel (0) target = $region29
      $region28: #{custom-call.1} parent=2 // pred_region
        _
      $region29: #{custom-call.1} parent=2 // pred_fallthru
        _
      %v61 = vlaneseq
      %v62 = vand.u32 %v61, 127
      %v63 = vlaneseq
      %v64 = vshrl.u32 %v63, 7
      %v65 = vshrl.u32 %v64, 1
      %v66 = vand.u32 %v64, 1
      %v67 = vmul.u32 %v65, 128
      %v68 = vadd.s32 %v62, %v67
      %v70 = vld [vmem:[#allocation15] sm:$0xff]
      %vm71 = vcmp.lt.s32.totalorder %v70, 0
      %v72 = vsub.s32 2147483647, %v70
      %v73 = vsel %vm71, %v72, %v70
      %vm75 = vcmp.lt.s32.totalorder %v68, 8192
      %v76 = vsel %vm75, %v73, 2147483648
      %77 = vst [vmem:[#allocation15] sm:$0xff] %v76
      %s78 = scalar_lea.vmem [#allocation15], 8
      %v79 = vld [vmem:[%s78] sm:$0xff]
      %vm80 = vcmp.lt.s32.totalorder %v79, 0
      %v81 = vsub.s32 2147483647, %v79
      %v82 = vsel %vm80, %v81, %v79
      %v83 = vadd.s32 %v68, 512
      %vm84 = vcmp.lt.s32.totalorder %v83, 8192
      %v85 = vsel %vm84, %v82, 2147483648
      %86 = vst [vmem:[%s78] sm:$0xff] %v85
      %s87 = scalar_lea.vmem [#allocation15], 16
      %v88 = vld [vmem:[%s87] sm:$0xff]
      %vm89 = vcmp.lt.s32.totalorder %v88, 0
      %v90 = vsub.s32 2147483647, %v88
      %v91 = vsel %vm89, %v90, %v88
      %v92 = vadd.s32 %v68, 1024
      %vm93 = vcmp.lt.s32.totalorder %v92, 8192
      %v94 = vsel %vm93, %v91, 2147483648
      %95 = vst [vmem:[%s87] sm:$0xff] %v94
      %s96 = scalar_lea.vmem [#allocation15], 24
      %v97 = vld [vmem:[%s96] sm:$0xff]
      %vm98 = vcmp.lt.s32.totalorder %v97, 0
      %v99 = vsub.s32 2147483647, %v97
      %v100 = vsel %vm98, %v99, %v97
      %v101 = vadd.s32 %v68, 1536
      %vm102 = vcmp.lt.s32.totalorder %v101, 8192
      %v103 = vsel %vm102, %v100, 2147483648
      %104 = vst [vmem:[%s96] sm:$0xff] %v103
      %s105 = scalar_lea.vmem [#allocation15], 32
      %v106 = vld [vmem:[%s105] sm:$0xff]
      %vm107 = vcmp.lt.s32.totalorder %v106, 0
      %v108 = vsub.s32 2147483647, %v106
      %v109 = vsel %vm107, %v108, %v106
      %v110 = vadd.s32 %v68, 2048
      %vm111 = vcmp.lt.s32.totalorder %v110, 8192
      %v112 = vsel %vm111, %v109, 2147483648
      %113 = vst [vmem:[%s105] sm:$0xff] %v112
      %s114 = scalar_lea.vmem [#allocation15], 40
      %v115 = vld [vmem:[%s114] sm:$0xff]
      %vm116 = vcmp.lt.s32.totalorder %v115, 0
      %v117 = vsub.s32 2147483647, %v115
      %v118 = vsel %vm116, %v117, %v115
      %v119 = vadd.s32 %v68, 2560
      %vm120 = vcmp.lt.s32.totalorder %v119, 8192
      %v121 = vsel %vm120, %v118, 2147483648
      %122 = vst [vmem:[%s114] sm:$0xff] %v121
      %s123 = scalar_lea.vmem [#allocation15], 48
      %v124 = vld [vmem:[%s123] sm:$0xff]
      %vm125 = vcmp.lt.s32.totalorder %v124, 0
      %v126 = vsub.s32 2147483647, %v124
      %v127 = vsel %vm125, %v126, %v124
      %v128 = vadd.s32 %v68, 3072
      %vm129 = vcmp.lt.s32.totalorder %v128, 8192
      %v130 = vsel %vm129, %v127, 2147483648
      %131 = vst [vmem:[%s123] sm:$0xff] %v130
      %s132 = scalar_lea.vmem [#allocation15], 56
      %v133 = vld [vmem:[%s132] sm:$0xff]
      %vm134 = vcmp.lt.s32.totalorder %v133, 0
      %v135 = vsub.s32 2147483647, %v133
      %v136 = vsel %vm134, %v135, %v133
      %v137 = vadd.s32 %v68, 3584
      %vm138 = vcmp.lt.s32.totalorder %v137, 8192
      %v139 = vsel %vm138, %v136, 2147483648
      %140 = vst [vmem:[%s132] sm:$0xff] %v139
      %s141 = scalar_lea.vmem [#allocation15], 64
      %v142 = vld [vmem:[%s141] sm:$0xff]
      %vm143 = vcmp.lt.s32.totalorder %v142, 0
      %v144 = vsub.s32 2147483647, %v142
      %v145 = vsel %vm143, %v144, %v142
      %v146 = vadd.s32 %v68, 4096
      %vm147 = vcmp.lt.s32.totalorder %v146, 8192
      %v148 = vsel %vm147, %v145, 2147483648
      %149 = vst [vmem:[%s141] sm:$0xff] %v148
      %s150 = scalar_lea.vmem [#allocation15], 72
      %v151 = vld [vmem:[%s150] sm:$0xff]
      %vm152 = vcmp.lt.s32.totalorder %v151, 0
      %v153 = vsub.s32 2147483647, %v151
      %v154 = vsel %vm152, %v153, %v151
      %v155 = vadd.s32 %v68, 4608
      %vm156 = vcmp.lt.s32.totalorder %v155, 8192
      %v157 = vsel %vm156, %v154, 2147483648
      %158 = vst [vmem:[%s150] sm:$0xff] %v157
      %s159 = scalar_lea.vmem [#allocation15], 80
      %v160 = vld [vmem:[%s159] sm:$0xff]
      %vm161 = vcmp.lt.s32.totalorder %v160, 0
      %v162 = vsub.s32 2147483647, %v160
      %v163 = vsel %vm161, %v162, %v160
      %v164 = vadd.s32 %v68, 5120
      %vm165 = vcmp.lt.s32.totalorder %v164, 8192
      %v166 = vsel %vm165, %v163, 2147483648
      %167 = vst [vmem:[%s159] sm:$0xff] %v166
      %s168 = scalar_lea.vmem [#allocation15], 88
      %v169 = vld [vmem:[%s168] sm:$0xff]
      %vm170 = vcmp.lt.s32.totalorder %v169, 0
      %v171 = vsub.s32 2147483647, %v169
      %v172 = vsel %vm170, %v171, %v169
      %v173 = vadd.s32 %v68, 5632
      %vm174 = vcmp.lt.s32.totalorder %v173, 8192
      %v175 = vsel %vm174, %v172, 2147483648
      %176 = vst [vmem:[%s168] sm:$0xff] %v175
      %s177 = scalar_lea.vmem [#allocation15], 96
      %v178 = vld [vmem:[%s177] sm:$0xff]
      %vm179 = vcmp.lt.s32.totalorder %v178, 0
      %v180 = vsub.s32 2147483647, %v178
      %v181 = vsel %vm179, %v180, %v178
      %v182 = vadd.s32 %v68, 6144
      %vm183 = vcmp.lt.s32.totalorder %v182, 8192
      %v184 = vsel %vm183, %v181, 2147483648
      %185 = vst [vmem:[%s177] sm:$0xff] %v184
      %s186 = scalar_lea.vmem [#allocation15], 104
      %v187 = vld [vmem:[%s186] sm:$0xff]
      %vm188 = vcmp.lt.s32.totalorder %v187, 0
      %v189 = vsub.s32 2147483647, %v187
      %v190 = vsel %vm188, %v189, %v187
      %v191 = vadd.s32 %v68, 6656
      %vm192 = vcmp.lt.s32.totalorder %v191, 8192
      %v193 = vsel %vm192, %v190, 2147483648
      %194 = vst [vmem:[%s186] sm:$0xff] %v193
      %s195 = scalar_lea.vmem [#allocation15], 112
      %v196 = vld [vmem:[%s195] sm:$0xff]
      %vm197 = vcmp.lt.s32.totalorder %v196, 0
      %v198 = vsub.s32 2147483647, %v196
      %v199 = vsel %vm197, %v198, %v196
      %v200 = vadd.s32 %v68, 7168
      %vm201 = vcmp.lt.s32.totalorder %v200, 8192
      %v202 = vsel %vm201, %v199, 2147483648
      %203 = vst [vmem:[%s195] sm:$0xff] %v202
      %s204 = scalar_lea.vmem [#allocation15], 120
      %v205 = vld [vmem:[%s204] sm:$0xff]
      %vm206 = vcmp.lt.s32.totalorder %v205, 0
      %v207 = vsub.s32 2147483647, %v205
      %v208 = vsel %vm206, %v207, %v205
      %v209 = vadd.s32 %v68, 7680
      %vm210 = vcmp.lt.s32.totalorder %v209, 8192
      %v211 = vsel %vm210, %v208, 2147483648
      %212 = vst [vmem:[%s204] sm:$0xff] %v211
      %v213 = vlaneseq
      %v214 = vand.u32 %v213, 127
      %v215 = vlaneseq
      %v216 = vshrl.u32 %v215, 7
      %v217 = vshrl.u32 %v216, 1
      %v218 = vand.u32 %v216, 1
      %v219 = vmul.u32 %v217, 128
      %v220 = vadd.s32 %v214, %v219
      %223 = vst [vmem:[#allocation16] sm:$0xff] %v220
      %v224 = vadd.s32 %v220, 512
      %s225 = scalar_lea.vmem [#allocation16], 8
      %226 = vst [vmem:[%s225] sm:$0xff] %v224
      %v227 = vadd.s32 %v220, 1024
      %s228 = scalar_lea.vmem [#allocation16], 16
      %229 = vst [vmem:[%s228] sm:$0xff] %v227
      %v230 = vadd.s32 %v220, 1536
      %s231 = scalar_lea.vmem [#allocation16], 24
      %232 = vst [vmem:[%s231] sm:$0xff] %v230
      %v233 = vadd.s32 %v220, 2048
      %s234 = scalar_lea.vmem [#allocation16], 32
      %235 = vst [vmem:[%s234] sm:$0xff] %v233
      %v236 = vadd.s32 %v220, 2560
      %s237 = scalar_lea.vmem [#allocation16], 40
      %238 = vst [vmem:[%s237] sm:$0xff] %v236
      %v239 = vadd.s32 %v220, 3072
      %s240 = scalar_lea.vmem [#allocation16], 48
      %241 = vst [vmem:[%s240] sm:$0xff] %v239
      %v242 = vadd.s32 %v220, 3584
      %s243 = scalar_lea.vmem [#allocation16], 56
      %244 = vst [vmem:[%s243] sm:$0xff] %v242
      %v245 = vadd.s32 %v220, 4096
      %s246 = scalar_lea.vmem [#allocation16], 64
      %247 = vst [vmem:[%s246] sm:$0xff] %v245
      %v248 = vadd.s32 %v220, 4608
      %s249 = scalar_lea.vmem [#allocation16], 72
      %250 = vst [vmem:[%s249] sm:$0xff] %v248
      %v251 = vadd.s32 %v220, 5120
      %s252 = scalar_lea.vmem [#allocation16], 80
      %253 = vst [vmem:[%s252] sm:$0xff] %v251
      %v254 = vadd.s32 %v220, 5632
      %s255 = scalar_lea.vmem [#allocation16], 88
      %256 = vst [vmem:[%s255] sm:$0xff] %v254
      %v257 = vadd.s32 %v220, 6144
      %s258 = scalar_lea.vmem [#allocation16], 96
      %259 = vst [vmem:[%s258] sm:$0xff] %v257
      %v260 = vadd.s32 %v220, 6656
      %s261 = scalar_lea.vmem [#allocation16], 104
      %262 = vst [vmem:[%s261] sm:$0xff] %v260
      %v263 = vadd.s32 %v220, 7168
      %s264 = scalar_lea.vmem [#allocation16], 112
      %265 = vst [vmem:[%s264] sm:$0xff] %v263
      %v266 = vadd.s32 %v220, 7680
      %s267 = scalar_lea.vmem [#allocation16], 120
      %268 = vst [vmem:[%s267] sm:$0xff] %v266
      %269 = xla_tuple [#allocation15], [#allocation16]
      %270 = vst [vmem:[#allocation12] sm:$0xff] 2147483648
      %271 = vst [vmem:[#allocation14] sm:$0xff] 2147483647
      %272 = xla_tuple [#allocation12], [#allocation14]
      loop: start=0, step=1, limit=4
      $region30: #{custom-call.1} parent=2 // loop_pre_header
        _
      $region31: #{custom-call.1} parent=2 // loop_header
        %s274 = sphi 0, %s278
        %p275 = scmp.ge.s32.totalorder %s274, 4
      $region32: #{custom-call.1} parent=2 // loop_header_branch
        %277 = sbr.rel (%p275) target = $region36
      $region33: #{custom-call.1} parent=2 // loop_body
        %v279 = vld [vmem:[#allocation15] sm:$0xff]
        %v280 = vld [vmem:[#allocation16] sm:$0xff]
        %281 = xla_tuple %v279, %v280
        %s282 = scalar_lea.vmem [#allocation15], 8
        %v283 = vld [vmem:[%s282] sm:$0xff]
        %s284 = scalar_lea.vmem [#allocation16], 8
        %v285 = vld [vmem:[%s284] sm:$0xff]
        %286 = xla_tuple %v283, %v285
        %vm287 = vcmp.gt.s32.totalorder %v283, %v279
        %vm288 = vcmp.eq.s32.totalorder %v283, %v279
        %vm289 = vcmp.lt.s32.totalorder %v285, %v280
        %vm290 = vmand %vm288, %vm289
        %vm291 = vmor %vm287, %vm290
        %v292 = vsel %vm291, %v283, %v279
        %v293 = vsel %vm291, %v285, %v280
        %294 = xla_tuple %v292, %v293
        %s295 = scalar_lea.vmem [#allocation15], 16
        %v296 = vld [vmem:[%s295] sm:$0xff]
        %s297 = scalar_lea.vmem [#allocation16], 16
        %v298 = vld [vmem:[%s297] sm:$0xff]
        %299 = xla_tuple %v296, %v298
        %vm300 = vcmp.gt.s32.totalorder %v296, %v292
        %vm301 = vcmp.eq.s32.totalorder %v296, %v292
        %vm302 = vcmp.lt.s32.totalorder %v298, %v293
        %vm303 = vmand %vm301, %vm302
        %vm304 = vmor %vm300, %vm303
        %v305 = vsel %vm304, %v296, %v292
        %v306 = vsel %vm304, %v298, %v293
        %307 = xla_tuple %v305, %v306
        %s308 = scalar_lea.vmem [#allocation15], 24
        %v309 = vld [vmem:[%s308] sm:$0xff]
        %s310 = scalar_lea.vmem [#allocation16], 24
        %v311 = vld [vmem:[%s310] sm:$0xff]
        %312 = xla_tuple %v309, %v311
        %vm313 = vcmp.gt.s32.totalorder %v309, %v305
        %vm314 = vcmp.eq.s32.totalorder %v309, %v305
        %vm315 = vcmp.lt.s32.totalorder %v311, %v306
        %vm316 = vmand %vm314, %vm315
        %vm317 = vmor %vm313, %vm316
        %v318 = vsel %vm317, %v309, %v305
        %v319 = vsel %vm317, %v311, %v306
        %320 = xla_tuple %v318, %v319
        %s321 = scalar_lea.vmem [#allocation15], 32
        %v322 = vld [vmem:[%s321] sm:$0xff]
        %s323 = scalar_lea.vmem [#allocation16], 32
        %v324 = vld [vmem:[%s323] sm:$0xff]
        %325 = xla_tuple %v322, %v324
        %vm326 = vcmp.gt.s32.totalorder %v322, %v318
        %vm327 = vcmp.eq.s32.totalorder %v322, %v318
        %vm328 = vcmp.lt.s32.totalorder %v324, %v319
        %vm329 = vmand %vm327, %vm328
        %vm330 = vmor %vm326, %vm329
        %v331 = vsel %vm330, %v322, %v318
        %v332 = vsel %vm330, %v324, %v319
        %333 = xla_tuple %v331, %v332
        %s334 = scalar_lea.vmem [#allocation15], 40
        %v335 = vld [vmem:[%s334] sm:$0xff]
        %s336 = scalar_lea.vmem [#allocation16], 40
        %v337 = vld [vmem:[%s336] sm:$0xff]
        %338 = xla_tuple %v335, %v337
        %vm339 = vcmp.gt.s32.totalorder %v335, %v331
        %vm340 = vcmp.eq.s32.totalorder %v335, %v331
        %vm341 = vcmp.lt.s32.totalorder %v337, %v332
        %vm342 = vmand %vm340, %vm341
        %vm343 = vmor %vm339, %vm342
        %v344 = vsel %vm343, %v335, %v331
        %v345 = vsel %vm343, %v337, %v332
        %346 = xla_tuple %v344, %v345
        %s347 = scalar_lea.vmem [#allocation15], 48
        %v348 = vld [vmem:[%s347] sm:$0xff]
        %s349 = scalar_lea.vmem [#allocation16], 48
        %v350 = vld [vmem:[%s349] sm:$0xff]
        %351 = xla_tuple %v348, %v350
        %vm352 = vcmp.gt.s32.totalorder %v348, %v344
        %vm353 = vcmp.eq.s32.totalorder %v348, %v344
        %vm354 = vcmp.lt.s32.totalorder %v350, %v345
        %vm355 = vmand %vm353, %vm354
        %vm356 = vmor %vm352, %vm355
        %v357 = vsel %vm356, %v348, %v344
        %v358 = vsel %vm356, %v350, %v345
        %359 = xla_tuple %v357, %v358
        %s360 = scalar_lea.vmem [#allocation15], 56
        %v361 = vld [vmem:[%s360] sm:$0xff]
        %s362 = scalar_lea.vmem [#allocation16], 56
        %v363 = vld [vmem:[%s362] sm:$0xff]
        %364 = xla_tuple %v361, %v363
        %vm365 = vcmp.gt.s32.totalorder %v361, %v357
        %vm366 = vcmp.eq.s32.totalorder %v361, %v357
        %vm367 = vcmp.lt.s32.totalorder %v363, %v358
        %vm368 = vmand %vm366, %vm367
        %vm369 = vmor %vm365, %vm368
        %v370 = vsel %vm369, %v361, %v357
        %v371 = vsel %vm369, %v363, %v358
        %372 = xla_tuple %v370, %v371
        %s373 = scalar_lea.vmem [#allocation15], 64
        %v374 = vld [vmem:[%s373] sm:$0xff]
        %s375 = scalar_lea.vmem [#allocation16], 64
        %v376 = vld [vmem:[%s375] sm:$0xff]
        %377 = xla_tuple %v374, %v376
        %vm378 = vcmp.gt.s32.totalorder %v374, %v370
        %vm379 = vcmp.eq.s32.totalorder %v374, %v370
        %vm380 = vcmp.lt.s32.totalorder %v376, %v371
        %vm381 = vmand %vm379, %vm380
        %vm382 = vmor %vm378, %vm381
        %v383 = vsel %vm382, %v374, %v370
        %v384 = vsel %vm382, %v376, %v371
        %385 = xla_tuple %v383, %v384
        %s386 = scalar_lea.vmem [#allocation15], 72
        %v387 = vld [vmem:[%s386] sm:$0xff]
        %s388 = scalar_lea.vmem [#allocation16], 72
        %v389 = vld [vmem:[%s388] sm:$0xff]
        %390 = xla_tuple %v387, %v389
        %vm391 = vcmp.gt.s32.totalorder %v387, %v383
        %vm392 = vcmp.eq.s32.totalorder %v387, %v383
        %vm393 = vcmp.lt.s32.totalorder %v389, %v384
        %vm394 = vmand %vm392, %vm393
        %vm395 = vmor %vm391, %vm394
        %v396 = vsel %vm395, %v387, %v383
        %v397 = vsel %vm395, %v389, %v384
        %398 = xla_tuple %v396, %v397
        %s399 = scalar_lea.vmem [#allocation15], 80
        %v400 = vld [vmem:[%s399] sm:$0xff]
        %s401 = scalar_lea.vmem [#allocation16], 80
        %v402 = vld [vmem:[%s401] sm:$0xff]
        %403 = xla_tuple %v400, %v402
        %vm404 = vcmp.gt.s32.totalorder %v400, %v396
        %vm405 = vcmp.eq.s32.totalorder %v400, %v396
        %vm406 = vcmp.lt.s32.totalorder %v402, %v397
        %vm407 = vmand %vm405, %vm406
        %vm408 = vmor %vm404, %vm407
        %v409 = vsel %vm408, %v400, %v396
        %v410 = vsel %vm408, %v402, %v397
        %411 = xla_tuple %v409, %v410
        %s412 = scalar_lea.vmem [#allocation15], 88
        %v413 = vld [vmem:[%s412] sm:$0xff]
        %s414 = scalar_lea.vmem [#allocation16], 88
        %v415 = vld [vmem:[%s414] sm:$0xff]
        %416 = xla_tuple %v413, %v415
        %vm417 = vcmp.gt.s32.totalorder %v413, %v409
        %vm418 = vcmp.eq.s32.totalorder %v413, %v409
        %vm419 = vcmp.lt.s32.totalorder %v415, %v410
        %vm420 = vmand %vm418, %vm419
        %vm421 = vmor %vm417, %vm420
        %v422 = vsel %vm421, %v413, %v409
        %v423 = vsel %vm421, %v415, %v410
        %424 = xla_tuple %v422, %v423
        %s425 = scalar_lea.vmem [#allocation15], 96
        %v426 = vld [vmem:[%s425] sm:$0xff]
        %s427 = scalar_lea.vmem [#allocation16], 96
        %v428 = vld [vmem:[%s427] sm:$0xff]
        %429 = xla_tuple %v426, %v428
        %vm430 = vcmp.gt.s32.totalorder %v426, %v422
        %vm431 = vcmp.eq.s32.totalorder %v426, %v422
        %vm432 = vcmp.lt.s32.totalorder %v428, %v423
        %vm433 = vmand %vm431, %vm432
        %vm434 = vmor %vm430, %vm433
        %v435 = vsel %vm434, %v426, %v422
        %v436 = vsel %vm434, %v428, %v423
        %437 = xla_tuple %v435, %v436
        %s438 = scalar_lea.vmem [#allocation15], 104
        %v439 = vld [vmem:[%s438] sm:$0xff]
        %s440 = scalar_lea.vmem [#allocation16], 104
        %v441 = vld [vmem:[%s440] sm:$0xff]
        %442 = xla_tuple %v439, %v441
        %vm443 = vcmp.gt.s32.totalorder %v439, %v435
        %vm444 = vcmp.eq.s32.totalorder %v439, %v435
        %vm445 = vcmp.lt.s32.totalorder %v441, %v436
        %vm446 = vmand %vm444, %vm445
        %vm447 = vmor %vm443, %vm446
        %v448 = vsel %vm447, %v439, %v435
        %v449 = vsel %vm447, %v441, %v436
        %450 = xla_tuple %v448, %v449
        %s451 = scalar_lea.vmem [#allocation15], 112
        %v452 = vld [vmem:[%s451] sm:$0xff]
        %s453 = scalar_lea.vmem [#allocation16], 112
        %v454 = vld [vmem:[%s453] sm:$0xff]
        %455 = xla_tuple %v452, %v454
        %vm456 = vcmp.gt.s32.totalorder %v452, %v448
        %vm457 = vcmp.eq.s32.totalorder %v452, %v448
        %vm458 = vcmp.lt.s32.totalorder %v454, %v449
        %vm459 = vmand %vm457, %vm458
        %vm460 = vmor %vm456, %vm459
        %v461 = vsel %vm460, %v452, %v448
        %v462 = vsel %vm460, %v454, %v449
        %463 = xla_tuple %v461, %v462
        %s464 = scalar_lea.vmem [#allocation15], 120
        %v465 = vld [vmem:[%s464] sm:$0xff]
        %s466 = scalar_lea.vmem [#allocation16], 120
        %v467 = vld [vmem:[%s466] sm:$0xff]
        %468 = xla_tuple %v465, %v467
        %vm469 = vcmp.gt.s32.totalorder %v465, %v461
        %vm470 = vcmp.eq.s32.totalorder %v465, %v461
        %vm471 = vcmp.lt.s32.totalorder %v467, %v462
        %vm472 = vmand %vm470, %vm471
        %vm473 = vmor %vm469, %vm472
        %v474 = vsel %vm473, %v465, %v461
        %v475 = vsel %vm473, %v467, %v462
        %476 = xla_tuple %v474, %v475
        %v477 = vrot.slane %v474, 2
        %v478 = vrot.slane %v475, 2
        %479 = xla_tuple %v477, %v478
        %vm480 = vcmp.gt.s32.totalorder %v477, %v474
        %vm481 = vcmp.eq.s32.totalorder %v477, %v474
        %vm482 = vcmp.lt.s32.totalorder %v478, %v475
        %vm483 = vmand %vm481, %vm482
        %vm484 = vmor %vm480, %vm483
        %v485 = vsel %vm484, %v477, %v474
        %v486 = vsel %vm484, %v478, %v475
        %487 = xla_tuple %v485, %v486
        %v488 = vrot.slane %v485, 2
        %v489 = vrot.slane %v486, 2
        %490 = xla_tuple %v488, %v489
        %vm491 = vcmp.gt.s32.totalorder %v488, %v485
        %vm492 = vcmp.eq.s32.totalorder %v488, %v485
        %vm493 = vcmp.lt.s32.totalorder %v489, %v486
        %vm494 = vmand %vm492, %vm493
        %vm495 = vmor %vm491, %vm494
        %v496 = vsel %vm495, %v488, %v485
        %v497 = vsel %vm495, %v489, %v486
        %498 = xla_tuple %v496, %v497
        %v499 = vrot.slane %v496, 2
        %v500 = vrot.slane %v497, 2
        %501 = xla_tuple %v499, %v500
        %vm502 = vcmp.gt.s32.totalorder %v499, %v496
        %vm503 = vcmp.eq.s32.totalorder %v499, %v496
        %vm504 = vcmp.lt.s32.totalorder %v500, %v497
        %vm505 = vmand %vm503, %vm504
        %vm506 = vmor %vm502, %vm505
        %v507 = vsel %vm506, %v499, %v496
        %v508 = vsel %vm506, %v500, %v497
        %509 = xla_tuple %v507, %v508
        %510 = vxpose.xlu0.b32.start [1/16] %v507, 128
        %511 = vxpose.xlu0.b32.cont [2/16] %v507, 128
        %512 = vxpose.xlu0.b32.cont [3/16] %v507, 128
        %513 = vxpose.xlu0.b32.cont [4/16] %v507, 128
        %514 = vxpose.xlu0.b32.cont [5/16] %v507, 128
        %515 = vxpose.xlu0.b32.cont [6/16] %v507, 128
        %516 = vxpose.xlu0.b32.cont [7/16] %v507, 128
        %517 = vxpose.xlu0.b32.cont [8/16] %v507, 128
        %518 = vxpose.xlu0.b32.cont [9/16] %v507, 128
        %519 = vxpose.xlu0.b32.cont [10/16] %v507, 128
        %520 = vxpose.xlu0.b32.cont [11/16] %v507, 128
        %521 = vxpose.xlu0.b32.cont [12/16] %v507, 128
        %522 = vxpose.xlu0.b32.cont [13/16] %v507, 128
        %523 = vxpose.xlu0.b32.cont [14/16] %v507, 128
        %524 = vxpose.xlu0.b32.cont [15/16] %v507, 128
        %525 = vxpose.xlu0.b32.end [16/16] %v507, 128
        %v526 = vpop.trf.xlu0
        %v527 = vpop.trf.xlu0
        %v528 = vpop.trf.xlu0
        %v529 = vpop.trf.xlu0
        %v530 = vpop.trf.xlu0
        %v531 = vpop.trf.xlu0
        %v532 = vpop.trf.xlu0
        %v533 = vpop.trf.xlu0
        %v534 = vpop.trf.xlu0
        %v535 = vpop.trf.xlu0
        %v536 = vpop.trf.xlu0
        %v537 = vpop.trf.xlu0
        %v538 = vpop.trf.xlu0
        %v539 = vpop.trf.xlu0
        %v540 = vpop.trf.xlu0
        %v541 = vpop.trf.xlu0
        %542 = vxpose.xlu0.b32.start [1/16] %v508, 128
        %543 = vxpose.xlu0.b32.cont [2/16] %v508, 128
        %544 = vxpose.xlu0.b32.cont [3/16] %v508, 128
        %545 = vxpose.xlu0.b32.cont [4/16] %v508, 128
        %546 = vxpose.xlu0.b32.cont [5/16] %v508, 128
        %547 = vxpose.xlu0.b32.cont [6/16] %v508, 128
        %548 = vxpose.xlu0.b32.cont [7/16] %v508, 128
        %549 = vxpose.xlu0.b32.cont [8/16] %v508, 128
        %550 = vxpose.xlu0.b32.cont [9/16] %v508, 128
        %551 = vxpose.xlu0.b32.cont [10/16] %v508, 128
        %552 = vxpose.xlu0.b32.cont [11/16] %v508, 128
        %553 = vxpose.xlu0.b32.cont [12/16] %v508, 128
        %554 = vxpose.xlu0.b32.cont [13/16] %v508, 128
        %555 = vxpose.xlu0.b32.cont [14/16] %v508, 128
        %556 = vxpose.xlu0.b32.cont [15/16] %v508, 128
        %557 = vxpose.xlu0.b32.end [16/16] %v508, 128
        %v558 = vpop.trf.xlu0
        %v559 = vpop.trf.xlu0
        %v560 = vpop.trf.xlu0
        %v561 = vpop.trf.xlu0
        %v562 = vpop.trf.xlu0
        %v563 = vpop.trf.xlu0
        %v564 = vpop.trf.xlu0
        %v565 = vpop.trf.xlu0
        %v566 = vpop.trf.xlu0
        %v567 = vpop.trf.xlu0
        %v568 = vpop.trf.xlu0
        %v569 = vpop.trf.xlu0
        %v570 = vpop.trf.xlu0
        %v571 = vpop.trf.xlu0
        %v572 = vpop.trf.xlu0
        %v573 = vpop.trf.xlu0
        %574 = xla_tuple %v526, %v558
        %575 = xla_tuple %v527, %v559
        %vm576 = vcmp.gt.s32.totalorder %v527, %v526
        %vm577 = vcmp.eq.s32.totalorder %v527, %v526
        %vm578 = vcmp.lt.s32.totalorder %v559, %v558
        %vm579 = vmand %vm577, %vm578
        %vm580 = vmor %vm576, %vm579
        %v581 = vsel %vm580, %v527, %v526
        %v582 = vsel %vm580, %v559, %v558
        %583 = xla_tuple %v581, %v582
        %584 = xla_tuple %v528, %v560
        %vm585 = vcmp.gt.s32.totalorder %v528, %v581
        %vm586 = vcmp.eq.s32.totalorder %v528, %v581
        %vm587 = vcmp.lt.s32.totalorder %v560, %v582
        %vm588 = vmand %vm586, %vm587
        %vm589 = vmor %vm585, %vm588
        %v590 = vsel %vm589, %v528, %v581
        %v591 = vsel %vm589, %v560, %v582
        %592 = xla_tuple %v590, %v591
        %593 = xla_tuple %v529, %v561
        %vm594 = vcmp.gt.s32.totalorder %v529, %v590
        %vm595 = vcmp.eq.s32.totalorder %v529, %v590
        %vm596 = vcmp.lt.s32.totalorder %v561, %v591
        %vm597 = vmand %vm595, %vm596
        %vm598 = vmor %vm594, %vm597
        %v599 = vsel %vm598, %v529, %v590
        %v600 = vsel %vm598, %v561, %v591
        %601 = xla_tuple %v599, %v600
        %602 = xla_tuple %v530, %v562
        %vm603 = vcmp.gt.s32.totalorder %v530, %v599
        %vm604 = vcmp.eq.s32.totalorder %v530, %v599
        %vm605 = vcmp.lt.s32.totalorder %v562, %v600
        %vm606 = vmand %vm604, %vm605
        %vm607 = vmor %vm603, %vm606
        %v608 = vsel %vm607, %v530, %v599
        %v609 = vsel %vm607, %v562, %v600
        %610 = xla_tuple %v608, %v609
        %611 = xla_tuple %v531, %v563
        %vm612 = vcmp.gt.s32.totalorder %v531, %v608
        %vm613 = vcmp.eq.s32.totalorder %v531, %v608
        %vm614 = vcmp.lt.s32.totalorder %v563, %v609
        %vm615 = vmand %vm613, %vm614
        %vm616 = vmor %vm612, %vm615
        %v617 = vsel %vm616, %v531, %v608
        %v618 = vsel %vm616, %v563, %v609
        %619 = xla_tuple %v617, %v618
        %620 = xla_tuple %v532, %v564
        %vm621 = vcmp.gt.s32.totalorder %v532, %v617
        %vm622 = vcmp.eq.s32.totalorder %v532, %v617
        %vm623 = vcmp.lt.s32.totalorder %v564, %v618
        %vm624 = vmand %vm622, %vm623
        %vm625 = vmor %vm621, %vm624
        %v626 = vsel %vm625, %v532, %v617
        %v627 = vsel %vm625, %v564, %v618
        %628 = xla_tuple %v626, %v627
        %629 = xla_tuple %v533, %v565
        %vm630 = vcmp.gt.s32.totalorder %v533, %v626
        %vm631 = vcmp.eq.s32.totalorder %v533, %v626
        %vm632 = vcmp.lt.s32.totalorder %v565, %v627
        %vm633 = vmand %vm631, %vm632
        %vm634 = vmor %vm630, %vm633
        %v635 = vsel %vm634, %v533, %v626
        %v636 = vsel %vm634, %v565, %v627
        %637 = xla_tuple %v635, %v636
        %638 = xla_tuple %v534, %v566
        %vm639 = vcmp.gt.s32.totalorder %v534, %v635
        %vm640 = vcmp.eq.s32.totalorder %v534, %v635
        %vm641 = vcmp.lt.s32.totalorder %v566, %v636
        %vm642 = vmand %vm640, %vm641
        %vm643 = vmor %vm639, %vm642
        %v644 = vsel %vm643, %v534, %v635
        %v645 = vsel %vm643, %v566, %v636
        %646 = xla_tuple %v644, %v645
        %647 = xla_tuple %v535, %v567
        %vm648 = vcmp.gt.s32.totalorder %v535, %v644
        %vm649 = vcmp.eq.s32.totalorder %v535, %v644
        %vm650 = vcmp.lt.s32.totalorder %v567, %v645
        %vm651 = vmand %vm649, %vm650
        %vm652 = vmor %vm648, %vm651
        %v653 = vsel %vm652, %v535, %v644
        %v654 = vsel %vm652, %v567, %v645
        %655 = xla_tuple %v653, %v654
        %656 = xla_tuple %v536, %v568
        %vm657 = vcmp.gt.s32.totalorder %v536, %v653
        %vm658 = vcmp.eq.s32.totalorder %v536, %v653
        %vm659 = vcmp.lt.s32.totalorder %v568, %v654
        %vm660 = vmand %vm658, %vm659
        %vm661 = vmor %vm657, %vm660
        %v662 = vsel %vm661, %v536, %v653
        %v663 = vsel %vm661, %v568, %v654
        %664 = xla_tuple %v662, %v663
        %665 = xla_tuple %v537, %v569
        %vm666 = vcmp.gt.s32.totalorder %v537, %v662
        %vm667 = vcmp.eq.s32.totalorder %v537, %v662
        %vm668 = vcmp.lt.s32.totalorder %v569, %v663
        %vm669 = vmand %vm667, %vm668
        %vm670 = vmor %vm666, %vm669
        %v671 = vsel %vm670, %v537, %v662
        %v672 = vsel %vm670, %v569, %v663
        %673 = xla_tuple %v671, %v672
        %674 = xla_tuple %v538, %v570
        %vm675 = vcmp.gt.s32.totalorder %v538, %v671
        %vm676 = vcmp.eq.s32.totalorder %v538, %v671
        %vm677 = vcmp.lt.s32.totalorder %v570, %v672
        %vm678 = vmand %vm676, %vm677
        %vm679 = vmor %vm675, %vm678
        %v680 = vsel %vm679, %v538, %v671
        %v681 = vsel %vm679, %v570, %v672
        %682 = xla_tuple %v680, %v681
        %683 = xla_tuple %v539, %v571
        %vm684 = vcmp.gt.s32.totalorder %v539, %v680
        %vm685 = vcmp.eq.s32.totalorder %v539, %v680
        %vm686 = vcmp.lt.s32.totalorder %v571, %v681
        %vm687 = vmand %vm685, %vm686
        %vm688 = vmor %vm684, %vm687
        %v689 = vsel %vm688, %v539, %v680
        %v690 = vsel %vm688, %v571, %v681
        %691 = xla_tuple %v689, %v690
        %692 = xla_tuple %v540, %v572
        %vm693 = vcmp.gt.s32.totalorder %v540, %v689
        %vm694 = vcmp.eq.s32.totalorder %v540, %v689
        %vm695 = vcmp.lt.s32.totalorder %v572, %v690
        %vm696 = vmand %vm694, %vm695
        %vm697 = vmor %vm693, %vm696
        %v698 = vsel %vm697, %v540, %v689
        %v699 = vsel %vm697, %v572, %v690
        %700 = xla_tuple %v698, %v699
        %701 = xla_tuple %v541, %v573
        %vm702 = vcmp.gt.s32.totalorder %v541, %v698
        %vm703 = vcmp.eq.s32.totalorder %v541, %v698
        %vm704 = vcmp.lt.s32.totalorder %v573, %v699
        %vm705 = vmand %vm703, %vm704
        %vm706 = vmor %vm702, %vm705
        %v707 = vsel %vm706, %v541, %v698
        %v708 = vsel %vm706, %v573, %v699
        %709 = xla_tuple %v707, %v708
        %v710 = vrot.slane %v707, 1
        %v711 = vrot.slane %v708, 1
        %712 = xla_tuple %v710, %v711
        %vm713 = vcmp.gt.s32.totalorder %v710, %v707
        %vm714 = vcmp.eq.s32.totalorder %v710, %v707
        %vm715 = vcmp.lt.s32.totalorder %v711, %v708
        %vm716 = vmand %vm714, %vm715
        %vm717 = vmor %vm713, %vm716
        %v718 = vsel %vm717, %v710, %v707
        %v719 = vsel %vm717, %v711, %v708
        %720 = xla_tuple %v718, %v719
        %v721 = vrot.slane %v718, 1
        %v722 = vrot.slane %v719, 1
        %723 = xla_tuple %v721, %v722
        %vm724 = vcmp.gt.s32.totalorder %v721, %v718
        %vm725 = vcmp.eq.s32.totalorder %v721, %v718
        %vm726 = vcmp.lt.s32.totalorder %v722, %v719
        %vm727 = vmand %vm725, %vm726
        %vm728 = vmor %vm724, %vm727
        %v729 = vsel %vm728, %v721, %v718
        %v730 = vsel %vm728, %v722, %v719
        %731 = xla_tuple %v729, %v730
        %v732 = vrot.slane %v729, 1
        %v733 = vrot.slane %v730, 1
        %734 = xla_tuple %v732, %v733
        %vm735 = vcmp.gt.s32.totalorder %v732, %v729
        %vm736 = vcmp.eq.s32.totalorder %v732, %v729
        %vm737 = vcmp.lt.s32.totalorder %v733, %v730
        %vm738 = vmand %vm736, %vm737
        %vm739 = vmor %vm735, %vm738
        %v740 = vsel %vm739, %v732, %v729
        %v741 = vsel %vm739, %v733, %v730
        %742 = xla_tuple %v740, %v741
        %v743 = vrot.slane %v740, 1
        %v744 = vrot.slane %v741, 1
        %745 = xla_tuple %v743, %v744
        %vm746 = vcmp.gt.s32.totalorder %v743, %v740
        %vm747 = vcmp.eq.s32.totalorder %v743, %v740
        %vm748 = vcmp.lt.s32.totalorder %v744, %v741
        %vm749 = vmand %vm747, %vm748
        %vm750 = vmor %vm746, %vm749
        %v751 = vsel %vm750, %v743, %v740
        %v752 = vsel %vm750, %v744, %v741
        %753 = xla_tuple %v751, %v752
        %v754 = vrot.slane %v751, 1
        %v755 = vrot.slane %v752, 1
        %756 = xla_tuple %v754, %v755
        %vm757 = vcmp.gt.s32.totalorder %v754, %v751
        %vm758 = vcmp.eq.s32.totalorder %v754, %v751
        %vm759 = vcmp.lt.s32.totalorder %v755, %v752
        %vm760 = vmand %vm758, %vm759
        %vm761 = vmor %vm757, %vm760
        %v762 = vsel %vm761, %v754, %v751
        %v763 = vsel %vm761, %v755, %v752
        %764 = xla_tuple %v762, %v763
        %v765 = vrot.slane %v762, 1
        %v766 = vrot.slane %v763, 1
        %767 = xla_tuple %v765, %v766
        %vm768 = vcmp.gt.s32.totalorder %v765, %v762
        %vm769 = vcmp.eq.s32.totalorder %v765, %v762
        %vm770 = vcmp.lt.s32.totalorder %v766, %v763
        %vm771 = vmand %vm769, %vm770
        %vm772 = vmor %vm768, %vm771
        %v773 = vsel %vm772, %v765, %v762
        %v774 = vsel %vm772, %v766, %v763
        %775 = xla_tuple %v773, %v774
        %v776 = vrot.slane %v773, 1
        %v777 = vrot.slane %v774, 1
        %778 = xla_tuple %v776, %v777
        %vm779 = vcmp.gt.s32.totalorder %v776, %v773
        %vm780 = vcmp.eq.s32.totalorder %v776, %v773
        %vm781 = vcmp.lt.s32.totalorder %v777, %v774
        %vm782 = vmand %vm780, %vm781
        %vm783 = vmor %vm779, %vm782
        %v784 = vsel %vm783, %v776, %v773
        %v785 = vsel %vm783, %v777, %v774
        %786 = xla_tuple %v784, %v785
        %s787 = scalar_lea.vmem [#allocation12], %s274
        %788 = vst [vmem:[%s787] sm:$0x1] %v784
        %s789 = scalar_lea.vmem [#allocation14], %s274
        %790 = vst [vmem:[%s789] sm:$0x1] %v785
        %791 = xla_tuple %788, %790
        %792 = vxpose.xlu0.b32.start [1/16] %v785, 128
        %793 = vxpose.xlu0.b32.cont [2/16] 0.0, 128
        %794 = vxpose.xlu0.b32.cont [3/16] 0.0, 128
        %795 = vxpose.xlu0.b32.cont [4/16] 0.0, 128
        %796 = vxpose.xlu0.b32.cont [5/16] 0.0, 128
        %797 = vxpose.xlu0.b32.cont [6/16] 0.0, 128
        %798 = vxpose.xlu0.b32.cont [7/16] 0.0, 128
        %799 = vxpose.xlu0.b32.cont [8/16] 0.0, 128
        %800 = vxpose.xlu0.b32.cont [9/16] 0.0, 128
        %801 = vxpose.xlu0.b32.cont [10/16] 0.0, 128
        %802 = vxpose.xlu0.b32.cont [11/16] 0.0, 128
        %803 = vxpose.xlu0.b32.cont [12/16] 0.0, 128
        %804 = vxpose.xlu0.b32.cont [13/16] 0.0, 128
        %805 = vxpose.xlu0.b32.cont [14/16] 0.0, 128
        %806 = vxpose.xlu0.b32.cont [15/16] 0.0, 128
        %807 = vxpose.xlu0.b32.end [16/16] 0.0, 128
        %v808 = vpop.trf.xlu0
        %v809 = vpop.trf.xlu0
        %v810 = vpop.trf.xlu0
        %v811 = vpop.trf.xlu0
        %v812 = vpop.trf.xlu0
        %v813 = vpop.trf.xlu0
        %v814 = vpop.trf.xlu0
        %v815 = vpop.trf.xlu0
        %v816 = vpop.trf.xlu0
        %v817 = vpop.trf.xlu0
        %v818 = vpop.trf.xlu0
        %v819 = vpop.trf.xlu0
        %v820 = vpop.trf.xlu0
        %v821 = vpop.trf.xlu0
        %v822 = vpop.trf.xlu0
        %v823 = vpop.trf.xlu0
        %s824 = vtos %v808
        %s825 = sshrl.u32 %s824, 9
        %p826 = scmp.lt.s32.totalorder %s824, 0
        %s827 = ssub.s32 0, %s824
        %s828 = scalar_select %p826, %s827, %s824
        %s829 = sand.u32 %s828, 511
        %s830 = ssub.s32 0, %s829
        %s831 = scalar_select %p826, %s830, %s829
        %s832 = sshrl.u32 %s831, 7
        %s833 = smul.u32 %s832, 256
        %s834 = sand.u32 %s831, 127
        %s835 = sadd.s32 %s833, %s834
        %v836 = vlaneseq
        %v837 = vstv %s835
        %vm839 = vcmp.eq.s32.totalorder %v836, %v837
        %s840 = smul.addr %s825, 8
        %s841 = scalar_lea.vmem [#allocation15], %s840
        %842 = vst.msk [vmem:[%s841] sm:$0xff] %vm839, 2147483648
        %s843 = smul.addr %s825, 8
        %s844 = scalar_lea.vmem [#allocation16], %s843
        %845 = vst.msk [vmem:[%s844] sm:$0xff] %vm839, 2147483647
        %846 = xla_tuple %842, %845
        %v847 = vrot.slane %v808, 1
        %s848 = vtos %v847
        %s849 = sshrl.u32 %s848, 9
        %p850 = scmp.lt.s32.totalorder %s848, 0
        %s851 = ssub.s32 0, %s848
        %s852 = scalar_select %p850, %s851, %s848
        %s853 = sand.u32 %s852, 511
        %s854 = ssub.s32 0, %s853
        %s855 = scalar_select %p850, %s854, %s853
        %s856 = sshrl.u32 %s855, 7
        %s857 = smul.u32 %s856, 256
        %s858 = sand.u32 %s855, 127
        %s859 = sadd.s32 %s857, %s858
        %v860 = vlaneseq
        %v861 = vstv %s859
        %v862 = vadd.s32 %v861, 128
        %vm863 = vcmp.eq.s32.totalorder %v860, %v862
        %s864 = smul.addr %s849, 8
        %s865 = scalar_lea.vmem [#allocation15], %s864
        %866 = vst.msk [vmem:[%s865] sm:$0xff] %vm863, 2147483648
        %s867 = smul.addr %s849, 8
        %s868 = scalar_lea.vmem [#allocation16], %s867
        %869 = vst.msk [vmem:[%s868] sm:$0xff] %vm863, 2147483647
        %870 = xla_tuple %866, %869
        %v871 = vrot.slane %v847, 1
      $region34: #{custom-call.1} parent=2 // loop_footer
        %s278 = sadd.s32 1, %s274
      $region35: #{custom-call.1} parent=2 // loop_footer_branch
        %273 = sbr.rel target = $region31
      $region36: #{custom-call.1} parent=2 // loop_exit
        _
      %s872 = scalar_lea.vmem [#allocation12], 7
      %v873 = vld [vmem:[%s872] ss:$-1 sm:$0xff]
      %s874 = scalar_lea.vmem [#allocation12], 7
      %v875 = vld [vmem:[%s874] ss:$-1 sm:$0xff]
      %876 = vst [vmem:[#allocation12] sm:$0xff] %v875
      %877 = vst [vmem:[#allocation12] sm:$0xff] %v873
      %s878 = scalar_lea.vmem [#allocation14], 7
      %v879 = vld [vmem:[%s878] ss:$-1 sm:$0xff]
      %s880 = scalar_lea.vmem [#allocation14], 7
      %v881 = vld [vmem:[%s880] ss:$-1 sm:$0xff]
      %882 = vst [vmem:[#allocation14] sm:$0xff] %v881
      %883 = vst [vmem:[#allocation14] sm:$0xff] %v879
      %884 = xla_tuple %877, %883
      %v885 = vld [vmem:[#allocation11] sm:$0xff]
      %v886 = vld [vmem:[#allocation13] sm:$0xff]
      %887 = xla_tuple %v885, %v886
      %v888 = vld [vmem:[#allocation12] sm:$0xff]
      %v889 = vld [vmem:[#allocation14] sm:$0xff]
      %890 = xla_tuple %v888, %v889
      %vm891 = vcmp.gt.s32.totalorder %v885, %v888
      %vm892 = vcmp.eq.s32.totalorder %v885, %v888
      %vm893 = vcmp.lt.s32.totalorder %v886, %v889
      %vm894 = vmand %vm892, %vm893
      %vm895 = vmor %vm891, %vm894
      %v896 = vsel %vm895, %v885, %v888
      %897 = vst [vmem:[#allocation11] sm:$0xff] %v896
      %v898 = vsel %vm895, %v888, %v885
      %899 = vst [vmem:[#allocation12] sm:$0xff] %v898
      %v900 = vsel %vm895, %v886, %v889
      %901 = vst [vmem:[#allocation13] sm:$0xff] %v900
      %v902 = vsel %vm895, %v889, %v886
      %903 = vst [vmem:[#allocation14] sm:$0xff] %v902
      %904 = xla_tuple %899, %903
      %905 = xla_tuple [#allocation11], [#allocation13]
      %v906 = vld [vmem:[#allocation11] sm:$0xff]
      %v907 = vld [vmem:[#allocation13] sm:$0xff]
      %908 = xla_tuple %v906, %v907
      %v910 = vunpack.c.l.s4 839939668
      %v911 = vunpack.c.0.s8 %v910
      %v912 = vlaneseq
      %v913 = vshrl.u32 %v912, 7
      %v914 = vsub.s32 %v911, %v913
      %v915 = vrot.slane %v906, %v914
      %v917 = vunpack.c.l.s4 839939668
      %v918 = vunpack.c.0.s8 %v917
      %v919 = vlaneseq
      %v920 = vshrl.u32 %v919, 7
      %v921 = vsub.s32 %v918, %v920
      %v922 = vrot.slane %v907, %v921
      %923 = xla_tuple %v915, %v922
      %vm924 = vcmp.gt.s32.totalorder %v906, %v915
      %vm925 = vcmp.eq.s32.totalorder %v906, %v915
      %vm926 = vcmp.lt.s32.totalorder %v907, %v922
      %vm927 = vmand %vm925, %vm926
      %vm928 = vmor %vm924, %vm927
      %v929 = vlaneseq
      %v930 = vshrl.u32 %v929, 7
      %v931 = vand.u32 %v930, 4
      %vm932 = vcmp.ne.s32.totalorder %v931, 0
      %vm933 = vmxor %vm928, %vm932
      %v934 = vsel %vm933, %v906, %v915
      %v935 = vsel %vm933, %v907, %v922
      %936 = xla_tuple %v934, %v935
      %v938 = vunpack.c.l.s4 1417023538
      %v939 = vunpack.c.0.s8 %v938
      %v940 = vlaneseq
      %v941 = vshrl.u32 %v940, 7
      %v942 = vsub.s32 %v939, %v941
      %v943 = vrot.slane %v934, %v942
      %v945 = vunpack.c.l.s4 1417023538
      %v946 = vunpack.c.0.s8 %v945
      %v947 = vlaneseq
      %v948 = vshrl.u32 %v947, 7
      %v949 = vsub.s32 %v946, %v948
      %v950 = vrot.slane %v935, %v949
      %951 = xla_tuple %v943, %v950
      %vm952 = vcmp.gt.s32.totalorder %v934, %v943
      %vm953 = vcmp.eq.s32.totalorder %v934, %v943
      %vm954 = vcmp.lt.s32.totalorder %v935, %v950
      %vm955 = vmand %vm953, %vm954
      %vm956 = vmor %vm952, %vm955
      %v957 = vlaneseq
      %v958 = vshrl.u32 %v957, 7
      %v959 = vand.u32 %v958, 2
      %vm960 = vcmp.ne.s32.totalorder %v959, 0
      %vm961 = vmxor %vm956, %vm960
      %v962 = vsel %vm961, %v934, %v943
      %v963 = vsel %vm961, %v935, %v950
      %964 = xla_tuple %v962, %v963
      %v966 = vunpack.c.l.s4 1732584193
      %v967 = vunpack.c.0.s8 %v966
      %v968 = vlaneseq
      %v969 = vshrl.u32 %v968, 7
      %v970 = vsub.s32 %v967, %v969
      %v971 = vrot.slane %v962, %v970
      %v973 = vunpack.c.l.s4 1732584193
      %v974 = vunpack.c.0.s8 %v973
      %v975 = vlaneseq
      %v976 = vshrl.u32 %v975, 7
      %v977 = vsub.s32 %v974, %v976
      %v978 = vrot.slane %v963, %v977
      %979 = xla_tuple %v971, %v978
      %vm980 = vcmp.gt.s32.totalorder %v962, %v971
      %vm981 = vcmp.eq.s32.totalorder %v962, %v971
      %vm982 = vcmp.lt.s32.totalorder %v963, %v978
      %vm983 = vmand %vm981, %vm982
      %vm984 = vmor %vm980, %vm983
      %v985 = vlaneseq
      %v986 = vshrl.u32 %v985, 7
      %v987 = vand.u32 %v986, 1
      %vm988 = vcmp.ne.s32.totalorder %v987, 0
      %vm989 = vmxor %vm984, %vm988
      %v990 = vsel %vm989, %v962, %v971
      %v991 = vsel %vm989, %v963, %v978
      %992 = xla_tuple %v990, %v991
      %993 = vst [vmem:[#allocation11] sm:$0xff] %v990
      %994 = vst [vmem:[#allocation13] sm:$0xff] %v991
      %995 = xla_tuple %993, %994
      %v996 = vld [vmem:[#allocation11] sm:$0xff]
      %v997 = vld [vmem:[#allocation13] sm:$0xff]
      %998 = xla_tuple %v996, %v997
      %v1000 = vunpack.c.l.s4 839939668
      %v1001 = vunpack.c.0.s8 %v1000
      %v1002 = vlaneseq
      %v1003 = vshrl.u32 %v1002, 7
      %v1004 = vsub.s32 %v1001, %v1003
      %v1005 = vrot.slane %v996, %v1004
      %v1007 = vunpack.c.l.s4 839939668
      %v1008 = vunpack.c.0.s8 %v1007
      %v1009 = vlaneseq
      %v1010 = vshrl.u32 %v1009, 7
      %v1011 = vsub.s32 %v1008, %v1010
      %v1012 = vrot.slane %v997, %v1011
      %1013 = xla_tuple %v1005, %v1012
      %vm1014 = vcmp.gt.s32.totalorder %v996, %v1005
      %vm1015 = vcmp.eq.s32.totalorder %v996, %v1005
      %vm1016 = vcmp.lt.s32.totalorder %v997, %v1012
      %vm1017 = vmand %vm1015, %vm1016
      %vm1018 = vmor %vm1014, %vm1017
      %v1019 = vlaneseq
      %v1020 = vshrl.u32 %v1019, 7
      %v1021 = vand.u32 %v1020, 4
      %vm1022 = vcmp.ne.s32.totalorder %v1021, 0
      %vm1023 = vmxor %vm1018, %vm1022
      %v1024 = vsel %vm1023, %v996, %v1005
      %v1025 = vsel %vm1023, %v997, %v1012
      %1026 = xla_tuple %v1024, %v1025
      %v1028 = vunpack.c.l.s4 1417023538
      %v1029 = vunpack.c.0.s8 %v1028
      %v1030 = vlaneseq
      %v1031 = vshrl.u32 %v1030, 7
      %v1032 = vsub.s32 %v1029, %v1031
      %v1033 = vrot.slane %v1024, %v1032
      %v1035 = vunpack.c.l.s4 1417023538
      %v1036 = vunpack.c.0.s8 %v1035
      %v1037 = vlaneseq
      %v1038 = vshrl.u32 %v1037, 7
      %v1039 = vsub.s32 %v1036, %v1038
      %v1040 = vrot.slane %v1025, %v1039
      %1041 = xla_tuple %v1033, %v1040
      %vm1042 = vcmp.gt.s32.totalorder %v1024, %v1033
      %vm1043 = vcmp.eq.s32.totalorder %v1024, %v1033
      %vm1044 = vcmp.lt.s32.totalorder %v1025, %v1040
      %vm1045 = vmand %vm1043, %vm1044
      %vm1046 = vmor %vm1042, %vm1045
      %v1047 = vlaneseq
      %v1048 = vshrl.u32 %v1047, 7
      %v1049 = vand.u32 %v1048, 2
      %vm1050 = vcmp.ne.s32.totalorder %v1049, 0
      %vm1051 = vmxor %vm1046, %vm1050
      %v1052 = vsel %vm1051, %v1024, %v1033
      %v1053 = vsel %vm1051, %v1025, %v1040
      %1054 = xla_tuple %v1052, %v1053
      %v1056 = vunpack.c.l.s4 1732584193
      %v1057 = vunpack.c.0.s8 %v1056
      %v1058 = vlaneseq
      %v1059 = vshrl.u32 %v1058, 7
      %v1060 = vsub.s32 %v1057, %v1059
      %v1061 = vrot.slane %v1052, %v1060
      %v1063 = vunpack.c.l.s4 1732584193
      %v1064 = vunpack.c.0.s8 %v1063
      %v1065 = vlaneseq
      %v1066 = vshrl.u32 %v1065, 7
      %v1067 = vsub.s32 %v1064, %v1066
      %v1068 = vrot.slane %v1053, %v1067
      %1069 = xla_tuple %v1061, %v1068
      %vm1070 = vcmp.gt.s32.totalorder %v1052, %v1061
      %vm1071 = vcmp.eq.s32.totalorder %v1052, %v1061
      %vm1072 = vcmp.lt.s32.totalorder %v1053, %v1068
      %vm1073 = vmand %vm1071, %vm1072
      %vm1074 = vmor %vm1070, %vm1073
      %v1075 = vlaneseq
      %v1076 = vshrl.u32 %v1075, 7
      %v1077 = vand.u32 %v1076, 1
      %vm1078 = vcmp.ne.s32.totalorder %v1077, 0
      %vm1079 = vmxor %vm1074, %vm1078
      %v1080 = vsel %vm1079, %v1052, %v1061
      %v1081 = vsel %vm1079, %v1053, %v1068
      %1082 = xla_tuple %v1080, %v1081
      %1083 = vst [vmem:[#allocation11] sm:$0xff] %v1080
      %1084 = vst [vmem:[#allocation13] sm:$0xff] %v1081
      %1085 = xla_tuple %1083, %1084
      %1086 = xla_tuple [#allocation12], [#allocation14]
      %v1087 = vld [vmem:[#allocation12] sm:$0xff]
      %v1088 = vld [vmem:[#allocation14] sm:$0xff]
      %1089 = xla_tuple %v1087, %v1088
      %v1091 = vunpack.c.l.s4 839939668
      %v1092 = vunpack.c.0.s8 %v1091
      %v1093 = vlaneseq
      %v1094 = vshrl.u32 %v1093, 7
      %v1095 = vsub.s32 %v1092, %v1094
      %v1096 = vrot.slane %v1087, %v1095
      %v1098 = vunpack.c.l.s4 839939668
      %v1099 = vunpack.c.0.s8 %v1098
      %v1100 = vlaneseq
      %v1101 = vshrl.u32 %v1100, 7
      %v1102 = vsub.s32 %v1099, %v1101
      %v1103 = vrot.slane %v1088, %v1102
      %1104 = xla_tuple %v1096, %v1103
      %vm1105 = vcmp.gt.s32.totalorder %v1087, %v1096
      %vm1106 = vcmp.eq.s32.totalorder %v1087, %v1096
      %vm1107 = vcmp.lt.s32.totalorder %v1088, %v1103
      %vm1108 = vmand %vm1106, %vm1107
      %vm1109 = vmor %vm1105, %vm1108
      %v1110 = vlaneseq
      %v1111 = vshrl.u32 %v1110, 7
      %v1112 = vand.u32 %v1111, 4
      %vm1113 = vcmp.ne.s32.totalorder %v1112, 0
      %vm1114 = vmxor %vm1109, %vm1113
      %v1115 = vsel %vm1114, %v1087, %v1096
      %v1116 = vsel %vm1114, %v1088, %v1103
      %1117 = xla_tuple %v1115, %v1116
      %v1119 = vunpack.c.l.s4 1417023538
      %v1120 = vunpack.c.0.s8 %v1119
      %v1121 = vlaneseq
      %v1122 = vshrl.u32 %v1121, 7
      %v1123 = vsub.s32 %v1120, %v1122
      %v1124 = vrot.slane %v1115, %v1123
      %v1126 = vunpack.c.l.s4 1417023538
      %v1127 = vunpack.c.0.s8 %v1126
      %v1128 = vlaneseq
      %v1129 = vshrl.u32 %v1128, 7
      %v1130 = vsub.s32 %v1127, %v1129
      %v1131 = vrot.slane %v1116, %v1130
      %1132 = xla_tuple %v1124, %v1131
      %vm1133 = vcmp.gt.s32.totalorder %v1115, %v1124
      %vm1134 = vcmp.eq.s32.totalorder %v1115, %v1124
      %vm1135 = vcmp.lt.s32.totalorder %v1116, %v1131
      %vm1136 = vmand %vm1134, %vm1135
      %vm1137 = vmor %vm1133, %vm1136
      %v1138 = vlaneseq
      %v1139 = vshrl.u32 %v1138, 7
      %v1140 = vand.u32 %v1139, 2
      %vm1141 = vcmp.ne.s32.totalorder %v1140, 0
      %vm1142 = vmxor %vm1137, %vm1141
      %v1143 = vsel %vm1142, %v1115, %v1124
      %v1144 = vsel %vm1142, %v1116, %v1131
      %1145 = xla_tuple %v1143, %v1144
      %v1147 = vunpack.c.l.s4 1732584193
      %v1148 = vunpack.c.0.s8 %v1147
      %v1149 = vlaneseq
      %v1150 = vshrl.u32 %v1149, 7
      %v1151 = vsub.s32 %v1148, %v1150
      %v1152 = vrot.slane %v1143, %v1151
      %v1154 = vunpack.c.l.s4 1732584193
      %v1155 = vunpack.c.0.s8 %v1154
      %v1156 = vlaneseq
      %v1157 = vshrl.u32 %v1156, 7
      %v1158 = vsub.s32 %v1155, %v1157
      %v1159 = vrot.slane %v1144, %v1158
      %1160 = xla_tuple %v1152, %v1159
      %vm1161 = vcmp.gt.s32.totalorder %v1143, %v1152
      %vm1162 = vcmp.eq.s32.totalorder %v1143, %v1152
      %vm1163 = vcmp.lt.s32.totalorder %v1144, %v1159
      %vm1164 = vmand %vm1162, %vm1163
      %vm1165 = vmor %vm1161, %vm1164
      %v1166 = vlaneseq
      %v1167 = vshrl.u32 %v1166, 7
      %v1168 = vand.u32 %v1167, 1
      %vm1169 = vcmp.ne.s32.totalorder %v1168, 0
      %vm1170 = vmxor %vm1165, %vm1169
      %v1171 = vsel %vm1170, %v1143, %v1152
      %v1172 = vsel %vm1170, %v1144, %v1159
      %1173 = xla_tuple %v1171, %v1172
      %1174 = vst [vmem:[#allocation12] sm:$0xff] %v1171
      %1175 = vst [vmem:[#allocation14] sm:$0xff] %v1172
      %1176 = xla_tuple %1174, %1175
      %v1177 = vld [vmem:[#allocation12] sm:$0xff]
      %v1178 = vld [vmem:[#allocation14] sm:$0xff]
      %1179 = xla_tuple %v1177, %v1178
      %v1181 = vunpack.c.l.s4 839939668
      %v1182 = vunpack.c.0.s8 %v1181
      %v1183 = vlaneseq
      %v1184 = vshrl.u32 %v1183, 7
      %v1185 = vsub.s32 %v1182, %v1184
      %v1186 = vrot.slane %v1177, %v1185
      %v1188 = vunpack.c.l.s4 839939668
      %v1189 = vunpack.c.0.s8 %v1188
      %v1190 = vlaneseq
      %v1191 = vshrl.u32 %v1190, 7
      %v1192 = vsub.s32 %v1189, %v1191
      %v1193 = vrot.slane %v1178, %v1192
      %1194 = xla_tuple %v1186, %v1193
      %vm1195 = vcmp.gt.s32.totalorder %v1177, %v1186
      %vm1196 = vcmp.eq.s32.totalorder %v1177, %v1186
      %vm1197 = vcmp.lt.s32.totalorder %v1178, %v1193
      %vm1198 = vmand %vm1196, %vm1197
      %vm1199 = vmor %vm1195, %vm1198
      %v1200 = vlaneseq
      %v1201 = vshrl.u32 %v1200, 7
      %v1202 = vand.u32 %v1201, 4
      %vm1203 = vcmp.ne.s32.totalorder %v1202, 0
      %vm1204 = vmxor %vm1199, %vm1203
      %v1205 = vsel %vm1204, %v1177, %v1186
      %v1206 = vsel %vm1204, %v1178, %v1193
      %1207 = xla_tuple %v1205, %v1206
      %v1209 = vunpack.c.l.s4 1417023538
      %v1210 = vunpack.c.0.s8 %v1209
      %v1211 = vlaneseq
      %v1212 = vshrl.u32 %v1211, 7
      %v1213 = vsub.s32 %v1210, %v1212
      %v1214 = vrot.slane %v1205, %v1213
      %v1216 = vunpack.c.l.s4 1417023538
      %v1217 = vunpack.c.0.s8 %v1216
      %v1218 = vlaneseq
      %v1219 = vshrl.u32 %v1218, 7
      %v1220 = vsub.s32 %v1217, %v1219
      %v1221 = vrot.slane %v1206, %v1220
      %1222 = xla_tuple %v1214, %v1221
      %vm1223 = vcmp.gt.s32.totalorder %v1205, %v1214
      %vm1224 = vcmp.eq.s32.totalorder %v1205, %v1214
      %vm1225 = vcmp.lt.s32.totalorder %v1206, %v1221
      %vm1226 = vmand %vm1224, %vm1225
      %vm1227 = vmor %vm1223, %vm1226
      %v1228 = vlaneseq
      %v1229 = vshrl.u32 %v1228, 7
      %v1230 = vand.u32 %v1229, 2
      %vm1231 = vcmp.ne.s32.totalorder %v1230, 0
      %vm1232 = vmxor %vm1227, %vm1231
      %v1233 = vsel %vm1232, %v1205, %v1214
      %v1234 = vsel %vm1232, %v1206, %v1221
      %1235 = xla_tuple %v1233, %v1234
      %v1237 = vunpack.c.l.s4 1732584193
      %v1238 = vunpack.c.0.s8 %v1237
      %v1239 = vlaneseq
      %v1240 = vshrl.u32 %v1239, 7
      %v1241 = vsub.s32 %v1238, %v1240
      %v1242 = vrot.slane %v1233, %v1241
      %v1244 = vunpack.c.l.s4 1732584193
      %v1245 = vunpack.c.0.s8 %v1244
      %v1246 = vlaneseq
      %v1247 = vshrl.u32 %v1246, 7
      %v1248 = vsub.s32 %v1245, %v1247
      %v1249 = vrot.slane %v1234, %v1248
      %1250 = xla_tuple %v1242, %v1249
      %vm1251 = vcmp.gt.s32.totalorder %v1233, %v1242
      %vm1252 = vcmp.eq.s32.totalorder %v1233, %v1242
      %vm1253 = vcmp.lt.s32.totalorder %v1234, %v1249
      %vm1254 = vmand %vm1252, %vm1253
      %vm1255 = vmor %vm1251, %vm1254
      %v1256 = vlaneseq
      %v1257 = vshrl.u32 %v1256, 7
      %v1258 = vand.u32 %v1257, 1
      %vm1259 = vcmp.ne.s32.totalorder %v1258, 0
      %vm1260 = vmxor %vm1255, %vm1259
      %v1261 = vsel %vm1260, %v1233, %v1242
      %v1262 = vsel %vm1260, %v1234, %v1249
      %1263 = xla_tuple %v1261, %v1262
      %1264 = vst [vmem:[#allocation12] sm:$0xff] %v1261
      %1265 = vst [vmem:[#allocation14] sm:$0xff] %v1262
      %1266 = xla_tuple %1264, %1265
    %v1267 = vld [vmem:[#allocation11] sm:$0xff]
    %vm1268 = vcmp.lt.s32.totalorder %v1267, 0
    %v1269 = vsub.s32 2147483647, %v1267
    %v1270 = vsel %vm1268, %v1269, %v1267
    %1271 = vst [vmem:[#allocation11] sm:$0xff] %v1270
    %v1272 = vld [vmem:[#allocation11] sm:$0xff]
    %1273 = vxpose.xlu0.b32.start.end [1/1] (short) %v1272, 128
    %v1274 = vpop.trf.xlu0
    %v1275 = vpop.trf.xlu0
    %v1276 = vpop.trf.xlu0
    %v1277 = vpop.trf.xlu0
    %v1278 = vpop.trf.xlu0
    %v1279 = vpop.trf.xlu0
    %v1280 = vpop.trf.xlu0
    %v1281 = vpop.trf.xlu0
    %v1282 = vpop.trf.xlu0
    %v1283 = vpop.trf.xlu0
    %v1284 = vpop.trf.xlu0
    %v1285 = vpop.trf.xlu0
    %v1286 = vpop.trf.xlu0
    %v1287 = vpop.trf.xlu0
    %v1288 = vpop.trf.xlu0
    %v1289 = vpop.trf.xlu0
    %1290 = vst [vmem:[#allocation7] sm:$0xff] %v1274
    %v1291 = vld [vmem:[#allocation13] sm:$0xff]
    %1292 = vxpose.xlu0.b32.start.end [1/1] (short) %v1291, 128
    %v1293 = vpop.trf.xlu0
    %v1294 = vpop.trf.xlu0
    %v1295 = vpop.trf.xlu0
    %v1296 = vpop.trf.xlu0
    %v1297 = vpop.trf.xlu0
    %v1298 = vpop.trf.xlu0
    %v1299 = vpop.trf.xlu0
    %v1300 = vpop.trf.xlu0
    %v1301 = vpop.trf.xlu0
    %v1302 = vpop.trf.xlu0
    %v1303 = vpop.trf.xlu0
    %v1304 = vpop.trf.xlu0
    %v1305 = vpop.trf.xlu0
    %v1306 = vpop.trf.xlu0
    %v1307 = vpop.trf.xlu0
    %v1308 = vpop.trf.xlu0
    %1309 = vst [vmem:[#allocation9] sm:$0xff] %v1293
    %s1311 = sshllo.u32 0, 2
    %v1313 = vld [vmem:[#allocation7] sm:%s1311]
    %s1314 = sshllo.u32 0, 2
    %1315 = vst [vmem:[#allocation8] sm:%s1314] %v1313
    %s1317 = sshllo.u32 0, 2
    %v1319 = vld [vmem:[#allocation9] sm:%s1317]
    %s1320 = sshllo.u32 0, 2
    %1321 = vst [vmem:[#allocation10] sm:%s1320] %v1319
    // Predicated region
    $region37: #{custom-call.1} parent=1 // pred_check
      _
    $region38: #{custom-call.1} parent=1 // pred_check_branch
      %1323 = sbr.rel (0) target = $region40
    $region39: #{custom-call.1} parent=1 // pred_region
      // Predicated region
      $region41: #{custom-call.1} parent=39 // pred_check
        _
      $region42: #{custom-call.1} parent=39 // pred_check_branch
        %1325 = sbr.rel target = $region44
      $region43: #{custom-call.1} parent=39 // pred_region
        // Predicated region
        $region56: #{custom-call.1} parent=43 // pred_check
          _
        $region57: #{custom-call.1} parent=43 // pred_check_branch
          %1340 = sbr.rel (0) target = $region59
        $region58: #{custom-call.1} parent=43 // pred_region
          loop: start=0, step=1, limit=1
          $region60: #{custom-call.1} parent=58 // loop_pre_header
            _
          $region61: #{custom-call.1} parent=58 // loop_header
            %s1343 = sphi 0, %s1347
            %p1344 = scmp.ge.s32.totalorder %s1343, 1
            %s1348 = sphi [#allocation8], [#allocation8]
            %s1349 = sphi %s1, %s1
          $region62: #{custom-call.1} parent=58 // loop_header_branch
            %1346 = sbr.rel (%p1344) target = $region66
          $region63: #{custom-call.1} parent=58 // loop_body
            %v1350 = vld [vmem:[%s1348] sm:$0x3]
            %1351 = vst [vmem:[%s1349] sm:$0x3] %v1350
          $region64: #{custom-call.1} parent=58 // loop_footer
            %s1347 = sadd.s32 1, %s1343
          $region65: #{custom-call.1} parent=58 // loop_footer_branch
            %1342 = sbr.rel target = $region61
          $region66: #{custom-call.1} parent=58 // loop_exit
            _
        $region59: #{custom-call.1} parent=43 // pred_fallthru
          _
      $region44: #{custom-call.1} parent=39 // pred_fallthru
        _
      // Predicated region
      $region45: #{custom-call.1} parent=39 // pred_check
        _
      $region46: #{custom-call.1} parent=39 // pred_check_branch
        %1327 = sbr.rel (0) target = $region48
      $region47: #{custom-call.1} parent=39 // pred_region
        loop: start=0, step=1, limit=1
        $region49: #{custom-call.1} parent=47 // loop_pre_header
          _
        $region50: #{custom-call.1} parent=47 // loop_header
          %s1330 = sphi 0, %s1334
          %p1331 = scmp.ge.s32.totalorder %s1330, 1
          %s1335 = sphi [#allocation8], [#allocation8]
          %s1336 = sphi %s1, %s1
        $region51: #{custom-call.1} parent=47 // loop_header_branch
          %1333 = sbr.rel (%p1331) target = $region55
        $region52: #{custom-call.1} parent=47 // loop_body
          %v1337 = vld [vmem:[%s1335] sm:$0x3]
          %1338 = vst [vmem:[%s1336] sm:$0x3] %v1337
        $region53: #{custom-call.1} parent=47 // loop_footer
          %s1334 = sadd.s32 1, %s1330
        $region54: #{custom-call.1} parent=47 // loop_footer_branch
          %1329 = sbr.rel target = $region50
        $region55: #{custom-call.1} parent=47 // loop_exit
          _
      $region48: #{custom-call.1} parent=39 // pred_fallthru
        _
    $region40: #{custom-call.1} parent=1 // pred_fallthru
      _
    %1352 = vnop
    // Predicated region
    $region67: #{custom-call.1} parent=1 // pred_check
      _
    $region68: #{custom-call.1} parent=1 // pred_check_branch
      %1354 = sbr.rel (0) target = $region70
    $region69: #{custom-call.1} parent=1 // pred_region
      // Predicated region
      $region71: #{custom-call.1} parent=69 // pred_check
        _
      $region72: #{custom-call.1} parent=69 // pred_check_branch
        %1356 = sbr.rel target = $region74
      $region73: #{custom-call.1} parent=69 // pred_region
        // Predicated region
        $region86: #{custom-call.1} parent=73 // pred_check
          _
        $region87: #{custom-call.1} parent=73 // pred_check_branch
          %1371 = sbr.rel (0) target = $region89
        $region88: #{custom-call.1} parent=73 // pred_region
          loop: start=0, step=1, limit=1
          $region90: #{custom-call.1} parent=88 // loop_pre_header
            _
          $region91: #{custom-call.1} parent=88 // loop_header
            %s1374 = sphi 0, %s1378
            %p1375 = scmp.ge.s32.totalorder %s1374, 1
            %s1379 = sphi [#allocation10], [#allocation10]
            %s1380 = sphi %s2, %s2
          $region92: #{custom-call.1} parent=88 // loop_header_branch
            %1377 = sbr.rel (%p1375) target = $region96
          $region93: #{custom-call.1} parent=88 // loop_body
            %v1381 = vld [vmem:[%s1379] sm:$0x3]
            %1382 = vst [vmem:[%s1380] sm:$0x3] %v1381
          $region94: #{custom-call.1} parent=88 // loop_footer
            %s1378 = sadd.s32 1, %s1374
          $region95: #{custom-call.1} parent=88 // loop_footer_branch
            %1373 = sbr.rel target = $region91
          $region96: #{custom-call.1} parent=88 // loop_exit
            _
        $region89: #{custom-call.1} parent=73 // pred_fallthru
          _
      $region74: #{custom-call.1} parent=69 // pred_fallthru
        _
      // Predicated region
      $region75: #{custom-call.1} parent=69 // pred_check
        _
      $region76: #{custom-call.1} parent=69 // pred_check_branch
        %1358 = sbr.rel (0) target = $region78
      $region77: #{custom-call.1} parent=69 // pred_region
        loop: start=0, step=1, limit=1
        $region79: #{custom-call.1} parent=77 // loop_pre_header
          _
        $region80: #{custom-call.1} parent=77 // loop_header
          %s1361 = sphi 0, %s1365
          %p1362 = scmp.ge.s32.totalorder %s1361, 1
          %s1366 = sphi [#allocation10], [#allocation10]
          %s1367 = sphi %s2, %s2
        $region81: #{custom-call.1} parent=77 // loop_header_branch
          %1364 = sbr.rel (%p1362) target = $region85
        $region82: #{custom-call.1} parent=77 // loop_body
          %v1368 = vld [vmem:[%s1366] sm:$0x3]
          %1369 = vst [vmem:[%s1367] sm:$0x3] %v1368
        $region83: #{custom-call.1} parent=77 // loop_footer
          %s1365 = sadd.s32 1, %s1361
        $region84: #{custom-call.1} parent=77 // loop_footer_branch
          %1360 = sbr.rel target = $region80
        $region85: #{custom-call.1} parent=77 // loop_exit
          _
      $region78: #{custom-call.1} parent=69 // pred_fallthru
        _
    $region70: #{custom-call.1} parent=1 // pred_fallthru
      _
    %1383 = vnop

// kernel: _lambda_.7
$region0: #{_lambda_.7}
  #allocation0 [shape = 'u32[]', space=smem, size = 0x4, offset = 0x4, fixed_abs, tag = 'smem constant byte address 0x4 - core index']
  #allocation1 [shape = 'u32[144,128]{1,0:T(1,128)}', space=vmem, size = 0x12000, scoped, tag = 'internal scratch']
  #allocation2 [shape = 's32[1]{0}', space=sflag, size = 0x4, scoped, tag = 'scoped memory for _lambda_.7']
  #allocation3 [shape = 'u8[1024]{0}', space=smem, size = 0x400, scoped, tag = 'prefetched SMEM operand 0']
  %s0 = inlined_call_operand.vmem [shape: s32[2,4], index: 0, kind: input, shape index: {}]
  %s1 = inlined_call_operand.vmem [shape: f32[2,32,4], index: 1, kind: input, shape index: {}]
  %s2 = inlined_call_operand.vmem [shape: f32[2,384,1], index: 2, kind: output, shape index: {}]
  %s3 = sld [smem:[#allocation0]]
  $region37: #{_lambda_.7} parent=0
    _
  %s5 = ssub.s32 1, %s3
  %s6 = scalar_select 0, %s5, %s3
  %s7 = sshll.u32 %s0, 4
  %s8 = int_to_ptr.vmem [resolvable:$true] %s7
  %10 = dma.vmem_to_smem %s8, 32, [#allocation3], [#allocation2]
  %11 = dma.done [#allocation2], 32
  %12 = sfence
  loop: start=0, step=1, limit=4
  $region2: #{_lambda_.7} parent=0 // loop_pre_header
    _
  $region3: #{_lambda_.7} parent=0 // loop_header
    %s14 = sphi 0, %s18
    %p15 = scmp.ge.s32.totalorder %s14, 4
    %s24 = sphi 0, %s26
    %s27 = sphi 0, %s24
    %s28 = sphi 0, %s27
    %s44 = sphi 0, %s28
    %s50 = sphi 0, %s52
    %s53 = sphi 0, %s50
    %s54 = sphi 0, %s53
    %s70 = sphi 0, %s54
  $region4: #{_lambda_.7} parent=0 // loop_header_branch
    %17 = sbr.rel (%p15) target = $region8
  $region5: #{_lambda_.7} parent=0 // loop_body
    %s19 = ssub.s32 %s14, 1
    %s20 = ssub.s32 %s14, 2
    %s21 = sadd.s32 %s14, 1
    %s22 = ssub.s32 %s14, %s21
    %p23 = scmp.eq.s32.totalorder %s22, 0
    %s25 = sadd.s32 %s24, 1
    %s26 = scalar_select %p23, %s24, %s25
    %p29 = pneg %p23
    %p30 = scmp.eq.s32.totalorder %s14, 1
    %p31 = por %p29, %p30
    %p32 = scmp.ne.s32.totalorder %s24, %s27
    %p33 = scmp.eq.s32.totalorder %s14, 0
    %p34 = por %p32, %p33
    %p35 = scmp.ne.s32.totalorder %s24, %s27
    %p36 = scmp.eq.s32.totalorder %s19, 1
    %p37 = por %p35, %p36
    %p38 = scmp.ne.s32.totalorder %s27, %s28
    %p39 = scmp.eq.s32.totalorder %s19, 0
    %p40 = por %p38, %p39
    %p41 = scmp.ne.s32.totalorder %s27, %s28
    %p42 = scmp.eq.s32.totalorder %s20, 1
    %p43 = por %p41, %p42
    %p45 = scmp.ne.s32.totalorder %s28, %s44
    %p46 = scmp.eq.s32.totalorder %s20, 0
    %p47 = por %p45, %p46
    %s48 = ssub.s32 %s14, %s21
    %p49 = scmp.eq.s32.totalorder %s48, 0
    %s51 = sadd.s32 %s50, 1
    %s52 = scalar_select %p49, %s50, %s51
    %p55 = pneg %p49
    %p56 = scmp.eq.s32.totalorder %s14, 1
    %p57 = por %p55, %p56
    %p58 = scmp.ne.s32.totalorder %s50, %s53
    %p59 = scmp.eq.s32.totalorder %s14, 0
    %p60 = por %p58, %p59
    %p61 = scmp.ne.s32.totalorder %s50, %s53
    %p62 = scmp.eq.s32.totalorder %s19, 1
    %p63 = por %p61, %p62
    %p64 = scmp.ne.s32.totalorder %s53, %s54
    %p65 = scmp.eq.s32.totalorder %s19, 0
    %p66 = por %p64, %p65
    %p67 = scmp.ne.s32.totalorder %s53, %s54
    %p68 = scmp.eq.s32.totalorder %s20, 1
    %p69 = por %p67, %p68
    %p71 = scmp.ne.s32.totalorder %s54, %s70
    %p72 = scmp.eq.s32.totalorder %s20, 0
    %p73 = por %p71, %p72
    %p74 = scmp.le.s32.totalorder 1, %s14
    %p75 = scmp.lt.s32.totalorder %s14, 3
    %p76 = pnand %p74, %p75
    %p77 = pneg %p76
    // Predicated region
    $region9: #{_lambda_.7} parent=5 // pred_check
      _
    $region10: #{_lambda_.7} parent=5 // pred_check_branch
      %79 = sbr.rel (%p76) target = $region12
    $region11: #{_lambda_.7} parent=5 // pred_region
      %s80 = ssub.s32 %s14, 1
    $region12: #{_lambda_.7} parent=5 // pred_fallthru
      _
    %p81 = scmp.lt.s32.totalorder %s14, 2
    // Predicated region
    $region13: #{_lambda_.7} parent=5 // pred_check
      %p82 = pneg %p81
    $region14: #{_lambda_.7} parent=5 // pred_check_branch
      %84 = sbr.rel (%p82) target = $region16
    $region15: #{_lambda_.7} parent=5 // pred_region
      // Predicated region
      $region17: #{_lambda_.7} parent=15 // pred_check
        %p85 = pneg %p34
      $region18: #{_lambda_.7} parent=15 // pred_check_branch
        %87 = sbr.rel (%p85) target = $region20
      $region19: #{_lambda_.7} parent=15 // pred_region
        %p88 = scmp.lt.s32.totalorder %s14, 1
        %s89 = scalar_select %p88, %s14, 1
        %s90 = smul.addr %s89, 4
        %s91 = smul.addr %s90, 8
        %s92 = scalar_lea.vmem %s1, %s91
      $region20: #{_lambda_.7} parent=15 // pred_fallthru
        _
    $region16: #{_lambda_.7} parent=5 // pred_fallthru
      _
    %p93 = scmp.le.s32.totalorder 1, %s14
    %p94 = scmp.lt.s32.totalorder %s14, 3
    %p95 = pnand %p93, %p94
    %p96 = pneg %p95
    // Predicated region
    $region21: #{_lambda_.7} parent=5 // pred_check
      _
    $region22: #{_lambda_.7} parent=5 // pred_check_branch
      %98 = sbr.rel (%p95) target = $region24
    $region23: #{_lambda_.7} parent=5 // pred_region
      %s99 = ssub.s32 %s14, 1
      %p100 = scmp.lt.s32.totalorder %s19, 1
      %s101 = scalar_select %p100, %s19, 1
      %s102 = smul.addr %s101, 4
      %s103 = smul.addr %s102, 8
      %s104 = scalar_lea.vmem %s1, %s103
      %p105 = pneg %p40
      %p106 = pneg %p37
      %p107 = pneg %p66
      %p108 = pneg %p63
      %p109 = scmp.lt.s32.totalorder %s19, 1
      %s110 = scalar_select %p109, %s19, 1
      %s111 = smul.addr %s110, 48
      %s112 = smul.addr %s111, 8
      %s113 = scalar_lea.vmem %s2, %s112
      %p114 = scmp.lt.s32.totalorder %s19, 1
      %s115 = scalar_select %p114, %s19, 1
      %s116 = smul.addr %s115, 4
      %s117 = smul.addr %s116, 8
      %s118 = scalar_lea.vmem %s1, %s117
      %p119 = scmp.lt.s32.totalorder %s19, 1
      %s120 = scalar_select %p119, %s19, 1
      %s121 = smul.addr %s120, 48
      %s122 = smul.addr %s121, 8
      %s123 = scalar_lea.vmem %s2, %s122
      %vm124 = vcmask 7168
      %125 = vst.msk [vmem:[%s123] sm:$0xff] %vm124, 0.0
      %126 = vst.msk [vmem:[%s123 + $0x8] sm:$0xff] %vm124, 0.0
      %127 = vst.msk [vmem:[%s123 + $0x10] sm:$0xff] %vm124, 0.0
      %128 = vst.msk [vmem:[%s123 + $0x18] sm:$0xff] %vm124, 0.0
      %129 = vst.msk [vmem:[%s123 + $0x20] sm:$0xff] %vm124, 0.0
      %130 = vst.msk [vmem:[%s123 + $0x28] sm:$0xff] %vm124, 0.0
      %131 = vst.msk [vmem:[%s123 + $0x30] sm:$0xff] %vm124, 0.0
      %132 = vst.msk [vmem:[%s123 + $0x38] sm:$0xff] %vm124, 0.0
      %133 = vst.msk [vmem:[%s123 + $0x40] sm:$0xff] %vm124, 0.0
      %134 = vst.msk [vmem:[%s123 + $0x48] sm:$0xff] %vm124, 0.0
      %135 = vst.msk [vmem:[%s123 + $0x50] sm:$0xff] %vm124, 0.0
      %136 = vst.msk [vmem:[%s123 + $0x58] sm:$0xff] %vm124, 0.0
      %137 = vst.msk [vmem:[%s123 + $0x60] sm:$0xff] %vm124, 0.0
      %138 = vst.msk [vmem:[%s123 + $0x68] sm:$0xff] %vm124, 0.0
      %139 = vst.msk [vmem:[%s123 + $0x70] sm:$0xff] %vm124, 0.0
      %140 = vst.msk [vmem:[%s123 + $0x78] sm:$0xff] %vm124, 0.0
      %141 = vst.msk [vmem:[%s123 + $0x80] sm:$0xff] %vm124, 0.0
      %142 = vst.msk [vmem:[%s123 + $0x88] sm:$0xff] %vm124, 0.0
      %143 = vst.msk [vmem:[%s123 + $0x90] sm:$0xff] %vm124, 0.0
      %144 = vst.msk [vmem:[%s123 + $0x98] sm:$0xff] %vm124, 0.0
      %145 = vst.msk [vmem:[%s123 + $0xa0] sm:$0xff] %vm124, 0.0
      %146 = vst.msk [vmem:[%s123 + $0xa8] sm:$0xff] %vm124, 0.0
      %147 = vst.msk [vmem:[%s123 + $0xb0] sm:$0xff] %vm124, 0.0
      %148 = vst.msk [vmem:[%s123 + $0xb8] sm:$0xff] %vm124, 0.0
      %149 = vst.msk [vmem:[%s123 + $0xc0] sm:$0xff] %vm124, 0.0
      %150 = vst.msk [vmem:[%s123 + $0xc8] sm:$0xff] %vm124, 0.0
      %151 = vst.msk [vmem:[%s123 + $0xd0] sm:$0xff] %vm124, 0.0
      %152 = vst.msk [vmem:[%s123 + $0xd8] sm:$0xff] %vm124, 0.0
      %153 = vst.msk [vmem:[%s123 + $0xe0] sm:$0xff] %vm124, 0.0
      %154 = vst.msk [vmem:[%s123 + $0xe8] sm:$0xff] %vm124, 0.0
      %155 = vst.msk [vmem:[%s123 + $0xf0] sm:$0xff] %vm124, 0.0
      %156 = vst.msk [vmem:[%s123 + $0xf8] sm:$0xff] %vm124, 0.0
      %157 = vst.msk [vmem:[%s123 + $0x100] sm:$0xff] %vm124, 0.0
      %158 = vst.msk [vmem:[%s123 + $0x108] sm:$0xff] %vm124, 0.0
      %159 = vst.msk [vmem:[%s123 + $0x110] sm:$0xff] %vm124, 0.0
      %160 = vst.msk [vmem:[%s123 + $0x118] sm:$0xff] %vm124, 0.0
      %161 = vst.msk [vmem:[%s123 + $0x120] sm:$0xff] %vm124, 0.0
      %162 = vst.msk [vmem:[%s123 + $0x128] sm:$0xff] %vm124, 0.0
      %163 = vst.msk [vmem:[%s123 + $0x130] sm:$0xff] %vm124, 0.0
      %164 = vst.msk [vmem:[%s123 + $0x138] sm:$0xff] %vm124, 0.0
      %165 = vst.msk [vmem:[%s123 + $0x140] sm:$0xff] %vm124, 0.0
      %166 = vst.msk [vmem:[%s123 + $0x148] sm:$0xff] %vm124, 0.0
      %167 = vst.msk [vmem:[%s123 + $0x150] sm:$0xff] %vm124, 0.0
      %168 = vst.msk [vmem:[%s123 + $0x158] sm:$0xff] %vm124, 0.0
      %169 = vst.msk [vmem:[%s123 + $0x160] sm:$0xff] %vm124, 0.0
      %170 = vst.msk [vmem:[%s123 + $0x168] sm:$0xff] %vm124, 0.0
      %171 = vst.msk [vmem:[%s123 + $0x170] sm:$0xff] %vm124, 0.0
      %172 = vst.msk [vmem:[%s123 + $0x178] sm:$0xff] %vm124, 0.0
      %v173 = vld [vmem:[%s118] sm:$0xff]
      %v174 = vld [vmem:[%s118 + $0x8] sm:$0xff]
      %v175 = vld [vmem:[%s118 + $0x10] sm:$0xff]
      %v176 = vld [vmem:[%s118 + $0x18] sm:$0xff]
      %s177 = smul.u32 %s19, 128
      %s178 = sld [smem:[#allocation3 + %s177]]
      %s179 = sadd.s32 %s178, 32
      %s180 = scalar_lea.vmem %s123, %s179
      %v181 = vld [vmem:[%s180] sm:$0xff]
      %v182 = vld [vmem:[%s180 + $0x8] sm:$0xff]
      %v183 = vld [vmem:[%s180 + $0x10] sm:$0xff]
      %v184 = vld [vmem:[%s180 + $0x18] sm:$0xff]
      %v185 = vadd.f32 %v181, %v173
      %v186 = vadd.f32 %v182, %v174
      %v187 = vadd.f32 %v183, %v175
      %v188 = vadd.f32 %v184, %v176
      %189 = vst.msk [vmem:[%s180] sm:$0xff] %vm124, %v185
      %190 = vst.msk [vmem:[%s180 + $0x8] sm:$0xff] %vm124, %v186
      %191 = vst.msk [vmem:[%s180 + $0x10] sm:$0xff] %vm124, %v187
      %192 = vst.msk [vmem:[%s180 + $0x18] sm:$0xff] %vm124, %v188
      %s193 = sadd.s32 %s177, 1
      %s194 = sld [smem:[#allocation3 + %s193]]
      %s195 = sadd.s32 %s194, 32
      %s196 = scalar_lea.vmem %s123, %s195
      %v197 = vld [vmem:[%s196] sm:$0xff]
      %v198 = vld [vmem:[%s196 + $0x8] sm:$0xff]
      %v199 = vld [vmem:[%s196 + $0x10] sm:$0xff]
      %v200 = vld [vmem:[%s196 + $0x18] sm:$0xff]
      %205 = vrot.lane.b32.xlu0 %v173, 127
      %v206 = vpop.permute.xlu0 %205
      %207 = vrot.lane.b32.xlu0 %v174, 127
      %v208 = vpop.permute.xlu0 %207
      %209 = vrot.lane.b32.xlu0 %v175, 127
      %v210 = vpop.permute.xlu0 %209
      %211 = vrot.lane.b32.xlu0 %v176, 127
      %v212 = vpop.permute.xlu0 %211
      %v217 = vadd.f32 %v197, %v206
      %v218 = vadd.f32 %v198, %v208
      %v219 = vadd.f32 %v199, %v210
      %v220 = vadd.f32 %v200, %v212
      %221 = vst.msk [vmem:[%s196] sm:$0xff] %vm124, %v217
      %222 = vst.msk [vmem:[%s196 + $0x8] sm:$0xff] %vm124, %v218
      %223 = vst.msk [vmem:[%s196 + $0x10] sm:$0xff] %vm124, %v219
      %224 = vst.msk [vmem:[%s196 + $0x18] sm:$0xff] %vm124, %v220
      %s225 = sadd.s32 %s177, 2
      %s226 = sld [smem:[#allocation3 + %s225]]
      %s227 = sadd.s32 %s226, 32
      %s228 = scalar_lea.vmem %s123, %s227
      %v229 = vld [vmem:[%s228] sm:$0xff]
      %v230 = vld [vmem:[%s228 + $0x8] sm:$0xff]
      %v231 = vld [vmem:[%s228 + $0x10] sm:$0xff]
      %v232 = vld [vmem:[%s228 + $0x18] sm:$0xff]
      %233 = vrot.lane.b32.xlu0 %v173, 126
      %v234 = vpop.permute.xlu0 %233
      %235 = vrot.lane.b32.xlu0 %v174, 126
      %v236 = vpop.permute.xlu0 %235
      %237 = vrot.lane.b32.xlu0 %v175, 126
      %v238 = vpop.permute.xlu0 %237
      %239 = vrot.lane.b32.xlu0 %v176, 126
      %v240 = vpop.permute.xlu0 %239
      %v245 = vadd.f32 %v229, %v234
      %v246 = vadd.f32 %v230, %v236
      %v247 = vadd.f32 %v231, %v238
      %v248 = vadd.f32 %v232, %v240
      %249 = vst.msk [vmem:[%s228] sm:$0xff] %vm124, %v245
      %250 = vst.msk [vmem:[%s228 + $0x8] sm:$0xff] %vm124, %v246
      %251 = vst.msk [vmem:[%s228 + $0x10] sm:$0xff] %vm124, %v247
      %252 = vst.msk [vmem:[%s228 + $0x18] sm:$0xff] %vm124, %v248
      %s253 = sadd.s32 %s177, 3
      %s254 = sld [smem:[#allocation3 + %s253]]
      %s255 = sadd.s32 %s254, 32
      %s256 = scalar_lea.vmem %s123, %s255
      %v257 = vld [vmem:[%s256] sm:$0xff]
      %v258 = vld [vmem:[%s256 + $0x8] sm:$0xff]
      %v259 = vld [vmem:[%s256 + $0x10] sm:$0xff]
      %v260 = vld [vmem:[%s256 + $0x18] sm:$0xff]
      %261 = vrot.lane.b32.xlu0 %v173, 125
      %v262 = vpop.permute.xlu0 %261
      %263 = vrot.lane.b32.xlu0 %v174, 125
      %v264 = vpop.permute.xlu0 %263
      %265 = vrot.lane.b32.xlu0 %v175, 125
      %v266 = vpop.permute.xlu0 %265
      %267 = vrot.lane.b32.xlu0 %v176, 125
      %v268 = vpop.permute.xlu0 %267
      %v273 = vadd.f32 %v257, %v262
      %v274 = vadd.f32 %v258, %v264
      %v275 = vadd.f32 %v259, %v266
      %v276 = vadd.f32 %v260, %v268
      %277 = vst.msk [vmem:[%s256] sm:$0xff] %vm124, %v273
      %278 = vst.msk [vmem:[%s256 + $0x8] sm:$0xff] %vm124, %v274
      %279 = vst.msk [vmem:[%s256 + $0x10] sm:$0xff] %vm124, %v275
      %280 = vst.msk [vmem:[%s256 + $0x18] sm:$0xff] %vm124, %v276
      %p281 = scmp.lt.s32.totalorder %s19, 1
      %s282 = scalar_select %p281, %s19, 1
      %s283 = smul.addr %s282, 48
      %s284 = smul.addr %s283, 8
      %s285 = scalar_lea.vmem %s2, %s284
      // Predicated region
      $region25: #{_lambda_.7} parent=23 // pred_check
        %p286 = pneg %p63
      $region26: #{_lambda_.7} parent=23 // pred_check_branch
        %288 = sbr.rel (%p286) target = $region28
      $region27: #{_lambda_.7} parent=23 // pred_region
        _
      $region28: #{_lambda_.7} parent=23 // pred_fallthru
        _
    $region24: #{_lambda_.7} parent=5 // pred_fallthru
      _
    %p289 = scmp.le.s32.totalorder 2, %s14
    // Predicated region
    $region29: #{_lambda_.7} parent=5 // pred_check
      %p290 = pneg %p289
    $region30: #{_lambda_.7} parent=5 // pred_check_branch
      %292 = sbr.rel (%p290) target = $region32
    $region31: #{_lambda_.7} parent=5 // pred_region
      %s293 = ssub.s32 %s14, 2
      // Predicated region
      $region33: #{_lambda_.7} parent=31 // pred_check
        %p294 = pneg %p69
      $region34: #{_lambda_.7} parent=31 // pred_check_branch
        %296 = sbr.rel (%p294) target = $region36
      $region35: #{_lambda_.7} parent=31 // pred_region
        %p297 = scmp.lt.s32.totalorder %s20, 1
        %s298 = scalar_select %p297, %s20, 1
        %s299 = smul.addr %s298, 48
        %s300 = smul.addr %s299, 8
        %s301 = scalar_lea.vmem %s2, %s300
      $region36: #{_lambda_.7} parent=31 // pred_fallthru
        _
    $region32: #{_lambda_.7} parent=5 // pred_fallthru
      _
  $region6: #{_lambda_.7} parent=0 // loop_footer
    %s18 = sadd.s32 1, %s14
  $region7: #{_lambda_.7} parent=0 // loop_footer_branch
    %13 = sbr.rel target = $region3
  $region8: #{_lambda_.7} parent=0 // loop_exit
    _

// kernel: reverse.18
$region0: #{reverse.18}
  %s0 = inlined_call_operand.vmem [shape: f32[2,512], index: 0, kind: input, shape index: {}]
  %s1 = inlined_call_operand.vmem [shape: f32[2,512], index: 1, kind: output, shape index: {}]
  %v2 = vlaneseq
  %v3 = vsub.s32 127, %v2
  %4 = vset.pattern.permute.xlu0 %v3
  $region1: #{reverse.18} parent=0
    #allocation0 [shape = 'u8[4096]{0}', space=vmem, size = 0x1000, scoped, tag = 'operand span for operand 0']
    #allocation1 [shape = 'u8[2048]{0}', space=vmem, size = 0x800, scoped, tag = 'packed  for operand 0']
    #allocation2 [shape = 'u8[4096]{0}', space=vmem, size = 0x1000, scoped, tag = 'operand span for operand 1']
    #allocation3 [shape = 'u8[2048]{0}', space=vmem, size = 0x800, scoped, tag = 'packed  for operand 1']
    loop: start=0, step=1, limit=6
    $region2: #{reverse.18} parent=1 // loop_pre_header
      _
    $region3: #{reverse.18} parent=1 // loop_header
      %s6 = sphi 0, %s10
      %p7 = scmp.ge.s32.totalorder %s6, 6
      %s13 = sphi 0, %s25
      %s14 = sphi 0, %s21
      %s15 = sphi 0, %s13
      %s16 = sphi 0, %s14
      %s17 = sphi 0, %s15
      %s18 = sphi 0, %s16
    $region4: #{reverse.18} parent=1 // loop_header_branch
      %9 = sbr.rel (%p7) target = $region8
    $region5: #{reverse.18} parent=1 // loop_body
      %s11 = ssub.s32 %s6, 1
      %s12 = ssub.s32 %s6, 2
      %s19 = sadd.s32 1, %s14
      %p20 = scmp.ge.s32.totalorder %s19, 4
      %s21 = scalar_select %p20, 0, %s19
      %s22 = sadd.s32 1, %s13
      %s23 = scalar_select %p20, %s22, %s13
      %p24 = scmp.ge.s32.totalorder %s23, 1
      %s25 = scalar_select %p24, 0, %s23
      %p26 = scmp.le.s32.totalorder 1, %s6
      %p27 = scmp.lt.s32.totalorder %s6, 5
      %p28 = pnand %p26, %p27
      %p29 = pneg %p28
      // Predicated region
      $region9: #{reverse.18} parent=5 // pred_check
        _
      $region10: #{reverse.18} parent=5 // pred_check_branch
        %31 = sbr.rel (%p28) target = $region12
      $region11: #{reverse.18} parent=5 // pred_region
        %s32 = ssub.s32 %s6, 1
      $region12: #{reverse.18} parent=5 // pred_fallthru
        _
      %p33 = scmp.lt.s32.totalorder %s6, 4
      // Predicated region
      $region13: #{reverse.18} parent=5 // pred_check
        %p34 = pneg %p33
      $region14: #{reverse.18} parent=5 // pred_check_branch
        %36 = sbr.rel (%p34) target = $region16
      $region15: #{reverse.18} parent=5 // pred_region
        %s37 = sand.u32 %s6, 1
        %s38 = sand.u32 %s6, 1
        %s39 = smul.addr %s38, 2
        %s40 = scalar_lea.vmem [#allocation1], %s39
        %s41 = ssub.s32 3, %s14
        %s42 = smul.addr %s13, 4
        %s43 = sadd.s32 %s41, %s42
        %s44 = smul.addr %s43, 2
        %s45 = scalar_lea.vmem %s0, %s44
        // Predicated region
        $region17: #{reverse.18} parent=15 // pred_check
          _
        $region18: #{reverse.18} parent=15 // pred_check_branch
          %47 = sbr.rel (0) target = $region20
        $region19: #{reverse.18} parent=15 // pred_region
          // Predicated region
          $region21: #{reverse.18} parent=19 // pred_check
            _
          $region22: #{reverse.18} parent=19 // pred_check_branch
            %49 = sbr.rel target = $region24
          $region23: #{reverse.18} parent=19 // pred_region
            // Predicated region
            $region36: #{reverse.18} parent=23 // pred_check
              _
            $region37: #{reverse.18} parent=23 // pred_check_branch
              %64 = sbr.rel (0) target = $region39
            $region38: #{reverse.18} parent=23 // pred_region
              loop: start=0, step=1, limit=1
              $region40: #{reverse.18} parent=38 // loop_pre_header
                _
              $region41: #{reverse.18} parent=38 // loop_header
                %s67 = sphi 0, %s71
                %p68 = scmp.ge.s32.totalorder %s67, 1
                %s72 = sphi %s45, %s45
                %s73 = sphi %s40, %s40
              $region42: #{reverse.18} parent=38 // loop_header_branch
                %70 = sbr.rel (%p68) target = $region46
              $region43: #{reverse.18} parent=38 // loop_body
                %v74 = vld [vmem:[%s72] sm:$0x3]
                %75 = vst [vmem:[%s73] sm:$0x3] %v74
              $region44: #{reverse.18} parent=38 // loop_footer
                %s71 = sadd.s32 1, %s67
              $region45: #{reverse.18} parent=38 // loop_footer_branch
                %66 = sbr.rel target = $region41
              $region46: #{reverse.18} parent=38 // loop_exit
                _
            $region39: #{reverse.18} parent=23 // pred_fallthru
              _
          $region24: #{reverse.18} parent=19 // pred_fallthru
            _
          // Predicated region
          $region25: #{reverse.18} parent=19 // pred_check
            _
          $region26: #{reverse.18} parent=19 // pred_check_branch
            %51 = sbr.rel (0) target = $region28
          $region27: #{reverse.18} parent=19 // pred_region
            loop: start=0, step=1, limit=1
            $region29: #{reverse.18} parent=27 // loop_pre_header
              _
            $region30: #{reverse.18} parent=27 // loop_header
              %s54 = sphi 0, %s58
              %p55 = scmp.ge.s32.totalorder %s54, 1
              %s59 = sphi %s45, %s45
              %s60 = sphi %s40, %s40
            $region31: #{reverse.18} parent=27 // loop_header_branch
              %57 = sbr.rel (%p55) target = $region35
            $region32: #{reverse.18} parent=27 // loop_body
              %v61 = vld [vmem:[%s59] sm:$0x3]
              %62 = vst [vmem:[%s60] sm:$0x3] %v61
            $region33: #{reverse.18} parent=27 // loop_footer
              %s58 = sadd.s32 1, %s54
            $region34: #{reverse.18} parent=27 // loop_footer_branch
              %53 = sbr.rel target = $region30
            $region35: #{reverse.18} parent=27 // loop_exit
              _
          $region28: #{reverse.18} parent=19 // pred_fallthru
            _
        $region20: #{reverse.18} parent=15 // pred_fallthru
          _
        %76 = vnop
      $region16: #{reverse.18} parent=5 // pred_fallthru
        _
      %p77 = scmp.le.s32.totalorder 1, %s6
      %p78 = scmp.lt.s32.totalorder %s6, 5
      %p79 = pnand %p77, %p78
      %p80 = pneg %p79
      // Predicated region
      $region47: #{reverse.18} parent=5 // pred_check
        _
      $region48: #{reverse.18} parent=5 // pred_check_branch
        %82 = sbr.rel (%p79) target = $region50
      $region49: #{reverse.18} parent=5 // pred_region
        %s83 = ssub.s32 %s6, 1
        %s84 = sand.u32 %s11, 1
        %s85 = sand.u32 %s11, 1
        %s86 = smul.addr %s85, 2
        %s87 = scalar_lea.vmem [#allocation1], %s86
        %s88 = sand.u32 %s11, 1
        %s89 = sand.u32 %s11, 1
        %s90 = smul.addr %s89, 2
        %s91 = scalar_lea.vmem [#allocation1], %s90
        %s92 = sand.u32 %s11, 1
        %s93 = sand.u32 %s11, 1
        %s94 = smul.addr %s93, 2
        %s95 = scalar_lea.vmem [#allocation3], %s94
        %s97 = sshllo.u32 0, 2
        %v98 = vld [vmem:[%s91] sm:%s97]
        %99 = vst [vmem:[#allocation0] sm:%s97] %v98
        %s100 = ssub.s32 3, %s16
        %v101 = vld [vmem:[#allocation0] sm:$0xff]
        %102 = vperm.xlu0 %4, %v101
        %v103 = vpop.permute.xlu0 %102
        %104 = vst [vmem:[#allocation2] sm:$0xff] %v103
        %s106 = sshllo.u32 0, 2
        %v108 = vld [vmem:[#allocation2] sm:%s106]
        %s109 = sshllo.u32 0, 2
        %110 = vst [vmem:[%s95] sm:%s109] %v108
        %s111 = sand.u32 %s11, 1
        %s112 = sand.u32 %s11, 1
        %s113 = smul.addr %s112, 2
        %s114 = scalar_lea.vmem [#allocation3], %s113
        %s115 = smul.addr %s15, 4
        %s116 = sadd.s32 %s16, %s115
        %s117 = smul.addr %s116, 2
        %s118 = scalar_lea.vmem %s1, %s117
        // Predicated region
        $region51: #{reverse.18} parent=49 // pred_check
          _
        $region52: #{reverse.18} parent=49 // pred_check_branch
          %120 = sbr.rel (0) target = $region54
        $region53: #{reverse.18} parent=49 // pred_region
          // Predicated region
          $region55: #{reverse.18} parent=53 // pred_check
            _
          $region56: #{reverse.18} parent=53 // pred_check_branch
            %122 = sbr.rel target = $region58
          $region57: #{reverse.18} parent=53 // pred_region
            // Predicated region
            $region70: #{reverse.18} parent=57 // pred_check
              _
            $region71: #{reverse.18} parent=57 // pred_check_branch
              %137 = sbr.rel (0) target = $region73
            $region72: #{reverse.18} parent=57 // pred_region
              loop: start=0, step=1, limit=1
              $region74: #{reverse.18} parent=72 // loop_pre_header
                _
              $region75: #{reverse.18} parent=72 // loop_header
                %s140 = sphi 0, %s144
                %p141 = scmp.ge.s32.totalorder %s140, 1
                %s145 = sphi %s114, %s114
                %s146 = sphi %s118, %s118
              $region76: #{reverse.18} parent=72 // loop_header_branch
                %143 = sbr.rel (%p141) target = $region80
              $region77: #{reverse.18} parent=72 // loop_body
                %v147 = vld [vmem:[%s145] sm:$0x3]
                %148 = vst [vmem:[%s146] sm:$0x3] %v147
              $region78: #{reverse.18} parent=72 // loop_footer
                %s144 = sadd.s32 1, %s140
              $region79: #{reverse.18} parent=72 // loop_footer_branch
                %139 = sbr.rel target = $region75
              $region80: #{reverse.18} parent=72 // loop_exit
                _
            $region73: #{reverse.18} parent=57 // pred_fallthru
              _
          $region58: #{reverse.18} parent=53 // pred_fallthru
            _
          // Predicated region
          $region59: #{reverse.18} parent=53 // pred_check
            _
          $region60: #{reverse.18} parent=53 // pred_check_branch
            %124 = sbr.rel (0) target = $region62
          $region61: #{reverse.18} parent=53 // pred_region
            loop: start=0, step=1, limit=1
            $region63: #{reverse.18} parent=61 // loop_pre_header
              _
            $region64: #{reverse.18} parent=61 // loop_header
              %s127 = sphi 0, %s131
              %p128 = scmp.ge.s32.totalorder %s127, 1
              %s132 = sphi %s114, %s114
              %s133 = sphi %s118, %s118
            $region65: #{reverse.18} parent=61 // loop_header_branch
              %130 = sbr.rel (%p128) target = $region69
            $region66: #{reverse.18} parent=61 // loop_body
              %v134 = vld [vmem:[%s132] sm:$0x3]
              %135 = vst [vmem:[%s133] sm:$0x3] %v134
            $region67: #{reverse.18} parent=61 // loop_footer
              %s131 = sadd.s32 1, %s127
            $region68: #{reverse.18} parent=61 // loop_footer_branch
              %126 = sbr.rel target = $region64
            $region69: #{reverse.18} parent=61 // loop_exit
              _
          $region62: #{reverse.18} parent=53 // pred_fallthru
            _
        $region54: #{reverse.18} parent=49 // pred_fallthru
          _
        %149 = vnop
      $region50: #{reverse.18} parent=5 // pred_fallthru
        _
      %p150 = scmp.le.s32.totalorder 2, %s6
      // Predicated region
      $region81: #{reverse.18} parent=5 // pred_check
        %p151 = pneg %p150
      $region82: #{reverse.18} parent=5 // pred_check_branch
        %153 = sbr.rel (%p151) target = $region84
      $region83: #{reverse.18} parent=5 // pred_region
        %s154 = ssub.s32 %s6, 2
        %s155 = sand.u32 %s12, 1
        %s156 = sand.u32 %s12, 1
        %s157 = smul.addr %s156, 2
        %s158 = scalar_lea.vmem [#allocation3], %s157
      $region84: #{reverse.18} parent=5 // pred_fallthru
        _
    $region6: #{reverse.18} parent=1 // loop_footer
      %s10 = sadd.s32 1, %s6
    $region7: #{reverse.18} parent=1 // loop_footer_branch
      %5 = sbr.rel target = $region3
    $region8: #{reverse.18} parent=1 // loop_exit
      _

</llo_original>
